<compile_context>
chip_gen: v7x
topology: tpu7x:2x2x1
jax: 0.10.0
libtpu: 0.0.40
codegen_flags: <defaults>
</compile_context>

<pallas_src>
import functools

import numpy as np

import jax
import jax.numpy as jnp
from jax.experimental import pallas as pl
from jax.experimental.pallas import tpu as pltpu

EPS = 1e-5
N_BLOCKS = 9


# ----------------------------------------------------------- in-kernel helpers --

def _inorm(y):
    """InstanceNorm2d (affine=False) on a [P, C] tile, single pass."""
    p = y.shape[0]
    s = jnp.sum(y, axis=0, keepdims=True)
    ss = jnp.sum(y * y, axis=0, keepdims=True)
    mean = s * (1.0 / p)
    var = jnp.maximum(ss * (1.0 / p) - mean * mean, 0.0)
    return (y - mean) * jax.lax.rsqrt(var + EPS)


def _inorm_dense(y, cm):
    """InstanceNorm2d on a lane-dense [Ho, Wo*C] tile.

    cm is a constant [Wo*C, Wo*C] matrix with cm[w*C+c, w'*C+c'] = d(c,c')/(Ho*Wo),
    so colsum(y @ cm) is the per-channel mean broadcast back to the dense layout."""
    mean = jnp.sum(jnp.dot(y, cm, preferred_element_type=jnp.float32),
                   axis=0, keepdims=True)
    ex2 = jnp.sum(jnp.dot(y * y, cm, preferred_element_type=jnp.float32),
                  axis=0, keepdims=True)
    var = jnp.maximum(ex2 - mean * mean, 0.0)
    return (y - mean) * jax.lax.rsqrt(var + EPS)


def _reflect_pad1(pad_ref, v):
    """ReflectionPad2d(1) of v [H, W, C] into VMEM scratch pad_ref [H+2, W+2, C]."""
    H, W, _ = v.shape
    pad_ref[1:H + 1, 1:W + 1, :] = v
    pad_ref[0:1, 1:W + 1, :] = v[1:2]
    pad_ref[H + 1:H + 2, 1:W + 1, :] = v[H - 2:H - 1]
    pad_ref[:, 0:1, :] = pad_ref[:, 2:3, :]
    pad_ref[:, W + 1:W + 2, :] = pad_ref[:, W - 1:W, :]


def _dw3x3(pad_ref, w, H, W):
    """Depthwise 3x3 (valid) over the padded scratch; w: [9, C]. Returns [H*W, C]."""
    pv = pad_ref[...]
    acc = pv[0:H, 0:W, :] * w[0]
    for k in range(1, 9):
        ky, kx = k // 3, k % 3
        acc = acc + pv[ky:ky + H, kx:kx + W, :] * w[k]
    return acc.reshape(H * W, acc.shape[-1])


# ------------------------------------------------------------------ conv kernel --

def _dense_conv_kernel(x_ref, B_ref, bias_ref, cm_ref, o_ref, *, norm, act):
    # x_ref: [1, S, Hr, Wp*Cin]  (row-parity phases of the padded input)
    # B_ref: [KH, Wp*Cin, Wo*Cout] banded weight (bf16)
    # bias_ref: [1, Wo*Cout]   cm_ref: [Wo*Cout, Wo*Cout]
    # o_ref: [1, Ho, Wo*Cout]  (lane-dense output)
    KH = B_ref.shape[0]
    S = x_ref.shape[1]
    Ho, Dout = o_ref.shape[1], o_ref.shape[2]
    acc = jnp.zeros((Ho, Dout), jnp.float32)
    for ky in range(KH):
        rows = x_ref[0, ky % S, (ky // S):(ky // S) + Ho, :]
        acc = acc + jnp.dot(rows.astype(jnp.bfloat16), B_ref[ky],
                            preferred_element_type=jnp.float32)
    y = acc + bias_ref[...]
    if norm:
        y = _inorm_dense(y, cm_ref[...])
    if act == "relu":
        y = jnp.maximum(y, 0.0)
    elif act == "tanh":
        y = jnp.tanh(y)
    o_ref[0] = y.astype(o_ref.dtype)


def dense_conv(x_phases, B, bias_d, cm, *, Ho, norm, act):
    N, S, Hr, Din = x_phases.shape
    KH, _, Dout = B.shape
    kern = functools.partial(_dense_conv_kernel, norm=norm, act=act)
    return pl.pallas_call(
        kern,
        out_shape=jax.ShapeDtypeStruct((N, Ho, Dout), jnp.float32),
        grid=(N,),
        in_specs=[
            pl.BlockSpec((1, S, Hr, Din), lambda n: (n, 0, 0, 0)),
            pl.BlockSpec((KH, Din, Dout), lambda n: (0, 0, 0)),
            pl.BlockSpec((1, Dout), lambda n: (0, 0)),
            pl.BlockSpec((Dout, Dout), lambda n: (0, 0)),
        ],
        out_specs=pl.BlockSpec((1, Ho, Dout), lambda n: (n, 0, 0)),
        compiler_params=pltpu.CompilerParams(dimension_semantics=("parallel",)),
    )(x_phases, B, bias_d, cm)


# ----------------------------------------------------- fused resnet-blocks kernel --

def _resblocks_kernel(x_ref, dw1_ref, db1_ref, pw1_ref, pb1_ref,
                      dw2_ref, db2_ref, pw2_ref, pb2_ref, o_ref,
                      act_ref, pad1_ref, pad2_ref, *, H, W):
    nb = pl.num_programs(1)
    b = pl.program_id(1)
    Cin = act_ref.shape[1]
    Cmid = pad2_ref.shape[2]

    @pl.when(b == 0)
    def _():
        act_ref[...] = x_ref[0]

    x = act_ref[...]                                   # [P, Cin], VMEM-resident

    # SeparableConv2d(ic->oc): reflectpad1 -> dw3x3 + bias -> IN -> pw1x1 + bias
    # then block-level IN + ReLU.
    _reflect_pad1(pad1_ref, x.reshape(H, W, Cin))
    h = _dw3x3(pad1_ref, dw1_ref[0], H, W)
    h = _inorm(h + db1_ref[0])
    h = jnp.dot(h.astype(jnp.bfloat16), pw1_ref[0].astype(jnp.bfloat16),
                preferred_element_type=jnp.float32) + pb1_ref[0]
    h = jnp.maximum(_inorm(h), 0.0)                    # [P, Cmid]
    # Dropout(p=0) == identity

    # SeparableConv2d(oc->ic) + block-level IN + residual.
    _reflect_pad1(pad2_ref, h.reshape(H, W, Cmid))
    g = _dw3x3(pad2_ref, dw2_ref[0], H, W)
    g = _inorm(g + db2_ref[0])
    g = jnp.dot(g.astype(jnp.bfloat16), pw2_ref[0].astype(jnp.bfloat16),
                preferred_element_type=jnp.float32) + pb2_ref[0]
    y = x + _inorm(g)                                  # [P, Cin]

    act_ref[...] = y

    @pl.when(b == nb - 1)
    def _():
        o_ref[0] = y.astype(o_ref.dtype)


def resnet_blocks(xb, params, H, W):
    N, P, Cin = xb.shape
    nb = params["blk_dw1"].shape[0]
    Cmid = params["blk_pw1"].shape[2]
    kern = functools.partial(_resblocks_kernel, H=H, W=W)
    return pl.pallas_call(
        kern,
        out_shape=jax.ShapeDtypeStruct((N, P, Cin), jnp.float32),
        grid=(N, nb),
        in_specs=[
            pl.BlockSpec((1, P, Cin), lambda n, b: (n, 0, 0)),
            pl.BlockSpec((1, 9, Cin), lambda n, b: (b, 0, 0)),
            pl.BlockSpec((1, 1, Cin), lambda n, b: (b, 0, 0)),
            pl.BlockSpec((1, Cin, Cmid), lambda n, b: (b, 0, 0)),
            pl.BlockSpec((1, 1, Cmid), lambda n, b: (b, 0, 0)),
            pl.BlockSpec((1, 9, Cmid), lambda n, b: (b, 0, 0)),
            pl.BlockSpec((1, 1, Cmid), lambda n, b: (b, 0, 0)),
            pl.BlockSpec((1, Cmid, Cin), lambda n, b: (b, 0, 0)),
            pl.BlockSpec((1, 1, Cin), lambda n, b: (b, 0, 0)),
        ],
        out_specs=pl.BlockSpec((1, P, Cin), lambda n, b: (n, 0, 0)),
        scratch_shapes=[
            pltpu.VMEM((P, Cin), jnp.float32),
            pltpu.VMEM((H + 2, W + 2, Cin), jnp.float32),
            pltpu.VMEM((H + 2, W + 2, Cmid), jnp.float32),
        ],
        compiler_params=pltpu.CompilerParams(
            dimension_semantics=("parallel", "arbitrary")),
    )(xb, params["blk_dw1"], params["blk_db1"], params["blk_pw1"], params["blk_pb1"],
      params["blk_dw2"], params["blk_db2"], params["blk_pw2"], params["blk_pb2"])


# ---------------------------------------------------------------- plain-JAX glue --

def to_phases(x_pad, stride):
    # [N, Hp, Wp, C] -> [N, stride, Hrows, Wp*C]
    N, Hp, Wp, C = x_pad.shape
    d = x_pad.reshape(N, Hp, Wp * C)
    if stride == 1:
        return d[:, None]
    assert stride == 2 and Hp % 2 == 0
    return jnp.stack([d[:, 0::2], d[:, 1::2]], axis=1)


def dilate2(x):
    # insert one zero between spatial elements (ConvTranspose2d stride-2 equivalence)
    N, H, W, C = x.shape
    out = jnp.zeros((N, 2 * H - 1, 2 * W - 1, C), x.dtype)
    return out.at[:, ::2, ::2, :].set(x)


# --------------------------------------------------------------------- forward --

def generator_forward(x_nchw, params, output_nc=3):
    x = jnp.transpose(x_nchw, (0, 2, 3, 1)).astype(jnp.float32)     # NCHW -> NHWC
    N, H, W, _ = x.shape

    # stem: ReflectionPad2d(3) + Conv7x7 + IN + ReLU
    xp = jnp.pad(x, ((0, 0), (3, 3), (3, 3), (0, 0)), mode="reflect")
    y = dense_conv(to_phases(xp, 1), params["stem_B"], params["stem_b"],
                   params["stem_cm"], Ho=H, norm=True, act="relu")
    h, w = H, W

    # two stride-2 downsampling convs (k=3, pad=1) + IN + ReLU
    for name in ("down0", "down1"):
        c = y.shape[-1] // w
        x4 = y.reshape(N, h, w, c)
        xp = jnp.pad(x4, ((0, 0), (1, 1), (1, 1), (0, 0)))
        y = dense_conv(to_phases(xp, 2), params[name + "_B"], params[name + "_b"],
                       params[name + "_cm"], Ho=h // 2, norm=True, act="relu")
        h, w = h // 2, w // 2

    # 9 MyResnetBlocks, fully fused into a single pallas_call
    cb = y.shape[-1] // w
    xb = y.reshape(N, h * w, cb)
    yb = resnet_blocks(xb, params, h, w)
    y = yb.reshape(N, h, w, cb)

    # two ConvTranspose2d(k=3, s=2, p=1, op=1) via dilate + pad(1,2) + conv3x3
    for name in ("up0", "up1"):
        xd = dilate2(y)
        xp = jnp.pad(xd, ((0, 0), (1, 2), (1, 2), (0, 0)))
        yd = dense_conv(to_phases(xp, 1), params[name + "_B"], params[name + "_b"],
                        params[name + "_cm"], Ho=h * 2, norm=True, act="relu")
        h, w = h * 2, w * 2
        c = yd.shape[-1] // w
        y = yd.reshape(N, h, w, c)

    # head: ReflectionPad2d(3) + Conv7x7 (Cout zero-padded to 8 for lane density) + Tanh
    xp = jnp.pad(y, ((0, 0), (3, 3), (3, 3), (0, 0)), mode="reflect")
    yh = dense_conv(to_phases(xp, 1), params["head_B"], params["head_b"],
                    params["head_cm"], Ho=h, norm=False, act="tanh")
    out = yh.reshape(N, h, w, -1)[..., :output_nc]
    return jnp.transpose(out, (0, 3, 1, 2))  # NHWC -> NCHW


# -------------------------------------------------------------- parameter setup --

def _banded(np_w, Wp, Wo, stride):
    """Pack a [KH, KW, Cin, Cout] conv weight into KH banded [Wp*Cin, Wo*Cout] mats."""
    KH, KW, Cin, Cout = np_w.shape
    B = np.zeros((KH, Wp * Cin, Wo * Cout), np.float32)
    for ky in range(KH):
        for kx in range(KW):
            for w in range(Wo):
                ci0 = (stride * w + kx) * Cin
                B[ky, ci0:ci0 + Cin, w * Cout:(w + 1) * Cout] = np_w[ky, kx]
    return B


def init_params(key, config, input_nc=3, output_nc=3, n_blocks=N_BLOCKS, H=16, W=16):
    keys = jax.random.split(key, 128)
    ki = iter(range(128))

    def rnd(shape, scale=0.05):
        return np.asarray(jax.random.normal(keys[next(ki)], shape, jnp.float32)) * scale

    P = {}

    def conv_pack(prefix, Cin, Cout, K, stride, Wp, Wo, Ho, cout_pad=None):
        wgt = rnd((K, K, Cin, Cout))
        b = rnd((Cout,), 0.01)
        if cout_pad is not None and cout_pad > Cout:
            wgt = np.concatenate(
                [wgt, np.zeros((K, K, Cin, cout_pad - Cout), np.float32)], axis=-1)
            b = np.concatenate([b, np.zeros((cout_pad - Cout,), np.float32)])
            Cout = cout_pad
        P[prefix + "_B"] = jnp.asarray(_banded(wgt, Wp, Wo, stride), jnp.bfloat16)
        P[prefix + "_b"] = jnp.asarray(np.tile(b, Wo)[None], jnp.float32)
        P[prefix + "_cm"] = jnp.asarray(
            np.kron(np.ones((Wo, Wo), np.float32),
                    np.eye(Cout, dtype=np.float32)) / float(Ho * Wo),
            jnp.float32)

    c0 = config[0]
    c1 = config[1] * 2
    c2 = config[2] * 4

    conv_pack("stem", input_nc, c0, 7, 1, W + 6, W, H)
    conv_pack("down0", c0, c1, 3, 2, W + 2, W // 2, H // 2)
    conv_pack("down1", c1, c2, 3, 2, W // 2 + 2, W // 4, H // 4)

    cmids = {config[i // 3 + 3] * 4 for i in range(n_blocks)}
    assert len(cmids) == 1, "fused block kernel assumes uniform mid channels"
    cmid = cmids.pop()

    def stack(fn):
        return jnp.asarray(np.stack([fn(i) for i in range(n_blocks)]), jnp.float32)

    P["blk_dw1"] = stack(lambda i: rnd((9, c2)))
    P["blk_db1"] = stack(lambda i: rnd((1, c2), 0.01))
    P["blk_pw1"] = stack(lambda i: rnd((c2, cmid)))
    P["blk_pb1"] = stack(lambda i: rnd((1, cmid), 0.01))
    P["blk_dw2"] = stack(lambda i: rnd((9, cmid)))
    P["blk_db2"] = stack(lambda i: rnd((1, cmid), 0.01))
    P["blk_pw2"] = stack(lambda i: rnd((cmid, c2)))
    P["blk_pb2"] = stack(lambda i: rnd((1, c2), 0.01))

    # ConvTranspose2d weights stored already flipped/transposed into plain-conv layout.
    u0_out = config[6] * 2
    u1_out = config[7]
    conv_pack("up0", c2, u0_out, 3, 1, W // 2 + 2, W // 2, H // 2)
    conv_pack("up1", u0_out, u1_out, 3, 1, W + 2, W, H)
    conv_pack("head", u1_out, output_nc, 7, 1, W + 6, W, H, cout_pad=8)
    return P


# --------------------------------------------------------------------------- main --

if __name__ == "__main__":
    key = jax.random.PRNGKey(0)
    kp, kx = jax.random.split(key)
    config = [8, 8, 8, 8, 8, 8, 8, 8]
    H = W = 16
    params = init_params(kp, config, input_nc=3, output_nc=3, H=H, W=W)
    x = jax.random.normal(kx, (2, 3, H, W), jnp.float32)  # NCHW, like PyTorch

    fwd = jax.jit(generator_forward)
    out = jax.block_until_ready(fwd(x, params))

    assert out.shape == (2, 3, H, W), out.shape
    assert bool(jnp.all(jnp.isfinite(out)))
    assert bool(jnp.all(jnp.abs(out) <= 1.0 + 1e-6))  # tanh range
    print("KERNEL_OK")
</pallas_src>

<mosaic_0001>
module attributes {stable_mosaic.version = 11 : i64} {
  func.func @_dense_conv_kernel(%arg0: i32, %arg1: memref<1x1x22x66xf32, #tpu.memory_space<vmem>>, %arg2: memref<7x66x128xbf16, #tpu.memory_space<vmem>>, %arg3: memref<1x128xf32, #tpu.memory_space<vmem>>, %arg4: memref<128x128xf32, #tpu.memory_space<vmem>>, %arg5: memref<1x16x128xf32, #tpu.memory_space<vmem>>) attributes {dimension_semantics = [#tpu.dimension_semantics<parallel>], iteration_bounds = array<i64: 2>, scalar_prefetch = 0 : i64, scratch_operands = 0 : i64, tpu.core_type = #tpu.core_type<tc>, window_params = [{transform_indices = @transform_0, window_bounds = array<i64: 1, 1, 22, 66>}, {pipeline_mode = #tpu.pipeline_mode<synchronous>, transform_indices = @transform_1, window_bounds = array<i64: 7, 66, 128>}, {pipeline_mode = #tpu.pipeline_mode<synchronous>, transform_indices = @transform_2, window_bounds = array<i64: 1, 128>}, {pipeline_mode = #tpu.pipeline_mode<synchronous>, transform_indices = @transform_3, window_bounds = array<i64: 128, 128>}, {transform_indices = @transform_4, window_bounds = array<i64: 1, 16, 128>}]} {
    %cst = arith.constant 0.000000e+00 : f32
    %0 = vector.broadcast %cst : f32 to vector<16x128xf32>
    %c0 = arith.constant 0 : index
    %c0_0 = arith.constant 0 : index
    %c0_1 = arith.constant 0 : index
    %c0_2 = arith.constant 0 : index
    %1 = vector.load %arg1[%c0, %c0_0, %c0_1, %c0_2] : memref<1x1x22x66xf32, #tpu.memory_space<vmem>>, vector<1x1x16x66xf32>
    %2 = vector.shape_cast %1 : vector<1x1x16x66xf32> to vector<16x66xf32>
    %3 = arith.truncf %2 : vector<16x66xf32> to vector<16x66xbf16>
    %c0_3 = arith.constant 0 : index
    %c0_4 = arith.constant 0 : index
    %c0_5 = arith.constant 0 : index
    %4 = vector.load %arg2[%c0_3, %c0_4, %c0_5] : memref<7x66x128xbf16, #tpu.memory_space<vmem>>, vector<1x66x128xbf16>
    %5 = vector.shape_cast %4 : vector<1x66x128xbf16> to vector<66x128xbf16>
    %cst_6 = arith.constant dense<0.000000e+00> : vector<16x128xf32>
    %6 = tpu.matmul %3, %5, %cst_6 {dimension_numbers = #tpu.dot_dimension_numbers<[1], [0], [0], [1], [0, 0, 1, 1], [], []>} : vector<16x66xbf16>, vector<66x128xbf16>, vector<16x128xf32> -> vector<16x128xf32>
    %7 = arith.addf %0, %6 : vector<16x128xf32>
    %c0_7 = arith.constant 0 : index
    %c0_8 = arith.constant 0 : index
    %c1 = arith.constant 1 : index
    %c0_9 = arith.constant 0 : index
    %8 = vector.load %arg1[%c0_7, %c0_8, %c1, %c0_9] : memref<1x1x22x66xf32, #tpu.memory_space<vmem>>, vector<1x1x16x66xf32>
    %9 = vector.shape_cast %8 : vector<1x1x16x66xf32> to vector<16x66xf32>
    %10 = arith.truncf %9 : vector<16x66xf32> to vector<16x66xbf16>
    %c1_10 = arith.constant 1 : index
    %c0_11 = arith.constant 0 : index
    %c0_12 = arith.constant 0 : index
    %11 = vector.load %arg2[%c1_10, %c0_11, %c0_12] : memref<7x66x128xbf16, #tpu.memory_space<vmem>>, vector<1x66x128xbf16>
    %12 = vector.shape_cast %11 : vector<1x66x128xbf16> to vector<66x128xbf16>
    %cst_13 = arith.constant dense<0.000000e+00> : vector<16x128xf32>
    %13 = tpu.matmul %10, %12, %cst_13 {dimension_numbers = #tpu.dot_dimension_numbers<[1], [0], [0], [1], [0, 0, 1, 1], [], []>} : vector<16x66xbf16>, vector<66x128xbf16>, vector<16x128xf32> -> vector<16x128xf32>
    %14 = arith.addf %7, %13 : vector<16x128xf32>
    %c0_14 = arith.constant 0 : index
    %c0_15 = arith.constant 0 : index
    %c2 = arith.constant 2 : index
    %c0_16 = arith.constant 0 : index
    %15 = vector.load %arg1[%c0_14, %c0_15, %c2, %c0_16] : memref<1x1x22x66xf32, #tpu.memory_space<vmem>>, vector<1x1x16x66xf32>
    %16 = vector.shape_cast %15 : vector<1x1x16x66xf32> to vector<16x66xf32>
    %17 = arith.truncf %16 : vector<16x66xf32> to vector<16x66xbf16>
    %c2_17 = arith.constant 2 : index
    %c0_18 = arith.constant 0 : index
    %c0_19 = arith.constant 0 : index
    %18 = vector.load %arg2[%c2_17, %c0_18, %c0_19] : memref<7x66x128xbf16, #tpu.memory_space<vmem>>, vector<1x66x128xbf16>
    %19 = vector.shape_cast %18 : vector<1x66x128xbf16> to vector<66x128xbf16>
    %cst_20 = arith.constant dense<0.000000e+00> : vector<16x128xf32>
    %20 = tpu.matmul %17, %19, %cst_20 {dimension_numbers = #tpu.dot_dimension_numbers<[1], [0], [0], [1], [0, 0, 1, 1], [], []>} : vector<16x66xbf16>, vector<66x128xbf16>, vector<16x128xf32> -> vector<16x128xf32>
    %21 = arith.addf %14, %20 : vector<16x128xf32>
    %c0_21 = arith.constant 0 : index
    %c0_22 = arith.constant 0 : index
    %c3 = arith.constant 3 : index
    %c0_23 = arith.constant 0 : index
    %22 = vector.load %arg1[%c0_21, %c0_22, %c3, %c0_23] : memref<1x1x22x66xf32, #tpu.memory_space<vmem>>, vector<1x1x16x66xf32>
    %23 = vector.shape_cast %22 : vector<1x1x16x66xf32> to vector<16x66xf32>
    %24 = arith.truncf %23 : vector<16x66xf32> to vector<16x66xbf16>
    %c3_24 = arith.constant 3 : index
    %c0_25 = arith.constant 0 : index
    %c0_26 = arith.constant 0 : index
    %25 = vector.load %arg2[%c3_24, %c0_25, %c0_26] : memref<7x66x128xbf16, #tpu.memory_space<vmem>>, vector<1x66x128xbf16>
    %26 = vector.shape_cast %25 : vector<1x66x128xbf16> to vector<66x128xbf16>
    %cst_27 = arith.constant dense<0.000000e+00> : vector<16x128xf32>
    %27 = tpu.matmul %24, %26, %cst_27 {dimension_numbers = #tpu.dot_dimension_numbers<[1], [0], [0], [1], [0, 0, 1, 1], [], []>} : vector<16x66xbf16>, vector<66x128xbf16>, vector<16x128xf32> -> vector<16x128xf32>
    %28 = arith.addf %21, %27 : vector<16x128xf32>
    %c0_28 = arith.constant 0 : index
    %c0_29 = arith.constant 0 : index
    %c4 = arith.constant 4 : index
    %c0_30 = arith.constant 0 : index
    %29 = vector.load %arg1[%c0_28, %c0_29, %c4, %c0_30] : memref<1x1x22x66xf32, #tpu.memory_space<vmem>>, vector<1x1x16x66xf32>
    %30 = vector.shape_cast %29 : vector<1x1x16x66xf32> to vector<16x66xf32>
    %31 = arith.truncf %30 : vector<16x66xf32> to vector<16x66xbf16>
    %c4_31 = arith.constant 4 : index
    %c0_32 = arith.constant 0 : index
    %c0_33 = arith.constant 0 : index
    %32 = vector.load %arg2[%c4_31, %c0_32, %c0_33] : memref<7x66x128xbf16, #tpu.memory_space<vmem>>, vector<1x66x128xbf16>
    %33 = vector.shape_cast %32 : vector<1x66x128xbf16> to vector<66x128xbf16>
    %cst_34 = arith.constant dense<0.000000e+00> : vector<16x128xf32>
    %34 = tpu.matmul %31, %33, %cst_34 {dimension_numbers = #tpu.dot_dimension_numbers<[1], [0], [0], [1], [0, 0, 1, 1], [], []>} : vector<16x66xbf16>, vector<66x128xbf16>, vector<16x128xf32> -> vector<16x128xf32>
    %35 = arith.addf %28, %34 : vector<16x128xf32>
    %c0_35 = arith.constant 0 : index
    %c0_36 = arith.constant 0 : index
    %c5 = arith.constant 5 : index
    %c0_37 = arith.constant 0 : index
    %36 = vector.load %arg1[%c0_35, %c0_36, %c5, %c0_37] : memref<1x1x22x66xf32, #tpu.memory_space<vmem>>, vector<1x1x16x66xf32>
    %37 = vector.shape_cast %36 : vector<1x1x16x66xf32> to vector<16x66xf32>
    %38 = arith.truncf %37 : vector<16x66xf32> to vector<16x66xbf16>
    %c5_38 = arith.constant 5 : index
    %c0_39 = arith.constant 0 : index
    %c0_40 = arith.constant 0 : index
    %39 = vector.load %arg2[%c5_38, %c0_39, %c0_40] : memref<7x66x128xbf16, #tpu.memory_space<vmem>>, vector<1x66x128xbf16>
    %40 = vector.shape_cast %39 : vector<1x66x128xbf16> to vector<66x128xbf16>
    %cst_41 = arith.constant dense<0.000000e+00> : vector<16x128xf32>
    %41 = tpu.matmul %38, %40, %cst_41 {dimension_numbers = #tpu.dot_dimension_numbers<[1], [0], [0], [1], [0, 0, 1, 1], [], []>} : vector<16x66xbf16>, vector<66x128xbf16>, vector<16x128xf32> -> vector<16x128xf32>
    %42 = arith.addf %35, %41 : vector<16x128xf32>
    %c0_42 = arith.constant 0 : index
    %c0_43 = arith.constant 0 : index
    %c6 = arith.constant 6 : index
    %c0_44 = arith.constant 0 : index
    %43 = vector.load %arg1[%c0_42, %c0_43, %c6, %c0_44] : memref<1x1x22x66xf32, #tpu.memory_space<vmem>>, vector<1x1x16x66xf32>
    %44 = vector.shape_cast %43 : vector<1x1x16x66xf32> to vector<16x66xf32>
    %45 = arith.truncf %44 : vector<16x66xf32> to vector<16x66xbf16>
    %c6_45 = arith.constant 6 : index
    %c0_46 = arith.constant 0 : index
    %c0_47 = arith.constant 0 : index
    %46 = vector.load %arg2[%c6_45, %c0_46, %c0_47] : memref<7x66x128xbf16, #tpu.memory_space<vmem>>, vector<1x66x128xbf16>
    %47 = vector.shape_cast %46 : vector<1x66x128xbf16> to vector<66x128xbf16>
    %cst_48 = arith.constant dense<0.000000e+00> : vector<16x128xf32>
    %48 = tpu.matmul %45, %47, %cst_48 {dimension_numbers = #tpu.dot_dimension_numbers<[1], [0], [0], [1], [0, 0, 1, 1], [], []>} : vector<16x66xbf16>, vector<66x128xbf16>, vector<16x128xf32> -> vector<16x128xf32>
    %49 = arith.addf %42, %48 : vector<16x128xf32>
    %c0_49 = arith.constant 0 : index
    %c0_50 = arith.constant 0 : index
    %50 = vector.load %arg3[%c0_49, %c0_50] : memref<1x128xf32, #tpu.memory_space<vmem>>, vector<1x128xf32>
    %51 = vector.broadcast %50 : vector<1x128xf32> to vector<16x128xf32>
    %52 = arith.addf %49, %51 : vector<16x128xf32>
    %c0_51 = arith.constant 0 : index
    %c0_52 = arith.constant 0 : index
    %53 = vector.load %arg4[%c0_51, %c0_52] : memref<128x128xf32, #tpu.memory_space<vmem>>, vector<128x128xf32>
    %cst_53 = arith.constant dense<0.000000e+00> : vector<16x128xf32>
    %54 = tpu.matmul %52, %53, %cst_53 {dimension_numbers = #tpu.dot_dimension_numbers<[1], [0], [0], [1], [0, 0, 1, 1], [], []>} : vector<16x128xf32>, vector<128x128xf32>, vector<16x128xf32> -> vector<16x128xf32>
    %cst_54 = arith.constant dense<0.000000e+00> : vector<128xf32>
    %55 = vector.multi_reduction <add>, %54, %cst_54 [0] : vector<16x128xf32> to vector<128xf32>
    %56 = vector.shape_cast %55 : vector<128xf32> to vector<1x128xf32>
    %57 = arith.mulf %52, %52 : vector<16x128xf32>
    %cst_55 = arith.constant dense<0.000000e+00> : vector<16x128xf32>
    %58 = tpu.matmul %57, %53, %cst_55 {dimension_numbers = #tpu.dot_dimension_numbers<[1], [0], [0], [1], [0, 0, 1, 1], [], []>} : vector<16x128xf32>, vector<128x128xf32>, vector<16x128xf32> -> vector<16x128xf32>
    %cst_56 = arith.constant dense<0.000000e+00> : vector<128xf32>
    %59 = vector.multi_reduction <add>, %58, %cst_56 [0] : vector<16x128xf32> to vector<128xf32>
    %60 = vector.shape_cast %59 : vector<128xf32> to vector<1x128xf32>
    %61 = arith.mulf %56, %56 : vector<1x128xf32>
    %62 = arith.subf %60, %61 : vector<1x128xf32>
    %cst_57 = arith.constant 0.000000e+00 : f32
    %63 = vector.broadcast %cst_57 : f32 to vector<1x128xf32>
    %64 = arith.maximumf %62, %63 : vector<1x128xf32>
    %65 = vector.broadcast %56 : vector<1x128xf32> to vector<16x128xf32>
    %66 = arith.subf %52, %65 : vector<16x128xf32>
    %cst_58 = arith.constant 9.99999974E-6 : f32
    %67 = vector.broadcast %cst_58 : f32 to vector<1x128xf32>
    %68 = arith.addf %64, %67 : vector<1x128xf32>
    %69 = math.rsqrt %68 : vector<1x128xf32>
    %70 = vector.broadcast %69 : vector<1x128xf32> to vector<16x128xf32>
    %71 = arith.mulf %66, %70 : vector<16x128xf32>
    %cst_59 = arith.constant 0.000000e+00 : f32
    %72 = vector.broadcast %cst_59 : f32 to vector<16x128xf32>
    %73 = arith.maximumf %71, %72 : vector<16x128xf32>
    %c0_60 = arith.constant 0 : index
    %c0_61 = arith.constant 0 : index
    %c0_62 = arith.constant 0 : index
    %74 = vector.load %arg5[%c0_60, %c0_61, %c0_62] : memref<1x16x128xf32, #tpu.memory_space<vmem>>, vector<1x16x128xf32>
    %75 = vector.shape_cast %74 : vector<1x16x128xf32> to vector<16x128xf32>
    %76 = vector.shape_cast %73 : vector<16x128xf32> to vector<1x16x128xf32>
    tpu.vector_store %arg5[%c0_60, %c0_61, %c0_62], %76 {strides = array<i32>} : memref<1x16x128xf32, #tpu.memory_space<vmem>>, vector<1x16x128xf32>,
    return
  }
  func.func @transform_0(%arg0: i32) -> (i32, i32, i32, i32) {
    %c0_i32 = arith.constant 0 : i32
    %c0_i32_0 = arith.constant 0 : i32
    %c0_i32_1 = arith.constant 0 : i32
    %c0_i32_2 = arith.constant 0 : i32
    return %arg0, %c0_i32, %c0_i32_0, %c0_i32_1 : i32, i32, i32, i32
  }
  func.func @transform_1(%arg0: i32) -> (i32, i32, i32) {
    %c0_i32 = arith.constant 0 : i32
    %c0_i32_0 = arith.constant 0 : i32
    %c0_i32_1 = arith.constant 0 : i32
    %c0_i32_2 = arith.constant 0 : i32
    return %c0_i32, %c0_i32_0, %c0_i32_1 : i32, i32, i32
  }
  func.func @transform_2(%arg0: i32) -> (i32, i32) {
    %c0_i32 = arith.constant 0 : i32
    %c0_i32_0 = arith.constant 0 : i32
    %c0_i32_1 = arith.constant 0 : i32
    return %c0_i32, %c0_i32_0 : i32, i32
  }
  func.func @transform_3(%arg0: i32) -> (i32, i32) {
    %c0_i32 = arith.constant 0 : i32
    %c0_i32_0 = arith.constant 0 : i32
    %c0_i32_1 = arith.constant 0 : i32
    return %c0_i32, %c0_i32_0 : i32, i32
  }
  func.func @transform_4(%arg0: i32) -> (i32, i32, i32) {
    %c0_i32 = arith.constant 0 : i32
    %c0_i32_0 = arith.constant 0 : i32
    %c0_i32_1 = arith.constant 0 : i32
    return %arg0, %c0_i32, %c0_i32_0 : i32, i32, i32
  }
}

module attributes {stable_mosaic.version = 11 : i64} {
  func.func @_dense_conv_kernel(%arg0: i32, %arg1: memref<1x2x9x144xf32, #tpu.memory_space<vmem>>, %arg2: memref<3x144x128xbf16, #tpu.memory_space<vmem>>, %arg3: memref<1x128xf32, #tpu.memory_space<vmem>>, %arg4: memref<128x128xf32, #tpu.memory_space<vmem>>, %arg5: memref<1x8x128xf32, #tpu.memory_space<vmem>>) attributes {dimension_semantics = [#tpu.dimension_semantics<parallel>], iteration_bounds = array<i64: 2>, scalar_prefetch = 0 : i64, scratch_operands = 0 : i64, tpu.core_type = #tpu.core_type<tc>, window_params = [{transform_indices = @transform_0, window_bounds = array<i64: 1, 2, 9, 144>}, {pipeline_mode = #tpu.pipeline_mode<synchronous>, transform_indices = @transform_1, window_bounds = array<i64: 3, 144, 128>}, {pipeline_mode = #tpu.pipeline_mode<synchronous>, transform_indices = @transform_2, window_bounds = array<i64: 1, 128>}, {pipeline_mode = #tpu.pipeline_mode<synchronous>, transform_indices = @transform_3, window_bounds = array<i64: 128, 128>}, {transform_indices = @transform_4, window_bounds = array<i64: 1, 8, 128>}]} {
    %cst = arith.constant 0.000000e+00 : f32
    %0 = vector.broadcast %cst : f32 to vector<8x128xf32>
    %c0 = arith.constant 0 : index
    %c0_0 = arith.constant 0 : index
    %c0_1 = arith.constant 0 : index
    %c0_2 = arith.constant 0 : index
    %1 = vector.load %arg1[%c0, %c0_0, %c0_1, %c0_2] : memref<1x2x9x144xf32, #tpu.memory_space<vmem>>, vector<1x1x8x144xf32>
    %2 = vector.shape_cast %1 : vector<1x1x8x144xf32> to vector<8x144xf32>
    %3 = arith.truncf %2 : vector<8x144xf32> to vector<8x144xbf16>
    %c0_3 = arith.constant 0 : index
    %c0_4 = arith.constant 0 : index
    %c0_5 = arith.constant 0 : index
    %4 = vector.load %arg2[%c0_3, %c0_4, %c0_5] : memref<3x144x128xbf16, #tpu.memory_space<vmem>>, vector<1x144x128xbf16>
    %5 = vector.shape_cast %4 : vector<1x144x128xbf16> to vector<144x128xbf16>
    %cst_6 = arith.constant dense<0.000000e+00> : vector<8x128xf32>
    %6 = tpu.matmul %3, %5, %cst_6 {dimension_numbers = #tpu.dot_dimension_numbers<[1], [0], [0], [1], [0, 0, 1, 1], [], []>} : vector<8x144xbf16>, vector<144x128xbf16>, vector<8x128xf32> -> vector<8x128xf32>
    %7 = arith.addf %0, %6 : vector<8x128xf32>
    %c0_7 = arith.constant 0 : index
    %c1 = arith.constant 1 : index
    %c0_8 = arith.constant 0 : index
    %c0_9 = arith.constant 0 : index
    %8 = vector.load %arg1[%c0_7, %c1, %c0_8, %c0_9] : memref<1x2x9x144xf32, #tpu.memory_space<vmem>>, vector<1x1x8x144xf32>
    %9 = vector.shape_cast %8 : vector<1x1x8x144xf32> to vector<8x144xf32>
    %10 = arith.truncf %9 : vector<8x144xf32> to vector<8x144xbf16>
    %c1_10 = arith.constant 1 : index
    %c0_11 = arith.constant 0 : index
    %c0_12 = arith.constant 0 : index
    %11 = vector.load %arg2[%c1_10, %c0_11, %c0_12] : memref<3x144x128xbf16, #tpu.memory_space<vmem>>, vector<1x144x128xbf16>
    %12 = vector.shape_cast %11 : vector<1x144x128xbf16> to vector<144x128xbf16>
    %cst_13 = arith.constant dense<0.000000e+00> : vector<8x128xf32>
    %13 = tpu.matmul %10, %12, %cst_13 {dimension_numbers = #tpu.dot_dimension_numbers<[1], [0], [0], [1], [0, 0, 1, 1], [], []>} : vector<8x144xbf16>, vector<144x128xbf16>, vector<8x128xf32> -> vector<8x128xf32>
    %14 = arith.addf %7, %13 : vector<8x128xf32>
    %c0_14 = arith.constant 0 : index
    %c0_15 = arith.constant 0 : index
    %c1_16 = arith.constant 1 : index
    %c0_17 = arith.constant 0 : index
    %15 = vector.load %arg1[%c0_14, %c0_15, %c1_16, %c0_17] : memref<1x2x9x144xf32, #tpu.memory_space<vmem>>, vector<1x1x8x144xf32>
    %16 = vector.shape_cast %15 : vector<1x1x8x144xf32> to vector<8x144xf32>
    %17 = arith.truncf %16 : vector<8x144xf32> to vector<8x144xbf16>
    %c2 = arith.constant 2 : index
    %c0_18 = arith.constant 0 : index
    %c0_19 = arith.constant 0 : index
    %18 = vector.load %arg2[%c2, %c0_18, %c0_19] : memref<3x144x128xbf16, #tpu.memory_space<vmem>>, vector<1x144x128xbf16>
    %19 = vector.shape_cast %18 : vector<1x144x128xbf16> to vector<144x128xbf16>
    %cst_20 = arith.constant dense<0.000000e+00> : vector<8x128xf32>
    %20 = tpu.matmul %17, %19, %cst_20 {dimension_numbers = #tpu.dot_dimension_numbers<[1], [0], [0], [1], [0, 0, 1, 1], [], []>} : vector<8x144xbf16>, vector<144x128xbf16>, vector<8x128xf32> -> vector<8x128xf32>
    %21 = arith.addf %14, %20 : vector<8x128xf32>
    %c0_21 = arith.constant 0 : index
    %c0_22 = arith.constant 0 : index
    %22 = vector.load %arg3[%c0_21, %c0_22] : memref<1x128xf32, #tpu.memory_space<vmem>>, vector<1x128xf32>
    %23 = vector.broadcast %22 : vector<1x128xf32> to vector<8x128xf32>
    %24 = arith.addf %21, %23 : vector<8x128xf32>
    %c0_23 = arith.constant 0 : index
    %c0_24 = arith.constant 0 : index
    %25 = vector.load %arg4[%c0_23, %c0_24] : memref<128x128xf32, #tpu.memory_space<vmem>>, vector<128x128xf32>
    %cst_25 = arith.constant dense<0.000000e+00> : vector<8x128xf32>
    %26 = tpu.matmul %24, %25, %cst_25 {dimension_numbers = #tpu.dot_dimension_numbers<[1], [0], [0], [1], [0, 0, 1, 1], [], []>} : vector<8x128xf32>, vector<128x128xf32>, vector<8x128xf32> -> vector<8x128xf32>
    %cst_26 = arith.constant dense<0.000000e+00> : vector<128xf32>
    %27 = vector.multi_reduction <add>, %26, %cst_26 [0] : vector<8x128xf32> to vector<128xf32>
    %28 = vector.shape_cast %27 : vector<128xf32> to vector<1x128xf32>
    %29 = arith.mulf %24, %24 : vector<8x128xf32>
    %cst_27 = arith.constant dense<0.000000e+00> : vector<8x128xf32>
    %30 = tpu.matmul %29, %25, %cst_27 {dimension_numbers = #tpu.dot_dimension_numbers<[1], [0], [0], [1], [0, 0, 1, 1], [], []>} : vector<8x128xf32>, vector<128x128xf32>, vector<8x128xf32> -> vector<8x128xf32>
    %cst_28 = arith.constant dense<0.000000e+00> : vector<128xf32>
    %31 = vector.multi_reduction <add>, %30, %cst_28 [0] : vector<8x128xf32> to vector<128xf32>
    %32 = vector.shape_cast %31 : vector<128xf32> to vector<1x128xf32>
    %33 = arith.mulf %28, %28 : vector<1x128xf32>
    %34 = arith.subf %32, %33 : vector<1x128xf32>
    %cst_29 = arith.constant 0.000000e+00 : f32
    %35 = vector.broadcast %cst_29 : f32 to vector<1x128xf32>
    %36 = arith.maximumf %34, %35 : vector<1x128xf32>
    %37 = vector.broadcast %28 : vector<1x128xf32> to vector<8x128xf32>
    %38 = arith.subf %24, %37 : vector<8x128xf32>
    %cst_30 = arith.constant 9.99999974E-6 : f32
    %39 = vector.broadcast %cst_30 : f32 to vector<1x128xf32>
    %40 = arith.addf %36, %39 : vector<1x128xf32>
    %41 = math.rsqrt %40 : vector<1x128xf32>
    %42 = vector.broadcast %41 : vector<1x128xf32> to vector<8x128xf32>
    %43 = arith.mulf %38, %42 : vector<8x128xf32>
    %cst_31 = arith.constant 0.000000e+00 : f32
    %44 = vector.broadcast %cst_31 : f32 to vector<8x128xf32>
    %45 = arith.maximumf %43, %44 : vector<8x128xf32>
    %c0_32 = arith.constant 0 : index
    %c0_33 = arith.constant 0 : index
    %c0_34 = arith.constant 0 : index
    %46 = vector.load %arg5[%c0_32, %c0_33, %c0_34] : memref<1x8x128xf32, #tpu.memory_space<vmem>>, vector<1x8x128xf32>
    %47 = vector.shape_cast %46 : vector<1x8x128xf32> to vector<8x128xf32>
    %48 = vector.shape_cast %45 : vector<8x128xf32> to vector<1x8x128xf32>
    tpu.vector_store %arg5[%c0_32, %c0_33, %c0_34], %48 {strides = array<i32>} : memref<1x8x128xf32, #tpu.memory_space<vmem>>, vector<1x8x128xf32>,
    return
  }
  func.func @transform_0(%arg0: i32) -> (i32, i32, i32, i32) {
    %c0_i32 = arith.constant 0 : i32
    %c0_i32_0 = arith.constant 0 : i32
    %c0_i32_1 = arith.constant 0 : i32
    %c0_i32_2 = arith.constant 0 : i32
    return %arg0, %c0_i32, %c0_i32_0, %c0_i32_1 : i32, i32, i32, i32
  }
  func.func @transform_1(%arg0: i32) -> (i32, i32, i32) {
    %c0_i32 = arith.constant 0 : i32
    %c0_i32_0 = arith.constant 0 : i32
    %c0_i32_1 = arith.constant 0 : i32
    %c0_i32_2 = arith.constant 0 : i32
    return %c0_i32, %c0_i32_0, %c0_i32_1 : i32, i32, i32
  }
  func.func @transform_2(%arg0: i32) -> (i32, i32) {
    %c0_i32 = arith.constant 0 : i32
    %c0_i32_0 = arith.constant 0 : i32
    %c0_i32_1 = arith.constant 0 : i32
    return %c0_i32, %c0_i32_0 : i32, i32
  }
  func.func @transform_3(%arg0: i32) -> (i32, i32) {
    %c0_i32 = arith.constant 0 : i32
    %c0_i32_0 = arith.constant 0 : i32
    %c0_i32_1 = arith.constant 0 : i32
    return %c0_i32, %c0_i32_0 : i32, i32
  }
  func.func @transform_4(%arg0: i32) -> (i32, i32, i32) {
    %c0_i32 = arith.constant 0 : i32
    %c0_i32_0 = arith.constant 0 : i32
    %c0_i32_1 = arith.constant 0 : i32
    return %arg0, %c0_i32, %c0_i32_0 : i32, i32, i32
  }
}

module attributes {stable_mosaic.version = 11 : i64} {
  func.func @_dense_conv_kernel(%arg0: i32, %arg1: memref<1x2x5x160xf32, #tpu.memory_space<vmem>>, %arg2: memref<3x160x128xbf16, #tpu.memory_space<vmem>>, %arg3: memref<1x128xf32, #tpu.memory_space<vmem>>, %arg4: memref<128x128xf32, #tpu.memory_space<vmem>>, %arg5: memref<1x4x128xf32, #tpu.memory_space<vmem>>) attributes {dimension_semantics = [#tpu.dimension_semantics<parallel>], iteration_bounds = array<i64: 2>, scalar_prefetch = 0 : i64, scratch_operands = 0 : i64, tpu.core_type = #tpu.core_type<tc>, window_params = [{transform_indices = @transform_0, window_bounds = array<i64: 1, 2, 5, 160>}, {pipeline_mode = #tpu.pipeline_mode<synchronous>, transform_indices = @transform_1, window_bounds = array<i64: 3, 160, 128>}, {pipeline_mode = #tpu.pipeline_mode<synchronous>, transform_indices = @transform_2, window_bounds = array<i64: 1, 128>}, {pipeline_mode = #tpu.pipeline_mode<synchronous>, transform_indices = @transform_3, window_bounds = array<i64: 128, 128>}, {transform_indices = @transform_4, window_bounds = array<i64: 1, 4, 128>}]} {
    %cst = arith.constant 0.000000e+00 : f32
    %0 = vector.broadcast %cst : f32 to vector<4x128xf32>
    %c0 = arith.constant 0 : index
    %c0_0 = arith.constant 0 : index
    %c0_1 = arith.constant 0 : index
    %c0_2 = arith.constant 0 : index
    %1 = vector.load %arg1[%c0, %c0_0, %c0_1, %c0_2] : memref<1x2x5x160xf32, #tpu.memory_space<vmem>>, vector<1x1x4x160xf32>
    %2 = vector.shape_cast %1 : vector<1x1x4x160xf32> to vector<4x160xf32>
    %3 = arith.truncf %2 : vector<4x160xf32> to vector<4x160xbf16>
    %c0_3 = arith.constant 0 : index
    %c0_4 = arith.constant 0 : index
    %c0_5 = arith.constant 0 : index
    %4 = vector.load %arg2[%c0_3, %c0_4, %c0_5] : memref<3x160x128xbf16, #tpu.memory_space<vmem>>, vector<1x160x128xbf16>
    %5 = vector.shape_cast %4 : vector<1x160x128xbf16> to vector<160x128xbf16>
    %cst_6 = arith.constant dense<0.000000e+00> : vector<4x128xf32>
    %6 = tpu.matmul %3, %5, %cst_6 {dimension_numbers = #tpu.dot_dimension_numbers<[1], [0], [0], [1], [0, 0, 1, 1], [], []>} : vector<4x160xbf16>, vector<160x128xbf16>, vector<4x128xf32> -> vector<4x128xf32>
    %7 = arith.addf %0, %6 : vector<4x128xf32>
    %c0_7 = arith.constant 0 : index
    %c1 = arith.constant 1 : index
    %c0_8 = arith.constant 0 : index
    %c0_9 = arith.constant 0 : index
    %8 = vector.load %arg1[%c0_7, %c1, %c0_8, %c0_9] : memref<1x2x5x160xf32, #tpu.memory_space<vmem>>, vector<1x1x4x160xf32>
    %9 = vector.shape_cast %8 : vector<1x1x4x160xf32> to vector<4x160xf32>
    %10 = arith.truncf %9 : vector<4x160xf32> to vector<4x160xbf16>
    %c1_10 = arith.constant 1 : index
    %c0_11 = arith.constant 0 : index
    %c0_12 = arith.constant 0 : index
    %11 = vector.load %arg2[%c1_10, %c0_11, %c0_12] : memref<3x160x128xbf16, #tpu.memory_space<vmem>>, vector<1x160x128xbf16>
    %12 = vector.shape_cast %11 : vector<1x160x128xbf16> to vector<160x128xbf16>
    %cst_13 = arith.constant dense<0.000000e+00> : vector<4x128xf32>
    %13 = tpu.matmul %10, %12, %cst_13 {dimension_numbers = #tpu.dot_dimension_numbers<[1], [0], [0], [1], [0, 0, 1, 1], [], []>} : vector<4x160xbf16>, vector<160x128xbf16>, vector<4x128xf32> -> vector<4x128xf32>
    %14 = arith.addf %7, %13 : vector<4x128xf32>
    %c0_14 = arith.constant 0 : index
    %c0_15 = arith.constant 0 : index
    %c1_16 = arith.constant 1 : index
    %c0_17 = arith.constant 0 : index
    %15 = vector.load %arg1[%c0_14, %c0_15, %c1_16, %c0_17] : memref<1x2x5x160xf32, #tpu.memory_space<vmem>>, vector<1x1x4x160xf32>
    %16 = vector.shape_cast %15 : vector<1x1x4x160xf32> to vector<4x160xf32>
    %17 = arith.truncf %16 : vector<4x160xf32> to vector<4x160xbf16>
    %c2 = arith.constant 2 : index
    %c0_18 = arith.constant 0 : index
    %c0_19 = arith.constant 0 : index
    %18 = vector.load %arg2[%c2, %c0_18, %c0_19] : memref<3x160x128xbf16, #tpu.memory_space<vmem>>, vector<1x160x128xbf16>
    %19 = vector.shape_cast %18 : vector<1x160x128xbf16> to vector<160x128xbf16>
    %cst_20 = arith.constant dense<0.000000e+00> : vector<4x128xf32>
    %20 = tpu.matmul %17, %19, %cst_20 {dimension_numbers = #tpu.dot_dimension_numbers<[1], [0], [0], [1], [0, 0, 1, 1], [], []>} : vector<4x160xbf16>, vector<160x128xbf16>, vector<4x128xf32> -> vector<4x128xf32>
    %21 = arith.addf %14, %20 : vector<4x128xf32>
    %c0_21 = arith.constant 0 : index
    %c0_22 = arith.constant 0 : index
    %22 = vector.load %arg3[%c0_21, %c0_22] : memref<1x128xf32, #tpu.memory_space<vmem>>, vector<1x128xf32>
    %23 = vector.broadcast %22 : vector<1x128xf32> to vector<4x128xf32>
    %24 = arith.addf %21, %23 : vector<4x128xf32>
    %c0_23 = arith.constant 0 : index
    %c0_24 = arith.constant 0 : index
    %25 = vector.load %arg4[%c0_23, %c0_24] : memref<128x128xf32, #tpu.memory_space<vmem>>, vector<128x128xf32>
    %cst_25 = arith.constant dense<0.000000e+00> : vector<4x128xf32>
    %26 = tpu.matmul %24, %25, %cst_25 {dimension_numbers = #tpu.dot_dimension_numbers<[1], [0], [0], [1], [0, 0, 1, 1], [], []>} : vector<4x128xf32>, vector<128x128xf32>, vector<4x128xf32> -> vector<4x128xf32>
    %cst_26 = arith.constant dense<0.000000e+00> : vector<128xf32>
    %27 = vector.multi_reduction <add>, %26, %cst_26 [0] : vector<4x128xf32> to vector<128xf32>
    %28 = vector.shape_cast %27 : vector<128xf32> to vector<1x128xf32>
    %29 = arith.mulf %24, %24 : vector<4x128xf32>
    %cst_27 = arith.constant dense<0.000000e+00> : vector<4x128xf32>
    %30 = tpu.matmul %29, %25, %cst_27 {dimension_numbers = #tpu.dot_dimension_numbers<[1], [0], [0], [1], [0, 0, 1, 1], [], []>} : vector<4x128xf32>, vector<128x128xf32>, vector<4x128xf32> -> vector<4x128xf32>
    %cst_28 = arith.constant dense<0.000000e+00> : vector<128xf32>
    %31 = vector.multi_reduction <add>, %30, %cst_28 [0] : vector<4x128xf32> to vector<128xf32>
    %32 = vector.shape_cast %31 : vector<128xf32> to vector<1x128xf32>
    %33 = arith.mulf %28, %28 : vector<1x128xf32>
    %34 = arith.subf %32, %33 : vector<1x128xf32>
    %cst_29 = arith.constant 0.000000e+00 : f32
    %35 = vector.broadcast %cst_29 : f32 to vector<1x128xf32>
    %36 = arith.maximumf %34, %35 : vector<1x128xf32>
    %37 = vector.broadcast %28 : vector<1x128xf32> to vector<4x128xf32>
    %38 = arith.subf %24, %37 : vector<4x128xf32>
    %cst_30 = arith.constant 9.99999974E-6 : f32
    %39 = vector.broadcast %cst_30 : f32 to vector<1x128xf32>
    %40 = arith.addf %36, %39 : vector<1x128xf32>
    %41 = math.rsqrt %40 : vector<1x128xf32>
    %42 = vector.broadcast %41 : vector<1x128xf32> to vector<4x128xf32>
    %43 = arith.mulf %38, %42 : vector<4x128xf32>
    %cst_31 = arith.constant 0.000000e+00 : f32
    %44 = vector.broadcast %cst_31 : f32 to vector<4x128xf32>
    %45 = arith.maximumf %43, %44 : vector<4x128xf32>
    %c0_32 = arith.constant 0 : index
    %c0_33 = arith.constant 0 : index
    %c0_34 = arith.constant 0 : index
    %46 = vector.load %arg5[%c0_32, %c0_33, %c0_34] : memref<1x4x128xf32, #tpu.memory_space<vmem>>, vector<1x4x128xf32>
    %47 = vector.shape_cast %46 : vector<1x4x128xf32> to vector<4x128xf32>
    %48 = vector.shape_cast %45 : vector<4x128xf32> to vector<1x4x128xf32>
    tpu.vector_store %arg5[%c0_32, %c0_33, %c0_34], %48 {strides = array<i32>} : memref<1x4x128xf32, #tpu.memory_space<vmem>>, vector<1x4x128xf32>,
    return
  }
  func.func @transform_0(%arg0: i32) -> (i32, i32, i32, i32) {
    %c0_i32 = arith.constant 0 : i32
    %c0_i32_0 = arith.constant 0 : i32
    %c0_i32_1 = arith.constant 0 : i32
    %c0_i32_2 = arith.constant 0 : i32
    return %arg0, %c0_i32, %c0_i32_0, %c0_i32_1 : i32, i32, i32, i32
  }
  func.func @transform_1(%arg0: i32) -> (i32, i32, i32) {
    %c0_i32 = arith.constant 0 : i32
    %c0_i32_0 = arith.constant 0 : i32
    %c0_i32_1 = arith.constant 0 : i32
    %c0_i32_2 = arith.constant 0 : i32
    return %c0_i32, %c0_i32_0, %c0_i32_1 : i32, i32, i32
  }
  func.func @transform_2(%arg0: i32) -> (i32, i32) {
    %c0_i32 = arith.constant 0 : i32
    %c0_i32_0 = arith.constant 0 : i32
    %c0_i32_1 = arith.constant 0 : i32
    return %c0_i32, %c0_i32_0 : i32, i32
  }
  func.func @transform_3(%arg0: i32) -> (i32, i32) {
    %c0_i32 = arith.constant 0 : i32
    %c0_i32_0 = arith.constant 0 : i32
    %c0_i32_1 = arith.constant 0 : i32
    return %c0_i32, %c0_i32_0 : i32, i32
  }
  func.func @transform_4(%arg0: i32) -> (i32, i32, i32) {
    %c0_i32 = arith.constant 0 : i32
    %c0_i32_0 = arith.constant 0 : i32
    %c0_i32_1 = arith.constant 0 : i32
    return %arg0, %c0_i32, %c0_i32_0 : i32, i32, i32
  }
}

module attributes {stable_mosaic.version = 11 : i64} {
  func.func @_resblocks_kernel(%arg0: i32, %arg1: i32, %arg2: memref<1x16x32xf32, #tpu.memory_space<vmem>>, %arg3: memref<1x9x32xf32, #tpu.memory_space<vmem>>, %arg4: memref<1x1x32xf32, #tpu.memory_space<vmem>>, %arg5: memref<1x32x32xf32, #tpu.memory_space<vmem>>, %arg6: memref<1x1x32xf32, #tpu.memory_space<vmem>>, %arg7: memref<1x9x32xf32, #tpu.memory_space<vmem>>, %arg8: memref<1x1x32xf32, #tpu.memory_space<vmem>>, %arg9: memref<1x32x32xf32, #tpu.memory_space<vmem>>, %arg10: memref<1x1x32xf32, #tpu.memory_space<vmem>>, %arg11: memref<1x16x32xf32, #tpu.memory_space<vmem>>, %arg12: memref<16x32xf32, #tpu.memory_space<vmem>>, %arg13: memref<6x6x32xf32, #tpu.memory_space<vmem>>, %arg14: memref<6x6x32xf32, #tpu.memory_space<vmem>>) attributes {dimension_semantics = [#tpu.dimension_semantics<parallel>, #tpu.dimension_semantics<arbitrary>], iteration_bounds = array<i64: 2, 9>, scalar_prefetch = 0 : i64, scratch_operands = 3 : i64, tpu.core_type = #tpu.core_type<tc>, window_params = [{transform_indices = @transform_0, window_bounds = array<i64: 1, 16, 32>}, {transform_indices = @transform_1, window_bounds = array<i64: 1, 9, 32>}, {transform_indices = @transform_2, window_bounds = array<i64: 1, 1, 32>}, {transform_indices = @transform_3, window_bounds = array<i64: 1, 32, 32>}, {transform_indices = @transform_4, window_bounds = array<i64: 1, 1, 32>}, {transform_indices = @transform_5, window_bounds = array<i64: 1, 9, 32>}, {transform_indices = @transform_6, window_bounds = array<i64: 1, 1, 32>}, {transform_indices = @transform_7, window_bounds = array<i64: 1, 32, 32>}, {transform_indices = @transform_8, window_bounds = array<i64: 1, 1, 32>}, {transform_indices = @transform_9, window_bounds = array<i64: 1, 16, 32>}]} {
    %c0_i32 = arith.constant 0 : i32
    %0 = arith.cmpi eq, %arg1, %c0_i32 : i32
    %1 = arith.extui %0 : i1 to i32
    %c0_i32_0 = arith.constant 0 : i32
    %2 = arith.cmpi ne, %1, %c0_i32_0 : i32
    scf.if %2 {
      %c0_99 = arith.constant 0 : index
      %c0_100 = arith.constant 0 : index
      %c0_101 = arith.constant 0 : index
      %269 = vector.load %arg2[%c0_99, %c0_100, %c0_101] : memref<1x16x32xf32, #tpu.memory_space<vmem>>, vector<1x16x32xf32>
      %270 = vector.shape_cast %269 : vector<1x16x32xf32> to vector<16x32xf32>
      %c0_102 = arith.constant 0 : index
      %c0_103 = arith.constant 0 : index
      %271 = vector.load %arg12[%c0_102, %c0_103] : memref<16x32xf32, #tpu.memory_space<vmem>>, vector<16x32xf32>
      tpu.vector_store %arg12[%c0_102, %c0_103], %270 {strides = array<i32>} : memref<16x32xf32, #tpu.memory_space<vmem>>, vector<16x32xf32>,
    } else {
    }
    %c0 = arith.constant 0 : index
    %c0_1 = arith.constant 0 : index
    %3 = vector.load %arg12[%c0, %c0_1] : memref<16x32xf32, #tpu.memory_space<vmem>>, vector<16x32xf32>
    %4 = vector.shape_cast %3 : vector<16x32xf32> to vector<4x4x32xf32>
    %c1 = arith.constant 1 : index
    %c1_2 = arith.constant 1 : index
    %c0_3 = arith.constant 0 : index
    %5 = vector.load %arg13[%c1, %c1_2, %c0_3] : memref<6x6x32xf32, #tpu.memory_space<vmem>>, vector<4x4x32xf32>
    tpu.vector_store %arg13[%c1, %c1_2, %c0_3], %4 {strides = array<i32>} : memref<6x6x32xf32, #tpu.memory_space<vmem>>, vector<4x4x32xf32>,
    %6 = vector.extract_strided_slice %4 {offsets = [1, 0, 0], sizes = [1, 4, 32], strides = [1, 1, 1]} : vector<4x4x32xf32> to vector<1x4x32xf32>
    %c0_4 = arith.constant 0 : index
    %c1_5 = arith.constant 1 : index
    %c0_6 = arith.constant 0 : index
    %7 = vector.load %arg13[%c0_4, %c1_5, %c0_6] : memref<6x6x32xf32, #tpu.memory_space<vmem>>, vector<1x4x32xf32>
    tpu.vector_store %arg13[%c0_4, %c1_5, %c0_6], %6 {strides = array<i32>} : memref<6x6x32xf32, #tpu.memory_space<vmem>>, vector<1x4x32xf32>,
    %8 = vector.extract_strided_slice %4 {offsets = [2, 0, 0], sizes = [1, 4, 32], strides = [1, 1, 1]} : vector<4x4x32xf32> to vector<1x4x32xf32>
    %c5 = arith.constant 5 : index
    %c1_7 = arith.constant 1 : index
    %c0_8 = arith.constant 0 : index
    %9 = vector.load %arg13[%c5, %c1_7, %c0_8] : memref<6x6x32xf32, #tpu.memory_space<vmem>>, vector<1x4x32xf32>
    tpu.vector_store %arg13[%c5, %c1_7, %c0_8], %8 {strides = array<i32>} : memref<6x6x32xf32, #tpu.memory_space<vmem>>, vector<1x4x32xf32>,
    %c0_9 = arith.constant 0 : index
    %c2 = arith.constant 2 : index
    %c0_10 = arith.constant 0 : index
    %10 = vector.load %arg13[%c0_9, %c2, %c0_10] : memref<6x6x32xf32, #tpu.memory_space<vmem>>, vector<6x1x32xf32>
    %c0_11 = arith.constant 0 : index
    %c0_12 = arith.constant 0 : index
    %c0_13 = arith.constant 0 : index
    %11 = vector.load %arg13[%c0_11, %c0_12, %c0_13] : memref<6x6x32xf32, #tpu.memory_space<vmem>>, vector<6x1x32xf32>
    tpu.vector_store %arg13[%c0_11, %c0_12, %c0_13], %10 {strides = array<i32>} : memref<6x6x32xf32, #tpu.memory_space<vmem>>, vector<6x1x32xf32>,
    %c0_14 = arith.constant 0 : index
    %c3 = arith.constant 3 : index
    %c0_15 = arith.constant 0 : index
    %12 = vector.load %arg13[%c0_14, %c3, %c0_15] : memref<6x6x32xf32, #tpu.memory_space<vmem>>, vector<6x1x32xf32>
    %c0_16 = arith.constant 0 : index
    %c5_17 = arith.constant 5 : index
    %c0_18 = arith.constant 0 : index
    %13 = vector.load %arg13[%c0_16, %c5_17, %c0_18] : memref<6x6x32xf32, #tpu.memory_space<vmem>>, vector<6x1x32xf32>
    tpu.vector_store %arg13[%c0_16, %c5_17, %c0_18], %12 {strides = array<i32>} : memref<6x6x32xf32, #tpu.memory_space<vmem>>, vector<6x1x32xf32>,
    %c0_19 = arith.constant 0 : index
    %c0_20 = arith.constant 0 : index
    %c0_21 = arith.constant 0 : index
    %14 = vector.load %arg3[%c0_19, %c0_20, %c0_21] : memref<1x9x32xf32, #tpu.memory_space<vmem>>, vector<1x9x32xf32>
    %15 = vector.shape_cast %14 : vector<1x9x32xf32> to vector<9x32xf32>
    %c0_22 = arith.constant 0 : index
    %c0_23 = arith.constant 0 : index
    %c0_24 = arith.constant 0 : index
    %16 = vector.load %arg13[%c0_22, %c0_23, %c0_24] : memref<6x6x32xf32, #tpu.memory_space<vmem>>, vector<6x6x32xf32>
    %17 = vector.extract_strided_slice %16 {offsets = [0, 0, 0], sizes = [4, 4, 32], strides = [1, 1, 1]} : vector<6x6x32xf32> to vector<4x4x32xf32>
    %18 = vector.extract_strided_slice %15 {offsets = [0, 0], sizes = [1, 32], strides = [1, 1]} : vector<9x32xf32> to vector<1x32xf32>
    %19 = vector.shape_cast %18 : vector<1x32xf32> to vector<32xf32>
    %20 = vector.shape_cast %19 : vector<32xf32> to vector<1x1x32xf32>
    %21 = vector.broadcast %20 : vector<1x1x32xf32> to vector<4x4x32xf32>
    %22 = arith.mulf %17, %21 : vector<4x4x32xf32>
    %23 = vector.extract_strided_slice %16 {offsets = [0, 1, 0], sizes = [4, 4, 32], strides = [1, 1, 1]} : vector<6x6x32xf32> to vector<4x4x32xf32>
    %24 = vector.extract_strided_slice %15 {offsets = [1, 0], sizes = [1, 32], strides = [1, 1]} : vector<9x32xf32> to vector<1x32xf32>
    %25 = vector.shape_cast %24 : vector<1x32xf32> to vector<32xf32>
    %26 = vector.shape_cast %25 : vector<32xf32> to vector<1x1x32xf32>
    %27 = vector.broadcast %26 : vector<1x1x32xf32> to vector<4x4x32xf32>
    %28 = arith.mulf %23, %27 : vector<4x4x32xf32>
    %29 = arith.addf %22, %28 : vector<4x4x32xf32>
    %30 = vector.extract_strided_slice %16 {offsets = [0, 2, 0], sizes = [4, 4, 32], strides = [1, 1, 1]} : vector<6x6x32xf32> to vector<4x4x32xf32>
    %31 = vector.extract_strided_slice %15 {offsets = [2, 0], sizes = [1, 32], strides = [1, 1]} : vector<9x32xf32> to vector<1x32xf32>
    %32 = vector.shape_cast %31 : vector<1x32xf32> to vector<32xf32>
    %33 = vector.shape_cast %32 : vector<32xf32> to vector<1x1x32xf32>
    %34 = vector.broadcast %33 : vector<1x1x32xf32> to vector<4x4x32xf32>
    %35 = arith.mulf %30, %34 : vector<4x4x32xf32>
    %36 = arith.addf %29, %35 : vector<4x4x32xf32>
    %37 = vector.extract_strided_slice %16 {offsets = [1, 0, 0], sizes = [4, 4, 32], strides = [1, 1, 1]} : vector<6x6x32xf32> to vector<4x4x32xf32>
    %38 = vector.extract_strided_slice %15 {offsets = [3, 0], sizes = [1, 32], strides = [1, 1]} : vector<9x32xf32> to vector<1x32xf32>
    %39 = vector.shape_cast %38 : vector<1x32xf32> to vector<32xf32>
    %40 = vector.shape_cast %39 : vector<32xf32> to vector<1x1x32xf32>
    %41 = vector.broadcast %40 : vector<1x1x32xf32> to vector<4x4x32xf32>
    %42 = arith.mulf %37, %41 : vector<4x4x32xf32>
    %43 = arith.addf %36, %42 : vector<4x4x32xf32>
    %44 = vector.extract_strided_slice %16 {offsets = [1, 1, 0], sizes = [4, 4, 32], strides = [1, 1, 1]} : vector<6x6x32xf32> to vector<4x4x32xf32>
    %45 = vector.extract_strided_slice %15 {offsets = [4, 0], sizes = [1, 32], strides = [1, 1]} : vector<9x32xf32> to vector<1x32xf32>
    %46 = vector.shape_cast %45 : vector<1x32xf32> to vector<32xf32>
    %47 = vector.shape_cast %46 : vector<32xf32> to vector<1x1x32xf32>
    %48 = vector.broadcast %47 : vector<1x1x32xf32> to vector<4x4x32xf32>
    %49 = arith.mulf %44, %48 : vector<4x4x32xf32>
    %50 = arith.addf %43, %49 : vector<4x4x32xf32>
    %51 = vector.extract_strided_slice %16 {offsets = [1, 2, 0], sizes = [4, 4, 32], strides = [1, 1, 1]} : vector<6x6x32xf32> to vector<4x4x32xf32>
    %52 = vector.extract_strided_slice %15 {offsets = [5, 0], sizes = [1, 32], strides = [1, 1]} : vector<9x32xf32> to vector<1x32xf32>
    %53 = vector.shape_cast %52 : vector<1x32xf32> to vector<32xf32>
    %54 = vector.shape_cast %53 : vector<32xf32> to vector<1x1x32xf32>
    %55 = vector.broadcast %54 : vector<1x1x32xf32> to vector<4x4x32xf32>
    %56 = arith.mulf %51, %55 : vector<4x4x32xf32>
    %57 = arith.addf %50, %56 : vector<4x4x32xf32>
    %58 = vector.extract_strided_slice %16 {offsets = [2, 0, 0], sizes = [4, 4, 32], strides = [1, 1, 1]} : vector<6x6x32xf32> to vector<4x4x32xf32>
    %59 = vector.extract_strided_slice %15 {offsets = [6, 0], sizes = [1, 32], strides = [1, 1]} : vector<9x32xf32> to vector<1x32xf32>
    %60 = vector.shape_cast %59 : vector<1x32xf32> to vector<32xf32>
    %61 = vector.shape_cast %60 : vector<32xf32> to vector<1x1x32xf32>
    %62 = vector.broadcast %61 : vector<1x1x32xf32> to vector<4x4x32xf32>
    %63 = arith.mulf %58, %62 : vector<4x4x32xf32>
    %64 = arith.addf %57, %63 : vector<4x4x32xf32>
    %65 = vector.extract_strided_slice %16 {offsets = [2, 1, 0], sizes = [4, 4, 32], strides = [1, 1, 1]} : vector<6x6x32xf32> to vector<4x4x32xf32>
    %66 = vector.extract_strided_slice %15 {offsets = [7, 0], sizes = [1, 32], strides = [1, 1]} : vector<9x32xf32> to vector<1x32xf32>
    %67 = vector.shape_cast %66 : vector<1x32xf32> to vector<32xf32>
    %68 = vector.shape_cast %67 : vector<32xf32> to vector<1x1x32xf32>
    %69 = vector.broadcast %68 : vector<1x1x32xf32> to vector<4x4x32xf32>
    %70 = arith.mulf %65, %69 : vector<4x4x32xf32>
    %71 = arith.addf %64, %70 : vector<4x4x32xf32>
    %72 = vector.extract_strided_slice %16 {offsets = [2, 2, 0], sizes = [4, 4, 32], strides = [1, 1, 1]} : vector<6x6x32xf32> to vector<4x4x32xf32>
    %73 = vector.extract_strided_slice %15 {offsets = [8, 0], sizes = [1, 32], strides = [1, 1]} : vector<9x32xf32> to vector<1x32xf32>
    %74 = vector.shape_cast %73 : vector<1x32xf32> to vector<32xf32>
    %75 = vector.shape_cast %74 : vector<32xf32> to vector<1x1x32xf32>
    %76 = vector.broadcast %75 : vector<1x1x32xf32> to vector<4x4x32xf32>
    %77 = arith.mulf %72, %76 : vector<4x4x32xf32>
    %78 = arith.addf %71, %77 : vector<4x4x32xf32>
    %79 = vector.shape_cast %78 : vector<4x4x32xf32> to vector<16x32xf32>
    %c0_25 = arith.constant 0 : index
    %c0_26 = arith.constant 0 : index
    %c0_27 = arith.constant 0 : index
    %80 = vector.load %arg4[%c0_25, %c0_26, %c0_27] : memref<1x1x32xf32, #tpu.memory_space<vmem>>, vector<1x1x32xf32>
    %81 = vector.shape_cast %80 : vector<1x1x32xf32> to vector<1x32xf32>
    %82 = vector.broadcast %81 : vector<1x32xf32> to vector<16x32xf32>
    %83 = arith.addf %79, %82 : vector<16x32xf32>
    %cst = arith.constant dense<0.000000e+00> : vector<32xf32>
    %84 = vector.multi_reduction <add>, %83, %cst [0] : vector<16x32xf32> to vector<32xf32>
    %85 = vector.shape_cast %84 : vector<32xf32> to vector<1x32xf32>
    %86 = arith.mulf %83, %83 : vector<16x32xf32>
    %cst_28 = arith.constant dense<0.000000e+00> : vector<32xf32>
    %87 = vector.multi_reduction <add>, %86, %cst_28 [0] : vector<16x32xf32> to vector<32xf32>
    %88 = vector.shape_cast %87 : vector<32xf32> to vector<1x32xf32>
    %cst_29 = arith.constant 6.250000e-02 : f32
    %89 = vector.broadcast %cst_29 : f32 to vector<1x32xf32>
    %90 = arith.mulf %85, %89 : vector<1x32xf32>
    %cst_30 = arith.constant 6.250000e-02 : f32
    %91 = vector.broadcast %cst_30 : f32 to vector<1x32xf32>
    %92 = arith.mulf %88, %91 : vector<1x32xf32>
    %93 = arith.mulf %90, %90 : vector<1x32xf32>
    %94 = arith.subf %92, %93 : vector<1x32xf32>
    %cst_31 = arith.constant 0.000000e+00 : f32
    %95 = vector.broadcast %cst_31 : f32 to vector<1x32xf32>
    %96 = arith.maximumf %94, %95 : vector<1x32xf32>
    %97 = vector.broadcast %90 : vector<1x32xf32> to vector<16x32xf32>
    %98 = arith.subf %83, %97 : vector<16x32xf32>
    %cst_32 = arith.constant 9.99999974E-6 : f32
    %99 = vector.broadcast %cst_32 : f32 to vector<1x32xf32>
    %100 = arith.addf %96, %99 : vector<1x32xf32>
    %101 = math.rsqrt %100 : vector<1x32xf32>
    %102 = vector.broadcast %101 : vector<1x32xf32> to vector<16x32xf32>
    %103 = arith.mulf %98, %102 : vector<16x32xf32>
    %104 = arith.truncf %103 : vector<16x32xf32> to vector<16x32xbf16>
    %c0_33 = arith.constant 0 : index
    %c0_34 = arith.constant 0 : index
    %c0_35 = arith.constant 0 : index
    %105 = vector.load %arg5[%c0_33, %c0_34, %c0_35] : memref<1x32x32xf32, #tpu.memory_space<vmem>>, vector<1x32x32xf32>
    %106 = vector.shape_cast %105 : vector<1x32x32xf32> to vector<32x32xf32>
    %107 = arith.truncf %106 : vector<32x32xf32> to vector<32x32xbf16>
    %cst_36 = arith.constant dense<0.000000e+00> : vector<16x32xf32>
    %108 = tpu.matmul %104, %107, %cst_36 {dimension_numbers = #tpu.dot_dimension_numbers<[1], [0], [0], [1], [0, 0, 1, 1], [], []>} : vector<16x32xbf16>, vector<32x32xbf16>, vector<16x32xf32> -> vector<16x32xf32>
    %c0_37 = arith.constant 0 : index
    %c0_38 = arith.constant 0 : index
    %c0_39 = arith.constant 0 : index
    %109 = vector.load %arg6[%c0_37, %c0_38, %c0_39] : memref<1x1x32xf32, #tpu.memory_space<vmem>>, vector<1x1x32xf32>
    %110 = vector.shape_cast %109 : vector<1x1x32xf32> to vector<1x32xf32>
    %111 = vector.broadcast %110 : vector<1x32xf32> to vector<16x32xf32>
    %112 = arith.addf %108, %111 : vector<16x32xf32>
    %cst_40 = arith.constant dense<0.000000e+00> : vector<32xf32>
    %113 = vector.multi_reduction <add>, %112, %cst_40 [0] : vector<16x32xf32> to vector<32xf32>
    %114 = vector.shape_cast %113 : vector<32xf32> to vector<1x32xf32>
    %115 = arith.mulf %112, %112 : vector<16x32xf32>
    %cst_41 = arith.constant dense<0.000000e+00> : vector<32xf32>
    %116 = vector.multi_reduction <add>, %115, %cst_41 [0] : vector<16x32xf32> to vector<32xf32>
    %117 = vector.shape_cast %116 : vector<32xf32> to vector<1x32xf32>
    %cst_42 = arith.constant 6.250000e-02 : f32
    %118 = vector.broadcast %cst_42 : f32 to vector<1x32xf32>
    %119 = arith.mulf %114, %118 : vector<1x32xf32>
    %cst_43 = arith.constant 6.250000e-02 : f32
    %120 = vector.broadcast %cst_43 : f32 to vector<1x32xf32>
    %121 = arith.mulf %117, %120 : vector<1x32xf32>
    %122 = arith.mulf %119, %119 : vector<1x32xf32>
    %123 = arith.subf %121, %122 : vector<1x32xf32>
    %cst_44 = arith.constant 0.000000e+00 : f32
    %124 = vector.broadcast %cst_44 : f32 to vector<1x32xf32>
    %125 = arith.maximumf %123, %124 : vector<1x32xf32>
    %126 = vector.broadcast %119 : vector<1x32xf32> to vector<16x32xf32>
    %127 = arith.subf %112, %126 : vector<16x32xf32>
    %cst_45 = arith.constant 9.99999974E-6 : f32
    %128 = vector.broadcast %cst_45 : f32 to vector<1x32xf32>
    %129 = arith.addf %125, %128 : vector<1x32xf32>
    %130 = math.rsqrt %129 : vector<1x32xf32>
    %131 = vector.broadcast %130 : vector<1x32xf32> to vector<16x32xf32>
    %132 = arith.mulf %127, %131 : vector<16x32xf32>
    %cst_46 = arith.constant 0.000000e+00 : f32
    %133 = vector.broadcast %cst_46 : f32 to vector<16x32xf32>
    %134 = arith.maximumf %132, %133 : vector<16x32xf32>
    %135 = vector.shape_cast %134 : vector<16x32xf32> to vector<4x4x32xf32>
    %c1_47 = arith.constant 1 : index
    %c1_48 = arith.constant 1 : index
    %c0_49 = arith.constant 0 : index
    %136 = vector.load %arg14[%c1_47, %c1_48, %c0_49] : memref<6x6x32xf32, #tpu.memory_space<vmem>>, vector<4x4x32xf32>
    tpu.vector_store %arg14[%c1_47, %c1_48, %c0_49], %135 {strides = array<i32>} : memref<6x6x32xf32, #tpu.memory_space<vmem>>, vector<4x4x32xf32>,
    %137 = vector.extract_strided_slice %135 {offsets = [1, 0, 0], sizes = [1, 4, 32], strides = [1, 1, 1]} : vector<4x4x32xf32> to vector<1x4x32xf32>
    %c0_50 = arith.constant 0 : index
    %c1_51 = arith.constant 1 : index
    %c0_52 = arith.constant 0 : index
    %138 = vector.load %arg14[%c0_50, %c1_51, %c0_52] : memref<6x6x32xf32, #tpu.memory_space<vmem>>, vector<1x4x32xf32>
    tpu.vector_store %arg14[%c0_50, %c1_51, %c0_52], %137 {strides = array<i32>} : memref<6x6x32xf32, #tpu.memory_space<vmem>>, vector<1x4x32xf32>,
    %139 = vector.extract_strided_slice %135 {offsets = [2, 0, 0], sizes = [1, 4, 32], strides = [1, 1, 1]} : vector<4x4x32xf32> to vector<1x4x32xf32>
    %c5_53 = arith.constant 5 : index
    %c1_54 = arith.constant 1 : index
    %c0_55 = arith.constant 0 : index
    %140 = vector.load %arg14[%c5_53, %c1_54, %c0_55] : memref<6x6x32xf32, #tpu.memory_space<vmem>>, vector<1x4x32xf32>
    tpu.vector_store %arg14[%c5_53, %c1_54, %c0_55], %139 {strides = array<i32>} : memref<6x6x32xf32, #tpu.memory_space<vmem>>, vector<1x4x32xf32>,
    %c0_56 = arith.constant 0 : index
    %c2_57 = arith.constant 2 : index
    %c0_58 = arith.constant 0 : index
    %141 = vector.load %arg14[%c0_56, %c2_57, %c0_58] : memref<6x6x32xf32, #tpu.memory_space<vmem>>, vector<6x1x32xf32>
    %c0_59 = arith.constant 0 : index
    %c0_60 = arith.constant 0 : index
    %c0_61 = arith.constant 0 : index
    %142 = vector.load %arg14[%c0_59, %c0_60, %c0_61] : memref<6x6x32xf32, #tpu.memory_space<vmem>>, vector<6x1x32xf32>
    tpu.vector_store %arg14[%c0_59, %c0_60, %c0_61], %141 {strides = array<i32>} : memref<6x6x32xf32, #tpu.memory_space<vmem>>, vector<6x1x32xf32>,
    %c0_62 = arith.constant 0 : index
    %c3_63 = arith.constant 3 : index
    %c0_64 = arith.constant 0 : index
    %143 = vector.load %arg14[%c0_62, %c3_63, %c0_64] : memref<6x6x32xf32, #tpu.memory_space<vmem>>, vector<6x1x32xf32>
    %c0_65 = arith.constant 0 : index
    %c5_66 = arith.constant 5 : index
    %c0_67 = arith.constant 0 : index
    %144 = vector.load %arg14[%c0_65, %c5_66, %c0_67] : memref<6x6x32xf32, #tpu.memory_space<vmem>>, vector<6x1x32xf32>
    tpu.vector_store %arg14[%c0_65, %c5_66, %c0_67], %143 {strides = array<i32>} : memref<6x6x32xf32, #tpu.memory_space<vmem>>, vector<6x1x32xf32>,
    %c0_68 = arith.constant 0 : index
    %c0_69 = arith.constant 0 : index
    %c0_70 = arith.constant 0 : index
    %145 = vector.load %arg7[%c0_68, %c0_69, %c0_70] : memref<1x9x32xf32, #tpu.memory_space<vmem>>, vector<1x9x32xf32>
    %146 = vector.shape_cast %145 : vector<1x9x32xf32> to vector<9x32xf32>
    %c0_71 = arith.constant 0 : index
    %c0_72 = arith.constant 0 : index
    %c0_73 = arith.constant 0 : index
    %147 = vector.load %arg14[%c0_71, %c0_72, %c0_73] : memref<6x6x32xf32, #tpu.memory_space<vmem>>, vector<6x6x32xf32>
    %148 = vector.extract_strided_slice %147 {offsets = [0, 0, 0], sizes = [4, 4, 32], strides = [1, 1, 1]} : vector<6x6x32xf32> to vector<4x4x32xf32>
    %149 = vector.extract_strided_slice %146 {offsets = [0, 0], sizes = [1, 32], strides = [1, 1]} : vector<9x32xf32> to vector<1x32xf32>
    %150 = vector.shape_cast %149 : vector<1x32xf32> to vector<32xf32>
    %151 = vector.shape_cast %150 : vector<32xf32> to vector<1x1x32xf32>
    %152 = vector.broadcast %151 : vector<1x1x32xf32> to vector<4x4x32xf32>
    %153 = arith.mulf %148, %152 : vector<4x4x32xf32>
    %154 = vector.extract_strided_slice %147 {offsets = [0, 1, 0], sizes = [4, 4, 32], strides = [1, 1, 1]} : vector<6x6x32xf32> to vector<4x4x32xf32>
    %155 = vector.extract_strided_slice %146 {offsets = [1, 0], sizes = [1, 32], strides = [1, 1]} : vector<9x32xf32> to vector<1x32xf32>
    %156 = vector.shape_cast %155 : vector<1x32xf32> to vector<32xf32>
    %157 = vector.shape_cast %156 : vector<32xf32> to vector<1x1x32xf32>
    %158 = vector.broadcast %157 : vector<1x1x32xf32> to vector<4x4x32xf32>
    %159 = arith.mulf %154, %158 : vector<4x4x32xf32>
    %160 = arith.addf %153, %159 : vector<4x4x32xf32>
    %161 = vector.extract_strided_slice %147 {offsets = [0, 2, 0], sizes = [4, 4, 32], strides = [1, 1, 1]} : vector<6x6x32xf32> to vector<4x4x32xf32>
    %162 = vector.extract_strided_slice %146 {offsets = [2, 0], sizes = [1, 32], strides = [1, 1]} : vector<9x32xf32> to vector<1x32xf32>
    %163 = vector.shape_cast %162 : vector<1x32xf32> to vector<32xf32>
    %164 = vector.shape_cast %163 : vector<32xf32> to vector<1x1x32xf32>
    %165 = vector.broadcast %164 : vector<1x1x32xf32> to vector<4x4x32xf32>
    %166 = arith.mulf %161, %165 : vector<4x4x32xf32>
    %167 = arith.addf %160, %166 : vector<4x4x32xf32>
    %168 = vector.extract_strided_slice %147 {offsets = [1, 0, 0], sizes = [4, 4, 32], strides = [1, 1, 1]} : vector<6x6x32xf32> to vector<4x4x32xf32>
    %169 = vector.extract_strided_slice %146 {offsets = [3, 0], sizes = [1, 32], strides = [1, 1]} : vector<9x32xf32> to vector<1x32xf32>
    %170 = vector.shape_cast %169 : vector<1x32xf32> to vector<32xf32>
    %171 = vector.shape_cast %170 : vector<32xf32> to vector<1x1x32xf32>
    %172 = vector.broadcast %171 : vector<1x1x32xf32> to vector<4x4x32xf32>
    %173 = arith.mulf %168, %172 : vector<4x4x32xf32>
    %174 = arith.addf %167, %173 : vector<4x4x32xf32>
    %175 = vector.extract_strided_slice %147 {offsets = [1, 1, 0], sizes = [4, 4, 32], strides = [1, 1, 1]} : vector<6x6x32xf32> to vector<4x4x32xf32>
    %176 = vector.extract_strided_slice %146 {offsets = [4, 0], sizes = [1, 32], strides = [1, 1]} : vector<9x32xf32> to vector<1x32xf32>
    %177 = vector.shape_cast %176 : vector<1x32xf32> to vector<32xf32>
    %178 = vector.shape_cast %177 : vector<32xf32> to vector<1x1x32xf32>
    %179 = vector.broadcast %178 : vector<1x1x32xf32> to vector<4x4x32xf32>
    %180 = arith.mulf %175, %179 : vector<4x4x32xf32>
    %181 = arith.addf %174, %180 : vector<4x4x32xf32>
    %182 = vector.extract_strided_slice %147 {offsets = [1, 2, 0], sizes = [4, 4, 32], strides = [1, 1, 1]} : vector<6x6x32xf32> to vector<4x4x32xf32>
    %183 = vector.extract_strided_slice %146 {offsets = [5, 0], sizes = [1, 32], strides = [1, 1]} : vector<9x32xf32> to vector<1x32xf32>
    %184 = vector.shape_cast %183 : vector<1x32xf32> to vector<32xf32>
    %185 = vector.shape_cast %184 : vector<32xf32> to vector<1x1x32xf32>
    %186 = vector.broadcast %185 : vector<1x1x32xf32> to vector<4x4x32xf32>
    %187 = arith.mulf %182, %186 : vector<4x4x32xf32>
    %188 = arith.addf %181, %187 : vector<4x4x32xf32>
    %189 = vector.extract_strided_slice %147 {offsets = [2, 0, 0], sizes = [4, 4, 32], strides = [1, 1, 1]} : vector<6x6x32xf32> to vector<4x4x32xf32>
    %190 = vector.extract_strided_slice %146 {offsets = [6, 0], sizes = [1, 32], strides = [1, 1]} : vector<9x32xf32> to vector<1x32xf32>
    %191 = vector.shape_cast %190 : vector<1x32xf32> to vector<32xf32>
    %192 = vector.shape_cast %191 : vector<32xf32> to vector<1x1x32xf32>
    %193 = vector.broadcast %192 : vector<1x1x32xf32> to vector<4x4x32xf32>
    %194 = arith.mulf %189, %193 : vector<4x4x32xf32>
    %195 = arith.addf %188, %194 : vector<4x4x32xf32>
    %196 = vector.extract_strided_slice %147 {offsets = [2, 1, 0], sizes = [4, 4, 32], strides = [1, 1, 1]} : vector<6x6x32xf32> to vector<4x4x32xf32>
    %197 = vector.extract_strided_slice %146 {offsets = [7, 0], sizes = [1, 32], strides = [1, 1]} : vector<9x32xf32> to vector<1x32xf32>
    %198 = vector.shape_cast %197 : vector<1x32xf32> to vector<32xf32>
    %199 = vector.shape_cast %198 : vector<32xf32> to vector<1x1x32xf32>
    %200 = vector.broadcast %199 : vector<1x1x32xf32> to vector<4x4x32xf32>
    %201 = arith.mulf %196, %200 : vector<4x4x32xf32>
    %202 = arith.addf %195, %201 : vector<4x4x32xf32>
    %203 = vector.extract_strided_slice %147 {offsets = [2, 2, 0], sizes = [4, 4, 32], strides = [1, 1, 1]} : vector<6x6x32xf32> to vector<4x4x32xf32>
    %204 = vector.extract_strided_slice %146 {offsets = [8, 0], sizes = [1, 32], strides = [1, 1]} : vector<9x32xf32> to vector<1x32xf32>
    %205 = vector.shape_cast %204 : vector<1x32xf32> to vector<32xf32>
    %206 = vector.shape_cast %205 : vector<32xf32> to vector<1x1x32xf32>
    %207 = vector.broadcast %206 : vector<1x1x32xf32> to vector<4x4x32xf32>
    %208 = arith.mulf %203, %207 : vector<4x4x32xf32>
    %209 = arith.addf %202, %208 : vector<4x4x32xf32>
    %210 = vector.shape_cast %209 : vector<4x4x32xf32> to vector<16x32xf32>
    %c0_74 = arith.constant 0 : index
    %c0_75 = arith.constant 0 : index
    %c0_76 = arith.constant 0 : index
    %211 = vector.load %arg8[%c0_74, %c0_75, %c0_76] : memref<1x1x32xf32, #tpu.memory_space<vmem>>, vector<1x1x32xf32>
    %212 = vector.shape_cast %211 : vector<1x1x32xf32> to vector<1x32xf32>
    %213 = vector.broadcast %212 : vector<1x32xf32> to vector<16x32xf32>
    %214 = arith.addf %210, %213 : vector<16x32xf32>
    %cst_77 = arith.constant dense<0.000000e+00> : vector<32xf32>
    %215 = vector.multi_reduction <add>, %214, %cst_77 [0] : vector<16x32xf32> to vector<32xf32>
    %216 = vector.shape_cast %215 : vector<32xf32> to vector<1x32xf32>
    %217 = arith.mulf %214, %214 : vector<16x32xf32>
    %cst_78 = arith.constant dense<0.000000e+00> : vector<32xf32>
    %218 = vector.multi_reduction <add>, %217, %cst_78 [0] : vector<16x32xf32> to vector<32xf32>
    %219 = vector.shape_cast %218 : vector<32xf32> to vector<1x32xf32>
    %cst_79 = arith.constant 6.250000e-02 : f32
    %220 = vector.broadcast %cst_79 : f32 to vector<1x32xf32>
    %221 = arith.mulf %216, %220 : vector<1x32xf32>
    %cst_80 = arith.constant 6.250000e-02 : f32
    %222 = vector.broadcast %cst_80 : f32 to vector<1x32xf32>
    %223 = arith.mulf %219, %222 : vector<1x32xf32>
    %224 = arith.mulf %221, %221 : vector<1x32xf32>
    %225 = arith.subf %223, %224 : vector<1x32xf32>
    %cst_81 = arith.constant 0.000000e+00 : f32
    %226 = vector.broadcast %cst_81 : f32 to vector<1x32xf32>
    %227 = arith.maximumf %225, %226 : vector<1x32xf32>
    %228 = vector.broadcast %221 : vector<1x32xf32> to vector<16x32xf32>
    %229 = arith.subf %214, %228 : vector<16x32xf32>
    %cst_82 = arith.constant 9.99999974E-6 : f32
    %230 = vector.broadcast %cst_82 : f32 to vector<1x32xf32>
    %231 = arith.addf %227, %230 : vector<1x32xf32>
    %232 = math.rsqrt %231 : vector<1x32xf32>
    %233 = vector.broadcast %232 : vector<1x32xf32> to vector<16x32xf32>
    %234 = arith.mulf %229, %233 : vector<16x32xf32>
    %235 = arith.truncf %234 : vector<16x32xf32> to vector<16x32xbf16>
    %c0_83 = arith.constant 0 : index
    %c0_84 = arith.constant 0 : index
    %c0_85 = arith.constant 0 : index
    %236 = vector.load %arg9[%c0_83, %c0_84, %c0_85] : memref<1x32x32xf32, #tpu.memory_space<vmem>>, vector<1x32x32xf32>
    %237 = vector.shape_cast %236 : vector<1x32x32xf32> to vector<32x32xf32>
    %238 = arith.truncf %237 : vector<32x32xf32> to vector<32x32xbf16>
    %cst_86 = arith.constant dense<0.000000e+00> : vector<16x32xf32>
    %239 = tpu.matmul %235, %238, %cst_86 {dimension_numbers = #tpu.dot_dimension_numbers<[1], [0], [0], [1], [0, 0, 1, 1], [], []>} : vector<16x32xbf16>, vector<32x32xbf16>, vector<16x32xf32> -> vector<16x32xf32>
    %c0_87 = arith.constant 0 : index
    %c0_88 = arith.constant 0 : index
    %c0_89 = arith.constant 0 : index
    %240 = vector.load %arg10[%c0_87, %c0_88, %c0_89] : memref<1x1x32xf32, #tpu.memory_space<vmem>>, vector<1x1x32xf32>
    %241 = vector.shape_cast %240 : vector<1x1x32xf32> to vector<1x32xf32>
    %242 = vector.broadcast %241 : vector<1x32xf32> to vector<16x32xf32>
    %243 = arith.addf %239, %242 : vector<16x32xf32>
    %cst_90 = arith.constant dense<0.000000e+00> : vector<32xf32>
    %244 = vector.multi_reduction <add>, %243, %cst_90 [0] : vector<16x32xf32> to vector<32xf32>
    %245 = vector.shape_cast %244 : vector<32xf32> to vector<1x32xf32>
    %246 = arith.mulf %243, %243 : vector<16x32xf32>
    %cst_91 = arith.constant dense<0.000000e+00> : vector<32xf32>
    %247 = vector.multi_reduction <add>, %246, %cst_91 [0] : vector<16x32xf32> to vector<32xf32>
    %248 = vector.shape_cast %247 : vector<32xf32> to vector<1x32xf32>
    %cst_92 = arith.constant 6.250000e-02 : f32
    %249 = vector.broadcast %cst_92 : f32 to vector<1x32xf32>
    %250 = arith.mulf %245, %249 : vector<1x32xf32>
    %cst_93 = arith.constant 6.250000e-02 : f32
    %251 = vector.broadcast %cst_93 : f32 to vector<1x32xf32>
    %252 = arith.mulf %248, %251 : vector<1x32xf32>
    %253 = arith.mulf %250, %250 : vector<1x32xf32>
    %254 = arith.subf %252, %253 : vector<1x32xf32>
    %cst_94 = arith.constant 0.000000e+00 : f32
    %255 = vector.broadcast %cst_94 : f32 to vector<1x32xf32>
    %256 = arith.maximumf %254, %255 : vector<1x32xf32>
    %257 = vector.broadcast %250 : vector<1x32xf32> to vector<16x32xf32>
    %258 = arith.subf %243, %257 : vector<16x32xf32>
    %cst_95 = arith.constant 9.99999974E-6 : f32
    %259 = vector.broadcast %cst_95 : f32 to vector<1x32xf32>
    %260 = arith.addf %256, %259 : vector<1x32xf32>
    %261 = math.rsqrt %260 : vector<1x32xf32>
    %262 = vector.broadcast %261 : vector<1x32xf32> to vector<16x32xf32>
    %263 = arith.mulf %258, %262 : vector<16x32xf32>
    %264 = arith.addf %3, %263 : vector<16x32xf32>
    %c0_96 = arith.constant 0 : index
    %c0_97 = arith.constant 0 : index
    %265 = vector.load %arg12[%c0_96, %c0_97] : memref<16x32xf32, #tpu.memory_space<vmem>>, vector<16x32xf32>
    tpu.vector_store %arg12[%c0_96, %c0_97], %264 {strides = array<i32>} : memref<16x32xf32, #tpu.memory_space<vmem>>, vector<16x32xf32>,
    %c8_i32 = arith.constant 8 : i32
    %266 = arith.cmpi eq, %arg1, %c8_i32 : i32
    %267 = arith.extui %266 : i1 to i32
    %c0_i32_98 = arith.constant 0 : i32
    %268 = arith.cmpi ne, %267, %c0_i32_98 : i32
    scf.if %268 {
      %c0_99 = arith.constant 0 : index
      %c0_100 = arith.constant 0 : index
      %c0_101 = arith.constant 0 : index
      %269 = vector.load %arg11[%c0_99, %c0_100, %c0_101] : memref<1x16x32xf32, #tpu.memory_space<vmem>>, vector<1x16x32xf32>
      %270 = vector.shape_cast %269 : vector<1x16x32xf32> to vector<16x32xf32>
      %271 = vector.shape_cast %264 : vector<16x32xf32> to vector<1x16x32xf32>
      tpu.vector_store %arg11[%c0_99, %c0_100, %c0_101], %271 {strides = array<i32>} : memref<1x16x32xf32, #tpu.memory_space<vmem>>, vector<1x16x32xf32>,
    } else {
    }
    return
  }
  func.func @transform_0(%arg0: i32, %arg1: i32) -> (i32, i32, i32) {
    %c0_i32 = arith.constant 0 : i32
    %c0_i32_0 = arith.constant 0 : i32
    %c0_i32_1 = arith.constant 0 : i32
    return %arg0, %c0_i32, %c0_i32_0 : i32, i32, i32
  }
  func.func @transform_1(%arg0: i32, %arg1: i32) -> (i32, i32, i32) {
    %c0_i32 = arith.constant 0 : i32
    %c0_i32_0 = arith.constant 0 : i32
    %c0_i32_1 = arith.constant 0 : i32
    return %arg1, %c0_i32, %c0_i32_0 : i32, i32, i32
  }
  func.func @transform_2(%arg0: i32, %arg1: i32) -> (i32, i32, i32) {
    %c0_i32 = arith.constant 0 : i32
    %c0_i32_0 = arith.constant 0 : i32
    %c0_i32_1 = arith.constant 0 : i32
    return %arg1, %c0_i32, %c0_i32_0 : i32, i32, i32
  }
  func.func @transform_3(%arg0: i32, %arg1: i32) -> (i32, i32, i32) {
    %c0_i32 = arith.constant 0 : i32
    %c0_i32_0 = arith.constant 0 : i32
    %c0_i32_1 = arith.constant 0 : i32
    return %arg1, %c0_i32, %c0_i32_0 : i32, i32, i32
  }
  func.func @transform_4(%arg0: i32, %arg1: i32) -> (i32, i32, i32) {
    %c0_i32 = arith.constant 0 : i32
    %c0_i32_0 = arith.constant 0 : i32
    %c0_i32_1 = arith.constant 0 : i32
    return %arg1, %c0_i32, %c0_i32_0 : i32, i32, i32
  }
  func.func @transform_5(%arg0: i32, %arg1: i32) -> (i32, i32, i32) {
    %c0_i32 = arith.constant 0 : i32
    %c0_i32_0 = arith.constant 0 : i32
    %c0_i32_1 = arith.constant 0 : i32
    return %arg1, %c0_i32, %c0_i32_0 : i32, i32, i32
  }
  func.func @transform_6(%arg0: i32, %arg1: i32) -> (i32, i32, i32) {
    %c0_i32 = arith.constant 0 : i32
    %c0_i32_0 = arith.constant 0 : i32
    %c0_i32_1 = arith.constant 0 : i32
    return %arg1, %c0_i32, %c0_i32_0 : i32, i32, i32
  }
  func.func @transform_7(%arg0: i32, %arg1: i32) -> (i32, i32, i32) {
    %c0_i32 = arith.constant 0 : i32
    %c0_i32_0 = arith.constant 0 : i32
    %c0_i32_1 = arith.constant 0 : i32
    return %arg1, %c0_i32, %c0_i32_0 : i32, i32, i32
  }
  func.func @transform_8(%arg0: i32, %arg1: i32) -> (i32, i32, i32) {
    %c0_i32 = arith.constant 0 : i32
    %c0_i32_0 = arith.constant 0 : i32
    %c0_i32_1 = arith.constant 0 : i32
    return %arg1, %c0_i32, %c0_i32_0 : i32, i32, i32
  }
  func.func @transform_9(%arg0: i32, %arg1: i32) -> (i32, i32, i32) {
    %c0_i32 = arith.constant 0 : i32
    %c0_i32_0 = arith.constant 0 : i32
    %c0_i32_1 = arith.constant 0 : i32
    return %arg0, %c0_i32, %c0_i32_0 : i32, i32, i32
  }
}

module attributes {stable_mosaic.version = 11 : i64} {
  func.func @_dense_conv_kernel(%arg0: i32, %arg1: memref<1x1x10x320xf32, #tpu.memory_space<vmem>>, %arg2: memref<3x320x128xbf16, #tpu.memory_space<vmem>>, %arg3: memref<1x128xf32, #tpu.memory_space<vmem>>, %arg4: memref<128x128xf32, #tpu.memory_space<vmem>>, %arg5: memref<1x8x128xf32, #tpu.memory_space<vmem>>) attributes {dimension_semantics = [#tpu.dimension_semantics<parallel>], iteration_bounds = array<i64: 2>, scalar_prefetch = 0 : i64, scratch_operands = 0 : i64, tpu.core_type = #tpu.core_type<tc>, window_params = [{transform_indices = @transform_0, window_bounds = array<i64: 1, 1, 10, 320>}, {pipeline_mode = #tpu.pipeline_mode<synchronous>, transform_indices = @transform_1, window_bounds = array<i64: 3, 320, 128>}, {pipeline_mode = #tpu.pipeline_mode<synchronous>, transform_indices = @transform_2, window_bounds = array<i64: 1, 128>}, {pipeline_mode = #tpu.pipeline_mode<synchronous>, transform_indices = @transform_3, window_bounds = array<i64: 128, 128>}, {transform_indices = @transform_4, window_bounds = array<i64: 1, 8, 128>}]} {
    %cst = arith.constant 0.000000e+00 : f32
    %0 = vector.broadcast %cst : f32 to vector<8x128xf32>
    %c0 = arith.constant 0 : index
    %c0_0 = arith.constant 0 : index
    %c0_1 = arith.constant 0 : index
    %c0_2 = arith.constant 0 : index
    %1 = vector.load %arg1[%c0, %c0_0, %c0_1, %c0_2] : memref<1x1x10x320xf32, #tpu.memory_space<vmem>>, vector<1x1x8x320xf32>
    %2 = vector.shape_cast %1 : vector<1x1x8x320xf32> to vector<8x320xf32>
    %3 = arith.truncf %2 : vector<8x320xf32> to vector<8x320xbf16>
    %c0_3 = arith.constant 0 : index
    %c0_4 = arith.constant 0 : index
    %c0_5 = arith.constant 0 : index
    %4 = vector.load %arg2[%c0_3, %c0_4, %c0_5] : memref<3x320x128xbf16, #tpu.memory_space<vmem>>, vector<1x320x128xbf16>
    %5 = vector.shape_cast %4 : vector<1x320x128xbf16> to vector<320x128xbf16>
    %cst_6 = arith.constant dense<0.000000e+00> : vector<8x128xf32>
    %6 = tpu.matmul %3, %5, %cst_6 {dimension_numbers = #tpu.dot_dimension_numbers<[1], [0], [0], [1], [0, 0, 1, 1], [], []>} : vector<8x320xbf16>, vector<320x128xbf16>, vector<8x128xf32> -> vector<8x128xf32>
    %7 = arith.addf %0, %6 : vector<8x128xf32>
    %c0_7 = arith.constant 0 : index
    %c0_8 = arith.constant 0 : index
    %c1 = arith.constant 1 : index
    %c0_9 = arith.constant 0 : index
    %8 = vector.load %arg1[%c0_7, %c0_8, %c1, %c0_9] : memref<1x1x10x320xf32, #tpu.memory_space<vmem>>, vector<1x1x8x320xf32>
    %9 = vector.shape_cast %8 : vector<1x1x8x320xf32> to vector<8x320xf32>
    %10 = arith.truncf %9 : vector<8x320xf32> to vector<8x320xbf16>
    %c1_10 = arith.constant 1 : index
    %c0_11 = arith.constant 0 : index
    %c0_12 = arith.constant 0 : index
    %11 = vector.load %arg2[%c1_10, %c0_11, %c0_12] : memref<3x320x128xbf16, #tpu.memory_space<vmem>>, vector<1x320x128xbf16>
    %12 = vector.shape_cast %11 : vector<1x320x128xbf16> to vector<320x128xbf16>
    %cst_13 = arith.constant dense<0.000000e+00> : vector<8x128xf32>
    %13 = tpu.matmul %10, %12, %cst_13 {dimension_numbers = #tpu.dot_dimension_numbers<[1], [0], [0], [1], [0, 0, 1, 1], [], []>} : vector<8x320xbf16>, vector<320x128xbf16>, vector<8x128xf32> -> vector<8x128xf32>
    %14 = arith.addf %7, %13 : vector<8x128xf32>
    %c0_14 = arith.constant 0 : index
    %c0_15 = arith.constant 0 : index
    %c2 = arith.constant 2 : index
    %c0_16 = arith.constant 0 : index
    %15 = vector.load %arg1[%c0_14, %c0_15, %c2, %c0_16] : memref<1x1x10x320xf32, #tpu.memory_space<vmem>>, vector<1x1x8x320xf32>
    %16 = vector.shape_cast %15 : vector<1x1x8x320xf32> to vector<8x320xf32>
    %17 = arith.truncf %16 : vector<8x320xf32> to vector<8x320xbf16>
    %c2_17 = arith.constant 2 : index
    %c0_18 = arith.constant 0 : index
    %c0_19 = arith.constant 0 : index
    %18 = vector.load %arg2[%c2_17, %c0_18, %c0_19] : memref<3x320x128xbf16, #tpu.memory_space<vmem>>, vector<1x320x128xbf16>
    %19 = vector.shape_cast %18 : vector<1x320x128xbf16> to vector<320x128xbf16>
    %cst_20 = arith.constant dense<0.000000e+00> : vector<8x128xf32>
    %20 = tpu.matmul %17, %19, %cst_20 {dimension_numbers = #tpu.dot_dimension_numbers<[1], [0], [0], [1], [0, 0, 1, 1], [], []>} : vector<8x320xbf16>, vector<320x128xbf16>, vector<8x128xf32> -> vector<8x128xf32>
    %21 = arith.addf %14, %20 : vector<8x128xf32>
    %c0_21 = arith.constant 0 : index
    %c0_22 = arith.constant 0 : index
    %22 = vector.load %arg3[%c0_21, %c0_22] : memref<1x128xf32, #tpu.memory_space<vmem>>, vector<1x128xf32>
    %23 = vector.broadcast %22 : vector<1x128xf32> to vector<8x128xf32>
    %24 = arith.addf %21, %23 : vector<8x128xf32>
    %c0_23 = arith.constant 0 : index
    %c0_24 = arith.constant 0 : index
    %25 = vector.load %arg4[%c0_23, %c0_24] : memref<128x128xf32, #tpu.memory_space<vmem>>, vector<128x128xf32>
    %cst_25 = arith.constant dense<0.000000e+00> : vector<8x128xf32>
    %26 = tpu.matmul %24, %25, %cst_25 {dimension_numbers = #tpu.dot_dimension_numbers<[1], [0], [0], [1], [0, 0, 1, 1], [], []>} : vector<8x128xf32>, vector<128x128xf32>, vector<8x128xf32> -> vector<8x128xf32>
    %cst_26 = arith.constant dense<0.000000e+00> : vector<128xf32>
    %27 = vector.multi_reduction <add>, %26, %cst_26 [0] : vector<8x128xf32> to vector<128xf32>
    %28 = vector.shape_cast %27 : vector<128xf32> to vector<1x128xf32>
    %29 = arith.mulf %24, %24 : vector<8x128xf32>
    %cst_27 = arith.constant dense<0.000000e+00> : vector<8x128xf32>
    %30 = tpu.matmul %29, %25, %cst_27 {dimension_numbers = #tpu.dot_dimension_numbers<[1], [0], [0], [1], [0, 0, 1, 1], [], []>} : vector<8x128xf32>, vector<128x128xf32>, vector<8x128xf32> -> vector<8x128xf32>
    %cst_28 = arith.constant dense<0.000000e+00> : vector<128xf32>
    %31 = vector.multi_reduction <add>, %30, %cst_28 [0] : vector<8x128xf32> to vector<128xf32>
    %32 = vector.shape_cast %31 : vector<128xf32> to vector<1x128xf32>
    %33 = arith.mulf %28, %28 : vector<1x128xf32>
    %34 = arith.subf %32, %33 : vector<1x128xf32>
    %cst_29 = arith.constant 0.000000e+00 : f32
    %35 = vector.broadcast %cst_29 : f32 to vector<1x128xf32>
    %36 = arith.maximumf %34, %35 : vector<1x128xf32>
    %37 = vector.broadcast %28 : vector<1x128xf32> to vector<8x128xf32>
    %38 = arith.subf %24, %37 : vector<8x128xf32>
    %cst_30 = arith.constant 9.99999974E-6 : f32
    %39 = vector.broadcast %cst_30 : f32 to vector<1x128xf32>
    %40 = arith.addf %36, %39 : vector<1x128xf32>
    %41 = math.rsqrt %40 : vector<1x128xf32>
    %42 = vector.broadcast %41 : vector<1x128xf32> to vector<8x128xf32>
    %43 = arith.mulf %38, %42 : vector<8x128xf32>
    %cst_31 = arith.constant 0.000000e+00 : f32
    %44 = vector.broadcast %cst_31 : f32 to vector<8x128xf32>
    %45 = arith.maximumf %43, %44 : vector<8x128xf32>
    %c0_32 = arith.constant 0 : index
    %c0_33 = arith.constant 0 : index
    %c0_34 = arith.constant 0 : index
    %46 = vector.load %arg5[%c0_32, %c0_33, %c0_34] : memref<1x8x128xf32, #tpu.memory_space<vmem>>, vector<1x8x128xf32>
    %47 = vector.shape_cast %46 : vector<1x8x128xf32> to vector<8x128xf32>
    %48 = vector.shape_cast %45 : vector<8x128xf32> to vector<1x8x128xf32>
    tpu.vector_store %arg5[%c0_32, %c0_33, %c0_34], %48 {strides = array<i32>} : memref<1x8x128xf32, #tpu.memory_space<vmem>>, vector<1x8x128xf32>,
    return
  }
  func.func @transform_0(%arg0: i32) -> (i32, i32, i32, i32) {
    %c0_i32 = arith.constant 0 : i32
    %c0_i32_0 = arith.constant 0 : i32
    %c0_i32_1 = arith.constant 0 : i32
    %c0_i32_2 = arith.constant 0 : i32
    return %arg0, %c0_i32, %c0_i32_0, %c0_i32_1 : i32, i32, i32, i32
  }
  func.func @transform_1(%arg0: i32) -> (i32, i32, i32) {
    %c0_i32 = arith.constant 0 : i32
    %c0_i32_0 = arith.constant 0 : i32
    %c0_i32_1 = arith.constant 0 : i32
    %c0_i32_2 = arith.constant 0 : i32
    return %c0_i32, %c0_i32_0, %c0_i32_1 : i32, i32, i32
  }
  func.func @transform_2(%arg0: i32) -> (i32, i32) {
    %c0_i32 = arith.constant 0 : i32
    %c0_i32_0 = arith.constant 0 : i32
    %c0_i32_1 = arith.constant 0 : i32
    return %c0_i32, %c0_i32_0 : i32, i32
  }
  func.func @transform_3(%arg0: i32) -> (i32, i32) {
    %c0_i32 = arith.constant 0 : i32
    %c0_i32_0 = arith.constant 0 : i32
    %c0_i32_1 = arith.constant 0 : i32
    return %c0_i32, %c0_i32_0 : i32, i32
  }
  func.func @transform_4(%arg0: i32) -> (i32, i32, i32) {
    %c0_i32 = arith.constant 0 : i32
    %c0_i32_0 = arith.constant 0 : i32
    %c0_i32_1 = arith.constant 0 : i32
    return %arg0, %c0_i32, %c0_i32_0 : i32, i32, i32
  }
}

module attributes {stable_mosaic.version = 11 : i64} {
  func.func @_dense_conv_kernel(%arg0: i32, %arg1: memref<1x1x18x288xf32, #tpu.memory_space<vmem>>, %arg2: memref<3x288x128xbf16, #tpu.memory_space<vmem>>, %arg3: memref<1x128xf32, #tpu.memory_space<vmem>>, %arg4: memref<128x128xf32, #tpu.memory_space<vmem>>, %arg5: memref<1x16x128xf32, #tpu.memory_space<vmem>>) attributes {dimension_semantics = [#tpu.dimension_semantics<parallel>], iteration_bounds = array<i64: 2>, scalar_prefetch = 0 : i64, scratch_operands = 0 : i64, tpu.core_type = #tpu.core_type<tc>, window_params = [{transform_indices = @transform_0, window_bounds = array<i64: 1, 1, 18, 288>}, {pipeline_mode = #tpu.pipeline_mode<synchronous>, transform_indices = @transform_1, window_bounds = array<i64: 3, 288, 128>}, {pipeline_mode = #tpu.pipeline_mode<synchronous>, transform_indices = @transform_2, window_bounds = array<i64: 1, 128>}, {pipeline_mode = #tpu.pipeline_mode<synchronous>, transform_indices = @transform_3, window_bounds = array<i64: 128, 128>}, {transform_indices = @transform_4, window_bounds = array<i64: 1, 16, 128>}]} {
    %cst = arith.constant 0.000000e+00 : f32
    %0 = vector.broadcast %cst : f32 to vector<16x128xf32>
    %c0 = arith.constant 0 : index
    %c0_0 = arith.constant 0 : index
    %c0_1 = arith.constant 0 : index
    %c0_2 = arith.constant 0 : index
    %1 = vector.load %arg1[%c0, %c0_0, %c0_1, %c0_2] : memref<1x1x18x288xf32, #tpu.memory_space<vmem>>, vector<1x1x16x288xf32>
    %2 = vector.shape_cast %1 : vector<1x1x16x288xf32> to vector<16x288xf32>
    %3 = arith.truncf %2 : vector<16x288xf32> to vector<16x288xbf16>
    %c0_3 = arith.constant 0 : index
    %c0_4 = arith.constant 0 : index
    %c0_5 = arith.constant 0 : index
    %4 = vector.load %arg2[%c0_3, %c0_4, %c0_5] : memref<3x288x128xbf16, #tpu.memory_space<vmem>>, vector<1x288x128xbf16>
    %5 = vector.shape_cast %4 : vector<1x288x128xbf16> to vector<288x128xbf16>
    %cst_6 = arith.constant dense<0.000000e+00> : vector<16x128xf32>
    %6 = tpu.matmul %3, %5, %cst_6 {dimension_numbers = #tpu.dot_dimension_numbers<[1], [0], [0], [1], [0, 0, 1, 1], [], []>} : vector<16x288xbf16>, vector<288x128xbf16>, vector<16x128xf32> -> vector<16x128xf32>
    %7 = arith.addf %0, %6 : vector<16x128xf32>
    %c0_7 = arith.constant 0 : index
    %c0_8 = arith.constant 0 : index
    %c1 = arith.constant 1 : index
    %c0_9 = arith.constant 0 : index
    %8 = vector.load %arg1[%c0_7, %c0_8, %c1, %c0_9] : memref<1x1x18x288xf32, #tpu.memory_space<vmem>>, vector<1x1x16x288xf32>
    %9 = vector.shape_cast %8 : vector<1x1x16x288xf32> to vector<16x288xf32>
    %10 = arith.truncf %9 : vector<16x288xf32> to vector<16x288xbf16>
    %c1_10 = arith.constant 1 : index
    %c0_11 = arith.constant 0 : index
    %c0_12 = arith.constant 0 : index
    %11 = vector.load %arg2[%c1_10, %c0_11, %c0_12] : memref<3x288x128xbf16, #tpu.memory_space<vmem>>, vector<1x288x128xbf16>
    %12 = vector.shape_cast %11 : vector<1x288x128xbf16> to vector<288x128xbf16>
    %cst_13 = arith.constant dense<0.000000e+00> : vector<16x128xf32>
    %13 = tpu.matmul %10, %12, %cst_13 {dimension_numbers = #tpu.dot_dimension_numbers<[1], [0], [0], [1], [0, 0, 1, 1], [], []>} : vector<16x288xbf16>, vector<288x128xbf16>, vector<16x128xf32> -> vector<16x128xf32>
    %14 = arith.addf %7, %13 : vector<16x128xf32>
    %c0_14 = arith.constant 0 : index
    %c0_15 = arith.constant 0 : index
    %c2 = arith.constant 2 : index
    %c0_16 = arith.constant 0 : index
    %15 = vector.load %arg1[%c0_14, %c0_15, %c2, %c0_16] : memref<1x1x18x288xf32, #tpu.memory_space<vmem>>, vector<1x1x16x288xf32>
    %16 = vector.shape_cast %15 : vector<1x1x16x288xf32> to vector<16x288xf32>
    %17 = arith.truncf %16 : vector<16x288xf32> to vector<16x288xbf16>
    %c2_17 = arith.constant 2 : index
    %c0_18 = arith.constant 0 : index
    %c0_19 = arith.constant 0 : index
    %18 = vector.load %arg2[%c2_17, %c0_18, %c0_19] : memref<3x288x128xbf16, #tpu.memory_space<vmem>>, vector<1x288x128xbf16>
    %19 = vector.shape_cast %18 : vector<1x288x128xbf16> to vector<288x128xbf16>
    %cst_20 = arith.constant dense<0.000000e+00> : vector<16x128xf32>
    %20 = tpu.matmul %17, %19, %cst_20 {dimension_numbers = #tpu.dot_dimension_numbers<[1], [0], [0], [1], [0, 0, 1, 1], [], []>} : vector<16x288xbf16>, vector<288x128xbf16>, vector<16x128xf32> -> vector<16x128xf32>
    %21 = arith.addf %14, %20 : vector<16x128xf32>
    %c0_21 = arith.constant 0 : index
    %c0_22 = arith.constant 0 : index
    %22 = vector.load %arg3[%c0_21, %c0_22] : memref<1x128xf32, #tpu.memory_space<vmem>>, vector<1x128xf32>
    %23 = vector.broadcast %22 : vector<1x128xf32> to vector<16x128xf32>
    %24 = arith.addf %21, %23 : vector<16x128xf32>
    %c0_23 = arith.constant 0 : index
    %c0_24 = arith.constant 0 : index
    %25 = vector.load %arg4[%c0_23, %c0_24] : memref<128x128xf32, #tpu.memory_space<vmem>>, vector<128x128xf32>
    %cst_25 = arith.constant dense<0.000000e+00> : vector<16x128xf32>
    %26 = tpu.matmul %24, %25, %cst_25 {dimension_numbers = #tpu.dot_dimension_numbers<[1], [0], [0], [1], [0, 0, 1, 1], [], []>} : vector<16x128xf32>, vector<128x128xf32>, vector<16x128xf32> -> vector<16x128xf32>
    %cst_26 = arith.constant dense<0.000000e+00> : vector<128xf32>
    %27 = vector.multi_reduction <add>, %26, %cst_26 [0] : vector<16x128xf32> to vector<128xf32>
    %28 = vector.shape_cast %27 : vector<128xf32> to vector<1x128xf32>
    %29 = arith.mulf %24, %24 : vector<16x128xf32>
    %cst_27 = arith.constant dense<0.000000e+00> : vector<16x128xf32>
    %30 = tpu.matmul %29, %25, %cst_27 {dimension_numbers = #tpu.dot_dimension_numbers<[1], [0], [0], [1], [0, 0, 1, 1], [], []>} : vector<16x128xf32>, vector<128x128xf32>, vector<16x128xf32> -> vector<16x128xf32>
    %cst_28 = arith.constant dense<0.000000e+00> : vector<128xf32>
    %31 = vector.multi_reduction <add>, %30, %cst_28 [0] : vector<16x128xf32> to vector<128xf32>
    %32 = vector.shape_cast %31 : vector<128xf32> to vector<1x128xf32>
    %33 = arith.mulf %28, %28 : vector<1x128xf32>
    %34 = arith.subf %32, %33 : vector<1x128xf32>
    %cst_29 = arith.constant 0.000000e+00 : f32
    %35 = vector.broadcast %cst_29 : f32 to vector<1x128xf32>
    %36 = arith.maximumf %34, %35 : vector<1x128xf32>
    %37 = vector.broadcast %28 : vector<1x128xf32> to vector<16x128xf32>
    %38 = arith.subf %24, %37 : vector<16x128xf32>
    %cst_30 = arith.constant 9.99999974E-6 : f32
    %39 = vector.broadcast %cst_30 : f32 to vector<1x128xf32>
    %40 = arith.addf %36, %39 : vector<1x128xf32>
    %41 = math.rsqrt %40 : vector<1x128xf32>
    %42 = vector.broadcast %41 : vector<1x128xf32> to vector<16x128xf32>
    %43 = arith.mulf %38, %42 : vector<16x128xf32>
    %cst_31 = arith.constant 0.000000e+00 : f32
    %44 = vector.broadcast %cst_31 : f32 to vector<16x128xf32>
    %45 = arith.maximumf %43, %44 : vector<16x128xf32>
    %c0_32 = arith.constant 0 : index
    %c0_33 = arith.constant 0 : index
    %c0_34 = arith.constant 0 : index
    %46 = vector.load %arg5[%c0_32, %c0_33, %c0_34] : memref<1x16x128xf32, #tpu.memory_space<vmem>>, vector<1x16x128xf32>
    %47 = vector.shape_cast %46 : vector<1x16x128xf32> to vector<16x128xf32>
    %48 = vector.shape_cast %45 : vector<16x128xf32> to vector<1x16x128xf32>
    tpu.vector_store %arg5[%c0_32, %c0_33, %c0_34], %48 {strides = array<i32>} : memref<1x16x128xf32, #tpu.memory_space<vmem>>, vector<1x16x128xf32>,
    return
  }
  func.func @transform_0(%arg0: i32) -> (i32, i32, i32, i32) {
    %c0_i32 = arith.constant 0 : i32
    %c0_i32_0 = arith.constant 0 : i32
    %c0_i32_1 = arith.constant 0 : i32
    %c0_i32_2 = arith.constant 0 : i32
    return %arg0, %c0_i32, %c0_i32_0, %c0_i32_1 : i32, i32, i32, i32
  }
  func.func @transform_1(%arg0: i32) -> (i32, i32, i32) {
    %c0_i32 = arith.constant 0 : i32
    %c0_i32_0 = arith.constant 0 : i32
    %c0_i32_1 = arith.constant 0 : i32
    %c0_i32_2 = arith.constant 0 : i32
    return %c0_i32, %c0_i32_0, %c0_i32_1 : i32, i32, i32
  }
  func.func @transform_2(%arg0: i32) -> (i32, i32) {
    %c0_i32 = arith.constant 0 : i32
    %c0_i32_0 = arith.constant 0 : i32
    %c0_i32_1 = arith.constant 0 : i32
    return %c0_i32, %c0_i32_0 : i32, i32
  }
  func.func @transform_3(%arg0: i32) -> (i32, i32) {
    %c0_i32 = arith.constant 0 : i32
    %c0_i32_0 = arith.constant 0 : i32
    %c0_i32_1 = arith.constant 0 : i32
    return %c0_i32, %c0_i32_0 : i32, i32
  }
  func.func @transform_4(%arg0: i32) -> (i32, i32, i32) {
    %c0_i32 = arith.constant 0 : i32
    %c0_i32_0 = arith.constant 0 : i32
    %c0_i32_1 = arith.constant 0 : i32
    return %arg0, %c0_i32, %c0_i32_0 : i32, i32, i32
  }
}

module attributes {stable_mosaic.version = 11 : i64} {
  func.func @_dense_conv_kernel(%arg0: i32, %arg1: memref<1x1x22x176xf32, #tpu.memory_space<vmem>>, %arg2: memref<7x176x128xbf16, #tpu.memory_space<vmem>>, %arg3: memref<1x128xf32, #tpu.memory_space<vmem>>, %arg4: memref<128x128xf32, #tpu.memory_space<vmem>>, %arg5: memref<1x16x128xf32, #tpu.memory_space<vmem>>) attributes {dimension_semantics = [#tpu.dimension_semantics<parallel>], iteration_bounds = array<i64: 2>, scalar_prefetch = 0 : i64, scratch_operands = 0 : i64, tpu.core_type = #tpu.core_type<tc>, window_params = [{transform_indices = @transform_0, window_bounds = array<i64: 1, 1, 22, 176>}, {pipeline_mode = #tpu.pipeline_mode<synchronous>, transform_indices = @transform_1, window_bounds = array<i64: 7, 176, 128>}, {pipeline_mode = #tpu.pipeline_mode<synchronous>, transform_indices = @transform_2, window_bounds = array<i64: 1, 128>}, {pipeline_mode = #tpu.pipeline_mode<synchronous>, transform_indices = @transform_3, window_bounds = array<i64: 128, 128>}, {transform_indices = @transform_4, window_bounds = array<i64: 1, 16, 128>}]} {
    %cst = arith.constant 0.000000e+00 : f32
    %0 = vector.broadcast %cst : f32 to vector<16x128xf32>
    %c0 = arith.constant 0 : index
    %c0_0 = arith.constant 0 : index
    %c0_1 = arith.constant 0 : index
    %c0_2 = arith.constant 0 : index
    %1 = vector.load %arg1[%c0, %c0_0, %c0_1, %c0_2] : memref<1x1x22x176xf32, #tpu.memory_space<vmem>>, vector<1x1x16x176xf32>
    %2 = vector.shape_cast %1 : vector<1x1x16x176xf32> to vector<16x176xf32>
    %3 = arith.truncf %2 : vector<16x176xf32> to vector<16x176xbf16>
    %c0_3 = arith.constant 0 : index
    %c0_4 = arith.constant 0 : index
    %c0_5 = arith.constant 0 : index
    %4 = vector.load %arg2[%c0_3, %c0_4, %c0_5] : memref<7x176x128xbf16, #tpu.memory_space<vmem>>, vector<1x176x128xbf16>
    %5 = vector.shape_cast %4 : vector<1x176x128xbf16> to vector<176x128xbf16>
    %cst_6 = arith.constant dense<0.000000e+00> : vector<16x128xf32>
    %6 = tpu.matmul %3, %5, %cst_6 {dimension_numbers = #tpu.dot_dimension_numbers<[1], [0], [0], [1], [0, 0, 1, 1], [], []>} : vector<16x176xbf16>, vector<176x128xbf16>, vector<16x128xf32> -> vector<16x128xf32>
    %7 = arith.addf %0, %6 : vector<16x128xf32>
    %c0_7 = arith.constant 0 : index
    %c0_8 = arith.constant 0 : index
    %c1 = arith.constant 1 : index
    %c0_9 = arith.constant 0 : index
    %8 = vector.load %arg1[%c0_7, %c0_8, %c1, %c0_9] : memref<1x1x22x176xf32, #tpu.memory_space<vmem>>, vector<1x1x16x176xf32>
    %9 = vector.shape_cast %8 : vector<1x1x16x176xf32> to vector<16x176xf32>
    %10 = arith.truncf %9 : vector<16x176xf32> to vector<16x176xbf16>
    %c1_10 = arith.constant 1 : index
    %c0_11 = arith.constant 0 : index
    %c0_12 = arith.constant 0 : index
    %11 = vector.load %arg2[%c1_10, %c0_11, %c0_12] : memref<7x176x128xbf16, #tpu.memory_space<vmem>>, vector<1x176x128xbf16>
    %12 = vector.shape_cast %11 : vector<1x176x128xbf16> to vector<176x128xbf16>
    %cst_13 = arith.constant dense<0.000000e+00> : vector<16x128xf32>
    %13 = tpu.matmul %10, %12, %cst_13 {dimension_numbers = #tpu.dot_dimension_numbers<[1], [0], [0], [1], [0, 0, 1, 1], [], []>} : vector<16x176xbf16>, vector<176x128xbf16>, vector<16x128xf32> -> vector<16x128xf32>
    %14 = arith.addf %7, %13 : vector<16x128xf32>
    %c0_14 = arith.constant 0 : index
    %c0_15 = arith.constant 0 : index
    %c2 = arith.constant 2 : index
    %c0_16 = arith.constant 0 : index
    %15 = vector.load %arg1[%c0_14, %c0_15, %c2, %c0_16] : memref<1x1x22x176xf32, #tpu.memory_space<vmem>>, vector<1x1x16x176xf32>
    %16 = vector.shape_cast %15 : vector<1x1x16x176xf32> to vector<16x176xf32>
    %17 = arith.truncf %16 : vector<16x176xf32> to vector<16x176xbf16>
    %c2_17 = arith.constant 2 : index
    %c0_18 = arith.constant 0 : index
    %c0_19 = arith.constant 0 : index
    %18 = vector.load %arg2[%c2_17, %c0_18, %c0_19] : memref<7x176x128xbf16, #tpu.memory_space<vmem>>, vector<1x176x128xbf16>
    %19 = vector.shape_cast %18 : vector<1x176x128xbf16> to vector<176x128xbf16>
    %cst_20 = arith.constant dense<0.000000e+00> : vector<16x128xf32>
    %20 = tpu.matmul %17, %19, %cst_20 {dimension_numbers = #tpu.dot_dimension_numbers<[1], [0], [0], [1], [0, 0, 1, 1], [], []>} : vector<16x176xbf16>, vector<176x128xbf16>, vector<16x128xf32> -> vector<16x128xf32>
    %21 = arith.addf %14, %20 : vector<16x128xf32>
    %c0_21 = arith.constant 0 : index
    %c0_22 = arith.constant 0 : index
    %c3 = arith.constant 3 : index
    %c0_23 = arith.constant 0 : index
    %22 = vector.load %arg1[%c0_21, %c0_22, %c3, %c0_23] : memref<1x1x22x176xf32, #tpu.memory_space<vmem>>, vector<1x1x16x176xf32>
    %23 = vector.shape_cast %22 : vector<1x1x16x176xf32> to vector<16x176xf32>
    %24 = arith.truncf %23 : vector<16x176xf32> to vector<16x176xbf16>
    %c3_24 = arith.constant 3 : index
    %c0_25 = arith.constant 0 : index
    %c0_26 = arith.constant 0 : index
    %25 = vector.load %arg2[%c3_24, %c0_25, %c0_26] : memref<7x176x128xbf16, #tpu.memory_space<vmem>>, vector<1x176x128xbf16>
    %26 = vector.shape_cast %25 : vector<1x176x128xbf16> to vector<176x128xbf16>
    %cst_27 = arith.constant dense<0.000000e+00> : vector<16x128xf32>
    %27 = tpu.matmul %24, %26, %cst_27 {dimension_numbers = #tpu.dot_dimension_numbers<[1], [0], [0], [1], [0, 0, 1, 1], [], []>} : vector<16x176xbf16>, vector<176x128xbf16>, vector<16x128xf32> -> vector<16x128xf32>
    %28 = arith.addf %21, %27 : vector<16x128xf32>
    %c0_28 = arith.constant 0 : index
    %c0_29 = arith.constant 0 : index
    %c4 = arith.constant 4 : index
    %c0_30 = arith.constant 0 : index
    %29 = vector.load %arg1[%c0_28, %c0_29, %c4, %c0_30] : memref<1x1x22x176xf32, #tpu.memory_space<vmem>>, vector<1x1x16x176xf32>
    %30 = vector.shape_cast %29 : vector<1x1x16x176xf32> to vector<16x176xf32>
    %31 = arith.truncf %30 : vector<16x176xf32> to vector<16x176xbf16>
    %c4_31 = arith.constant 4 : index
    %c0_32 = arith.constant 0 : index
    %c0_33 = arith.constant 0 : index
    %32 = vector.load %arg2[%c4_31, %c0_32, %c0_33] : memref<7x176x128xbf16, #tpu.memory_space<vmem>>, vector<1x176x128xbf16>
    %33 = vector.shape_cast %32 : vector<1x176x128xbf16> to vector<176x128xbf16>
    %cst_34 = arith.constant dense<0.000000e+00> : vector<16x128xf32>
    %34 = tpu.matmul %31, %33, %cst_34 {dimension_numbers = #tpu.dot_dimension_numbers<[1], [0], [0], [1], [0, 0, 1, 1], [], []>} : vector<16x176xbf16>, vector<176x128xbf16>, vector<16x128xf32> -> vector<16x128xf32>
    %35 = arith.addf %28, %34 : vector<16x128xf32>
    %c0_35 = arith.constant 0 : index
    %c0_36 = arith.constant 0 : index
    %c5 = arith.constant 5 : index
    %c0_37 = arith.constant 0 : index
    %36 = vector.load %arg1[%c0_35, %c0_36, %c5, %c0_37] : memref<1x1x22x176xf32, #tpu.memory_space<vmem>>, vector<1x1x16x176xf32>
    %37 = vector.shape_cast %36 : vector<1x1x16x176xf32> to vector<16x176xf32>
    %38 = arith.truncf %37 : vector<16x176xf32> to vector<16x176xbf16>
    %c5_38 = arith.constant 5 : index
    %c0_39 = arith.constant 0 : index
    %c0_40 = arith.constant 0 : index
    %39 = vector.load %arg2[%c5_38, %c0_39, %c0_40] : memref<7x176x128xbf16, #tpu.memory_space<vmem>>, vector<1x176x128xbf16>
    %40 = vector.shape_cast %39 : vector<1x176x128xbf16> to vector<176x128xbf16>
    %cst_41 = arith.constant dense<0.000000e+00> : vector<16x128xf32>
    %41 = tpu.matmul %38, %40, %cst_41 {dimension_numbers = #tpu.dot_dimension_numbers<[1], [0], [0], [1], [0, 0, 1, 1], [], []>} : vector<16x176xbf16>, vector<176x128xbf16>, vector<16x128xf32> -> vector<16x128xf32>
    %42 = arith.addf %35, %41 : vector<16x128xf32>
    %c0_42 = arith.constant 0 : index
    %c0_43 = arith.constant 0 : index
    %c6 = arith.constant 6 : index
    %c0_44 = arith.constant 0 : index
    %43 = vector.load %arg1[%c0_42, %c0_43, %c6, %c0_44] : memref<1x1x22x176xf32, #tpu.memory_space<vmem>>, vector<1x1x16x176xf32>
    %44 = vector.shape_cast %43 : vector<1x1x16x176xf32> to vector<16x176xf32>
    %45 = arith.truncf %44 : vector<16x176xf32> to vector<16x176xbf16>
    %c6_45 = arith.constant 6 : index
    %c0_46 = arith.constant 0 : index
    %c0_47 = arith.constant 0 : index
    %46 = vector.load %arg2[%c6_45, %c0_46, %c0_47] : memref<7x176x128xbf16, #tpu.memory_space<vmem>>, vector<1x176x128xbf16>
    %47 = vector.shape_cast %46 : vector<1x176x128xbf16> to vector<176x128xbf16>
    %cst_48 = arith.constant dense<0.000000e+00> : vector<16x128xf32>
    %48 = tpu.matmul %45, %47, %cst_48 {dimension_numbers = #tpu.dot_dimension_numbers<[1], [0], [0], [1], [0, 0, 1, 1], [], []>} : vector<16x176xbf16>, vector<176x128xbf16>, vector<16x128xf32> -> vector<16x128xf32>
    %49 = arith.addf %42, %48 : vector<16x128xf32>
    %c0_49 = arith.constant 0 : index
    %c0_50 = arith.constant 0 : index
    %50 = vector.load %arg3[%c0_49, %c0_50] : memref<1x128xf32, #tpu.memory_space<vmem>>, vector<1x128xf32>
    %51 = vector.broadcast %50 : vector<1x128xf32> to vector<16x128xf32>
    %52 = arith.addf %49, %51 : vector<16x128xf32>
    %53 = math.tanh %52 : vector<16x128xf32>
    %c0_51 = arith.constant 0 : index
    %c0_52 = arith.constant 0 : index
    %c0_53 = arith.constant 0 : index
    %54 = vector.load %arg5[%c0_51, %c0_52, %c0_53] : memref<1x16x128xf32, #tpu.memory_space<vmem>>, vector<1x16x128xf32>
    %55 = vector.shape_cast %54 : vector<1x16x128xf32> to vector<16x128xf32>
    %56 = vector.shape_cast %53 : vector<16x128xf32> to vector<1x16x128xf32>
    tpu.vector_store %arg5[%c0_51, %c0_52, %c0_53], %56 {strides = array<i32>} : memref<1x16x128xf32, #tpu.memory_space<vmem>>, vector<1x16x128xf32>,
    return
  }
  func.func @transform_0(%arg0: i32) -> (i32, i32, i32, i32) {
    %c0_i32 = arith.constant 0 : i32
    %c0_i32_0 = arith.constant 0 : i32
    %c0_i32_1 = arith.constant 0 : i32
    %c0_i32_2 = arith.constant 0 : i32
    return %arg0, %c0_i32, %c0_i32_0, %c0_i32_1 : i32, i32, i32, i32
  }
  func.func @transform_1(%arg0: i32) -> (i32, i32, i32) {
    %c0_i32 = arith.constant 0 : i32
    %c0_i32_0 = arith.constant 0 : i32
    %c0_i32_1 = arith.constant 0 : i32
    %c0_i32_2 = arith.constant 0 : i32
    return %c0_i32, %c0_i32_0, %c0_i32_1 : i32, i32, i32
  }
  func.func @transform_2(%arg0: i32) -> (i32, i32) {
    %c0_i32 = arith.constant 0 : i32
    %c0_i32_0 = arith.constant 0 : i32
    %c0_i32_1 = arith.constant 0 : i32
    return %c0_i32, %c0_i32_0 : i32, i32
  }
  func.func @transform_3(%arg0: i32) -> (i32, i32) {
    %c0_i32 = arith.constant 0 : i32
    %c0_i32_0 = arith.constant 0 : i32
    %c0_i32_1 = arith.constant 0 : i32
    return %c0_i32, %c0_i32_0 : i32, i32
  }
  func.func @transform_4(%arg0: i32) -> (i32, i32, i32) {
    %c0_i32 = arith.constant 0 : i32
    %c0_i32_0 = arith.constant 0 : i32
    %c0_i32_1 = arith.constant 0 : i32
    return %arg0, %c0_i32, %c0_i32_0 : i32, i32, i32
  }
}

</mosaic_0001>

<llo_original>
// kernel: generator_forward.8
$region0: #{generator_forward.8}
  #allocation0 [shape = 'u32[]', space=smem, size = 0x4, offset = 0x4, fixed_abs, tag = 'smem constant byte address 0x4 - core index']
  #allocation1 [shape = 'u32[144,128]{1,0:T(1,128)}', space=vmem, size = 0x12000, scoped, tag = 'internal scratch']
  %s0 = inlined_call_operand.vmem [shape: f32[2,2,9,144], index: 0, kind: input, shape index: {}]
  %s1 = inlined_call_operand.vmem [shape: bf16[3,144,128], index: 1, kind: input, shape index: {}]
  %s2 = inlined_call_operand.vmem [shape: f32[1,128], index: 2, kind: input, shape index: {}]
  %s3 = inlined_call_operand.vmem [shape: f32[128,128], index: 3, kind: input, shape index: {}]
  %s4 = inlined_call_operand.vmem [shape: f32[2,8,128], index: 4, kind: output, shape index: {}]
  %s5 = sld [smem:[#allocation0]]
  $region49: #{generator_forward.8} parent=0
    _
  %s7 = ssub.s32 1, %s5
  %s8 = scalar_select 0, %s7, %s5
  loop: start=0, step=1, limit=4
  $region2: #{generator_forward.8} parent=0 // loop_pre_header
    _
  $region3: #{generator_forward.8} parent=0 // loop_header
    %s10 = sphi 0, %s14
    %p11 = scmp.ge.s32.totalorder %s10, 4
    %s20 = sphi 0, %s22
    %s23 = sphi 0, %s20
    %s24 = sphi 0, %s23
    %s40 = sphi 0, %s24
    %s44 = sphi 0, %s44
    %s46 = sphi 0, %s44
    %s47 = sphi 0, %s46
    %s61 = sphi 0, %s47
    %s65 = sphi 0, %s65
    %s67 = sphi 0, %s65
    %s68 = sphi 0, %s67
    %s82 = sphi 0, %s68
    %s86 = sphi 0, %s86
    %s88 = sphi 0, %s86
    %s89 = sphi 0, %s88
    %s103 = sphi 0, %s89
    %s109 = sphi 0, %s111
    %s112 = sphi 0, %s109
    %s113 = sphi 0, %s112
    %s129 = sphi 0, %s113
  $region4: #{generator_forward.8} parent=0 // loop_header_branch
    %13 = sbr.rel (%p11) target = $region8
  $region5: #{generator_forward.8} parent=0 // loop_body
    %s15 = ssub.s32 %s10, 1
    %s16 = ssub.s32 %s10, 2
    %s17 = sadd.s32 %s10, 1
    %s18 = ssub.s32 %s10, %s17
    %p19 = scmp.eq.s32.totalorder %s18, 0
    %s21 = sadd.s32 %s20, 1
    %s22 = scalar_select %p19, %s20, %s21
    %p25 = pneg %p19
    %p26 = scmp.eq.s32.totalorder %s10, 1
    %p27 = por %p25, %p26
    %p28 = scmp.ne.s32.totalorder %s20, %s23
    %p29 = scmp.eq.s32.totalorder %s10, 0
    %p30 = por %p28, %p29
    %p31 = scmp.ne.s32.totalorder %s20, %s23
    %p32 = scmp.eq.s32.totalorder %s15, 1
    %p33 = por %p31, %p32
    %p34 = scmp.ne.s32.totalorder %s23, %s24
    %p35 = scmp.eq.s32.totalorder %s15, 0
    %p36 = por %p34, %p35
    %p37 = scmp.ne.s32.totalorder %s23, %s24
    %p38 = scmp.eq.s32.totalorder %s16, 1
    %p39 = por %p37, %p38
    %p41 = scmp.ne.s32.totalorder %s24, %s40
    %p42 = scmp.eq.s32.totalorder %s16, 0
    %p43 = por %p41, %p42
    %s45 = sadd.s32 %s44, 1
    %p48 = scmp.eq.s32.totalorder %s10, 1
    %p49 = scmp.ne.s32.totalorder %s44, %s46
    %p50 = scmp.eq.s32.totalorder %s10, 0
    %p51 = por %p49, %p50
    %p52 = scmp.ne.s32.totalorder %s44, %s46
    %p53 = scmp.eq.s32.totalorder %s15, 1
    %p54 = por %p52, %p53
    %p55 = scmp.ne.s32.totalorder %s46, %s47
    %p56 = scmp.eq.s32.totalorder %s15, 0
    %p57 = por %p55, %p56
    %p58 = scmp.ne.s32.totalorder %s46, %s47
    %p59 = scmp.eq.s32.totalorder %s16, 1
    %p60 = por %p58, %p59
    %p62 = scmp.ne.s32.totalorder %s47, %s61
    %p63 = scmp.eq.s32.totalorder %s16, 0
    %p64 = por %p62, %p63
    %s66 = sadd.s32 %s65, 1
    %p69 = scmp.eq.s32.totalorder %s10, 1
    %p70 = scmp.ne.s32.totalorder %s65, %s67
    %p71 = scmp.eq.s32.totalorder %s10, 0
    %p72 = por %p70, %p71
    %p73 = scmp.ne.s32.totalorder %s65, %s67
    %p74 = scmp.eq.s32.totalorder %s15, 1
    %p75 = por %p73, %p74
    %p76 = scmp.ne.s32.totalorder %s67, %s68
    %p77 = scmp.eq.s32.totalorder %s15, 0
    %p78 = por %p76, %p77
    %p79 = scmp.ne.s32.totalorder %s67, %s68
    %p80 = scmp.eq.s32.totalorder %s16, 1
    %p81 = por %p79, %p80
    %p83 = scmp.ne.s32.totalorder %s68, %s82
    %p84 = scmp.eq.s32.totalorder %s16, 0
    %p85 = por %p83, %p84
    %s87 = sadd.s32 %s86, 1
    %p90 = scmp.eq.s32.totalorder %s10, 1
    %p91 = scmp.ne.s32.totalorder %s86, %s88
    %p92 = scmp.eq.s32.totalorder %s10, 0
    %p93 = por %p91, %p92
    %p94 = scmp.ne.s32.totalorder %s86, %s88
    %p95 = scmp.eq.s32.totalorder %s15, 1
    %p96 = por %p94, %p95
    %p97 = scmp.ne.s32.totalorder %s88, %s89
    %p98 = scmp.eq.s32.totalorder %s15, 0
    %p99 = por %p97, %p98
    %p100 = scmp.ne.s32.totalorder %s88, %s89
    %p101 = scmp.eq.s32.totalorder %s16, 1
    %p102 = por %p100, %p101
    %p104 = scmp.ne.s32.totalorder %s89, %s103
    %p105 = scmp.eq.s32.totalorder %s16, 0
    %p106 = por %p104, %p105
    %s107 = ssub.s32 %s10, %s17
    %p108 = scmp.eq.s32.totalorder %s107, 0
    %s110 = sadd.s32 %s109, 1
    %s111 = scalar_select %p108, %s109, %s110
    %p114 = pneg %p108
    %p115 = scmp.eq.s32.totalorder %s10, 1
    %p116 = por %p114, %p115
    %p117 = scmp.ne.s32.totalorder %s109, %s112
    %p118 = scmp.eq.s32.totalorder %s10, 0
    %p119 = por %p117, %p118
    %p120 = scmp.ne.s32.totalorder %s109, %s112
    %p121 = scmp.eq.s32.totalorder %s15, 1
    %p122 = por %p120, %p121
    %p123 = scmp.ne.s32.totalorder %s112, %s113
    %p124 = scmp.eq.s32.totalorder %s15, 0
    %p125 = por %p123, %p124
    %p126 = scmp.ne.s32.totalorder %s112, %s113
    %p127 = scmp.eq.s32.totalorder %s16, 1
    %p128 = por %p126, %p127
    %p130 = scmp.ne.s32.totalorder %s113, %s129
    %p131 = scmp.eq.s32.totalorder %s16, 0
    %p132 = por %p130, %p131
    %p133 = scmp.le.s32.totalorder 1, %s10
    %p134 = scmp.lt.s32.totalorder %s10, 3
    %p135 = pnand %p133, %p134
    %p136 = pneg %p135
    // Predicated region
    $region9: #{generator_forward.8} parent=5 // pred_check
      _
    $region10: #{generator_forward.8} parent=5 // pred_check_branch
      %138 = sbr.rel (%p135) target = $region12
    $region11: #{generator_forward.8} parent=5 // pred_region
      %s139 = ssub.s32 %s10, 1
      // Predicated region
      $region13: #{generator_forward.8} parent=11 // pred_check
        %p140 = pneg %p57
      $region14: #{generator_forward.8} parent=11 // pred_check_branch
        %142 = sbr.rel (%p140) target = $region16
      $region15: #{generator_forward.8} parent=11 // pred_region
        _
      $region16: #{generator_forward.8} parent=11 // pred_fallthru
        _
      // Predicated region
      $region17: #{generator_forward.8} parent=11 // pred_check
        %p143 = pneg %p78
      $region18: #{generator_forward.8} parent=11 // pred_check_branch
        %145 = sbr.rel (%p143) target = $region20
      $region19: #{generator_forward.8} parent=11 // pred_region
        _
      $region20: #{generator_forward.8} parent=11 // pred_fallthru
        _
      // Predicated region
      $region21: #{generator_forward.8} parent=11 // pred_check
        %p146 = pneg %p99
      $region22: #{generator_forward.8} parent=11 // pred_check_branch
        %148 = sbr.rel (%p146) target = $region24
      $region23: #{generator_forward.8} parent=11 // pred_region
        _
      $region24: #{generator_forward.8} parent=11 // pred_fallthru
        _
    $region12: #{generator_forward.8} parent=5 // pred_fallthru
      _
    %p149 = scmp.lt.s32.totalorder %s10, 2
    // Predicated region
    $region25: #{generator_forward.8} parent=5 // pred_check
      %p150 = pneg %p149
    $region26: #{generator_forward.8} parent=5 // pred_check_branch
      %152 = sbr.rel (%p150) target = $region28
    $region27: #{generator_forward.8} parent=5 // pred_region
      // Predicated region
      $region29: #{generator_forward.8} parent=27 // pred_check
        %p153 = pneg %p30
      $region30: #{generator_forward.8} parent=27 // pred_check_branch
        %155 = sbr.rel (%p153) target = $region32
      $region31: #{generator_forward.8} parent=27 // pred_region
        %p156 = scmp.lt.s32.totalorder %s10, 1
        %s157 = scalar_select %p156, %s10, 1
        %s158 = smul.addr %s157, 8
        %s159 = smul.addr %s158, 8
        %s160 = scalar_lea.vmem %s0, %s159
      $region32: #{generator_forward.8} parent=27 // pred_fallthru
        _
    $region28: #{generator_forward.8} parent=5 // pred_fallthru
      _
    %p161 = scmp.le.s32.totalorder 1, %s10
    %p162 = scmp.lt.s32.totalorder %s10, 3
    %p163 = pnand %p161, %p162
    %p164 = pneg %p163
    // Predicated region
    $region33: #{generator_forward.8} parent=5 // pred_check
      _
    $region34: #{generator_forward.8} parent=5 // pred_check_branch
      %166 = sbr.rel (%p163) target = $region36
    $region35: #{generator_forward.8} parent=5 // pred_region
      %s167 = ssub.s32 %s10, 1
      %p168 = scmp.lt.s32.totalorder %s15, 1
      %s169 = scalar_select %p168, %s15, 1
      %s170 = smul.addr %s169, 8
      %s171 = smul.addr %s170, 8
      %s172 = scalar_lea.vmem %s0, %s171
      %p173 = pneg %p36
      %p174 = pneg %p33
      %p175 = pneg %p57
      %p176 = pneg %p54
      %p177 = pneg %p78
      %p178 = pneg %p75
      %p179 = pneg %p99
      %p180 = pneg %p96
      %p181 = pneg %p125
      %p182 = pneg %p122
      %p183 = scmp.lt.s32.totalorder %s15, 1
      %s184 = scalar_select %p183, %s15, 1
      %s185 = smul.addr %s184, 8
      %s186 = scalar_lea.vmem %s4, %s185
      %p187 = scmp.lt.s32.totalorder %s15, 1
      %s188 = scalar_select %p187, %s15, 1
      %s189 = smul.addr %s188, 8
      %s190 = smul.addr %s189, 8
      %s191 = scalar_lea.vmem %s0, %s190
      %p192 = scmp.lt.s32.totalorder %s15, 1
      %s193 = scalar_select %p192, %s15, 1
      %s194 = smul.addr %s193, 8
      %s195 = scalar_lea.vmem %s4, %s194
      %v197 = vld [vmem:[%s191] sm:$0xff]
      %v198 = vld [vmem:[%s191 + $0x8] sm:$0xff]
      %v199 = vpack.c.bf16 %v197, %v197
      %v200 = vpack.c.bf16 %v198, %v198
      %v201 = vld [vmem:[%s1] sm:$0xf]
      %v202 = vld [vmem:[%s1 + $0x4] sm:$0xf]
      %v203 = vld [vmem:[%s1 + $0x8] sm:$0xf]
      %v204 = vld [vmem:[%s1 + $0xc] sm:$0xf]
      %v205 = vld [vmem:[%s1 + $0x10] sm:$0xf]
      %v206 = vld [vmem:[%s1 + $0x14] sm:$0xf]
      %v207 = vld [vmem:[%s1 + $0x18] sm:$0xf]
      %v208 = vld [vmem:[%s1 + $0x1c] sm:$0xf]
      %v209 = vld [vmem:[%s1 + $0x20] sm:$0xf]
      %v210 = vld [vmem:[%s1 + $0x24] sm:$0xf]
      %v211 = vld [vmem:[%s1 + $0x28] sm:$0xf]
      %v212 = vld [vmem:[%s1 + $0x2c] sm:$0xf]
      %v213 = vld [vmem:[%s1 + $0x30] sm:$0xf]
      %v214 = vld [vmem:[%s1 + $0x34] sm:$0xf]
      %v215 = vld [vmem:[%s1 + $0x38] sm:$0xf]
      %v216 = vld [vmem:[%s1 + $0x3c] sm:$0xf]
      %v217 = vld [vmem:[%s1 + $0x40] sm:$0xf]
      %v218 = vld [vmem:[%s1 + $0x44] sm:$0xf]
      %s219 = scalar_lea.vmem %s191, 32
      %v220 = vld [vmem:[%s219] sm:$0xff]
      %v221 = vld [vmem:[%s219 + $0x8] sm:$0xff]
      %v222 = vpack.c.bf16 %v220, %v220
      %v223 = vpack.c.bf16 %v221, %v221
      %s224 = scalar_lea.vmem %s1, 72
      %v225 = vld [vmem:[%s224] sm:$0xf]
      %v226 = vld [vmem:[%s224 + $0x4] sm:$0xf]
      %v227 = vld [vmem:[%s224 + $0x8] sm:$0xf]
      %v228 = vld [vmem:[%s224 + $0xc] sm:$0xf]
      %v229 = vld [vmem:[%s224 + $0x10] sm:$0xf]
      %v230 = vld [vmem:[%s224 + $0x14] sm:$0xf]
      %v231 = vld [vmem:[%s224 + $0x18] sm:$0xf]
      %v232 = vld [vmem:[%s224 + $0x1c] sm:$0xf]
      %v233 = vld [vmem:[%s224 + $0x20] sm:$0xf]
      %v234 = vld [vmem:[%s224 + $0x24] sm:$0xf]
      %v235 = vld [vmem:[%s224 + $0x28] sm:$0xf]
      %v236 = vld [vmem:[%s224 + $0x2c] sm:$0xf]
      %v237 = vld [vmem:[%s224 + $0x30] sm:$0xf]
      %v238 = vld [vmem:[%s224 + $0x34] sm:$0xf]
      %v239 = vld [vmem:[%s224 + $0x38] sm:$0xf]
      %v240 = vld [vmem:[%s224 + $0x3c] sm:$0xf]
      %v241 = vld [vmem:[%s224 + $0x40] sm:$0xf]
      %v242 = vld [vmem:[%s224 + $0x44] sm:$0xf]
      %v261 = vunpack.c.l.b16 %v225
      %v262 = vunpack.c.l.b16 %v226
      %v263 = vunpack.c.l.b16 %v227
      %v264 = vunpack.c.l.b16 %v228
      %v265 = vunpack.c.l.b16 %v229
      %v266 = vunpack.c.l.b16 %v230
      %v267 = vunpack.c.l.b16 %v231
      %v268 = vunpack.c.l.b16 %v232
      %v269 = vunpack.c.l.b16 %v233
      %v270 = vunpack.c.l.b16 %v234
      %v271 = vunpack.c.l.b16 %v235
      %v272 = vunpack.c.l.b16 %v236
      %v273 = vunpack.c.l.b16 %v237
      %v274 = vunpack.c.l.b16 %v238
      %v275 = vunpack.c.l.b16 %v239
      %v276 = vunpack.c.l.b16 %v240
      %v277 = vunpack.c.l.b16 %v241
      %v278 = vunpack.c.l.b16 %v242
      %v279 = vpack.c.b16 %v262, %v261
      %v280 = vpack.c.b16 %v264, %v263
      %v281 = vpack.c.b16 %v266, %v265
      %v282 = vpack.c.b16 %v268, %v267
      %v283 = vpack.c.b16 %v270, %v269
      %v284 = vpack.c.b16 %v272, %v271
      %v285 = vpack.c.b16 %v274, %v273
      %v286 = vpack.c.b16 %v276, %v275
      %v287 = vpack.c.b16 %v278, %v277
      %vm297 = vcmask 130048
      %v299 = vsel %vm297, %v223, 0
      %301 = vmatprep.subr.bf16.mxu0 0
      %302 = vmatpush1.bf16.msra.mxu0 %v279
      %303 = vmatprep.subr.bf16.mxu0 0
      %304 = vmatpush1.bf16.msra.mxu0 %v280
      %305 = vmatprep.subr.bf16.mxu0 0
      %306 = vmatpush1.bf16.msra.mxu0 %v281
      %307 = vmatprep.subr.bf16.mxu0 0
      %308 = vmatpush1.bf16.msra.mxu0 %v282
      %309 = vmatprep.subr.bf16.mxu0 0
      %310 = vmatpush1.bf16.msra.mxu0 %v283
      %311 = vmatprep.subr.bf16.mxu0 0
      %312 = vmatpush1.bf16.msra.mxu0 %v284
      %313 = vmatprep.subr.bf16.mxu0 0
      %314 = vmatpush1.bf16.msra.mxu0 %v285
      %315 = vmatprep.subr.bf16.mxu0 0
      %316 = vmatpush1.bf16.msra.mxu0 %v286
      %317 = vmatprep.subr.bf16.mxu0 0
      %318 = vmatpush1.bf16.msra.mxu0 %v287
      %319 = vmatprep.subr.bf16.mxu0 0
      %320 = vmatpush1.bf16.msra.mxu0 0
      %321 = vmatprep.subr.bf16.mxu0 0
      %322 = vmatpush1.bf16.msra.mxu0 0
      %323 = vmatprep.subr.bf16.mxu0 0
      %324 = vmatpush1.bf16.msra.mxu0 0
      %325 = vmatprep.subr.bf16.mxu0 0
      %326 = vmatpush1.bf16.msra.mxu0 0
      %327 = vmatprep.subr.bf16.mxu0 0
      %328 = vmatpush1.bf16.msra.mxu0 0
      %329 = vmatprep.subr.bf16.mxu0 0
      %330 = vmatpush1.bf16.msra.mxu0 0
      %331 = vmatprep.subr.bf16.mxu0 0
      %332 = vmatpush1.bf16.msra.mxu0 0
      %333 = vmatprep.mubr.bf16.mxu0 %v299
      %334 = vmatmul.mubr.bf16.gmra.mrb[0].mxu0 %v222
      %v335 = vpop.f32.mrb[0].mxu0
      %v336 = vadd.f32 0.0, %v335
      %v337 = vpop.f32.mrb[0].mxu0
      %v338 = vpop.f32.mrb[0].mxu0
      %v339 = vpop.f32.mrb[0].mxu0
      %340 = vdwg.mxu0
      %v359 = vunpack.c.l.b16 %v201
      %v360 = vunpack.c.l.b16 %v202
      %v361 = vunpack.c.l.b16 %v203
      %v362 = vunpack.c.l.b16 %v204
      %v363 = vunpack.c.l.b16 %v205
      %v364 = vunpack.c.l.b16 %v206
      %v365 = vunpack.c.l.b16 %v207
      %v366 = vunpack.c.l.b16 %v208
      %v367 = vunpack.c.l.b16 %v209
      %v368 = vunpack.c.l.b16 %v210
      %v369 = vunpack.c.l.b16 %v211
      %v370 = vunpack.c.l.b16 %v212
      %v371 = vunpack.c.l.b16 %v213
      %v372 = vunpack.c.l.b16 %v214
      %v373 = vunpack.c.l.b16 %v215
      %v374 = vunpack.c.l.b16 %v216
      %v375 = vunpack.c.l.b16 %v217
      %v376 = vunpack.c.l.b16 %v218
      %v377 = vpack.c.b16 %v360, %v359
      %v378 = vpack.c.b16 %v362, %v361
      %v379 = vpack.c.b16 %v364, %v363
      %v380 = vpack.c.b16 %v366, %v365
      %v381 = vpack.c.b16 %v368, %v367
      %v382 = vpack.c.b16 %v370, %v369
      %v383 = vpack.c.b16 %v372, %v371
      %v384 = vpack.c.b16 %v374, %v373
      %v385 = vpack.c.b16 %v376, %v375
      %v396 = vsel %vm297, %v200, 0
      %398 = vmatprep.subr.bf16.mxu0 0
      %399 = vmatpush1.bf16.msra.mxu0 %v377
      %400 = vmatprep.subr.bf16.mxu0 0
      %401 = vmatpush1.bf16.msra.mxu0 %v378
      %402 = vmatprep.subr.bf16.mxu0 0
      %403 = vmatpush1.bf16.msra.mxu0 %v379
      %404 = vmatprep.subr.bf16.mxu0 0
      %405 = vmatpush1.bf16.msra.mxu0 %v380
      %406 = vmatprep.subr.bf16.mxu0 0
      %407 = vmatpush1.bf16.msra.mxu0 %v381
      %408 = vmatprep.subr.bf16.mxu0 0
      %409 = vmatpush1.bf16.msra.mxu0 %v382
      %410 = vmatprep.subr.bf16.mxu0 0
      %411 = vmatpush1.bf16.msra.mxu0 %v383
      %412 = vmatprep.subr.bf16.mxu0 0
      %413 = vmatpush1.bf16.msra.mxu0 %v384
      %414 = vmatprep.subr.bf16.mxu0 0
      %415 = vmatpush1.bf16.msra.mxu0 %v385
      %416 = vmatprep.subr.bf16.mxu0 0
      %417 = vmatpush1.bf16.msra.mxu0 0
      %418 = vmatprep.subr.bf16.mxu0 0
      %419 = vmatpush1.bf16.msra.mxu0 0
      %420 = vmatprep.subr.bf16.mxu0 0
      %421 = vmatpush1.bf16.msra.mxu0 0
      %422 = vmatprep.subr.bf16.mxu0 0
      %423 = vmatpush1.bf16.msra.mxu0 0
      %424 = vmatprep.subr.bf16.mxu0 0
      %425 = vmatpush1.bf16.msra.mxu0 0
      %426 = vmatprep.subr.bf16.mxu0 0
      %427 = vmatpush1.bf16.msra.mxu0 0
      %428 = vmatprep.subr.bf16.mxu0 0
      %429 = vmatpush1.bf16.msra.mxu0 0
      %430 = vmatprep.mubr.bf16.mxu0 %v396
      %431 = vmatmul.mubr.bf16.gmra.mrb[0].mxu0 %v199
      %v432 = vpop.f32.mrb[0].mxu0
      %v433 = vadd.f32 %v336, %v432
      %v434 = vpop.f32.mrb[0].mxu0
      %v435 = vpop.f32.mrb[0].mxu0
      %v436 = vpop.f32.mrb[0].mxu0
      %437 = vdwg.mxu0
      %v438 = vld [vmem:[%s191] sm:$0xfe]
      %v439 = vld [vmem:[%s191 + $0x8] sm:$0xfe]
      %v440 = vld [vmem:[%s191 + $0x10] sm:$0x1]
      %v441 = vld [vmem:[%s191 + $0x18] sm:$0x1]
      %v442 = vpack.c.bf16 %v440, %v438
      %v443 = vpack.c.bf16 %v441, %v439
      %s444 = scalar_lea.vmem %s1, 144
      %v445 = vld [vmem:[%s444] sm:$0xf]
      %v446 = vld [vmem:[%s444 + $0x4] sm:$0xf]
      %v447 = vld [vmem:[%s444 + $0x8] sm:$0xf]
      %v448 = vld [vmem:[%s444 + $0xc] sm:$0xf]
      %v449 = vld [vmem:[%s444 + $0x10] sm:$0xf]
      %v450 = vld [vmem:[%s444 + $0x14] sm:$0xf]
      %v451 = vld [vmem:[%s444 + $0x18] sm:$0xf]
      %v452 = vld [vmem:[%s444 + $0x1c] sm:$0xf]
      %v453 = vld [vmem:[%s444 + $0x20] sm:$0xf]
      %v454 = vld [vmem:[%s444 + $0x24] sm:$0xf]
      %v455 = vld [vmem:[%s444 + $0x28] sm:$0xf]
      %v456 = vld [vmem:[%s444 + $0x2c] sm:$0xf]
      %v457 = vld [vmem:[%s444 + $0x30] sm:$0xf]
      %v458 = vld [vmem:[%s444 + $0x34] sm:$0xf]
      %v459 = vld [vmem:[%s444 + $0x38] sm:$0xf]
      %v460 = vld [vmem:[%s444 + $0x3c] sm:$0xf]
      %v461 = vld [vmem:[%s444 + $0x40] sm:$0xf]
      %v462 = vld [vmem:[%s444 + $0x44] sm:$0xf]
      %v464 = vshrl.u32 %v442, 16
      %v466 = vshll.u32 %v442, 16
      %v468 = vrot.slane %v466, 1
      %v469 = vor.u32 %v464, %v468
      %v471 = vshrl.u32 %v443, 16
      %v473 = vshll.u32 %v443, 16
      %v475 = vrot.slane %v473, 1
      %v476 = vor.u32 %v471, %v475
      %v496 = vunpack.c.l.b16 %v445
      %v497 = vunpack.c.l.b16 %v446
      %v498 = vunpack.c.l.b16 %v447
      %v499 = vunpack.c.l.b16 %v448
      %v500 = vunpack.c.l.b16 %v449
      %v501 = vunpack.c.l.b16 %v450
      %v502 = vunpack.c.l.b16 %v451
      %v503 = vunpack.c.l.b16 %v452
      %v504 = vunpack.c.l.b16 %v453
      %v505 = vunpack.c.l.b16 %v454
      %v506 = vunpack.c.l.b16 %v455
      %v507 = vunpack.c.l.b16 %v456
      %v508 = vunpack.c.l.b16 %v457
      %v509 = vunpack.c.l.b16 %v458
      %v510 = vunpack.c.l.b16 %v459
      %v511 = vunpack.c.l.b16 %v460
      %v512 = vunpack.c.l.b16 %v461
      %v513 = vunpack.c.l.b16 %v462
      %v514 = vpack.c.b16 %v497, %v496
      %v515 = vpack.c.b16 %v499, %v498
      %v516 = vpack.c.b16 %v501, %v500
      %v517 = vpack.c.b16 %v503, %v502
      %v518 = vpack.c.b16 %v505, %v504
      %v519 = vpack.c.b16 %v507, %v506
      %v520 = vpack.c.b16 %v509, %v508
      %v521 = vpack.c.b16 %v511, %v510
      %v522 = vpack.c.b16 %v513, %v512
      %v533 = vsel %vm297, %v476, 0
      %535 = vmatprep.subr.bf16.mxu0 0
      %536 = vmatpush1.bf16.msra.mxu0 %v514
      %537 = vmatprep.subr.bf16.mxu0 0
      %538 = vmatpush1.bf16.msra.mxu0 %v515
      %539 = vmatprep.subr.bf16.mxu0 0
      %540 = vmatpush1.bf16.msra.mxu0 %v516
      %541 = vmatprep.subr.bf16.mxu0 0
      %542 = vmatpush1.bf16.msra.mxu0 %v517
      %543 = vmatprep.subr.bf16.mxu0 0
      %544 = vmatpush1.bf16.msra.mxu0 %v518
      %545 = vmatprep.subr.bf16.mxu0 0
      %546 = vmatpush1.bf16.msra.mxu0 %v519
      %547 = vmatprep.subr.bf16.mxu0 0
      %548 = vmatpush1.bf16.msra.mxu0 %v520
      %549 = vmatprep.subr.bf16.mxu0 0
      %550 = vmatpush1.bf16.msra.mxu0 %v521
      %551 = vmatprep.subr.bf16.mxu0 0
      %552 = vmatpush1.bf16.msra.mxu0 %v522
      %553 = vmatprep.subr.bf16.mxu0 0
      %554 = vmatpush1.bf16.msra.mxu0 0
      %555 = vmatprep.subr.bf16.mxu0 0
      %556 = vmatpush1.bf16.msra.mxu0 0
      %557 = vmatprep.subr.bf16.mxu0 0
      %558 = vmatpush1.bf16.msra.mxu0 0
      %559 = vmatprep.subr.bf16.mxu0 0
      %560 = vmatpush1.bf16.msra.mxu0 0
      %561 = vmatprep.subr.bf16.mxu0 0
      %562 = vmatpush1.bf16.msra.mxu0 0
      %563 = vmatprep.subr.bf16.mxu0 0
      %564 = vmatpush1.bf16.msra.mxu0 0
      %565 = vmatprep.subr.bf16.mxu0 0
      %566 = vmatpush1.bf16.msra.mxu0 0
      %567 = vmatprep.mubr.bf16.mxu0 %v533
      %568 = vmatmul.mubr.bf16.gmra.mrb[0].mxu0 %v469
      %v569 = vpop.f32.mrb[0].mxu0
      %v570 = vadd.f32 0.0, %v569
      %v571 = vpop.f32.mrb[0].mxu0
      %v572 = vpop.f32.mrb[0].mxu0
      %v573 = vpop.f32.mrb[0].mxu0
      %574 = vdwg.mxu0
      %v575 = vadd.f32 %v433, %v570
      %v576 = vld [vmem:[%s2] sm:$0x1]
      %v578 = vlaneseq
      %v579 = vshrl.u32 %v578, 7
      %v580 = vsub.s32 0, %v579
      %v581 = vrot.slane %v576, %v580
      %v583 = vadd.f32 %v575, %v581
      %v584 = vld [vmem:[%s3] sm:$0xff]
      %v585 = vld [vmem:[%s3 + $0x8] sm:$0xff]
      %v586 = vld [vmem:[%s3 + $0x10] sm:$0xff]
      %v587 = vld [vmem:[%s3 + $0x18] sm:$0xff]
      %v588 = vld [vmem:[%s3 + $0x20] sm:$0xff]
      %v589 = vld [vmem:[%s3 + $0x28] sm:$0xff]
      %v590 = vld [vmem:[%s3 + $0x30] sm:$0xff]
      %v591 = vld [vmem:[%s3 + $0x38] sm:$0xff]
      %v592 = vld [vmem:[%s3 + $0x40] sm:$0xff]
      %v593 = vld [vmem:[%s3 + $0x48] sm:$0xff]
      %v594 = vld [vmem:[%s3 + $0x50] sm:$0xff]
      %v595 = vld [vmem:[%s3 + $0x58] sm:$0xff]
      %v596 = vld [vmem:[%s3 + $0x60] sm:$0xff]
      %v597 = vld [vmem:[%s3 + $0x68] sm:$0xff]
      %v598 = vld [vmem:[%s3 + $0x70] sm:$0xff]
      %v599 = vld [vmem:[%s3 + $0x78] sm:$0xff]
      %600 = vmatprep.subr.mxu0 0.0
      %601 = vmatpush1.msra.mxu0 %v584
      %602 = vmatprep.subr.mxu0 0.0
      %603 = vmatpush1.msra.mxu0 %v585
      %604 = vmatprep.subr.mxu0 0.0
      %605 = vmatpush1.msra.mxu0 %v586
      %606 = vmatprep.subr.mxu0 0.0
      %607 = vmatpush1.msra.mxu0 %v587
      %608 = vmatprep.subr.mxu0 0.0
      %609 = vmatpush1.msra.mxu0 %v588
      %610 = vmatprep.subr.mxu0 0.0
      %611 = vmatpush1.msra.mxu0 %v589
      %612 = vmatprep.subr.mxu0 0.0
      %613 = vmatpush1.msra.mxu0 %v590
      %614 = vmatprep.subr.mxu0 0.0
      %615 = vmatpush1.msra.mxu0 %v591
      %616 = vmatprep.subr.mxu0 0.0
      %617 = vmatpush1.msra.mxu0 %v592
      %618 = vmatprep.subr.mxu0 0.0
      %619 = vmatpush1.msra.mxu0 %v593
      %620 = vmatprep.subr.mxu0 0.0
      %621 = vmatpush1.msra.mxu0 %v594
      %622 = vmatprep.subr.mxu0 0.0
      %623 = vmatpush1.msra.mxu0 %v595
      %624 = vmatprep.subr.mxu0 0.0
      %625 = vmatpush1.msra.mxu0 %v596
      %626 = vmatprep.subr.mxu0 0.0
      %627 = vmatpush1.msra.mxu0 %v597
      %628 = vmatprep.subr.mxu0 0.0
      %629 = vmatpush1.msra.mxu0 %v598
      %630 = vmatprep.subr.mxu0 0.0
      %631 = vmatpush1.msra.mxu0 %v599
      %632 = vmatprep.subr.mxu0 0.0
      %633 = vmatpush1.msra.mxu0 0.0
      %634 = vmatprep.subr.mxu0 0.0
      %635 = vmatpush1.msra.mxu0 0.0
      %636 = vmatprep.subr.mxu0 0.0
      %637 = vmatpush1.msra.mxu0 0.0
      %638 = vmatprep.subr.mxu0 0.0
      %639 = vmatpush1.msra.mxu0 0.0
      %640 = vmatprep.subr.mxu0 0.0
      %641 = vmatpush1.msra.mxu0 0.0
      %642 = vmatprep.subr.mxu0 0.0
      %643 = vmatpush1.msra.mxu0 0.0
      %644 = vmatprep.subr.mxu0 0.0
      %645 = vmatpush1.msra.mxu0 0.0
      %646 = vmatprep.subr.mxu0 0.0
      %647 = vmatpush1.msra.mxu0 0.0
      %648 = vmatprep.subr.mxu0 0.0
      %649 = vmatpush1.msra.mxu0 0.0
      %650 = vmatprep.subr.mxu0 0.0
      %651 = vmatpush1.msra.mxu0 0.0
      %652 = vmatprep.subr.mxu0 0.0
      %653 = vmatpush1.msra.mxu0 0.0
      %654 = vmatprep.subr.mxu0 0.0
      %655 = vmatpush1.msra.mxu0 0.0
      %656 = vmatprep.subr.mxu0 0.0
      %657 = vmatpush1.msra.mxu0 0.0
      %658 = vmatprep.subr.mxu0 0.0
      %659 = vmatpush1.msra.mxu0 0.0
      %660 = vmatprep.subr.mxu0 0.0
      %661 = vmatpush1.msra.mxu0 0.0
      %662 = vmatprep.subr.mxu0 0.0
      %663 = vmatpush1.msra.mxu0 0.0
      %664 = vmatprep.mubr.f32.mxu0 0.0
      %665 = vmatmul.mubr.f32.gmra.mrb[0].mxu0 %v583
      %v666 = vpop.f32.mrb[0].mxu0
      %v667 = vadd.f32 0.0, %v666
      %v668 = vpop.f32.mrb[0].mxu0
      %669 = vdwg.mxu0
      %v670 = vrot.slane %v667, 4
      %v671 = vadd.f32 %v667, %v670
      %v672 = vrot.slane %v671, 2
      %v673 = vadd.f32 %v671, %v672
      %v674 = vrot.slane %v673, 1
      %v675 = vadd.f32 %v673, %v674
      %v676 = vmul.f32 %v583, %v583
      %677 = vmatprep.subr.mxu0 0.0
      %678 = vmatpush1.msra.mxu0 %v584
      %679 = vmatprep.subr.mxu0 0.0
      %680 = vmatpush1.msra.mxu0 %v585
      %681 = vmatprep.subr.mxu0 0.0
      %682 = vmatpush1.msra.mxu0 %v586
      %683 = vmatprep.subr.mxu0 0.0
      %684 = vmatpush1.msra.mxu0 %v587
      %685 = vmatprep.subr.mxu0 0.0
      %686 = vmatpush1.msra.mxu0 %v588
      %687 = vmatprep.subr.mxu0 0.0
      %688 = vmatpush1.msra.mxu0 %v589
      %689 = vmatprep.subr.mxu0 0.0
      %690 = vmatpush1.msra.mxu0 %v590
      %691 = vmatprep.subr.mxu0 0.0
      %692 = vmatpush1.msra.mxu0 %v591
      %693 = vmatprep.subr.mxu0 0.0
      %694 = vmatpush1.msra.mxu0 %v592
      %695 = vmatprep.subr.mxu0 0.0
      %696 = vmatpush1.msra.mxu0 %v593
      %697 = vmatprep.subr.mxu0 0.0
      %698 = vmatpush1.msra.mxu0 %v594
      %699 = vmatprep.subr.mxu0 0.0
      %700 = vmatpush1.msra.mxu0 %v595
      %701 = vmatprep.subr.mxu0 0.0
      %702 = vmatpush1.msra.mxu0 %v596
      %703 = vmatprep.subr.mxu0 0.0
      %704 = vmatpush1.msra.mxu0 %v597
      %705 = vmatprep.subr.mxu0 0.0
      %706 = vmatpush1.msra.mxu0 %v598
      %707 = vmatprep.subr.mxu0 0.0
      %708 = vmatpush1.msra.mxu0 %v599
      %709 = vmatprep.subr.mxu0 0.0
      %710 = vmatpush1.msra.mxu0 0.0
      %711 = vmatprep.subr.mxu0 0.0
      %712 = vmatpush1.msra.mxu0 0.0
      %713 = vmatprep.subr.mxu0 0.0
      %714 = vmatpush1.msra.mxu0 0.0
      %715 = vmatprep.subr.mxu0 0.0
      %716 = vmatpush1.msra.mxu0 0.0
      %717 = vmatprep.subr.mxu0 0.0
      %718 = vmatpush1.msra.mxu0 0.0
      %719 = vmatprep.subr.mxu0 0.0
      %720 = vmatpush1.msra.mxu0 0.0
      %721 = vmatprep.subr.mxu0 0.0
      %722 = vmatpush1.msra.mxu0 0.0
      %723 = vmatprep.subr.mxu0 0.0
      %724 = vmatpush1.msra.mxu0 0.0
      %725 = vmatprep.subr.mxu0 0.0
      %726 = vmatpush1.msra.mxu0 0.0
      %727 = vmatprep.subr.mxu0 0.0
      %728 = vmatpush1.msra.mxu0 0.0
      %729 = vmatprep.subr.mxu0 0.0
      %730 = vmatpush1.msra.mxu0 0.0
      %731 = vmatprep.subr.mxu0 0.0
      %732 = vmatpush1.msra.mxu0 0.0
      %733 = vmatprep.subr.mxu0 0.0
      %734 = vmatpush1.msra.mxu0 0.0
      %735 = vmatprep.subr.mxu0 0.0
      %736 = vmatpush1.msra.mxu0 0.0
      %737 = vmatprep.subr.mxu0 0.0
      %738 = vmatpush1.msra.mxu0 0.0
      %739 = vmatprep.subr.mxu0 0.0
      %740 = vmatpush1.msra.mxu0 0.0
      %741 = vmatprep.mubr.f32.mxu0 0.0
      %742 = vmatmul.mubr.f32.gmra.mrb[0].mxu0 %v676
      %v743 = vpop.f32.mrb[0].mxu0
      %v744 = vadd.f32 0.0, %v743
      %v745 = vpop.f32.mrb[0].mxu0
      %746 = vdwg.mxu0
      %v747 = vrot.slane %v744, 4
      %v748 = vadd.f32 %v744, %v747
      %v749 = vrot.slane %v748, 2
      %v750 = vadd.f32 %v748, %v749
      %v751 = vrot.slane %v750, 1
      %v752 = vadd.f32 %v750, %v751
      %v753 = vmul.f32 %v675, %v675
      %v754 = vsub.f32 %v752, %v753
      %v755 = vmax.f32 %v754, 0.0
      %v756 = vsub.f32 %v583, %v675
      %v757 = vadd.f32 %v755, 1e-05
      %v758 = vrsqrt.pop %v757
      %v759 = vmul.f32 %v756, %v758
      %v760 = vmax.f32 %v759, 0.0
      %761 = vst [vmem:[%s195] sm:$0xff] %v760
      %p762 = scmp.lt.s32.totalorder %s15, 1
      %s763 = scalar_select %p762, %s15, 1
      %s764 = smul.addr %s763, 8
      %s765 = scalar_lea.vmem %s4, %s764
      // Predicated region
      $region37: #{generator_forward.8} parent=35 // pred_check
        %p766 = pneg %p122
      $region38: #{generator_forward.8} parent=35 // pred_check_branch
        %768 = sbr.rel (%p766) target = $region40
      $region39: #{generator_forward.8} parent=35 // pred_region
        _
      $region40: #{generator_forward.8} parent=35 // pred_fallthru
        _
    $region36: #{generator_forward.8} parent=5 // pred_fallthru
      _
    %p769 = scmp.le.s32.totalorder 2, %s10
    // Predicated region
    $region41: #{generator_forward.8} parent=5 // pred_check
      %p770 = pneg %p769
    $region42: #{generator_forward.8} parent=5 // pred_check_branch
      %772 = sbr.rel (%p770) target = $region44
    $region43: #{generator_forward.8} parent=5 // pred_region
      %s773 = ssub.s32 %s10, 2
      // Predicated region
      $region45: #{generator_forward.8} parent=43 // pred_check
        %p774 = pneg %p128
      $region46: #{generator_forward.8} parent=43 // pred_check_branch
        %776 = sbr.rel (%p774) target = $region48
      $region47: #{generator_forward.8} parent=43 // pred_region
        %p777 = scmp.lt.s32.totalorder %s16, 1
        %s778 = scalar_select %p777, %s16, 1
        %s779 = smul.addr %s778, 8
        %s780 = scalar_lea.vmem %s4, %s779
      $region48: #{generator_forward.8} parent=43 // pred_fallthru
        _
    $region44: #{generator_forward.8} parent=5 // pred_fallthru
      _
  $region6: #{generator_forward.8} parent=0 // loop_footer
    %s14 = sadd.s32 1, %s10
  $region7: #{generator_forward.8} parent=0 // loop_footer_branch
    %9 = sbr.rel target = $region3
  $region8: #{generator_forward.8} parent=0 // loop_exit
    _

// kernel: generator_forward.7
$region0: #{generator_forward.7}
  #allocation0 [shape = 'u32[]', space=smem, size = 0x4, offset = 0x4, fixed_abs, tag = 'smem constant byte address 0x4 - core index']
  #allocation1 [shape = 'u32[144,128]{1,0:T(1,128)}', space=vmem, size = 0x12000, scoped, tag = 'internal scratch']
  %s0 = inlined_call_operand.vmem [shape: f32[2,1,22,66], index: 0, kind: input, shape index: {}]
  %s1 = inlined_call_operand.vmem [shape: bf16[7,66,128], index: 1, kind: input, shape index: {}]
  %s2 = inlined_call_operand.vmem [shape: f32[1,128], index: 2, kind: input, shape index: {}]
  %s3 = inlined_call_operand.vmem [shape: f32[128,128], index: 3, kind: input, shape index: {}]
  %s4 = inlined_call_operand.vmem [shape: f32[2,16,128], index: 4, kind: output, shape index: {}]
  %s5 = sld [smem:[#allocation0]]
  $region49: #{generator_forward.7} parent=0
    _
  %s7 = ssub.s32 1, %s5
  %s8 = scalar_select 0, %s7, %s5
  loop: start=0, step=1, limit=4
  $region2: #{generator_forward.7} parent=0 // loop_pre_header
    _
  $region3: #{generator_forward.7} parent=0 // loop_header
    %s10 = sphi 0, %s14
    %p11 = scmp.ge.s32.totalorder %s10, 4
    %s20 = sphi 0, %s22
    %s23 = sphi 0, %s20
    %s24 = sphi 0, %s23
    %s40 = sphi 0, %s24
    %s44 = sphi 0, %s44
    %s46 = sphi 0, %s44
    %s47 = sphi 0, %s46
    %s61 = sphi 0, %s47
    %s65 = sphi 0, %s65
    %s67 = sphi 0, %s65
    %s68 = sphi 0, %s67
    %s82 = sphi 0, %s68
    %s86 = sphi 0, %s86
    %s88 = sphi 0, %s86
    %s89 = sphi 0, %s88
    %s103 = sphi 0, %s89
    %s109 = sphi 0, %s111
    %s112 = sphi 0, %s109
    %s113 = sphi 0, %s112
    %s129 = sphi 0, %s113
  $region4: #{generator_forward.7} parent=0 // loop_header_branch
    %13 = sbr.rel (%p11) target = $region8
  $region5: #{generator_forward.7} parent=0 // loop_body
    %s15 = ssub.s32 %s10, 1
    %s16 = ssub.s32 %s10, 2
    %s17 = sadd.s32 %s10, 1
    %s18 = ssub.s32 %s10, %s17
    %p19 = scmp.eq.s32.totalorder %s18, 0
    %s21 = sadd.s32 %s20, 1
    %s22 = scalar_select %p19, %s20, %s21
    %p25 = pneg %p19
    %p26 = scmp.eq.s32.totalorder %s10, 1
    %p27 = por %p25, %p26
    %p28 = scmp.ne.s32.totalorder %s20, %s23
    %p29 = scmp.eq.s32.totalorder %s10, 0
    %p30 = por %p28, %p29
    %p31 = scmp.ne.s32.totalorder %s20, %s23
    %p32 = scmp.eq.s32.totalorder %s15, 1
    %p33 = por %p31, %p32
    %p34 = scmp.ne.s32.totalorder %s23, %s24
    %p35 = scmp.eq.s32.totalorder %s15, 0
    %p36 = por %p34, %p35
    %p37 = scmp.ne.s32.totalorder %s23, %s24
    %p38 = scmp.eq.s32.totalorder %s16, 1
    %p39 = por %p37, %p38
    %p41 = scmp.ne.s32.totalorder %s24, %s40
    %p42 = scmp.eq.s32.totalorder %s16, 0
    %p43 = por %p41, %p42
    %s45 = sadd.s32 %s44, 1
    %p48 = scmp.eq.s32.totalorder %s10, 1
    %p49 = scmp.ne.s32.totalorder %s44, %s46
    %p50 = scmp.eq.s32.totalorder %s10, 0
    %p51 = por %p49, %p50
    %p52 = scmp.ne.s32.totalorder %s44, %s46
    %p53 = scmp.eq.s32.totalorder %s15, 1
    %p54 = por %p52, %p53
    %p55 = scmp.ne.s32.totalorder %s46, %s47
    %p56 = scmp.eq.s32.totalorder %s15, 0
    %p57 = por %p55, %p56
    %p58 = scmp.ne.s32.totalorder %s46, %s47
    %p59 = scmp.eq.s32.totalorder %s16, 1
    %p60 = por %p58, %p59
    %p62 = scmp.ne.s32.totalorder %s47, %s61
    %p63 = scmp.eq.s32.totalorder %s16, 0
    %p64 = por %p62, %p63
    %s66 = sadd.s32 %s65, 1
    %p69 = scmp.eq.s32.totalorder %s10, 1
    %p70 = scmp.ne.s32.totalorder %s65, %s67
    %p71 = scmp.eq.s32.totalorder %s10, 0
    %p72 = por %p70, %p71
    %p73 = scmp.ne.s32.totalorder %s65, %s67
    %p74 = scmp.eq.s32.totalorder %s15, 1
    %p75 = por %p73, %p74
    %p76 = scmp.ne.s32.totalorder %s67, %s68
    %p77 = scmp.eq.s32.totalorder %s15, 0
    %p78 = por %p76, %p77
    %p79 = scmp.ne.s32.totalorder %s67, %s68
    %p80 = scmp.eq.s32.totalorder %s16, 1
    %p81 = por %p79, %p80
    %p83 = scmp.ne.s32.totalorder %s68, %s82
    %p84 = scmp.eq.s32.totalorder %s16, 0
    %p85 = por %p83, %p84
    %s87 = sadd.s32 %s86, 1
    %p90 = scmp.eq.s32.totalorder %s10, 1
    %p91 = scmp.ne.s32.totalorder %s86, %s88
    %p92 = scmp.eq.s32.totalorder %s10, 0
    %p93 = por %p91, %p92
    %p94 = scmp.ne.s32.totalorder %s86, %s88
    %p95 = scmp.eq.s32.totalorder %s15, 1
    %p96 = por %p94, %p95
    %p97 = scmp.ne.s32.totalorder %s88, %s89
    %p98 = scmp.eq.s32.totalorder %s15, 0
    %p99 = por %p97, %p98
    %p100 = scmp.ne.s32.totalorder %s88, %s89
    %p101 = scmp.eq.s32.totalorder %s16, 1
    %p102 = por %p100, %p101
    %p104 = scmp.ne.s32.totalorder %s89, %s103
    %p105 = scmp.eq.s32.totalorder %s16, 0
    %p106 = por %p104, %p105
    %s107 = ssub.s32 %s10, %s17
    %p108 = scmp.eq.s32.totalorder %s107, 0
    %s110 = sadd.s32 %s109, 1
    %s111 = scalar_select %p108, %s109, %s110
    %p114 = pneg %p108
    %p115 = scmp.eq.s32.totalorder %s10, 1
    %p116 = por %p114, %p115
    %p117 = scmp.ne.s32.totalorder %s109, %s112
    %p118 = scmp.eq.s32.totalorder %s10, 0
    %p119 = por %p117, %p118
    %p120 = scmp.ne.s32.totalorder %s109, %s112
    %p121 = scmp.eq.s32.totalorder %s15, 1
    %p122 = por %p120, %p121
    %p123 = scmp.ne.s32.totalorder %s112, %s113
    %p124 = scmp.eq.s32.totalorder %s15, 0
    %p125 = por %p123, %p124
    %p126 = scmp.ne.s32.totalorder %s112, %s113
    %p127 = scmp.eq.s32.totalorder %s16, 1
    %p128 = por %p126, %p127
    %p130 = scmp.ne.s32.totalorder %s113, %s129
    %p131 = scmp.eq.s32.totalorder %s16, 0
    %p132 = por %p130, %p131
    %p133 = scmp.le.s32.totalorder 1, %s10
    %p134 = scmp.lt.s32.totalorder %s10, 3
    %p135 = pnand %p133, %p134
    %p136 = pneg %p135
    // Predicated region
    $region9: #{generator_forward.7} parent=5 // pred_check
      _
    $region10: #{generator_forward.7} parent=5 // pred_check_branch
      %138 = sbr.rel (%p135) target = $region12
    $region11: #{generator_forward.7} parent=5 // pred_region
      %s139 = ssub.s32 %s10, 1
      // Predicated region
      $region13: #{generator_forward.7} parent=11 // pred_check
        %p140 = pneg %p57
      $region14: #{generator_forward.7} parent=11 // pred_check_branch
        %142 = sbr.rel (%p140) target = $region16
      $region15: #{generator_forward.7} parent=11 // pred_region
        _
      $region16: #{generator_forward.7} parent=11 // pred_fallthru
        _
      // Predicated region
      $region17: #{generator_forward.7} parent=11 // pred_check
        %p143 = pneg %p78
      $region18: #{generator_forward.7} parent=11 // pred_check_branch
        %145 = sbr.rel (%p143) target = $region20
      $region19: #{generator_forward.7} parent=11 // pred_region
        _
      $region20: #{generator_forward.7} parent=11 // pred_fallthru
        _
      // Predicated region
      $region21: #{generator_forward.7} parent=11 // pred_check
        %p146 = pneg %p99
      $region22: #{generator_forward.7} parent=11 // pred_check_branch
        %148 = sbr.rel (%p146) target = $region24
      $region23: #{generator_forward.7} parent=11 // pred_region
        _
      $region24: #{generator_forward.7} parent=11 // pred_fallthru
        _
    $region12: #{generator_forward.7} parent=5 // pred_fallthru
      _
    %p149 = scmp.lt.s32.totalorder %s10, 2
    // Predicated region
    $region25: #{generator_forward.7} parent=5 // pred_check
      %p150 = pneg %p149
    $region26: #{generator_forward.7} parent=5 // pred_check_branch
      %152 = sbr.rel (%p150) target = $region28
    $region27: #{generator_forward.7} parent=5 // pred_region
      // Predicated region
      $region29: #{generator_forward.7} parent=27 // pred_check
        %p153 = pneg %p30
      $region30: #{generator_forward.7} parent=27 // pred_check_branch
        %155 = sbr.rel (%p153) target = $region32
      $region31: #{generator_forward.7} parent=27 // pred_region
        %p156 = scmp.lt.s32.totalorder %s10, 1
        %s157 = scalar_select %p156, %s10, 1
        %s158 = smul.addr %s157, 3
        %s159 = smul.addr %s158, 8
        %s160 = scalar_lea.vmem %s0, %s159
      $region32: #{generator_forward.7} parent=27 // pred_fallthru
        _
    $region28: #{generator_forward.7} parent=5 // pred_fallthru
      _
    %p161 = scmp.le.s32.totalorder 1, %s10
    %p162 = scmp.lt.s32.totalorder %s10, 3
    %p163 = pnand %p161, %p162
    %p164 = pneg %p163
    // Predicated region
    $region33: #{generator_forward.7} parent=5 // pred_check
      _
    $region34: #{generator_forward.7} parent=5 // pred_check_branch
      %166 = sbr.rel (%p163) target = $region36
    $region35: #{generator_forward.7} parent=5 // pred_region
      %s167 = ssub.s32 %s10, 1
      %p168 = scmp.lt.s32.totalorder %s15, 1
      %s169 = scalar_select %p168, %s15, 1
      %s170 = smul.addr %s169, 3
      %s171 = smul.addr %s170, 8
      %s172 = scalar_lea.vmem %s0, %s171
      %p173 = pneg %p36
      %p174 = pneg %p33
      %p175 = pneg %p57
      %p176 = pneg %p54
      %p177 = pneg %p78
      %p178 = pneg %p75
      %p179 = pneg %p99
      %p180 = pneg %p96
      %p181 = pneg %p125
      %p182 = pneg %p122
      %p183 = scmp.lt.s32.totalorder %s15, 1
      %s184 = scalar_select %p183, %s15, 1
      %s185 = smul.addr %s184, 2
      %s186 = smul.addr %s185, 8
      %s187 = scalar_lea.vmem %s4, %s186
      %p188 = scmp.lt.s32.totalorder %s15, 1
      %s189 = scalar_select %p188, %s15, 1
      %s190 = smul.addr %s189, 3
      %s191 = smul.addr %s190, 8
      %s192 = scalar_lea.vmem %s0, %s191
      %p193 = scmp.lt.s32.totalorder %s15, 1
      %s194 = scalar_select %p193, %s15, 1
      %s195 = smul.addr %s194, 2
      %s196 = smul.addr %s195, 8
      %s197 = scalar_lea.vmem %s4, %s196
      %v199 = vld [vmem:[%s192] sm:$0xff]
      %v200 = vld [vmem:[%s192 + $0x8] sm:$0xff]
      %v201 = vpack.c.bf16 %v200, %v199
      %v202 = vld [vmem:[%s1] sm:$0xf]
      %v203 = vld [vmem:[%s1 + $0x4] sm:$0xf]
      %v204 = vld [vmem:[%s1 + $0x8] sm:$0xf]
      %v205 = vld [vmem:[%s1 + $0xc] sm:$0xf]
      %v206 = vld [vmem:[%s1 + $0x10] sm:$0xf]
      %v207 = vld [vmem:[%s1 + $0x14] sm:$0xf]
      %v208 = vld [vmem:[%s1 + $0x18] sm:$0xf]
      %v209 = vld [vmem:[%s1 + $0x1c] sm:$0xf]
      %v210 = vld [vmem:[%s1 + $0x20] sm:$0x1]
      %v211 = vld [vmem:[%s192 + $0x1] sm:$0xff]
      %v212 = vld [vmem:[%s192 + $0x9] sm:$0xff]
      %v213 = vpack.c.bf16 %v212, %v211
      %s214 = scalar_lea.vmem %s1, 36
      %v215 = vld [vmem:[%s214] sm:$0xf]
      %v216 = vld [vmem:[%s214 + $0x4] sm:$0xf]
      %v217 = vld [vmem:[%s214 + $0x8] sm:$0xf]
      %v218 = vld [vmem:[%s214 + $0xc] sm:$0xf]
      %v219 = vld [vmem:[%s214 + $0x10] sm:$0xf]
      %v220 = vld [vmem:[%s214 + $0x14] sm:$0xf]
      %v221 = vld [vmem:[%s214 + $0x18] sm:$0xf]
      %v222 = vld [vmem:[%s214 + $0x1c] sm:$0xf]
      %v223 = vld [vmem:[%s214 + $0x20] sm:$0x1]
      %v233 = vunpack.c.l.b16 %v215
      %v234 = vunpack.c.l.b16 %v216
      %v235 = vunpack.c.l.b16 %v217
      %v236 = vunpack.c.l.b16 %v218
      %v237 = vunpack.c.l.b16 %v219
      %v238 = vunpack.c.l.b16 %v220
      %v239 = vunpack.c.l.b16 %v221
      %v240 = vunpack.c.l.b16 %v222
      %v241 = vunpack.c.l.b16 %v223
      %v242 = vpack.c.b16 %v234, %v233
      %v243 = vpack.c.b16 %v236, %v235
      %v244 = vpack.c.b16 %v238, %v237
      %v245 = vpack.c.b16 %v240, %v239
      %v246 = vpack.c.b16 %v241, %v241
      %vm251 = vcmask 539648
      %v253 = vsel %vm251, %v213, 0
      %vm255 = vcmask 1040384
      %v257 = vsel %vm255, %v246, 0
      %259 = vmatprep.subr.bf16.mxu0 0
      %260 = vmatpush1.bf16.msra.mxu0 %v242
      %261 = vmatprep.subr.bf16.mxu0 0
      %262 = vmatpush1.bf16.msra.mxu0 %v243
      %263 = vmatprep.subr.bf16.mxu0 0
      %264 = vmatpush1.bf16.msra.mxu0 %v244
      %265 = vmatprep.subr.bf16.mxu0 0
      %266 = vmatpush1.bf16.msra.mxu0 %v245
      %267 = vmatprep.subr.bf16.mxu0 0
      %268 = vmatpush1.bf16.msra.mxu0 %v257
      %269 = vmatprep.subr.bf16.mxu0 0
      %270 = vmatpush1.bf16.msra.mxu0 0
      %271 = vmatprep.subr.bf16.mxu0 0
      %272 = vmatpush1.bf16.msra.mxu0 0
      %273 = vmatprep.subr.bf16.mxu0 0
      %274 = vmatpush1.bf16.msra.mxu0 0
      %275 = vmatprep.subr.bf16.mxu0 0
      %276 = vmatpush1.bf16.msra.mxu0 0
      %277 = vmatprep.subr.bf16.mxu0 0
      %278 = vmatpush1.bf16.msra.mxu0 0
      %279 = vmatprep.subr.bf16.mxu0 0
      %280 = vmatpush1.bf16.msra.mxu0 0
      %281 = vmatprep.subr.bf16.mxu0 0
      %282 = vmatpush1.bf16.msra.mxu0 0
      %283 = vmatprep.subr.bf16.mxu0 0
      %284 = vmatpush1.bf16.msra.mxu0 0
      %285 = vmatprep.subr.bf16.mxu0 0
      %286 = vmatpush1.bf16.msra.mxu0 0
      %287 = vmatprep.subr.bf16.mxu0 0
      %288 = vmatpush1.bf16.msra.mxu0 0
      %289 = vmatprep.subr.bf16.mxu0 0
      %290 = vmatpush1.bf16.msra.mxu0 0
      %291 = vmatprep.mubr.bf16.mxu0 0
      %292 = vmatmul.mubr.bf16.gmra.mrb[0].mxu0 %v253
      %v293 = vpop.f32.mrb[0].mxu0
      %v294 = vadd.f32 0.0, %v293
      %v295 = vpop.f32.mrb[0].mxu0
      %v296 = vpop.f32.mrb[0].mxu0
      %v297 = vadd.f32 0.0, %v296
      %v298 = vpop.f32.mrb[0].mxu0
      %299 = vdwg.mxu0
      %v309 = vunpack.c.l.b16 %v202
      %v310 = vunpack.c.l.b16 %v203
      %v311 = vunpack.c.l.b16 %v204
      %v312 = vunpack.c.l.b16 %v205
      %v313 = vunpack.c.l.b16 %v206
      %v314 = vunpack.c.l.b16 %v207
      %v315 = vunpack.c.l.b16 %v208
      %v316 = vunpack.c.l.b16 %v209
      %v317 = vunpack.c.l.b16 %v210
      %v318 = vpack.c.b16 %v310, %v309
      %v319 = vpack.c.b16 %v312, %v311
      %v320 = vpack.c.b16 %v314, %v313
      %v321 = vpack.c.b16 %v316, %v315
      %v322 = vpack.c.b16 %v317, %v317
      %v328 = vsel %vm251, %v201, 0
      %v331 = vsel %vm255, %v322, 0
      %333 = vmatprep.subr.bf16.mxu0 0
      %334 = vmatpush1.bf16.msra.mxu0 %v318
      %335 = vmatprep.subr.bf16.mxu0 0
      %336 = vmatpush1.bf16.msra.mxu0 %v319
      %337 = vmatprep.subr.bf16.mxu0 0
      %338 = vmatpush1.bf16.msra.mxu0 %v320
      %339 = vmatprep.subr.bf16.mxu0 0
      %340 = vmatpush1.bf16.msra.mxu0 %v321
      %341 = vmatprep.subr.bf16.mxu0 0
      %342 = vmatpush1.bf16.msra.mxu0 %v331
      %343 = vmatprep.subr.bf16.mxu0 0
      %344 = vmatpush1.bf16.msra.mxu0 0
      %345 = vmatprep.subr.bf16.mxu0 0
      %346 = vmatpush1.bf16.msra.mxu0 0
      %347 = vmatprep.subr.bf16.mxu0 0
      %348 = vmatpush1.bf16.msra.mxu0 0
      %349 = vmatprep.subr.bf16.mxu0 0
      %350 = vmatpush1.bf16.msra.mxu0 0
      %351 = vmatprep.subr.bf16.mxu0 0
      %352 = vmatpush1.bf16.msra.mxu0 0
      %353 = vmatprep.subr.bf16.mxu0 0
      %354 = vmatpush1.bf16.msra.mxu0 0
      %355 = vmatprep.subr.bf16.mxu0 0
      %356 = vmatpush1.bf16.msra.mxu0 0
      %357 = vmatprep.subr.bf16.mxu0 0
      %358 = vmatpush1.bf16.msra.mxu0 0
      %359 = vmatprep.subr.bf16.mxu0 0
      %360 = vmatpush1.bf16.msra.mxu0 0
      %361 = vmatprep.subr.bf16.mxu0 0
      %362 = vmatpush1.bf16.msra.mxu0 0
      %363 = vmatprep.subr.bf16.mxu0 0
      %364 = vmatpush1.bf16.msra.mxu0 0
      %365 = vmatprep.mubr.bf16.mxu0 0
      %366 = vmatmul.mubr.bf16.gmra.mrb[0].mxu0 %v328
      %v367 = vpop.f32.mrb[0].mxu0
      %v368 = vadd.f32 %v294, %v367
      %v369 = vpop.f32.mrb[0].mxu0
      %v370 = vpop.f32.mrb[0].mxu0
      %v371 = vadd.f32 %v297, %v370
      %v372 = vpop.f32.mrb[0].mxu0
      %373 = vdwg.mxu0
      %v374 = vld [vmem:[%s192 + $0x2] sm:$0xff]
      %v375 = vld [vmem:[%s192 + $0xa] sm:$0xff]
      %v376 = vpack.c.bf16 %v375, %v374
      %s377 = scalar_lea.vmem %s1, 72
      %v378 = vld [vmem:[%s377] sm:$0xf]
      %v379 = vld [vmem:[%s377 + $0x4] sm:$0xf]
      %v380 = vld [vmem:[%s377 + $0x8] sm:$0xf]
      %v381 = vld [vmem:[%s377 + $0xc] sm:$0xf]
      %v382 = vld [vmem:[%s377 + $0x10] sm:$0xf]
      %v383 = vld [vmem:[%s377 + $0x14] sm:$0xf]
      %v384 = vld [vmem:[%s377 + $0x18] sm:$0xf]
      %v385 = vld [vmem:[%s377 + $0x1c] sm:$0xf]
      %v386 = vld [vmem:[%s377 + $0x20] sm:$0x1]
      %v396 = vunpack.c.l.b16 %v378
      %v397 = vunpack.c.l.b16 %v379
      %v398 = vunpack.c.l.b16 %v380
      %v399 = vunpack.c.l.b16 %v381
      %v400 = vunpack.c.l.b16 %v382
      %v401 = vunpack.c.l.b16 %v383
      %v402 = vunpack.c.l.b16 %v384
      %v403 = vunpack.c.l.b16 %v385
      %v404 = vunpack.c.l.b16 %v386
      %v405 = vpack.c.b16 %v397, %v396
      %v406 = vpack.c.b16 %v399, %v398
      %v407 = vpack.c.b16 %v401, %v400
      %v408 = vpack.c.b16 %v403, %v402
      %v409 = vpack.c.b16 %v404, %v404
      %v415 = vsel %vm251, %v376, 0
      %v418 = vsel %vm255, %v409, 0
      %420 = vmatprep.subr.bf16.mxu0 0
      %421 = vmatpush1.bf16.msra.mxu0 %v405
      %422 = vmatprep.subr.bf16.mxu0 0
      %423 = vmatpush1.bf16.msra.mxu0 %v406
      %424 = vmatprep.subr.bf16.mxu0 0
      %425 = vmatpush1.bf16.msra.mxu0 %v407
      %426 = vmatprep.subr.bf16.mxu0 0
      %427 = vmatpush1.bf16.msra.mxu0 %v408
      %428 = vmatprep.subr.bf16.mxu0 0
      %429 = vmatpush1.bf16.msra.mxu0 %v418
      %430 = vmatprep.subr.bf16.mxu0 0
      %431 = vmatpush1.bf16.msra.mxu0 0
      %432 = vmatprep.subr.bf16.mxu0 0
      %433 = vmatpush1.bf16.msra.mxu0 0
      %434 = vmatprep.subr.bf16.mxu0 0
      %435 = vmatpush1.bf16.msra.mxu0 0
      %436 = vmatprep.subr.bf16.mxu0 0
      %437 = vmatpush1.bf16.msra.mxu0 0
      %438 = vmatprep.subr.bf16.mxu0 0
      %439 = vmatpush1.bf16.msra.mxu0 0
      %440 = vmatprep.subr.bf16.mxu0 0
      %441 = vmatpush1.bf16.msra.mxu0 0
      %442 = vmatprep.subr.bf16.mxu0 0
      %443 = vmatpush1.bf16.msra.mxu0 0
      %444 = vmatprep.subr.bf16.mxu0 0
      %445 = vmatpush1.bf16.msra.mxu0 0
      %446 = vmatprep.subr.bf16.mxu0 0
      %447 = vmatpush1.bf16.msra.mxu0 0
      %448 = vmatprep.subr.bf16.mxu0 0
      %449 = vmatpush1.bf16.msra.mxu0 0
      %450 = vmatprep.subr.bf16.mxu0 0
      %451 = vmatpush1.bf16.msra.mxu0 0
      %452 = vmatprep.mubr.bf16.mxu0 0
      %453 = vmatmul.mubr.bf16.gmra.mrb[0].mxu0 %v415
      %v454 = vpop.f32.mrb[0].mxu0
      %v455 = vadd.f32 0.0, %v454
      %v456 = vpop.f32.mrb[0].mxu0
      %v457 = vpop.f32.mrb[0].mxu0
      %v458 = vadd.f32 0.0, %v457
      %v459 = vpop.f32.mrb[0].mxu0
      %460 = vdwg.mxu0
      %v461 = vadd.f32 %v368, %v455
      %v462 = vadd.f32 %v371, %v458
      %v463 = vld [vmem:[%s192 + $0x3] sm:$0xff]
      %v464 = vld [vmem:[%s192 + $0xb] sm:$0xff]
      %v465 = vpack.c.bf16 %v464, %v463
      %s466 = scalar_lea.vmem %s1, 108
      %v467 = vld [vmem:[%s466] sm:$0xf]
      %v468 = vld [vmem:[%s466 + $0x4] sm:$0xf]
      %v469 = vld [vmem:[%s466 + $0x8] sm:$0xf]
      %v470 = vld [vmem:[%s466 + $0xc] sm:$0xf]
      %v471 = vld [vmem:[%s466 + $0x10] sm:$0xf]
      %v472 = vld [vmem:[%s466 + $0x14] sm:$0xf]
      %v473 = vld [vmem:[%s466 + $0x18] sm:$0xf]
      %v474 = vld [vmem:[%s466 + $0x1c] sm:$0xf]
      %v475 = vld [vmem:[%s466 + $0x20] sm:$0x1]
      %v485 = vunpack.c.l.b16 %v467
      %v486 = vunpack.c.l.b16 %v468
      %v487 = vunpack.c.l.b16 %v469
      %v488 = vunpack.c.l.b16 %v470
      %v489 = vunpack.c.l.b16 %v471
      %v490 = vunpack.c.l.b16 %v472
      %v491 = vunpack.c.l.b16 %v473
      %v492 = vunpack.c.l.b16 %v474
      %v493 = vunpack.c.l.b16 %v475
      %v494 = vpack.c.b16 %v486, %v485
      %v495 = vpack.c.b16 %v488, %v487
      %v496 = vpack.c.b16 %v490, %v489
      %v497 = vpack.c.b16 %v492, %v491
      %v498 = vpack.c.b16 %v493, %v493
      %v504 = vsel %vm251, %v465, 0
      %v507 = vsel %vm255, %v498, 0
      %509 = vmatprep.subr.bf16.mxu0 0
      %510 = vmatpush1.bf16.msra.mxu0 %v494
      %511 = vmatprep.subr.bf16.mxu0 0
      %512 = vmatpush1.bf16.msra.mxu0 %v495
      %513 = vmatprep.subr.bf16.mxu0 0
      %514 = vmatpush1.bf16.msra.mxu0 %v496
      %515 = vmatprep.subr.bf16.mxu0 0
      %516 = vmatpush1.bf16.msra.mxu0 %v497
      %517 = vmatprep.subr.bf16.mxu0 0
      %518 = vmatpush1.bf16.msra.mxu0 %v507
      %519 = vmatprep.subr.bf16.mxu0 0
      %520 = vmatpush1.bf16.msra.mxu0 0
      %521 = vmatprep.subr.bf16.mxu0 0
      %522 = vmatpush1.bf16.msra.mxu0 0
      %523 = vmatprep.subr.bf16.mxu0 0
      %524 = vmatpush1.bf16.msra.mxu0 0
      %525 = vmatprep.subr.bf16.mxu0 0
      %526 = vmatpush1.bf16.msra.mxu0 0
      %527 = vmatprep.subr.bf16.mxu0 0
      %528 = vmatpush1.bf16.msra.mxu0 0
      %529 = vmatprep.subr.bf16.mxu0 0
      %530 = vmatpush1.bf16.msra.mxu0 0
      %531 = vmatprep.subr.bf16.mxu0 0
      %532 = vmatpush1.bf16.msra.mxu0 0
      %533 = vmatprep.subr.bf16.mxu0 0
      %534 = vmatpush1.bf16.msra.mxu0 0
      %535 = vmatprep.subr.bf16.mxu0 0
      %536 = vmatpush1.bf16.msra.mxu0 0
      %537 = vmatprep.subr.bf16.mxu0 0
      %538 = vmatpush1.bf16.msra.mxu0 0
      %539 = vmatprep.subr.bf16.mxu0 0
      %540 = vmatpush1.bf16.msra.mxu0 0
      %541 = vmatprep.mubr.bf16.mxu0 0
      %542 = vmatmul.mubr.bf16.gmra.mrb[0].mxu0 %v504
      %v543 = vpop.f32.mrb[0].mxu0
      %v544 = vadd.f32 0.0, %v543
      %v545 = vpop.f32.mrb[0].mxu0
      %v546 = vpop.f32.mrb[0].mxu0
      %v547 = vadd.f32 0.0, %v546
      %v548 = vpop.f32.mrb[0].mxu0
      %549 = vdwg.mxu0
      %v550 = vadd.f32 %v461, %v544
      %v551 = vadd.f32 %v462, %v547
      %v552 = vld [vmem:[%s192 + $0x4] sm:$0xff]
      %v553 = vld [vmem:[%s192 + $0xc] sm:$0xff]
      %v554 = vpack.c.bf16 %v553, %v552
      %s555 = scalar_lea.vmem %s1, 144
      %v556 = vld [vmem:[%s555] sm:$0xf]
      %v557 = vld [vmem:[%s555 + $0x4] sm:$0xf]
      %v558 = vld [vmem:[%s555 + $0x8] sm:$0xf]
      %v559 = vld [vmem:[%s555 + $0xc] sm:$0xf]
      %v560 = vld [vmem:[%s555 + $0x10] sm:$0xf]
      %v561 = vld [vmem:[%s555 + $0x14] sm:$0xf]
      %v562 = vld [vmem:[%s555 + $0x18] sm:$0xf]
      %v563 = vld [vmem:[%s555 + $0x1c] sm:$0xf]
      %v564 = vld [vmem:[%s555 + $0x20] sm:$0x1]
      %v574 = vunpack.c.l.b16 %v556
      %v575 = vunpack.c.l.b16 %v557
      %v576 = vunpack.c.l.b16 %v558
      %v577 = vunpack.c.l.b16 %v559
      %v578 = vunpack.c.l.b16 %v560
      %v579 = vunpack.c.l.b16 %v561
      %v580 = vunpack.c.l.b16 %v562
      %v581 = vunpack.c.l.b16 %v563
      %v582 = vunpack.c.l.b16 %v564
      %v583 = vpack.c.b16 %v575, %v574
      %v584 = vpack.c.b16 %v577, %v576
      %v585 = vpack.c.b16 %v579, %v578
      %v586 = vpack.c.b16 %v581, %v580
      %v587 = vpack.c.b16 %v582, %v582
      %v593 = vsel %vm251, %v554, 0
      %v596 = vsel %vm255, %v587, 0
      %598 = vmatprep.subr.bf16.mxu0 0
      %599 = vmatpush1.bf16.msra.mxu0 %v583
      %600 = vmatprep.subr.bf16.mxu0 0
      %601 = vmatpush1.bf16.msra.mxu0 %v584
      %602 = vmatprep.subr.bf16.mxu0 0
      %603 = vmatpush1.bf16.msra.mxu0 %v585
      %604 = vmatprep.subr.bf16.mxu0 0
      %605 = vmatpush1.bf16.msra.mxu0 %v586
      %606 = vmatprep.subr.bf16.mxu0 0
      %607 = vmatpush1.bf16.msra.mxu0 %v596
      %608 = vmatprep.subr.bf16.mxu0 0
      %609 = vmatpush1.bf16.msra.mxu0 0
      %610 = vmatprep.subr.bf16.mxu0 0
      %611 = vmatpush1.bf16.msra.mxu0 0
      %612 = vmatprep.subr.bf16.mxu0 0
      %613 = vmatpush1.bf16.msra.mxu0 0
      %614 = vmatprep.subr.bf16.mxu0 0
      %615 = vmatpush1.bf16.msra.mxu0 0
      %616 = vmatprep.subr.bf16.mxu0 0
      %617 = vmatpush1.bf16.msra.mxu0 0
      %618 = vmatprep.subr.bf16.mxu0 0
      %619 = vmatpush1.bf16.msra.mxu0 0
      %620 = vmatprep.subr.bf16.mxu0 0
      %621 = vmatpush1.bf16.msra.mxu0 0
      %622 = vmatprep.subr.bf16.mxu0 0
      %623 = vmatpush1.bf16.msra.mxu0 0
      %624 = vmatprep.subr.bf16.mxu0 0
      %625 = vmatpush1.bf16.msra.mxu0 0
      %626 = vmatprep.subr.bf16.mxu0 0
      %627 = vmatpush1.bf16.msra.mxu0 0
      %628 = vmatprep.subr.bf16.mxu0 0
      %629 = vmatpush1.bf16.msra.mxu0 0
      %630 = vmatprep.mubr.bf16.mxu0 0
      %631 = vmatmul.mubr.bf16.gmra.mrb[0].mxu0 %v593
      %v632 = vpop.f32.mrb[0].mxu0
      %v633 = vadd.f32 0.0, %v632
      %v634 = vpop.f32.mrb[0].mxu0
      %v635 = vpop.f32.mrb[0].mxu0
      %v636 = vadd.f32 0.0, %v635
      %v637 = vpop.f32.mrb[0].mxu0
      %638 = vdwg.mxu0
      %v639 = vadd.f32 %v550, %v633
      %v640 = vadd.f32 %v551, %v636
      %v641 = vld [vmem:[%s192 + $0x5] sm:$0xff]
      %v642 = vld [vmem:[%s192 + $0xd] sm:$0xff]
      %v643 = vpack.c.bf16 %v642, %v641
      %s644 = scalar_lea.vmem %s1, 180
      %v645 = vld [vmem:[%s644] sm:$0xf]
      %v646 = vld [vmem:[%s644 + $0x4] sm:$0xf]
      %v647 = vld [vmem:[%s644 + $0x8] sm:$0xf]
      %v648 = vld [vmem:[%s644 + $0xc] sm:$0xf]
      %v649 = vld [vmem:[%s644 + $0x10] sm:$0xf]
      %v650 = vld [vmem:[%s644 + $0x14] sm:$0xf]
      %v651 = vld [vmem:[%s644 + $0x18] sm:$0xf]
      %v652 = vld [vmem:[%s644 + $0x1c] sm:$0xf]
      %v653 = vld [vmem:[%s644 + $0x20] sm:$0x1]
      %v663 = vunpack.c.l.b16 %v645
      %v664 = vunpack.c.l.b16 %v646
      %v665 = vunpack.c.l.b16 %v647
      %v666 = vunpack.c.l.b16 %v648
      %v667 = vunpack.c.l.b16 %v649
      %v668 = vunpack.c.l.b16 %v650
      %v669 = vunpack.c.l.b16 %v651
      %v670 = vunpack.c.l.b16 %v652
      %v671 = vunpack.c.l.b16 %v653
      %v672 = vpack.c.b16 %v664, %v663
      %v673 = vpack.c.b16 %v666, %v665
      %v674 = vpack.c.b16 %v668, %v667
      %v675 = vpack.c.b16 %v670, %v669
      %v676 = vpack.c.b16 %v671, %v671
      %v682 = vsel %vm251, %v643, 0
      %v685 = vsel %vm255, %v676, 0
      %687 = vmatprep.subr.bf16.mxu0 0
      %688 = vmatpush1.bf16.msra.mxu0 %v672
      %689 = vmatprep.subr.bf16.mxu0 0
      %690 = vmatpush1.bf16.msra.mxu0 %v673
      %691 = vmatprep.subr.bf16.mxu0 0
      %692 = vmatpush1.bf16.msra.mxu0 %v674
      %693 = vmatprep.subr.bf16.mxu0 0
      %694 = vmatpush1.bf16.msra.mxu0 %v675
      %695 = vmatprep.subr.bf16.mxu0 0
      %696 = vmatpush1.bf16.msra.mxu0 %v685
      %697 = vmatprep.subr.bf16.mxu0 0
      %698 = vmatpush1.bf16.msra.mxu0 0
      %699 = vmatprep.subr.bf16.mxu0 0
      %700 = vmatpush1.bf16.msra.mxu0 0
      %701 = vmatprep.subr.bf16.mxu0 0
      %702 = vmatpush1.bf16.msra.mxu0 0
      %703 = vmatprep.subr.bf16.mxu0 0
      %704 = vmatpush1.bf16.msra.mxu0 0
      %705 = vmatprep.subr.bf16.mxu0 0
      %706 = vmatpush1.bf16.msra.mxu0 0
      %707 = vmatprep.subr.bf16.mxu0 0
      %708 = vmatpush1.bf16.msra.mxu0 0
      %709 = vmatprep.subr.bf16.mxu0 0
      %710 = vmatpush1.bf16.msra.mxu0 0
      %711 = vmatprep.subr.bf16.mxu0 0
      %712 = vmatpush1.bf16.msra.mxu0 0
      %713 = vmatprep.subr.bf16.mxu0 0
      %714 = vmatpush1.bf16.msra.mxu0 0
      %715 = vmatprep.subr.bf16.mxu0 0
      %716 = vmatpush1.bf16.msra.mxu0 0
      %717 = vmatprep.subr.bf16.mxu0 0
      %718 = vmatpush1.bf16.msra.mxu0 0
      %719 = vmatprep.mubr.bf16.mxu0 0
      %720 = vmatmul.mubr.bf16.gmra.mrb[0].mxu0 %v682
      %v721 = vpop.f32.mrb[0].mxu0
      %v722 = vadd.f32 0.0, %v721
      %v723 = vpop.f32.mrb[0].mxu0
      %v724 = vpop.f32.mrb[0].mxu0
      %v725 = vadd.f32 0.0, %v724
      %v726 = vpop.f32.mrb[0].mxu0
      %727 = vdwg.mxu0
      %v728 = vadd.f32 %v639, %v722
      %v729 = vadd.f32 %v640, %v725
      %v730 = vld [vmem:[%s192 + $0x6] sm:$0xff]
      %v731 = vld [vmem:[%s192 + $0xe] sm:$0xff]
      %v732 = vpack.c.bf16 %v731, %v730
      %s733 = scalar_lea.vmem %s1, 216
      %v734 = vld [vmem:[%s733] sm:$0xf]
      %v735 = vld [vmem:[%s733 + $0x4] sm:$0xf]
      %v736 = vld [vmem:[%s733 + $0x8] sm:$0xf]
      %v737 = vld [vmem:[%s733 + $0xc] sm:$0xf]
      %v738 = vld [vmem:[%s733 + $0x10] sm:$0xf]
      %v739 = vld [vmem:[%s733 + $0x14] sm:$0xf]
      %v740 = vld [vmem:[%s733 + $0x18] sm:$0xf]
      %v741 = vld [vmem:[%s733 + $0x1c] sm:$0xf]
      %v742 = vld [vmem:[%s733 + $0x20] sm:$0x1]
      %v752 = vunpack.c.l.b16 %v734
      %v753 = vunpack.c.l.b16 %v735
      %v754 = vunpack.c.l.b16 %v736
      %v755 = vunpack.c.l.b16 %v737
      %v756 = vunpack.c.l.b16 %v738
      %v757 = vunpack.c.l.b16 %v739
      %v758 = vunpack.c.l.b16 %v740
      %v759 = vunpack.c.l.b16 %v741
      %v760 = vunpack.c.l.b16 %v742
      %v761 = vpack.c.b16 %v753, %v752
      %v762 = vpack.c.b16 %v755, %v754
      %v763 = vpack.c.b16 %v757, %v756
      %v764 = vpack.c.b16 %v759, %v758
      %v765 = vpack.c.b16 %v760, %v760
      %v771 = vsel %vm251, %v732, 0
      %v774 = vsel %vm255, %v765, 0
      %776 = vmatprep.subr.bf16.mxu0 0
      %777 = vmatpush1.bf16.msra.mxu0 %v761
      %778 = vmatprep.subr.bf16.mxu0 0
      %779 = vmatpush1.bf16.msra.mxu0 %v762
      %780 = vmatprep.subr.bf16.mxu0 0
      %781 = vmatpush1.bf16.msra.mxu0 %v763
      %782 = vmatprep.subr.bf16.mxu0 0
      %783 = vmatpush1.bf16.msra.mxu0 %v764
      %784 = vmatprep.subr.bf16.mxu0 0
      %785 = vmatpush1.bf16.msra.mxu0 %v774
      %786 = vmatprep.subr.bf16.mxu0 0
      %787 = vmatpush1.bf16.msra.mxu0 0
      %788 = vmatprep.subr.bf16.mxu0 0
      %789 = vmatpush1.bf16.msra.mxu0 0
      %790 = vmatprep.subr.bf16.mxu0 0
      %791 = vmatpush1.bf16.msra.mxu0 0
      %792 = vmatprep.subr.bf16.mxu0 0
      %793 = vmatpush1.bf16.msra.mxu0 0
      %794 = vmatprep.subr.bf16.mxu0 0
      %795 = vmatpush1.bf16.msra.mxu0 0
      %796 = vmatprep.subr.bf16.mxu0 0
      %797 = vmatpush1.bf16.msra.mxu0 0
      %798 = vmatprep.subr.bf16.mxu0 0
      %799 = vmatpush1.bf16.msra.mxu0 0
      %800 = vmatprep.subr.bf16.mxu0 0
      %801 = vmatpush1.bf16.msra.mxu0 0
      %802 = vmatprep.subr.bf16.mxu0 0
      %803 = vmatpush1.bf16.msra.mxu0 0
      %804 = vmatprep.subr.bf16.mxu0 0
      %805 = vmatpush1.bf16.msra.mxu0 0
      %806 = vmatprep.subr.bf16.mxu0 0
      %807 = vmatpush1.bf16.msra.mxu0 0
      %808 = vmatprep.mubr.bf16.mxu0 0
      %809 = vmatmul.mubr.bf16.gmra.mrb[0].mxu0 %v771
      %v810 = vpop.f32.mrb[0].mxu0
      %v811 = vadd.f32 0.0, %v810
      %v812 = vpop.f32.mrb[0].mxu0
      %v813 = vpop.f32.mrb[0].mxu0
      %v814 = vadd.f32 0.0, %v813
      %v815 = vpop.f32.mrb[0].mxu0
      %816 = vdwg.mxu0
      %v817 = vadd.f32 %v728, %v811
      %v818 = vadd.f32 %v729, %v814
      %v819 = vld [vmem:[%s2] sm:$0x1]
      %v821 = vlaneseq
      %v822 = vshrl.u32 %v821, 7
      %v823 = vsub.s32 0, %v822
      %v824 = vrot.slane %v819, %v823
      %v826 = vadd.f32 %v817, %v824
      %v827 = vadd.f32 %v818, %v824
      %v828 = vld [vmem:[%s3] sm:$0xff]
      %v829 = vld [vmem:[%s3 + $0x8] sm:$0xff]
      %v830 = vld [vmem:[%s3 + $0x10] sm:$0xff]
      %v831 = vld [vmem:[%s3 + $0x18] sm:$0xff]
      %v832 = vld [vmem:[%s3 + $0x20] sm:$0xff]
      %v833 = vld [vmem:[%s3 + $0x28] sm:$0xff]
      %v834 = vld [vmem:[%s3 + $0x30] sm:$0xff]
      %v835 = vld [vmem:[%s3 + $0x38] sm:$0xff]
      %v836 = vld [vmem:[%s3 + $0x40] sm:$0xff]
      %v837 = vld [vmem:[%s3 + $0x48] sm:$0xff]
      %v838 = vld [vmem:[%s3 + $0x50] sm:$0xff]
      %v839 = vld [vmem:[%s3 + $0x58] sm:$0xff]
      %v840 = vld [vmem:[%s3 + $0x60] sm:$0xff]
      %v841 = vld [vmem:[%s3 + $0x68] sm:$0xff]
      %v842 = vld [vmem:[%s3 + $0x70] sm:$0xff]
      %v843 = vld [vmem:[%s3 + $0x78] sm:$0xff]
      %844 = vmatprep.subr.mxu0 0.0
      %845 = vmatpush1.msra.mxu0 %v828
      %846 = vmatprep.subr.mxu0 0.0
      %847 = vmatpush1.msra.mxu0 %v829
      %848 = vmatprep.subr.mxu0 0.0
      %849 = vmatpush1.msra.mxu0 %v830
      %850 = vmatprep.subr.mxu0 0.0
      %851 = vmatpush1.msra.mxu0 %v831
      %852 = vmatprep.subr.mxu0 0.0
      %853 = vmatpush1.msra.mxu0 %v832
      %854 = vmatprep.subr.mxu0 0.0
      %855 = vmatpush1.msra.mxu0 %v833
      %856 = vmatprep.subr.mxu0 0.0
      %857 = vmatpush1.msra.mxu0 %v834
      %858 = vmatprep.subr.mxu0 0.0
      %859 = vmatpush1.msra.mxu0 %v835
      %860 = vmatprep.subr.mxu0 0.0
      %861 = vmatpush1.msra.mxu0 %v836
      %862 = vmatprep.subr.mxu0 0.0
      %863 = vmatpush1.msra.mxu0 %v837
      %864 = vmatprep.subr.mxu0 0.0
      %865 = vmatpush1.msra.mxu0 %v838
      %866 = vmatprep.subr.mxu0 0.0
      %867 = vmatpush1.msra.mxu0 %v839
      %868 = vmatprep.subr.mxu0 0.0
      %869 = vmatpush1.msra.mxu0 %v840
      %870 = vmatprep.subr.mxu0 0.0
      %871 = vmatpush1.msra.mxu0 %v841
      %872 = vmatprep.subr.mxu0 0.0
      %873 = vmatpush1.msra.mxu0 %v842
      %874 = vmatprep.subr.mxu0 0.0
      %875 = vmatpush1.msra.mxu0 %v843
      %876 = vmatprep.subr.mxu0 0.0
      %877 = vmatpush1.msra.mxu0 0.0
      %878 = vmatprep.subr.mxu0 0.0
      %879 = vmatpush1.msra.mxu0 0.0
      %880 = vmatprep.subr.mxu0 0.0
      %881 = vmatpush1.msra.mxu0 0.0
      %882 = vmatprep.subr.mxu0 0.0
      %883 = vmatpush1.msra.mxu0 0.0
      %884 = vmatprep.subr.mxu0 0.0
      %885 = vmatpush1.msra.mxu0 0.0
      %886 = vmatprep.subr.mxu0 0.0
      %887 = vmatpush1.msra.mxu0 0.0
      %888 = vmatprep.subr.mxu0 0.0
      %889 = vmatpush1.msra.mxu0 0.0
      %890 = vmatprep.subr.mxu0 0.0
      %891 = vmatpush1.msra.mxu0 0.0
      %892 = vmatprep.subr.mxu0 0.0
      %893 = vmatpush1.msra.mxu0 0.0
      %894 = vmatprep.subr.mxu0 0.0
      %895 = vmatpush1.msra.mxu0 0.0
      %896 = vmatprep.subr.mxu0 0.0
      %897 = vmatpush1.msra.mxu0 0.0
      %898 = vmatprep.subr.mxu0 0.0
      %899 = vmatpush1.msra.mxu0 0.0
      %900 = vmatprep.subr.mxu0 0.0
      %901 = vmatpush1.msra.mxu0 0.0
      %902 = vmatprep.subr.mxu0 0.0
      %903 = vmatpush1.msra.mxu0 0.0
      %904 = vmatprep.subr.mxu0 0.0
      %905 = vmatpush1.msra.mxu0 0.0
      %906 = vmatprep.subr.mxu0 0.0
      %907 = vmatpush1.msra.mxu0 0.0
      %908 = vmatprep.mubr.f32.mxu0 0.0
      %909 = vmatmul.mubr.f32.gmra.mrb[0].mxu0 %v826
      %v910 = vpop.f32.mrb[0].mxu0
      %v911 = vadd.f32 0.0, %v910
      %v912 = vpop.f32.mrb[0].mxu0
      %913 = vmatprep.mubr.f32.mxu0 0.0
      %914 = vmatmul.mubr.f32.gmra.mrb[0].mxu0 %v827
      %v915 = vpop.f32.mrb[0].mxu0
      %v916 = vadd.f32 0.0, %v915
      %v917 = vpop.f32.mrb[0].mxu0
      %918 = vdwg.mxu0
      %v919 = vadd.f32 %v911, %v916
      %v920 = vrot.slane %v919, 4
      %v921 = vadd.f32 %v919, %v920
      %v922 = vrot.slane %v921, 2
      %v923 = vadd.f32 %v921, %v922
      %v924 = vrot.slane %v923, 1
      %v925 = vadd.f32 %v923, %v924
      %v926 = vmul.f32 %v826, %v826
      %v927 = vmul.f32 %v827, %v827
      %928 = vmatprep.subr.mxu0 0.0
      %929 = vmatpush1.msra.mxu0 %v828
      %930 = vmatprep.subr.mxu0 0.0
      %931 = vmatpush1.msra.mxu0 %v829
      %932 = vmatprep.subr.mxu0 0.0
      %933 = vmatpush1.msra.mxu0 %v830
      %934 = vmatprep.subr.mxu0 0.0
      %935 = vmatpush1.msra.mxu0 %v831
      %936 = vmatprep.subr.mxu0 0.0
      %937 = vmatpush1.msra.mxu0 %v832
      %938 = vmatprep.subr.mxu0 0.0
      %939 = vmatpush1.msra.mxu0 %v833
      %940 = vmatprep.subr.mxu0 0.0
      %941 = vmatpush1.msra.mxu0 %v834
      %942 = vmatprep.subr.mxu0 0.0
      %943 = vmatpush1.msra.mxu0 %v835
      %944 = vmatprep.subr.mxu0 0.0
      %945 = vmatpush1.msra.mxu0 %v836
      %946 = vmatprep.subr.mxu0 0.0
      %947 = vmatpush1.msra.mxu0 %v837
      %948 = vmatprep.subr.mxu0 0.0
      %949 = vmatpush1.msra.mxu0 %v838
      %950 = vmatprep.subr.mxu0 0.0
      %951 = vmatpush1.msra.mxu0 %v839
      %952 = vmatprep.subr.mxu0 0.0
      %953 = vmatpush1.msra.mxu0 %v840
      %954 = vmatprep.subr.mxu0 0.0
      %955 = vmatpush1.msra.mxu0 %v841
      %956 = vmatprep.subr.mxu0 0.0
      %957 = vmatpush1.msra.mxu0 %v842
      %958 = vmatprep.subr.mxu0 0.0
      %959 = vmatpush1.msra.mxu0 %v843
      %960 = vmatprep.subr.mxu0 0.0
      %961 = vmatpush1.msra.mxu0 0.0
      %962 = vmatprep.subr.mxu0 0.0
      %963 = vmatpush1.msra.mxu0 0.0
      %964 = vmatprep.subr.mxu0 0.0
      %965 = vmatpush1.msra.mxu0 0.0
      %966 = vmatprep.subr.mxu0 0.0
      %967 = vmatpush1.msra.mxu0 0.0
      %968 = vmatprep.subr.mxu0 0.0
      %969 = vmatpush1.msra.mxu0 0.0
      %970 = vmatprep.subr.mxu0 0.0
      %971 = vmatpush1.msra.mxu0 0.0
      %972 = vmatprep.subr.mxu0 0.0
      %973 = vmatpush1.msra.mxu0 0.0
      %974 = vmatprep.subr.mxu0 0.0
      %975 = vmatpush1.msra.mxu0 0.0
      %976 = vmatprep.subr.mxu0 0.0
      %977 = vmatpush1.msra.mxu0 0.0
      %978 = vmatprep.subr.mxu0 0.0
      %979 = vmatpush1.msra.mxu0 0.0
      %980 = vmatprep.subr.mxu0 0.0
      %981 = vmatpush1.msra.mxu0 0.0
      %982 = vmatprep.subr.mxu0 0.0
      %983 = vmatpush1.msra.mxu0 0.0
      %984 = vmatprep.subr.mxu0 0.0
      %985 = vmatpush1.msra.mxu0 0.0
      %986 = vmatprep.subr.mxu0 0.0
      %987 = vmatpush1.msra.mxu0 0.0
      %988 = vmatprep.subr.mxu0 0.0
      %989 = vmatpush1.msra.mxu0 0.0
      %990 = vmatprep.subr.mxu0 0.0
      %991 = vmatpush1.msra.mxu0 0.0
      %992 = vmatprep.mubr.f32.mxu0 0.0
      %993 = vmatmul.mubr.f32.gmra.mrb[0].mxu0 %v926
      %v994 = vpop.f32.mrb[0].mxu0
      %v995 = vadd.f32 0.0, %v994
      %v996 = vpop.f32.mrb[0].mxu0
      %997 = vmatprep.mubr.f32.mxu0 0.0
      %998 = vmatmul.mubr.f32.gmra.mrb[0].mxu0 %v927
      %v999 = vpop.f32.mrb[0].mxu0
      %v1000 = vadd.f32 0.0, %v999
      %v1001 = vpop.f32.mrb[0].mxu0
      %1002 = vdwg.mxu0
      %v1003 = vadd.f32 %v995, %v1000
      %v1004 = vrot.slane %v1003, 4
      %v1005 = vadd.f32 %v1003, %v1004
      %v1006 = vrot.slane %v1005, 2
      %v1007 = vadd.f32 %v1005, %v1006
      %v1008 = vrot.slane %v1007, 1
      %v1009 = vadd.f32 %v1007, %v1008
      %v1010 = vmul.f32 %v925, %v925
      %v1011 = vsub.f32 %v1009, %v1010
      %v1012 = vmax.f32 %v1011, 0.0
      %v1013 = vsub.f32 %v826, %v925
      %v1014 = vsub.f32 %v827, %v925
      %v1015 = vadd.f32 %v1012, 1e-05
      %v1016 = vrsqrt.pop %v1015
      %v1017 = vmul.f32 %v1013, %v1016
      %v1018 = vmul.f32 %v1014, %v1016
      %v1019 = vmax.f32 %v1017, 0.0
      %v1020 = vmax.f32 %v1018, 0.0
      %1021 = vst [vmem:[%s197] sm:$0xff] %v1019
      %1022 = vst [vmem:[%s197 + $0x8] sm:$0xff] %v1020
      %p1023 = scmp.lt.s32.totalorder %s15, 1
      %s1024 = scalar_select %p1023, %s15, 1
      %s1025 = smul.addr %s1024, 2
      %s1026 = smul.addr %s1025, 8
      %s1027 = scalar_lea.vmem %s4, %s1026
      // Predicated region
      $region37: #{generator_forward.7} parent=35 // pred_check
        %p1028 = pneg %p122
      $region38: #{generator_forward.7} parent=35 // pred_check_branch
        %1030 = sbr.rel (%p1028) target = $region40
      $region39: #{generator_forward.7} parent=35 // pred_region
        _
      $region40: #{generator_forward.7} parent=35 // pred_fallthru
        _
    $region36: #{generator_forward.7} parent=5 // pred_fallthru
      _
    %p1031 = scmp.le.s32.totalorder 2, %s10
    // Predicated region
    $region41: #{generator_forward.7} parent=5 // pred_check
      %p1032 = pneg %p1031
    $region42: #{generator_forward.7} parent=5 // pred_check_branch
      %1034 = sbr.rel (%p1032) target = $region44
    $region43: #{generator_forward.7} parent=5 // pred_region
      %s1035 = ssub.s32 %s10, 2
      // Predicated region
      $region45: #{generator_forward.7} parent=43 // pred_check
        %p1036 = pneg %p128
      $region46: #{generator_forward.7} parent=43 // pred_check_branch
        %1038 = sbr.rel (%p1036) target = $region48
      $region47: #{generator_forward.7} parent=43 // pred_region
        %p1039 = scmp.lt.s32.totalorder %s16, 1
        %s1040 = scalar_select %p1039, %s16, 1
        %s1041 = smul.addr %s1040, 2
        %s1042 = smul.addr %s1041, 8
        %s1043 = scalar_lea.vmem %s4, %s1042
      $region48: #{generator_forward.7} parent=43 // pred_fallthru
        _
    $region44: #{generator_forward.7} parent=5 // pred_fallthru
      _
  $region6: #{generator_forward.7} parent=0 // loop_footer
    %s14 = sadd.s32 1, %s10
  $region7: #{generator_forward.7} parent=0 // loop_footer_branch
    %9 = sbr.rel target = $region3
  $region8: #{generator_forward.7} parent=0 // loop_exit
    _

// kernel: generator_forward.9
$region0: #{generator_forward.9}
  #allocation0 [shape = 'u32[]', space=smem, size = 0x4, offset = 0x4, fixed_abs, tag = 'smem constant byte address 0x4 - core index']
  #allocation1 [shape = 'u32[144,128]{1,0:T(1,128)}', space=vmem, size = 0x12000, scoped, tag = 'internal scratch']
  %s0 = inlined_call_operand.vmem [shape: f32[2,2,5,160], index: 0, kind: input, shape index: {}]
  %s1 = inlined_call_operand.vmem [shape: bf16[3,160,128], index: 1, kind: input, shape index: {}]
  %s2 = inlined_call_operand.vmem [shape: f32[1,128], index: 2, kind: input, shape index: {}]
  %s3 = inlined_call_operand.vmem [shape: f32[128,128], index: 3, kind: input, shape index: {}]
  %s4 = inlined_call_operand.vmem [shape: f32[2,4,128], index: 4, kind: output, shape index: {}]
  %s5 = sld [smem:[#allocation0]]
  $region49: #{generator_forward.9} parent=0
    _
  %s7 = ssub.s32 1, %s5
  %s8 = scalar_select 0, %s7, %s5
  loop: start=0, step=1, limit=4
  $region2: #{generator_forward.9} parent=0 // loop_pre_header
    _
  $region3: #{generator_forward.9} parent=0 // loop_header
    %s10 = sphi 0, %s14
    %p11 = scmp.ge.s32.totalorder %s10, 4
    %s20 = sphi 0, %s22
    %s23 = sphi 0, %s20
    %s24 = sphi 0, %s23
    %s40 = sphi 0, %s24
    %s44 = sphi 0, %s44
    %s46 = sphi 0, %s44
    %s47 = sphi 0, %s46
    %s61 = sphi 0, %s47
    %s65 = sphi 0, %s65
    %s67 = sphi 0, %s65
    %s68 = sphi 0, %s67
    %s82 = sphi 0, %s68
    %s86 = sphi 0, %s86
    %s88 = sphi 0, %s86
    %s89 = sphi 0, %s88
    %s103 = sphi 0, %s89
    %s109 = sphi 0, %s111
    %s112 = sphi 0, %s109
    %s113 = sphi 0, %s112
    %s129 = sphi 0, %s113
  $region4: #{generator_forward.9} parent=0 // loop_header_branch
    %13 = sbr.rel (%p11) target = $region8
  $region5: #{generator_forward.9} parent=0 // loop_body
    %s15 = ssub.s32 %s10, 1
    %s16 = ssub.s32 %s10, 2
    %s17 = sadd.s32 %s10, 1
    %s18 = ssub.s32 %s10, %s17
    %p19 = scmp.eq.s32.totalorder %s18, 0
    %s21 = sadd.s32 %s20, 1
    %s22 = scalar_select %p19, %s20, %s21
    %p25 = pneg %p19
    %p26 = scmp.eq.s32.totalorder %s10, 1
    %p27 = por %p25, %p26
    %p28 = scmp.ne.s32.totalorder %s20, %s23
    %p29 = scmp.eq.s32.totalorder %s10, 0
    %p30 = por %p28, %p29
    %p31 = scmp.ne.s32.totalorder %s20, %s23
    %p32 = scmp.eq.s32.totalorder %s15, 1
    %p33 = por %p31, %p32
    %p34 = scmp.ne.s32.totalorder %s23, %s24
    %p35 = scmp.eq.s32.totalorder %s15, 0
    %p36 = por %p34, %p35
    %p37 = scmp.ne.s32.totalorder %s23, %s24
    %p38 = scmp.eq.s32.totalorder %s16, 1
    %p39 = por %p37, %p38
    %p41 = scmp.ne.s32.totalorder %s24, %s40
    %p42 = scmp.eq.s32.totalorder %s16, 0
    %p43 = por %p41, %p42
    %s45 = sadd.s32 %s44, 1
    %p48 = scmp.eq.s32.totalorder %s10, 1
    %p49 = scmp.ne.s32.totalorder %s44, %s46
    %p50 = scmp.eq.s32.totalorder %s10, 0
    %p51 = por %p49, %p50
    %p52 = scmp.ne.s32.totalorder %s44, %s46
    %p53 = scmp.eq.s32.totalorder %s15, 1
    %p54 = por %p52, %p53
    %p55 = scmp.ne.s32.totalorder %s46, %s47
    %p56 = scmp.eq.s32.totalorder %s15, 0
    %p57 = por %p55, %p56
    %p58 = scmp.ne.s32.totalorder %s46, %s47
    %p59 = scmp.eq.s32.totalorder %s16, 1
    %p60 = por %p58, %p59
    %p62 = scmp.ne.s32.totalorder %s47, %s61
    %p63 = scmp.eq.s32.totalorder %s16, 0
    %p64 = por %p62, %p63
    %s66 = sadd.s32 %s65, 1
    %p69 = scmp.eq.s32.totalorder %s10, 1
    %p70 = scmp.ne.s32.totalorder %s65, %s67
    %p71 = scmp.eq.s32.totalorder %s10, 0
    %p72 = por %p70, %p71
    %p73 = scmp.ne.s32.totalorder %s65, %s67
    %p74 = scmp.eq.s32.totalorder %s15, 1
    %p75 = por %p73, %p74
    %p76 = scmp.ne.s32.totalorder %s67, %s68
    %p77 = scmp.eq.s32.totalorder %s15, 0
    %p78 = por %p76, %p77
    %p79 = scmp.ne.s32.totalorder %s67, %s68
    %p80 = scmp.eq.s32.totalorder %s16, 1
    %p81 = por %p79, %p80
    %p83 = scmp.ne.s32.totalorder %s68, %s82
    %p84 = scmp.eq.s32.totalorder %s16, 0
    %p85 = por %p83, %p84
    %s87 = sadd.s32 %s86, 1
    %p90 = scmp.eq.s32.totalorder %s10, 1
    %p91 = scmp.ne.s32.totalorder %s86, %s88
    %p92 = scmp.eq.s32.totalorder %s10, 0
    %p93 = por %p91, %p92
    %p94 = scmp.ne.s32.totalorder %s86, %s88
    %p95 = scmp.eq.s32.totalorder %s15, 1
    %p96 = por %p94, %p95
    %p97 = scmp.ne.s32.totalorder %s88, %s89
    %p98 = scmp.eq.s32.totalorder %s15, 0
    %p99 = por %p97, %p98
    %p100 = scmp.ne.s32.totalorder %s88, %s89
    %p101 = scmp.eq.s32.totalorder %s16, 1
    %p102 = por %p100, %p101
    %p104 = scmp.ne.s32.totalorder %s89, %s103
    %p105 = scmp.eq.s32.totalorder %s16, 0
    %p106 = por %p104, %p105
    %s107 = ssub.s32 %s10, %s17
    %p108 = scmp.eq.s32.totalorder %s107, 0
    %s110 = sadd.s32 %s109, 1
    %s111 = scalar_select %p108, %s109, %s110
    %p114 = pneg %p108
    %p115 = scmp.eq.s32.totalorder %s10, 1
    %p116 = por %p114, %p115
    %p117 = scmp.ne.s32.totalorder %s109, %s112
    %p118 = scmp.eq.s32.totalorder %s10, 0
    %p119 = por %p117, %p118
    %p120 = scmp.ne.s32.totalorder %s109, %s112
    %p121 = scmp.eq.s32.totalorder %s15, 1
    %p122 = por %p120, %p121
    %p123 = scmp.ne.s32.totalorder %s112, %s113
    %p124 = scmp.eq.s32.totalorder %s15, 0
    %p125 = por %p123, %p124
    %p126 = scmp.ne.s32.totalorder %s112, %s113
    %p127 = scmp.eq.s32.totalorder %s16, 1
    %p128 = por %p126, %p127
    %p130 = scmp.ne.s32.totalorder %s113, %s129
    %p131 = scmp.eq.s32.totalorder %s16, 0
    %p132 = por %p130, %p131
    %p133 = scmp.le.s32.totalorder 1, %s10
    %p134 = scmp.lt.s32.totalorder %s10, 3
    %p135 = pnand %p133, %p134
    %p136 = pneg %p135
    // Predicated region
    $region9: #{generator_forward.9} parent=5 // pred_check
      _
    $region10: #{generator_forward.9} parent=5 // pred_check_branch
      %138 = sbr.rel (%p135) target = $region12
    $region11: #{generator_forward.9} parent=5 // pred_region
      %s139 = ssub.s32 %s10, 1
      // Predicated region
      $region13: #{generator_forward.9} parent=11 // pred_check
        %p140 = pneg %p57
      $region14: #{generator_forward.9} parent=11 // pred_check_branch
        %142 = sbr.rel (%p140) target = $region16
      $region15: #{generator_forward.9} parent=11 // pred_region
        _
      $region16: #{generator_forward.9} parent=11 // pred_fallthru
        _
      // Predicated region
      $region17: #{generator_forward.9} parent=11 // pred_check
        %p143 = pneg %p78
      $region18: #{generator_forward.9} parent=11 // pred_check_branch
        %145 = sbr.rel (%p143) target = $region20
      $region19: #{generator_forward.9} parent=11 // pred_region
        _
      $region20: #{generator_forward.9} parent=11 // pred_fallthru
        _
      // Predicated region
      $region21: #{generator_forward.9} parent=11 // pred_check
        %p146 = pneg %p99
      $region22: #{generator_forward.9} parent=11 // pred_check_branch
        %148 = sbr.rel (%p146) target = $region24
      $region23: #{generator_forward.9} parent=11 // pred_region
        _
      $region24: #{generator_forward.9} parent=11 // pred_fallthru
        _
    $region12: #{generator_forward.9} parent=5 // pred_fallthru
      _
    %p149 = scmp.lt.s32.totalorder %s10, 2
    // Predicated region
    $region25: #{generator_forward.9} parent=5 // pred_check
      %p150 = pneg %p149
    $region26: #{generator_forward.9} parent=5 // pred_check_branch
      %152 = sbr.rel (%p150) target = $region28
    $region27: #{generator_forward.9} parent=5 // pred_region
      // Predicated region
      $region29: #{generator_forward.9} parent=27 // pred_check
        %p153 = pneg %p30
      $region30: #{generator_forward.9} parent=27 // pred_check_branch
        %155 = sbr.rel (%p153) target = $region32
      $region31: #{generator_forward.9} parent=27 // pred_region
        %p156 = scmp.lt.s32.totalorder %s10, 1
        %s157 = scalar_select %p156, %s10, 1
        %s158 = smul.addr %s157, 4
        %s159 = smul.addr %s158, 8
        %s160 = scalar_lea.vmem %s0, %s159
      $region32: #{generator_forward.9} parent=27 // pred_fallthru
        _
    $region28: #{generator_forward.9} parent=5 // pred_fallthru
      _
    %p161 = scmp.le.s32.totalorder 1, %s10
    %p162 = scmp.lt.s32.totalorder %s10, 3
    %p163 = pnand %p161, %p162
    %p164 = pneg %p163
    // Predicated region
    $region33: #{generator_forward.9} parent=5 // pred_check
      _
    $region34: #{generator_forward.9} parent=5 // pred_check_branch
      %166 = sbr.rel (%p163) target = $region36
    $region35: #{generator_forward.9} parent=5 // pred_region
      %s167 = ssub.s32 %s10, 1
      %p168 = scmp.lt.s32.totalorder %s15, 1
      %s169 = scalar_select %p168, %s15, 1
      %s170 = smul.addr %s169, 4
      %s171 = smul.addr %s170, 8
      %s172 = scalar_lea.vmem %s0, %s171
      %p173 = pneg %p36
      %p174 = pneg %p33
      %p175 = pneg %p57
      %p176 = pneg %p54
      %p177 = pneg %p78
      %p178 = pneg %p75
      %p179 = pneg %p99
      %p180 = pneg %p96
      %p181 = pneg %p125
      %p182 = pneg %p122
      %p183 = scmp.lt.s32.totalorder %s15, 1
      %s184 = scalar_select %p183, %s15, 1
      %s185 = smul.addr %s184, 4
      %s186 = scalar_lea.vmem %s4, %s185
      %p187 = scmp.lt.s32.totalorder %s15, 1
      %s188 = scalar_select %p187, %s15, 1
      %s189 = smul.addr %s188, 4
      %s190 = smul.addr %s189, 8
      %s191 = scalar_lea.vmem %s0, %s190
      %p192 = scmp.lt.s32.totalorder %s15, 1
      %s193 = scalar_select %p192, %s15, 1
      %s194 = smul.addr %s193, 4
      %s195 = scalar_lea.vmem %s4, %s194
      %v197 = vld [vmem:[%s191] sm:$0xf]
      %v198 = vld [vmem:[%s191 + $0x8] sm:$0xf]
      %v199 = vpack.c.bf16 %v197, %v197
      %v200 = vpack.c.bf16 %v198, %v198
      %v201 = vld [vmem:[%s1] sm:$0xf]
      %v202 = vld [vmem:[%s1 + $0x4] sm:$0xf]
      %v203 = vld [vmem:[%s1 + $0x8] sm:$0xf]
      %v204 = vld [vmem:[%s1 + $0xc] sm:$0xf]
      %v205 = vld [vmem:[%s1 + $0x10] sm:$0xf]
      %v206 = vld [vmem:[%s1 + $0x14] sm:$0xf]
      %v207 = vld [vmem:[%s1 + $0x18] sm:$0xf]
      %v208 = vld [vmem:[%s1 + $0x1c] sm:$0xf]
      %v209 = vld [vmem:[%s1 + $0x20] sm:$0xf]
      %v210 = vld [vmem:[%s1 + $0x24] sm:$0xf]
      %v211 = vld [vmem:[%s1 + $0x28] sm:$0xf]
      %v212 = vld [vmem:[%s1 + $0x2c] sm:$0xf]
      %v213 = vld [vmem:[%s1 + $0x30] sm:$0xf]
      %v214 = vld [vmem:[%s1 + $0x34] sm:$0xf]
      %v215 = vld [vmem:[%s1 + $0x38] sm:$0xf]
      %v216 = vld [vmem:[%s1 + $0x3c] sm:$0xf]
      %v217 = vld [vmem:[%s1 + $0x40] sm:$0xf]
      %v218 = vld [vmem:[%s1 + $0x44] sm:$0xf]
      %v219 = vld [vmem:[%s1 + $0x48] sm:$0xf]
      %v220 = vld [vmem:[%s1 + $0x4c] sm:$0xf]
      %s221 = scalar_lea.vmem %s191, 16
      %v222 = vld [vmem:[%s221] sm:$0xf]
      %v223 = vld [vmem:[%s221 + $0x8] sm:$0xf]
      %v224 = vpack.c.bf16 %v222, %v222
      %v225 = vpack.c.bf16 %v223, %v223
      %s226 = scalar_lea.vmem %s1, 80
      %v227 = vld [vmem:[%s226] sm:$0xf]
      %v228 = vld [vmem:[%s226 + $0x4] sm:$0xf]
      %v229 = vld [vmem:[%s226 + $0x8] sm:$0xf]
      %v230 = vld [vmem:[%s226 + $0xc] sm:$0xf]
      %v231 = vld [vmem:[%s226 + $0x10] sm:$0xf]
      %v232 = vld [vmem:[%s226 + $0x14] sm:$0xf]
      %v233 = vld [vmem:[%s226 + $0x18] sm:$0xf]
      %v234 = vld [vmem:[%s226 + $0x1c] sm:$0xf]
      %v235 = vld [vmem:[%s226 + $0x20] sm:$0xf]
      %v236 = vld [vmem:[%s226 + $0x24] sm:$0xf]
      %v237 = vld [vmem:[%s226 + $0x28] sm:$0xf]
      %v238 = vld [vmem:[%s226 + $0x2c] sm:$0xf]
      %v239 = vld [vmem:[%s226 + $0x30] sm:$0xf]
      %v240 = vld [vmem:[%s226 + $0x34] sm:$0xf]
      %v241 = vld [vmem:[%s226 + $0x38] sm:$0xf]
      %v242 = vld [vmem:[%s226 + $0x3c] sm:$0xf]
      %v243 = vld [vmem:[%s226 + $0x40] sm:$0xf]
      %v244 = vld [vmem:[%s226 + $0x44] sm:$0xf]
      %v245 = vld [vmem:[%s226 + $0x48] sm:$0xf]
      %v246 = vld [vmem:[%s226 + $0x4c] sm:$0xf]
      %v267 = vunpack.c.l.b16 %v227
      %v268 = vunpack.c.l.b16 %v228
      %v269 = vunpack.c.l.b16 %v229
      %v270 = vunpack.c.l.b16 %v230
      %v271 = vunpack.c.l.b16 %v231
      %v272 = vunpack.c.l.b16 %v232
      %v273 = vunpack.c.l.b16 %v233
      %v274 = vunpack.c.l.b16 %v234
      %v275 = vunpack.c.l.b16 %v235
      %v276 = vunpack.c.l.b16 %v236
      %v277 = vunpack.c.l.b16 %v237
      %v278 = vunpack.c.l.b16 %v238
      %v279 = vunpack.c.l.b16 %v239
      %v280 = vunpack.c.l.b16 %v240
      %v281 = vunpack.c.l.b16 %v241
      %v282 = vunpack.c.l.b16 %v242
      %v283 = vunpack.c.l.b16 %v243
      %v284 = vunpack.c.l.b16 %v244
      %v285 = vunpack.c.l.b16 %v245
      %v286 = vunpack.c.l.b16 %v246
      %v287 = vpack.c.b16 %v268, %v267
      %v288 = vpack.c.b16 %v270, %v269
      %v289 = vpack.c.b16 %v272, %v271
      %v290 = vpack.c.b16 %v274, %v273
      %v291 = vpack.c.b16 %v276, %v275
      %v292 = vpack.c.b16 %v278, %v277
      %v293 = vpack.c.b16 %v280, %v279
      %v294 = vpack.c.b16 %v282, %v281
      %v295 = vpack.c.b16 %v284, %v283
      %v296 = vpack.c.b16 %v286, %v285
      %vm307 = vcmask 261120
      %v309 = vsel %vm307, %v225, 0
      %311 = vmatprep.subr.bf16.mxu0 0
      %312 = vmatpush1.bf16.msra.mxu0 %v287
      %313 = vmatprep.subr.bf16.mxu0 0
      %314 = vmatpush1.bf16.msra.mxu0 %v288
      %315 = vmatprep.subr.bf16.mxu0 0
      %316 = vmatpush1.bf16.msra.mxu0 %v289
      %317 = vmatprep.subr.bf16.mxu0 0
      %318 = vmatpush1.bf16.msra.mxu0 %v290
      %319 = vmatprep.subr.bf16.mxu0 0
      %320 = vmatpush1.bf16.msra.mxu0 %v291
      %321 = vmatprep.subr.bf16.mxu0 0
      %322 = vmatpush1.bf16.msra.mxu0 %v292
      %323 = vmatprep.subr.bf16.mxu0 0
      %324 = vmatpush1.bf16.msra.mxu0 %v293
      %325 = vmatprep.subr.bf16.mxu0 0
      %326 = vmatpush1.bf16.msra.mxu0 %v294
      %327 = vmatprep.subr.bf16.mxu0 0
      %328 = vmatpush1.bf16.msra.mxu0 %v295
      %329 = vmatprep.subr.bf16.mxu0 0
      %330 = vmatpush1.bf16.msra.mxu0 %v296
      %331 = vmatprep.subr.bf16.mxu0 0
      %332 = vmatpush1.bf16.msra.mxu0 0
      %333 = vmatprep.subr.bf16.mxu0 0
      %334 = vmatpush1.bf16.msra.mxu0 0
      %335 = vmatprep.subr.bf16.mxu0 0
      %336 = vmatpush1.bf16.msra.mxu0 0
      %337 = vmatprep.subr.bf16.mxu0 0
      %338 = vmatpush1.bf16.msra.mxu0 0
      %339 = vmatprep.subr.bf16.mxu0 0
      %340 = vmatpush1.bf16.msra.mxu0 0
      %341 = vmatprep.subr.bf16.mxu0 0
      %342 = vmatpush1.bf16.msra.mxu0 0
      %343 = vmatprep.mubr.bf16.mxu0 %v309
      %344 = vmatmul.mubr.bf16.gmra.mrb[0].mxu0 %v224
      %v345 = vpop.f32.mrb[0].mxu0
      %v346 = vadd.f32 0.0, %v345
      %v347 = vpop.f32.mrb[0].mxu0
      %v348 = vpop.f32.mrb[0].mxu0
      %v349 = vpop.f32.mrb[0].mxu0
      %350 = vdwg.mxu0
      %v371 = vunpack.c.l.b16 %v201
      %v372 = vunpack.c.l.b16 %v202
      %v373 = vunpack.c.l.b16 %v203
      %v374 = vunpack.c.l.b16 %v204
      %v375 = vunpack.c.l.b16 %v205
      %v376 = vunpack.c.l.b16 %v206
      %v377 = vunpack.c.l.b16 %v207
      %v378 = vunpack.c.l.b16 %v208
      %v379 = vunpack.c.l.b16 %v209
      %v380 = vunpack.c.l.b16 %v210
      %v381 = vunpack.c.l.b16 %v211
      %v382 = vunpack.c.l.b16 %v212
      %v383 = vunpack.c.l.b16 %v213
      %v384 = vunpack.c.l.b16 %v214
      %v385 = vunpack.c.l.b16 %v215
      %v386 = vunpack.c.l.b16 %v216
      %v387 = vunpack.c.l.b16 %v217
      %v388 = vunpack.c.l.b16 %v218
      %v389 = vunpack.c.l.b16 %v219
      %v390 = vunpack.c.l.b16 %v220
      %v391 = vpack.c.b16 %v372, %v371
      %v392 = vpack.c.b16 %v374, %v373
      %v393 = vpack.c.b16 %v376, %v375
      %v394 = vpack.c.b16 %v378, %v377
      %v395 = vpack.c.b16 %v380, %v379
      %v396 = vpack.c.b16 %v382, %v381
      %v397 = vpack.c.b16 %v384, %v383
      %v398 = vpack.c.b16 %v386, %v385
      %v399 = vpack.c.b16 %v388, %v387
      %v400 = vpack.c.b16 %v390, %v389
      %v412 = vsel %vm307, %v200, 0
      %414 = vmatprep.subr.bf16.mxu0 0
      %415 = vmatpush1.bf16.msra.mxu0 %v391
      %416 = vmatprep.subr.bf16.mxu0 0
      %417 = vmatpush1.bf16.msra.mxu0 %v392
      %418 = vmatprep.subr.bf16.mxu0 0
      %419 = vmatpush1.bf16.msra.mxu0 %v393
      %420 = vmatprep.subr.bf16.mxu0 0
      %421 = vmatpush1.bf16.msra.mxu0 %v394
      %422 = vmatprep.subr.bf16.mxu0 0
      %423 = vmatpush1.bf16.msra.mxu0 %v395
      %424 = vmatprep.subr.bf16.mxu0 0
      %425 = vmatpush1.bf16.msra.mxu0 %v396
      %426 = vmatprep.subr.bf16.mxu0 0
      %427 = vmatpush1.bf16.msra.mxu0 %v397
      %428 = vmatprep.subr.bf16.mxu0 0
      %429 = vmatpush1.bf16.msra.mxu0 %v398
      %430 = vmatprep.subr.bf16.mxu0 0
      %431 = vmatpush1.bf16.msra.mxu0 %v399
      %432 = vmatprep.subr.bf16.mxu0 0
      %433 = vmatpush1.bf16.msra.mxu0 %v400
      %434 = vmatprep.subr.bf16.mxu0 0
      %435 = vmatpush1.bf16.msra.mxu0 0
      %436 = vmatprep.subr.bf16.mxu0 0
      %437 = vmatpush1.bf16.msra.mxu0 0
      %438 = vmatprep.subr.bf16.mxu0 0
      %439 = vmatpush1.bf16.msra.mxu0 0
      %440 = vmatprep.subr.bf16.mxu0 0
      %441 = vmatpush1.bf16.msra.mxu0 0
      %442 = vmatprep.subr.bf16.mxu0 0
      %443 = vmatpush1.bf16.msra.mxu0 0
      %444 = vmatprep.subr.bf16.mxu0 0
      %445 = vmatpush1.bf16.msra.mxu0 0
      %446 = vmatprep.mubr.bf16.mxu0 %v412
      %447 = vmatmul.mubr.bf16.gmra.mrb[0].mxu0 %v199
      %v448 = vpop.f32.mrb[0].mxu0
      %v449 = vadd.f32 %v346, %v448
      %v450 = vpop.f32.mrb[0].mxu0
      %v451 = vpop.f32.mrb[0].mxu0
      %v452 = vpop.f32.mrb[0].mxu0
      %453 = vdwg.mxu0
      %v454 = vld [vmem:[%s191] sm:$0x1e]
      %v455 = vld [vmem:[%s191 + $0x8] sm:$0x1e]
      %v456 = vpack.c.bf16 %v454, %v454
      %v457 = vpack.c.bf16 %v455, %v455
      %s458 = scalar_lea.vmem %s1, 160
      %v459 = vld [vmem:[%s458] sm:$0xf]
      %v460 = vld [vmem:[%s458 + $0x4] sm:$0xf]
      %v461 = vld [vmem:[%s458 + $0x8] sm:$0xf]
      %v462 = vld [vmem:[%s458 + $0xc] sm:$0xf]
      %v463 = vld [vmem:[%s458 + $0x10] sm:$0xf]
      %v464 = vld [vmem:[%s458 + $0x14] sm:$0xf]
      %v465 = vld [vmem:[%s458 + $0x18] sm:$0xf]
      %v466 = vld [vmem:[%s458 + $0x1c] sm:$0xf]
      %v467 = vld [vmem:[%s458 + $0x20] sm:$0xf]
      %v468 = vld [vmem:[%s458 + $0x24] sm:$0xf]
      %v469 = vld [vmem:[%s458 + $0x28] sm:$0xf]
      %v470 = vld [vmem:[%s458 + $0x2c] sm:$0xf]
      %v471 = vld [vmem:[%s458 + $0x30] sm:$0xf]
      %v472 = vld [vmem:[%s458 + $0x34] sm:$0xf]
      %v473 = vld [vmem:[%s458 + $0x38] sm:$0xf]
      %v474 = vld [vmem:[%s458 + $0x3c] sm:$0xf]
      %v475 = vld [vmem:[%s458 + $0x40] sm:$0xf]
      %v476 = vld [vmem:[%s458 + $0x44] sm:$0xf]
      %v477 = vld [vmem:[%s458 + $0x48] sm:$0xf]
      %v478 = vld [vmem:[%s458 + $0x4c] sm:$0xf]
      %v480 = vshrl.u32 %v456, 16
      %v482 = vshll.u32 %v456, 16
      %v484 = vrot.slane %v482, 1
      %v485 = vor.u32 %v480, %v484
      %v487 = vshrl.u32 %v457, 16
      %v489 = vshll.u32 %v457, 16
      %v491 = vrot.slane %v489, 1
      %v492 = vor.u32 %v487, %v491
      %v514 = vunpack.c.l.b16 %v459
      %v515 = vunpack.c.l.b16 %v460
      %v516 = vunpack.c.l.b16 %v461
      %v517 = vunpack.c.l.b16 %v462
      %v518 = vunpack.c.l.b16 %v463
      %v519 = vunpack.c.l.b16 %v464
      %v520 = vunpack.c.l.b16 %v465
      %v521 = vunpack.c.l.b16 %v466
      %v522 = vunpack.c.l.b16 %v467
      %v523 = vunpack.c.l.b16 %v468
      %v524 = vunpack.c.l.b16 %v469
      %v525 = vunpack.c.l.b16 %v470
      %v526 = vunpack.c.l.b16 %v471
      %v527 = vunpack.c.l.b16 %v472
      %v528 = vunpack.c.l.b16 %v473
      %v529 = vunpack.c.l.b16 %v474
      %v530 = vunpack.c.l.b16 %v475
      %v531 = vunpack.c.l.b16 %v476
      %v532 = vunpack.c.l.b16 %v477
      %v533 = vunpack.c.l.b16 %v478
      %v534 = vpack.c.b16 %v515, %v514
      %v535 = vpack.c.b16 %v517, %v516
      %v536 = vpack.c.b16 %v519, %v518
      %v537 = vpack.c.b16 %v521, %v520
      %v538 = vpack.c.b16 %v523, %v522
      %v539 = vpack.c.b16 %v525, %v524
      %v540 = vpack.c.b16 %v527, %v526
      %v541 = vpack.c.b16 %v529, %v528
      %v542 = vpack.c.b16 %v531, %v530
      %v543 = vpack.c.b16 %v533, %v532
      %v555 = vsel %vm307, %v492, 0
      %557 = vmatprep.subr.bf16.mxu0 0
      %558 = vmatpush1.bf16.msra.mxu0 %v534
      %559 = vmatprep.subr.bf16.mxu0 0
      %560 = vmatpush1.bf16.msra.mxu0 %v535
      %561 = vmatprep.subr.bf16.mxu0 0
      %562 = vmatpush1.bf16.msra.mxu0 %v536
      %563 = vmatprep.subr.bf16.mxu0 0
      %564 = vmatpush1.bf16.msra.mxu0 %v537
      %565 = vmatprep.subr.bf16.mxu0 0
      %566 = vmatpush1.bf16.msra.mxu0 %v538
      %567 = vmatprep.subr.bf16.mxu0 0
      %568 = vmatpush1.bf16.msra.mxu0 %v539
      %569 = vmatprep.subr.bf16.mxu0 0
      %570 = vmatpush1.bf16.msra.mxu0 %v540
      %571 = vmatprep.subr.bf16.mxu0 0
      %572 = vmatpush1.bf16.msra.mxu0 %v541
      %573 = vmatprep.subr.bf16.mxu0 0
      %574 = vmatpush1.bf16.msra.mxu0 %v542
      %575 = vmatprep.subr.bf16.mxu0 0
      %576 = vmatpush1.bf16.msra.mxu0 %v543
      %577 = vmatprep.subr.bf16.mxu0 0
      %578 = vmatpush1.bf16.msra.mxu0 0
      %579 = vmatprep.subr.bf16.mxu0 0
      %580 = vmatpush1.bf16.msra.mxu0 0
      %581 = vmatprep.subr.bf16.mxu0 0
      %582 = vmatpush1.bf16.msra.mxu0 0
      %583 = vmatprep.subr.bf16.mxu0 0
      %584 = vmatpush1.bf16.msra.mxu0 0
      %585 = vmatprep.subr.bf16.mxu0 0
      %586 = vmatpush1.bf16.msra.mxu0 0
      %587 = vmatprep.subr.bf16.mxu0 0
      %588 = vmatpush1.bf16.msra.mxu0 0
      %589 = vmatprep.mubr.bf16.mxu0 %v555
      %590 = vmatmul.mubr.bf16.gmra.mrb[0].mxu0 %v485
      %v591 = vpop.f32.mrb[0].mxu0
      %v592 = vadd.f32 0.0, %v591
      %v593 = vpop.f32.mrb[0].mxu0
      %v594 = vpop.f32.mrb[0].mxu0
      %v595 = vpop.f32.mrb[0].mxu0
      %596 = vdwg.mxu0
      %v597 = vadd.f32 %v449, %v592
      %v598 = vld [vmem:[%s2] sm:$0x1]
      %v600 = vlaneseq
      %v601 = vshrl.u32 %v600, 7
      %v602 = vsub.s32 0, %v601
      %v603 = vrot.slane %v598, %v602
      %v605 = vadd.f32 %v597, %v603
      %v606 = vld [vmem:[%s3] sm:$0xff]
      %v607 = vld [vmem:[%s3 + $0x8] sm:$0xff]
      %v608 = vld [vmem:[%s3 + $0x10] sm:$0xff]
      %v609 = vld [vmem:[%s3 + $0x18] sm:$0xff]
      %v610 = vld [vmem:[%s3 + $0x20] sm:$0xff]
      %v611 = vld [vmem:[%s3 + $0x28] sm:$0xff]
      %v612 = vld [vmem:[%s3 + $0x30] sm:$0xff]
      %v613 = vld [vmem:[%s3 + $0x38] sm:$0xff]
      %v614 = vld [vmem:[%s3 + $0x40] sm:$0xff]
      %v615 = vld [vmem:[%s3 + $0x48] sm:$0xff]
      %v616 = vld [vmem:[%s3 + $0x50] sm:$0xff]
      %v617 = vld [vmem:[%s3 + $0x58] sm:$0xff]
      %v618 = vld [vmem:[%s3 + $0x60] sm:$0xff]
      %v619 = vld [vmem:[%s3 + $0x68] sm:$0xff]
      %v620 = vld [vmem:[%s3 + $0x70] sm:$0xff]
      %v621 = vld [vmem:[%s3 + $0x78] sm:$0xff]
      %622 = vmatprep.subr.mxu0 0.0
      %623 = vmatpush1.msra.mxu0 %v606
      %624 = vmatprep.subr.mxu0 0.0
      %625 = vmatpush1.msra.mxu0 %v607
      %626 = vmatprep.subr.mxu0 0.0
      %627 = vmatpush1.msra.mxu0 %v608
      %628 = vmatprep.subr.mxu0 0.0
      %629 = vmatpush1.msra.mxu0 %v609
      %630 = vmatprep.subr.mxu0 0.0
      %631 = vmatpush1.msra.mxu0 %v610
      %632 = vmatprep.subr.mxu0 0.0
      %633 = vmatpush1.msra.mxu0 %v611
      %634 = vmatprep.subr.mxu0 0.0
      %635 = vmatpush1.msra.mxu0 %v612
      %636 = vmatprep.subr.mxu0 0.0
      %637 = vmatpush1.msra.mxu0 %v613
      %638 = vmatprep.subr.mxu0 0.0
      %639 = vmatpush1.msra.mxu0 %v614
      %640 = vmatprep.subr.mxu0 0.0
      %641 = vmatpush1.msra.mxu0 %v615
      %642 = vmatprep.subr.mxu0 0.0
      %643 = vmatpush1.msra.mxu0 %v616
      %644 = vmatprep.subr.mxu0 0.0
      %645 = vmatpush1.msra.mxu0 %v617
      %646 = vmatprep.subr.mxu0 0.0
      %647 = vmatpush1.msra.mxu0 %v618
      %648 = vmatprep.subr.mxu0 0.0
      %649 = vmatpush1.msra.mxu0 %v619
      %650 = vmatprep.subr.mxu0 0.0
      %651 = vmatpush1.msra.mxu0 %v620
      %652 = vmatprep.subr.mxu0 0.0
      %653 = vmatpush1.msra.mxu0 %v621
      %654 = vmatprep.subr.mxu0 0.0
      %655 = vmatpush1.msra.mxu0 0.0
      %656 = vmatprep.subr.mxu0 0.0
      %657 = vmatpush1.msra.mxu0 0.0
      %658 = vmatprep.subr.mxu0 0.0
      %659 = vmatpush1.msra.mxu0 0.0
      %660 = vmatprep.subr.mxu0 0.0
      %661 = vmatpush1.msra.mxu0 0.0
      %662 = vmatprep.subr.mxu0 0.0
      %663 = vmatpush1.msra.mxu0 0.0
      %664 = vmatprep.subr.mxu0 0.0
      %665 = vmatpush1.msra.mxu0 0.0
      %666 = vmatprep.subr.mxu0 0.0
      %667 = vmatpush1.msra.mxu0 0.0
      %668 = vmatprep.subr.mxu0 0.0
      %669 = vmatpush1.msra.mxu0 0.0
      %670 = vmatprep.subr.mxu0 0.0
      %671 = vmatpush1.msra.mxu0 0.0
      %672 = vmatprep.subr.mxu0 0.0
      %673 = vmatpush1.msra.mxu0 0.0
      %674 = vmatprep.subr.mxu0 0.0
      %675 = vmatpush1.msra.mxu0 0.0
      %676 = vmatprep.subr.mxu0 0.0
      %677 = vmatpush1.msra.mxu0 0.0
      %678 = vmatprep.subr.mxu0 0.0
      %679 = vmatpush1.msra.mxu0 0.0
      %680 = vmatprep.subr.mxu0 0.0
      %681 = vmatpush1.msra.mxu0 0.0
      %682 = vmatprep.subr.mxu0 0.0
      %683 = vmatpush1.msra.mxu0 0.0
      %684 = vmatprep.subr.mxu0 0.0
      %685 = vmatpush1.msra.mxu0 0.0
      %686 = vmatprep.mubr.f32.mxu0 0.0
      %687 = vmatmul.mubr.f32.gmra.mrb[0].mxu0 %v605
      %v688 = vpop.f32.mrb[0].mxu0
      %v689 = vadd.f32 0.0, %v688
      %v690 = vpop.f32.mrb[0].mxu0
      %691 = vdwg.mxu0
      %vm692 = vcmask 1043456
      %v693 = vsel %vm692, %v689, 0.0
      %v694 = vrot.slane %v693, 4
      %v695 = vadd.f32 %v693, %v694
      %v696 = vrot.slane %v695, 2
      %v697 = vadd.f32 %v695, %v696
      %v698 = vrot.slane %v697, 1
      %v699 = vadd.f32 %v697, %v698
      %v700 = vmul.f32 %v605, %v605
      %701 = vmatprep.subr.mxu0 0.0
      %702 = vmatpush1.msra.mxu0 %v606
      %703 = vmatprep.subr.mxu0 0.0
      %704 = vmatpush1.msra.mxu0 %v607
      %705 = vmatprep.subr.mxu0 0.0
      %706 = vmatpush1.msra.mxu0 %v608
      %707 = vmatprep.subr.mxu0 0.0
      %708 = vmatpush1.msra.mxu0 %v609
      %709 = vmatprep.subr.mxu0 0.0
      %710 = vmatpush1.msra.mxu0 %v610
      %711 = vmatprep.subr.mxu0 0.0
      %712 = vmatpush1.msra.mxu0 %v611
      %713 = vmatprep.subr.mxu0 0.0
      %714 = vmatpush1.msra.mxu0 %v612
      %715 = vmatprep.subr.mxu0 0.0
      %716 = vmatpush1.msra.mxu0 %v613
      %717 = vmatprep.subr.mxu0 0.0
      %718 = vmatpush1.msra.mxu0 %v614
      %719 = vmatprep.subr.mxu0 0.0
      %720 = vmatpush1.msra.mxu0 %v615
      %721 = vmatprep.subr.mxu0 0.0
      %722 = vmatpush1.msra.mxu0 %v616
      %723 = vmatprep.subr.mxu0 0.0
      %724 = vmatpush1.msra.mxu0 %v617
      %725 = vmatprep.subr.mxu0 0.0
      %726 = vmatpush1.msra.mxu0 %v618
      %727 = vmatprep.subr.mxu0 0.0
      %728 = vmatpush1.msra.mxu0 %v619
      %729 = vmatprep.subr.mxu0 0.0
      %730 = vmatpush1.msra.mxu0 %v620
      %731 = vmatprep.subr.mxu0 0.0
      %732 = vmatpush1.msra.mxu0 %v621
      %733 = vmatprep.subr.mxu0 0.0
      %734 = vmatpush1.msra.mxu0 0.0
      %735 = vmatprep.subr.mxu0 0.0
      %736 = vmatpush1.msra.mxu0 0.0
      %737 = vmatprep.subr.mxu0 0.0
      %738 = vmatpush1.msra.mxu0 0.0
      %739 = vmatprep.subr.mxu0 0.0
      %740 = vmatpush1.msra.mxu0 0.0
      %741 = vmatprep.subr.mxu0 0.0
      %742 = vmatpush1.msra.mxu0 0.0
      %743 = vmatprep.subr.mxu0 0.0
      %744 = vmatpush1.msra.mxu0 0.0
      %745 = vmatprep.subr.mxu0 0.0
      %746 = vmatpush1.msra.mxu0 0.0
      %747 = vmatprep.subr.mxu0 0.0
      %748 = vmatpush1.msra.mxu0 0.0
      %749 = vmatprep.subr.mxu0 0.0
      %750 = vmatpush1.msra.mxu0 0.0
      %751 = vmatprep.subr.mxu0 0.0
      %752 = vmatpush1.msra.mxu0 0.0
      %753 = vmatprep.subr.mxu0 0.0
      %754 = vmatpush1.msra.mxu0 0.0
      %755 = vmatprep.subr.mxu0 0.0
      %756 = vmatpush1.msra.mxu0 0.0
      %757 = vmatprep.subr.mxu0 0.0
      %758 = vmatpush1.msra.mxu0 0.0
      %759 = vmatprep.subr.mxu0 0.0
      %760 = vmatpush1.msra.mxu0 0.0
      %761 = vmatprep.subr.mxu0 0.0
      %762 = vmatpush1.msra.mxu0 0.0
      %763 = vmatprep.subr.mxu0 0.0
      %764 = vmatpush1.msra.mxu0 0.0
      %765 = vmatprep.mubr.f32.mxu0 0.0
      %766 = vmatmul.mubr.f32.gmra.mrb[0].mxu0 %v700
      %v767 = vpop.f32.mrb[0].mxu0
      %v768 = vadd.f32 0.0, %v767
      %v769 = vpop.f32.mrb[0].mxu0
      %770 = vdwg.mxu0
      %v771 = vsel %vm692, %v768, 0.0
      %v772 = vrot.slane %v771, 4
      %v773 = vadd.f32 %v771, %v772
      %v774 = vrot.slane %v773, 2
      %v775 = vadd.f32 %v773, %v774
      %v776 = vrot.slane %v775, 1
      %v777 = vadd.f32 %v775, %v776
      %v778 = vmul.f32 %v699, %v699
      %v779 = vsub.f32 %v777, %v778
      %v780 = vmax.f32 %v779, 0.0
      %v781 = vsub.f32 %v605, %v699
      %v782 = vadd.f32 %v780, 1e-05
      %v783 = vrsqrt.pop %v782
      %v784 = vmul.f32 %v781, %v783
      %v785 = vmax.f32 %v784, 0.0
      %786 = vst [vmem:[%s195] sm:$0xf] %v785
      %p787 = scmp.lt.s32.totalorder %s15, 1
      %s788 = scalar_select %p787, %s15, 1
      %s789 = smul.addr %s788, 4
      %s790 = scalar_lea.vmem %s4, %s789
      // Predicated region
      $region37: #{generator_forward.9} parent=35 // pred_check
        %p791 = pneg %p122
      $region38: #{generator_forward.9} parent=35 // pred_check_branch
        %793 = sbr.rel (%p791) target = $region40
      $region39: #{generator_forward.9} parent=35 // pred_region
        _
      $region40: #{generator_forward.9} parent=35 // pred_fallthru
        _
    $region36: #{generator_forward.9} parent=5 // pred_fallthru
      _
    %p794 = scmp.le.s32.totalorder 2, %s10
    // Predicated region
    $region41: #{generator_forward.9} parent=5 // pred_check
      %p795 = pneg %p794
    $region42: #{generator_forward.9} parent=5 // pred_check_branch
      %797 = sbr.rel (%p795) target = $region44
    $region43: #{generator_forward.9} parent=5 // pred_region
      %s798 = ssub.s32 %s10, 2
      // Predicated region
      $region45: #{generator_forward.9} parent=43 // pred_check
        %p799 = pneg %p128
      $region46: #{generator_forward.9} parent=43 // pred_check_branch
        %801 = sbr.rel (%p799) target = $region48
      $region47: #{generator_forward.9} parent=43 // pred_region
        %p802 = scmp.lt.s32.totalorder %s16, 1
        %s803 = scalar_select %p802, %s16, 1
        %s804 = smul.addr %s803, 4
        %s805 = scalar_lea.vmem %s4, %s804
      $region48: #{generator_forward.9} parent=43 // pred_fallthru
        _
    $region44: #{generator_forward.9} parent=5 // pred_fallthru
      _
  $region6: #{generator_forward.9} parent=0 // loop_footer
    %s14 = sadd.s32 1, %s10
  $region7: #{generator_forward.9} parent=0 // loop_footer_branch
    %9 = sbr.rel target = $region3
  $region8: #{generator_forward.9} parent=0 // loop_exit
    _

// kernel: generator_forward.10
$region0: #{generator_forward.10}
  #allocation0 [shape = 'u32[]', space=smem, size = 0x4, offset = 0x4, fixed_abs, tag = 'smem constant byte address 0x4 - core index']
  #allocation1 [shape = 'u32[144,128]{1,0:T(1,128)}', space=vmem, size = 0x12000, scoped, tag = 'internal scratch']
  #allocation2 [shape = 'f32[16,32]{1,0:T(8,128)}', space=vmem, size = 0x2000, scoped, tag = 'scratch operand']
  #allocation3 [shape = 'f32[6,6,32]{2,1,0:T(8,128)}', space=vmem, size = 0x6000, scoped, tag = 'scratch operand']
  #allocation4 [shape = 'f32[6,6,32]{2,1,0:T(8,128)}', space=vmem, size = 0x6000, scoped, tag = 'scratch operand']
  %s0 = inlined_call_operand.vmem [shape: f32[2,16,32], index: 0, kind: input, shape index: {}]
  %s1 = inlined_call_operand.vmem [shape: f32[9,9,32], index: 1, kind: input, shape index: {}]
  %s2 = inlined_call_operand.vmem [shape: f32[9,1,32], index: 2, kind: input, shape index: {}]
  %s3 = inlined_call_operand.vmem [shape: f32[9,32,32], index: 3, kind: input, shape index: {}]
  %s4 = inlined_call_operand.vmem [shape: f32[9,1,32], index: 4, kind: input, shape index: {}]
  %s5 = inlined_call_operand.vmem [shape: f32[9,9,32], index: 5, kind: input, shape index: {}]
  %s6 = inlined_call_operand.vmem [shape: f32[9,1,32], index: 6, kind: input, shape index: {}]
  %s7 = inlined_call_operand.vmem [shape: f32[9,32,32], index: 7, kind: input, shape index: {}]
  %s8 = inlined_call_operand.vmem [shape: f32[9,1,32], index: 8, kind: input, shape index: {}]
  %s9 = inlined_call_operand.vmem [shape: f32[2,16,32], index: 9, kind: output, shape index: {}]
  %s10 = sld [smem:[#allocation0]]
  $region77: #{generator_forward.10} parent=0
    _
  %s12 = ssub.s32 1, %s10
  %s13 = scalar_select 0, %s12, %s10
  loop: start=0, step=1, limit=20
  $region2: #{generator_forward.10} parent=0 // loop_pre_header
    _
  $region3: #{generator_forward.10} parent=0 // loop_header
    %s15 = sphi 0, %s19
    %p16 = scmp.ge.s32.totalorder %s15, 20
    %s22 = sphi 0, %s34
    %s23 = sphi 0, %s30
    %s24 = sphi 0, %s22
    %s25 = sphi 0, %s23
    %s26 = sphi 0, %s24
    %s27 = sphi 0, %s25
    %s37 = sphi 0, %s39
    %s40 = sphi 0, %s37
    %s41 = sphi 0, %s40
    %s57 = sphi 0, %s41
    %s63 = sphi 0, %s65
    %s66 = sphi 0, %s63
    %s67 = sphi 0, %s66
    %s83 = sphi 0, %s67
    %s89 = sphi 0, %s91
    %s92 = sphi 0, %s89
    %s93 = sphi 0, %s92
    %s109 = sphi 0, %s93
    %s115 = sphi 0, %s117
    %s118 = sphi 0, %s115
    %s119 = sphi 0, %s118
    %s135 = sphi 0, %s119
    %s141 = sphi 0, %s143
    %s144 = sphi 0, %s141
    %s145 = sphi 0, %s144
    %s161 = sphi 0, %s145
    %s167 = sphi 0, %s169
    %s170 = sphi 0, %s167
    %s171 = sphi 0, %s170
    %s187 = sphi 0, %s171
    %s193 = sphi 0, %s195
    %s196 = sphi 0, %s193
    %s197 = sphi 0, %s196
    %s213 = sphi 0, %s197
    %s219 = sphi 0, %s221
    %s222 = sphi 0, %s219
    %s223 = sphi 0, %s222
    %s239 = sphi 0, %s223
    %s245 = sphi 0, %s247
    %s248 = sphi 0, %s245
    %s249 = sphi 0, %s248
    %s265 = sphi 0, %s249
    %s271 = sphi 0, %s273
    %s274 = sphi 0, %s271
    %s275 = sphi 0, %s274
    %s291 = sphi 0, %s275
  $region4: #{generator_forward.10} parent=0 // loop_header_branch
    %18 = sbr.rel (%p16) target = $region8
  $region5: #{generator_forward.10} parent=0 // loop_body
    %s20 = ssub.s32 %s15, 1
    %s21 = ssub.s32 %s15, 2
    %s28 = sadd.s32 1, %s23
    %p29 = scmp.ge.s32.totalorder %s28, 9
    %s30 = scalar_select %p29, 0, %s28
    %s31 = sadd.s32 1, %s22
    %s32 = scalar_select %p29, %s31, %s22
    %p33 = scmp.ge.s32.totalorder %s32, 2
    %s34 = scalar_select %p33, 0, %s32
    %s35 = ssub.s32 %s22, %s34
    %p36 = scmp.eq.s32.totalorder %s35, 0
    %s38 = sadd.s32 %s37, 1
    %s39 = scalar_select %p36, %s37, %s38
    %p42 = pneg %p36
    %p43 = scmp.eq.s32.totalorder %s15, 17
    %p44 = por %p42, %p43
    %p45 = scmp.ne.s32.totalorder %s37, %s40
    %p46 = scmp.eq.s32.totalorder %s15, 0
    %p47 = por %p45, %p46
    %p48 = scmp.ne.s32.totalorder %s37, %s40
    %p49 = scmp.eq.s32.totalorder %s20, 17
    %p50 = por %p48, %p49
    %p51 = scmp.ne.s32.totalorder %s40, %s41
    %p52 = scmp.eq.s32.totalorder %s20, 0
    %p53 = por %p51, %p52
    %p54 = scmp.ne.s32.totalorder %s40, %s41
    %p55 = scmp.eq.s32.totalorder %s21, 17
    %p56 = por %p54, %p55
    %p58 = scmp.ne.s32.totalorder %s41, %s57
    %p59 = scmp.eq.s32.totalorder %s21, 0
    %p60 = por %p58, %p59
    %s61 = ssub.s32 %s23, %s30
    %p62 = scmp.eq.s32.totalorder %s61, 0
    %s64 = sadd.s32 %s63, 1
    %s65 = scalar_select %p62, %s63, %s64
    %p68 = pneg %p62
    %p69 = scmp.eq.s32.totalorder %s15, 17
    %p70 = por %p68, %p69
    %p71 = scmp.ne.s32.totalorder %s63, %s66
    %p72 = scmp.eq.s32.totalorder %s15, 0
    %p73 = por %p71, %p72
    %p74 = scmp.ne.s32.totalorder %s63, %s66
    %p75 = scmp.eq.s32.totalorder %s20, 17
    %p76 = por %p74, %p75
    %p77 = scmp.ne.s32.totalorder %s66, %s67
    %p78 = scmp.eq.s32.totalorder %s20, 0
    %p79 = por %p77, %p78
    %p80 = scmp.ne.s32.totalorder %s66, %s67
    %p81 = scmp.eq.s32.totalorder %s21, 17
    %p82 = por %p80, %p81
    %p84 = scmp.ne.s32.totalorder %s67, %s83
    %p85 = scmp.eq.s32.totalorder %s21, 0
    %p86 = por %p84, %p85
    %s87 = ssub.s32 %s23, %s30
    %p88 = scmp.eq.s32.totalorder %s87, 0
    %s90 = sadd.s32 %s89, 1
    %s91 = scalar_select %p88, %s89, %s90
    %p94 = pneg %p88
    %p95 = scmp.eq.s32.totalorder %s15, 17
    %p96 = por %p94, %p95
    %p97 = scmp.ne.s32.totalorder %s89, %s92
    %p98 = scmp.eq.s32.totalorder %s15, 0
    %p99 = por %p97, %p98
    %p100 = scmp.ne.s32.totalorder %s89, %s92
    %p101 = scmp.eq.s32.totalorder %s20, 17
    %p102 = por %p100, %p101
    %p103 = scmp.ne.s32.totalorder %s92, %s93
    %p104 = scmp.eq.s32.totalorder %s20, 0
    %p105 = por %p103, %p104
    %p106 = scmp.ne.s32.totalorder %s92, %s93
    %p107 = scmp.eq.s32.totalorder %s21, 17
    %p108 = por %p106, %p107
    %p110 = scmp.ne.s32.totalorder %s93, %s109
    %p111 = scmp.eq.s32.totalorder %s21, 0
    %p112 = por %p110, %p111
    %s113 = ssub.s32 %s23, %s30
    %p114 = scmp.eq.s32.totalorder %s113, 0
    %s116 = sadd.s32 %s115, 1
    %s117 = scalar_select %p114, %s115, %s116
    %p120 = pneg %p114
    %p121 = scmp.eq.s32.totalorder %s15, 17
    %p122 = por %p120, %p121
    %p123 = scmp.ne.s32.totalorder %s115, %s118
    %p124 = scmp.eq.s32.totalorder %s15, 0
    %p125 = por %p123, %p124
    %p126 = scmp.ne.s32.totalorder %s115, %s118
    %p127 = scmp.eq.s32.totalorder %s20, 17
    %p128 = por %p126, %p127
    %p129 = scmp.ne.s32.totalorder %s118, %s119
    %p130 = scmp.eq.s32.totalorder %s20, 0
    %p131 = por %p129, %p130
    %p132 = scmp.ne.s32.totalorder %s118, %s119
    %p133 = scmp.eq.s32.totalorder %s21, 17
    %p134 = por %p132, %p133
    %p136 = scmp.ne.s32.totalorder %s119, %s135
    %p137 = scmp.eq.s32.totalorder %s21, 0
    %p138 = por %p136, %p137
    %s139 = ssub.s32 %s23, %s30
    %p140 = scmp.eq.s32.totalorder %s139, 0
    %s142 = sadd.s32 %s141, 1
    %s143 = scalar_select %p140, %s141, %s142
    %p146 = pneg %p140
    %p147 = scmp.eq.s32.totalorder %s15, 17
    %p148 = por %p146, %p147
    %p149 = scmp.ne.s32.totalorder %s141, %s144
    %p150 = scmp.eq.s32.totalorder %s15, 0
    %p151 = por %p149, %p150
    %p152 = scmp.ne.s32.totalorder %s141, %s144
    %p153 = scmp.eq.s32.totalorder %s20, 17
    %p154 = por %p152, %p153
    %p155 = scmp.ne.s32.totalorder %s144, %s145
    %p156 = scmp.eq.s32.totalorder %s20, 0
    %p157 = por %p155, %p156
    %p158 = scmp.ne.s32.totalorder %s144, %s145
    %p159 = scmp.eq.s32.totalorder %s21, 17
    %p160 = por %p158, %p159
    %p162 = scmp.ne.s32.totalorder %s145, %s161
    %p163 = scmp.eq.s32.totalorder %s21, 0
    %p164 = por %p162, %p163
    %s165 = ssub.s32 %s23, %s30
    %p166 = scmp.eq.s32.totalorder %s165, 0
    %s168 = sadd.s32 %s167, 1
    %s169 = scalar_select %p166, %s167, %s168
    %p172 = pneg %p166
    %p173 = scmp.eq.s32.totalorder %s15, 17
    %p174 = por %p172, %p173
    %p175 = scmp.ne.s32.totalorder %s167, %s170
    %p176 = scmp.eq.s32.totalorder %s15, 0
    %p177 = por %p175, %p176
    %p178 = scmp.ne.s32.totalorder %s167, %s170
    %p179 = scmp.eq.s32.totalorder %s20, 17
    %p180 = por %p178, %p179
    %p181 = scmp.ne.s32.totalorder %s170, %s171
    %p182 = scmp.eq.s32.totalorder %s20, 0
    %p183 = por %p181, %p182
    %p184 = scmp.ne.s32.totalorder %s170, %s171
    %p185 = scmp.eq.s32.totalorder %s21, 17
    %p186 = por %p184, %p185
    %p188 = scmp.ne.s32.totalorder %s171, %s187
    %p189 = scmp.eq.s32.totalorder %s21, 0
    %p190 = por %p188, %p189
    %s191 = ssub.s32 %s23, %s30
    %p192 = scmp.eq.s32.totalorder %s191, 0
    %s194 = sadd.s32 %s193, 1
    %s195 = scalar_select %p192, %s193, %s194
    %p198 = pneg %p192
    %p199 = scmp.eq.s32.totalorder %s15, 17
    %p200 = por %p198, %p199
    %p201 = scmp.ne.s32.totalorder %s193, %s196
    %p202 = scmp.eq.s32.totalorder %s15, 0
    %p203 = por %p201, %p202
    %p204 = scmp.ne.s32.totalorder %s193, %s196
    %p205 = scmp.eq.s32.totalorder %s20, 17
    %p206 = por %p204, %p205
    %p207 = scmp.ne.s32.totalorder %s196, %s197
    %p208 = scmp.eq.s32.totalorder %s20, 0
    %p209 = por %p207, %p208
    %p210 = scmp.ne.s32.totalorder %s196, %s197
    %p211 = scmp.eq.s32.totalorder %s21, 17
    %p212 = por %p210, %p211
    %p214 = scmp.ne.s32.totalorder %s197, %s213
    %p215 = scmp.eq.s32.totalorder %s21, 0
    %p216 = por %p214, %p215
    %s217 = ssub.s32 %s23, %s30
    %p218 = scmp.eq.s32.totalorder %s217, 0
    %s220 = sadd.s32 %s219, 1
    %s221 = scalar_select %p218, %s219, %s220
    %p224 = pneg %p218
    %p225 = scmp.eq.s32.totalorder %s15, 17
    %p226 = por %p224, %p225
    %p227 = scmp.ne.s32.totalorder %s219, %s222
    %p228 = scmp.eq.s32.totalorder %s15, 0
    %p229 = por %p227, %p228
    %p230 = scmp.ne.s32.totalorder %s219, %s222
    %p231 = scmp.eq.s32.totalorder %s20, 17
    %p232 = por %p230, %p231
    %p233 = scmp.ne.s32.totalorder %s222, %s223
    %p234 = scmp.eq.s32.totalorder %s20, 0
    %p235 = por %p233, %p234
    %p236 = scmp.ne.s32.totalorder %s222, %s223
    %p237 = scmp.eq.s32.totalorder %s21, 17
    %p238 = por %p236, %p237
    %p240 = scmp.ne.s32.totalorder %s223, %s239
    %p241 = scmp.eq.s32.totalorder %s21, 0
    %p242 = por %p240, %p241
    %s243 = ssub.s32 %s23, %s30
    %p244 = scmp.eq.s32.totalorder %s243, 0
    %s246 = sadd.s32 %s245, 1
    %s247 = scalar_select %p244, %s245, %s246
    %p250 = pneg %p244
    %p251 = scmp.eq.s32.totalorder %s15, 17
    %p252 = por %p250, %p251
    %p253 = scmp.ne.s32.totalorder %s245, %s248
    %p254 = scmp.eq.s32.totalorder %s15, 0
    %p255 = por %p253, %p254
    %p256 = scmp.ne.s32.totalorder %s245, %s248
    %p257 = scmp.eq.s32.totalorder %s20, 17
    %p258 = por %p256, %p257
    %p259 = scmp.ne.s32.totalorder %s248, %s249
    %p260 = scmp.eq.s32.totalorder %s20, 0
    %p261 = por %p259, %p260
    %p262 = scmp.ne.s32.totalorder %s248, %s249
    %p263 = scmp.eq.s32.totalorder %s21, 17
    %p264 = por %p262, %p263
    %p266 = scmp.ne.s32.totalorder %s249, %s265
    %p267 = scmp.eq.s32.totalorder %s21, 0
    %p268 = por %p266, %p267
    %s269 = ssub.s32 %s22, %s34
    %p270 = scmp.eq.s32.totalorder %s269, 0
    %s272 = sadd.s32 %s271, 1
    %s273 = scalar_select %p270, %s271, %s272
    %p276 = pneg %p270
    %p277 = scmp.eq.s32.totalorder %s15, 17
    %p278 = por %p276, %p277
    %p279 = scmp.ne.s32.totalorder %s271, %s274
    %p280 = scmp.eq.s32.totalorder %s15, 0
    %p281 = por %p279, %p280
    %p282 = scmp.ne.s32.totalorder %s271, %s274
    %p283 = scmp.eq.s32.totalorder %s20, 17
    %p284 = por %p282, %p283
    %p285 = scmp.ne.s32.totalorder %s274, %s275
    %p286 = scmp.eq.s32.totalorder %s20, 0
    %p287 = por %p285, %p286
    %p288 = scmp.ne.s32.totalorder %s274, %s275
    %p289 = scmp.eq.s32.totalorder %s21, 17
    %p290 = por %p288, %p289
    %p292 = scmp.ne.s32.totalorder %s275, %s291
    %p293 = scmp.eq.s32.totalorder %s21, 0
    %p294 = por %p292, %p293
    %p295 = scmp.le.s32.totalorder 1, %s15
    %p296 = scmp.lt.s32.totalorder %s15, 19
    %p297 = pnand %p295, %p296
    %p298 = pneg %p297
    // Predicated region
    $region9: #{generator_forward.10} parent=5 // pred_check
      _
    $region10: #{generator_forward.10} parent=5 // pred_check_branch
      %300 = sbr.rel (%p297) target = $region12
    $region11: #{generator_forward.10} parent=5 // pred_region
      %s301 = ssub.s32 %s15, 1
    $region12: #{generator_forward.10} parent=5 // pred_fallthru
      _
    %p302 = scmp.lt.s32.totalorder %s15, 18
    // Predicated region
    $region13: #{generator_forward.10} parent=5 // pred_check
      %p303 = pneg %p302
    $region14: #{generator_forward.10} parent=5 // pred_check_branch
      %305 = sbr.rel (%p303) target = $region16
    $region15: #{generator_forward.10} parent=5 // pred_region
      // Predicated region
      $region17: #{generator_forward.10} parent=15 // pred_check
        %p306 = pneg %p47
      $region18: #{generator_forward.10} parent=15 // pred_check_branch
        %308 = sbr.rel (%p306) target = $region20
      $region19: #{generator_forward.10} parent=15 // pred_region
        %p309 = scmp.lt.s32.totalorder %s22, 1
        %s310 = scalar_select %p309, %s22, 1
        %s311 = smul.addr %s310, 2
        %s312 = smul.addr %s311, 8
        %s313 = scalar_lea.vmem %s0, %s312
      $region20: #{generator_forward.10} parent=15 // pred_fallthru
        _
      // Predicated region
      $region21: #{generator_forward.10} parent=15 // pred_check
        %p314 = pneg %p73
      $region22: #{generator_forward.10} parent=15 // pred_check_branch
        %316 = sbr.rel (%p314) target = $region24
      $region23: #{generator_forward.10} parent=15 // pred_region
        %p317 = scmp.lt.s32.totalorder %s23, 8
        %s318 = scalar_select %p317, %s23, 8
        %s319 = smul.addr %s318, 2
        %s320 = smul.addr %s319, 8
        %s321 = scalar_lea.vmem %s1, %s320
      $region24: #{generator_forward.10} parent=15 // pred_fallthru
        _
      // Predicated region
      $region25: #{generator_forward.10} parent=15 // pred_check
        %p322 = pneg %p99
      $region26: #{generator_forward.10} parent=15 // pred_check_branch
        %324 = sbr.rel (%p322) target = $region28
      $region27: #{generator_forward.10} parent=15 // pred_region
        %p325 = scmp.lt.s32.totalorder %s23, 8
        %s326 = scalar_select %p325, %s23, 8
        %s327 = scalar_lea.vmem %s2, %s326
      $region28: #{generator_forward.10} parent=15 // pred_fallthru
        _
      // Predicated region
      $region29: #{generator_forward.10} parent=15 // pred_check
        %p328 = pneg %p125
      $region30: #{generator_forward.10} parent=15 // pred_check_branch
        %330 = sbr.rel (%p328) target = $region32
      $region31: #{generator_forward.10} parent=15 // pred_region
        %p331 = scmp.lt.s32.totalorder %s23, 8
        %s332 = scalar_select %p331, %s23, 8
        %s333 = smul.addr %s332, 4
        %s334 = smul.addr %s333, 8
        %s335 = scalar_lea.vmem %s3, %s334
      $region32: #{generator_forward.10} parent=15 // pred_fallthru
        _
      // Predicated region
      $region33: #{generator_forward.10} parent=15 // pred_check
        %p336 = pneg %p151
      $region34: #{generator_forward.10} parent=15 // pred_check_branch
        %338 = sbr.rel (%p336) target = $region36
      $region35: #{generator_forward.10} parent=15 // pred_region
        %p339 = scmp.lt.s32.totalorder %s23, 8
        %s340 = scalar_select %p339, %s23, 8
        %s341 = scalar_lea.vmem %s4, %s340
      $region36: #{generator_forward.10} parent=15 // pred_fallthru
        _
      // Predicated region
      $region37: #{generator_forward.10} parent=15 // pred_check
        %p342 = pneg %p177
      $region38: #{generator_forward.10} parent=15 // pred_check_branch
        %344 = sbr.rel (%p342) target = $region40
      $region39: #{generator_forward.10} parent=15 // pred_region
        %p345 = scmp.lt.s32.totalorder %s23, 8
        %s346 = scalar_select %p345, %s23, 8
        %s347 = smul.addr %s346, 2
        %s348 = smul.addr %s347, 8
        %s349 = scalar_lea.vmem %s5, %s348
      $region40: #{generator_forward.10} parent=15 // pred_fallthru
        _
      // Predicated region
      $region41: #{generator_forward.10} parent=15 // pred_check
        %p350 = pneg %p203
      $region42: #{generator_forward.10} parent=15 // pred_check_branch
        %352 = sbr.rel (%p350) target = $region44
      $region43: #{generator_forward.10} parent=15 // pred_region
        %p353 = scmp.lt.s32.totalorder %s23, 8
        %s354 = scalar_select %p353, %s23, 8
        %s355 = scalar_lea.vmem %s6, %s354
      $region44: #{generator_forward.10} parent=15 // pred_fallthru
        _
      // Predicated region
      $region45: #{generator_forward.10} parent=15 // pred_check
        %p356 = pneg %p229
      $region46: #{generator_forward.10} parent=15 // pred_check_branch
        %358 = sbr.rel (%p356) target = $region48
      $region47: #{generator_forward.10} parent=15 // pred_region
        %p359 = scmp.lt.s32.totalorder %s23, 8
        %s360 = scalar_select %p359, %s23, 8
        %s361 = smul.addr %s360, 4
        %s362 = smul.addr %s361, 8
        %s363 = scalar_lea.vmem %s7, %s362
      $region48: #{generator_forward.10} parent=15 // pred_fallthru
        _
      // Predicated region
      $region49: #{generator_forward.10} parent=15 // pred_check
        %p364 = pneg %p255
      $region50: #{generator_forward.10} parent=15 // pred_check_branch
        %366 = sbr.rel (%p364) target = $region52
      $region51: #{generator_forward.10} parent=15 // pred_region
        %p367 = scmp.lt.s32.totalorder %s23, 8
        %s368 = scalar_select %p367, %s23, 8
        %s369 = scalar_lea.vmem %s8, %s368
      $region52: #{generator_forward.10} parent=15 // pred_fallthru
        _
    $region16: #{generator_forward.10} parent=5 // pred_fallthru
      _
    %p370 = scmp.le.s32.totalorder 1, %s15
    %p371 = scmp.lt.s32.totalorder %s15, 19
    %p372 = pnand %p370, %p371
    %p373 = pneg %p372
    // Predicated region
    $region53: #{generator_forward.10} parent=5 // pred_check
      _
    $region54: #{generator_forward.10} parent=5 // pred_check_branch
      %375 = sbr.rel (%p372) target = $region56
    $region55: #{generator_forward.10} parent=5 // pred_region
      %s376 = ssub.s32 %s15, 1
      %p377 = scmp.lt.s32.totalorder %s24, 1
      %s378 = scalar_select %p377, %s24, 1
      %s379 = smul.addr %s378, 2
      %s380 = smul.addr %s379, 8
      %s381 = scalar_lea.vmem %s0, %s380
      %p382 = pneg %p53
      %p383 = pneg %p50
      %p384 = scmp.lt.s32.totalorder %s25, 8
      %s385 = scalar_select %p384, %s25, 8
      %s386 = smul.addr %s385, 2
      %s387 = smul.addr %s386, 8
      %s388 = scalar_lea.vmem %s1, %s387
      %p389 = pneg %p79
      %p390 = pneg %p76
      %p391 = scmp.lt.s32.totalorder %s25, 8
      %s392 = scalar_select %p391, %s25, 8
      %s393 = scalar_lea.vmem %s2, %s392
      %p394 = pneg %p105
      %p395 = pneg %p102
      %p396 = scmp.lt.s32.totalorder %s25, 8
      %s397 = scalar_select %p396, %s25, 8
      %s398 = smul.addr %s397, 4
      %s399 = smul.addr %s398, 8
      %s400 = scalar_lea.vmem %s3, %s399
      %p401 = pneg %p131
      %p402 = pneg %p128
      %p403 = scmp.lt.s32.totalorder %s25, 8
      %s404 = scalar_select %p403, %s25, 8
      %s405 = scalar_lea.vmem %s4, %s404
      %p406 = pneg %p157
      %p407 = pneg %p154
      %p408 = scmp.lt.s32.totalorder %s25, 8
      %s409 = scalar_select %p408, %s25, 8
      %s410 = smul.addr %s409, 2
      %s411 = smul.addr %s410, 8
      %s412 = scalar_lea.vmem %s5, %s411
      %p413 = pneg %p183
      %p414 = pneg %p180
      %p415 = scmp.lt.s32.totalorder %s25, 8
      %s416 = scalar_select %p415, %s25, 8
      %s417 = scalar_lea.vmem %s6, %s416
      %p418 = pneg %p209
      %p419 = pneg %p206
      %p420 = scmp.lt.s32.totalorder %s25, 8
      %s421 = scalar_select %p420, %s25, 8
      %s422 = smul.addr %s421, 4
      %s423 = smul.addr %s422, 8
      %s424 = scalar_lea.vmem %s7, %s423
      %p425 = pneg %p235
      %p426 = pneg %p232
      %p427 = scmp.lt.s32.totalorder %s25, 8
      %s428 = scalar_select %p427, %s25, 8
      %s429 = scalar_lea.vmem %s8, %s428
      %p430 = pneg %p261
      %p431 = pneg %p258
      %p432 = pneg %p287
      %p433 = pneg %p284
      %p434 = scmp.lt.s32.totalorder %s24, 1
      %s435 = scalar_select %p434, %s24, 1
      %s436 = smul.addr %s435, 2
      %s437 = smul.addr %s436, 8
      %s438 = scalar_lea.vmem %s9, %s437
      %p439 = scmp.lt.s32.totalorder %s24, 1
      %s440 = scalar_select %p439, %s24, 1
      %s441 = smul.addr %s440, 2
      %s442 = smul.addr %s441, 8
      %s443 = scalar_lea.vmem %s0, %s442
      %p444 = scmp.lt.s32.totalorder %s25, 8
      %s445 = scalar_select %p444, %s25, 8
      %s446 = smul.addr %s445, 2
      %s447 = smul.addr %s446, 8
      %s448 = scalar_lea.vmem %s1, %s447
      %p449 = scmp.lt.s32.totalorder %s25, 8
      %s450 = scalar_select %p449, %s25, 8
      %s451 = scalar_lea.vmem %s2, %s450
      %p452 = scmp.lt.s32.totalorder %s25, 8
      %s453 = scalar_select %p452, %s25, 8
      %s454 = smul.addr %s453, 4
      %s455 = smul.addr %s454, 8
      %s456 = scalar_lea.vmem %s3, %s455
      %p457 = scmp.lt.s32.totalorder %s25, 8
      %s458 = scalar_select %p457, %s25, 8
      %s459 = scalar_lea.vmem %s4, %s458
      %p460 = scmp.lt.s32.totalorder %s25, 8
      %s461 = scalar_select %p460, %s25, 8
      %s462 = smul.addr %s461, 2
      %s463 = smul.addr %s462, 8
      %s464 = scalar_lea.vmem %s5, %s463
      %p465 = scmp.lt.s32.totalorder %s25, 8
      %s466 = scalar_select %p465, %s25, 8
      %s467 = scalar_lea.vmem %s6, %s466
      %p468 = scmp.lt.s32.totalorder %s25, 8
      %s469 = scalar_select %p468, %s25, 8
      %s470 = smul.addr %s469, 4
      %s471 = smul.addr %s470, 8
      %s472 = scalar_lea.vmem %s7, %s471
      %p473 = scmp.lt.s32.totalorder %s25, 8
      %s474 = scalar_select %p473, %s25, 8
      %s475 = scalar_lea.vmem %s8, %s474
      %p476 = scmp.lt.s32.totalorder %s24, 1
      %s477 = scalar_select %p476, %s24, 1
      %s478 = smul.addr %s477, 2
      %s479 = smul.addr %s478, 8
      %s480 = scalar_lea.vmem %s9, %s479
      %p482 = scmp.eq.s32.totalorder %s25, 0
      // Predicated region
      $region57: #{generator_forward.10} parent=55 // pred_check
        %p483 = pneg %p482
      $region58: #{generator_forward.10} parent=55 // pred_check_branch
        %485 = sbr.rel (%p483) target = $region60
      $region59: #{generator_forward.10} parent=55 // pred_region
        %v486 = vld [vmem:[%s443] sm:$0xff]
        %v487 = vld [vmem:[%s443 + $0x8] sm:$0xff]
        %vm488 = vcmask 261120
        %489 = vst.msk [vmem:[#allocation2] sm:$0xff] %vm488, %v486
        %490 = vst.msk [vmem:[#allocation2 + $0x8] sm:$0xff] %vm488, %v487
      $region60: #{generator_forward.10} parent=55 // pred_fallthru
        _
      %v491 = vld [vmem:[#allocation2] sm:$0xff]
      %v492 = vld [vmem:[#allocation2 + $0x8] sm:$0xff]
      %v495 = vcombine.high %v491, %v491
      %v496 = vcombine.high %v492, %v492
      %s499 = scalar_lea.vmem [#allocation3], 8
      %vm500 = vcmask 257024
      %501 = vst.msk [vmem:[%s499 + $0x1] sm:$0xf] %vm500, %v491
      %502 = vst.msk [vmem:[%s499 + $0x9] sm:$0xf] %vm500, %v495
      %503 = vst.msk [vmem:[%s499 + $0x11] sm:$0xf] %vm500, %v492
      %504 = vst.msk [vmem:[%s499 + $0x19] sm:$0xf] %vm500, %v496
      %505 = vst.msk [vmem:[#allocation3 + $0x1] sm:$0xf] %vm500, %v495
      %s506 = scalar_lea.vmem [#allocation3], 40
      %507 = vst.msk [vmem:[%s506 + $0x1] sm:$0xf] %vm500, %v492
      %v508 = vld [vmem:[#allocation3 + $0x2] sm:$0x1]
      %v509 = vld [vmem:[#allocation3 + $0xa] sm:$0x1]
      %v510 = vld [vmem:[#allocation3 + $0x12] sm:$0x1]
      %v511 = vld [vmem:[#allocation3 + $0x1a] sm:$0x1]
      %v512 = vld [vmem:[#allocation3 + $0x22] sm:$0x1]
      %v513 = vld [vmem:[#allocation3 + $0x2a] sm:$0x1]
      %vm514 = vcmask 253952
      %515 = vst.msk [vmem:[#allocation3] sm:$0x1] %vm514, %v508
      %516 = vst.msk [vmem:[#allocation3 + $0x8] sm:$0x1] %vm514, %v509
      %517 = vst.msk [vmem:[#allocation3 + $0x10] sm:$0x1] %vm514, %v510
      %518 = vst.msk [vmem:[#allocation3 + $0x18] sm:$0x1] %vm514, %v511
      %519 = vst.msk [vmem:[#allocation3 + $0x20] sm:$0x1] %vm514, %v512
      %520 = vst.msk [vmem:[#allocation3 + $0x28] sm:$0x1] %vm514, %v513
      %v521 = vld [vmem:[#allocation3 + $0x3] sm:$0x1]
      %v522 = vld [vmem:[#allocation3 + $0xb] sm:$0x1]
      %v523 = vld [vmem:[#allocation3 + $0x13] sm:$0x1]
      %v524 = vld [vmem:[#allocation3 + $0x1b] sm:$0x1]
      %v525 = vld [vmem:[#allocation3 + $0x23] sm:$0x1]
      %v526 = vld [vmem:[#allocation3 + $0x2b] sm:$0x1]
      %527 = vst.msk [vmem:[#allocation3 + $0x5] sm:$0x1] %vm514, %v521
      %528 = vst.msk [vmem:[#allocation3 + $0xd] sm:$0x1] %vm514, %v522
      %529 = vst.msk [vmem:[#allocation3 + $0x15] sm:$0x1] %vm514, %v523
      %530 = vst.msk [vmem:[#allocation3 + $0x1d] sm:$0x1] %vm514, %v524
      %531 = vst.msk [vmem:[#allocation3 + $0x25] sm:$0x1] %vm514, %v525
      %532 = vst.msk [vmem:[#allocation3 + $0x2d] sm:$0x1] %vm514, %v526
      %v533 = vld [vmem:[%s448] sm:$0xff]
      %v534 = vld [vmem:[%s448 + $0x8] sm:$0x1]
      %v535 = vld [vmem:[#allocation3] sm:$0x3f]
      %v536 = vld [vmem:[#allocation3 + $0x8] sm:$0x3f]
      %v537 = vld [vmem:[#allocation3 + $0x10] sm:$0x3f]
      %v538 = vld [vmem:[#allocation3 + $0x18] sm:$0x3f]
      %v539 = vld [vmem:[#allocation3 + $0x20] sm:$0x3f]
      %v540 = vld [vmem:[#allocation3 + $0x28] sm:$0x3f]
      %v541 = vlaneseq
      %v542 = vshrl.u32 %v541, 7
      %v543 = vsub.s32 0, %v542
      %v544 = vrot.slane %v533, %v543
      %v545 = vmul.f32 %v535, %v544
      %v546 = vmul.f32 %v536, %v544
      %v547 = vmul.f32 %v537, %v544
      %v548 = vmul.f32 %v538, %v544
      %v549 = vlaneseq
      %v550 = vshrl.u32 %v549, 7
      %v551 = vsub.s32 1, %v550
      %v552 = vrot.slane %v533, %v551
      %v553 = vmul.f32 %v535, %v552
      %v554 = vmul.f32 %v536, %v552
      %v555 = vmul.f32 %v537, %v552
      %v556 = vmul.f32 %v538, %v552
      %v561 = vrot.slane %v553, 1
      %v562 = vrot.slane %v554, 1
      %v563 = vrot.slane %v555, 1
      %v564 = vrot.slane %v556, 1
      %v569 = vadd.f32 %v545, %v561
      %v570 = vadd.f32 %v546, %v562
      %v571 = vadd.f32 %v547, %v563
      %v572 = vadd.f32 %v548, %v564
      %v573 = vlaneseq
      %v574 = vshrl.u32 %v573, 7
      %v575 = vsub.s32 2, %v574
      %v576 = vrot.slane %v533, %v575
      %v577 = vmul.f32 %v535, %v576
      %v578 = vmul.f32 %v536, %v576
      %v579 = vmul.f32 %v537, %v576
      %v580 = vmul.f32 %v538, %v576
      %v585 = vrot.slane %v577, 2
      %v586 = vrot.slane %v578, 2
      %v587 = vrot.slane %v579, 2
      %v588 = vrot.slane %v580, 2
      %v593 = vadd.f32 %v569, %v585
      %v594 = vadd.f32 %v570, %v586
      %v595 = vadd.f32 %v571, %v587
      %v596 = vadd.f32 %v572, %v588
      %v597 = vlaneseq
      %v598 = vshrl.u32 %v597, 7
      %v599 = vsub.s32 3, %v598
      %v600 = vrot.slane %v533, %v599
      %v601 = vmul.f32 %v536, %v600
      %v602 = vmul.f32 %v537, %v600
      %v603 = vmul.f32 %v538, %v600
      %v604 = vmul.f32 %v539, %v600
      %v605 = vadd.f32 %v593, %v601
      %v606 = vadd.f32 %v594, %v602
      %v607 = vadd.f32 %v595, %v603
      %v608 = vadd.f32 %v596, %v604
      %v609 = vlaneseq
      %v610 = vshrl.u32 %v609, 7
      %v611 = vsub.s32 4, %v610
      %v612 = vrot.slane %v533, %v611
      %v613 = vmul.f32 %v536, %v612
      %v614 = vmul.f32 %v537, %v612
      %v615 = vmul.f32 %v538, %v612
      %v616 = vmul.f32 %v539, %v612
      %v621 = vrot.slane %v613, 1
      %v622 = vrot.slane %v614, 1
      %v623 = vrot.slane %v615, 1
      %v624 = vrot.slane %v616, 1
      %v629 = vadd.f32 %v605, %v621
      %v630 = vadd.f32 %v606, %v622
      %v631 = vadd.f32 %v607, %v623
      %v632 = vadd.f32 %v608, %v624
      %v633 = vlaneseq
      %v634 = vshrl.u32 %v633, 7
      %v635 = vsub.s32 5, %v634
      %v636 = vrot.slane %v533, %v635
      %v637 = vmul.f32 %v536, %v636
      %v638 = vmul.f32 %v537, %v636
      %v639 = vmul.f32 %v538, %v636
      %v640 = vmul.f32 %v539, %v636
      %v645 = vrot.slane %v637, 2
      %v646 = vrot.slane %v638, 2
      %v647 = vrot.slane %v639, 2
      %v648 = vrot.slane %v640, 2
      %v653 = vadd.f32 %v629, %v645
      %v654 = vadd.f32 %v630, %v646
      %v655 = vadd.f32 %v631, %v647
      %v656 = vadd.f32 %v632, %v648
      %v657 = vlaneseq
      %v658 = vshrl.u32 %v657, 7
      %v659 = vsub.s32 6, %v658
      %v660 = vrot.slane %v533, %v659
      %v661 = vmul.f32 %v537, %v660
      %v662 = vmul.f32 %v538, %v660
      %v663 = vmul.f32 %v539, %v660
      %v664 = vmul.f32 %v540, %v660
      %v665 = vadd.f32 %v653, %v661
      %v666 = vadd.f32 %v654, %v662
      %v667 = vadd.f32 %v655, %v663
      %v668 = vadd.f32 %v656, %v664
      %v669 = vlaneseq
      %v670 = vshrl.u32 %v669, 7
      %v671 = vsub.s32 7, %v670
      %v672 = vrot.slane %v533, %v671
      %v673 = vmul.f32 %v537, %v672
      %v674 = vmul.f32 %v538, %v672
      %v675 = vmul.f32 %v539, %v672
      %v676 = vmul.f32 %v540, %v672
      %v681 = vrot.slane %v673, 1
      %v682 = vrot.slane %v674, 1
      %v683 = vrot.slane %v675, 1
      %v684 = vrot.slane %v676, 1
      %v689 = vadd.f32 %v665, %v681
      %v690 = vadd.f32 %v666, %v682
      %v691 = vadd.f32 %v667, %v683
      %v692 = vadd.f32 %v668, %v684
      %v693 = vlaneseq
      %v694 = vshrl.u32 %v693, 7
      %v695 = vsub.s32 0, %v694
      %v696 = vrot.slane %v534, %v695
      %v697 = vmul.f32 %v537, %v696
      %v698 = vmul.f32 %v538, %v696
      %v699 = vmul.f32 %v539, %v696
      %v700 = vmul.f32 %v540, %v696
      %v705 = vrot.slane %v697, 2
      %v706 = vrot.slane %v698, 2
      %v707 = vrot.slane %v699, 2
      %v708 = vrot.slane %v700, 2
      %v713 = vadd.f32 %v689, %v705
      %v714 = vadd.f32 %v690, %v706
      %v715 = vadd.f32 %v691, %v707
      %v716 = vadd.f32 %v692, %v708
      %v717 = vld [vmem:[%s451] sm:$0x1]
      %v719 = vlaneseq
      %v720 = vshrl.u32 %v719, 7
      %v721 = vsub.s32 0, %v720
      %v722 = vrot.slane %v717, %v721
      %v724 = vcombine.high %v722, %v722
      %v726 = vadd.f32 %v713, %v722
      %v727 = vadd.f32 %v714, %v724
      %v728 = vadd.f32 %v715, %v722
      %v729 = vadd.f32 %v716, %v724
      %v734 = vcombine.low %v726, %v727
      %v735 = vcombine.low %v728, %v729
      %vm738 = vcmask 261120
      %v739 = vsel %vm738, %v734, 0.0
      %v740 = vsel %vm738, %v735, 0.0
      %v741 = vadd.f32 %v739, %v740
      %v742 = vrot.slane %v741, 4
      %v743 = vadd.f32 %v741, %v742
      %v744 = vrot.slane %v743, 2
      %v745 = vadd.f32 %v743, %v744
      %v746 = vrot.slane %v745, 1
      %v747 = vadd.f32 %v745, %v746
      %v748 = vmul.f32 %v726, %v726
      %v749 = vmul.f32 %v727, %v727
      %v750 = vmul.f32 %v728, %v728
      %v751 = vmul.f32 %v729, %v729
      %v756 = vcombine.low %v748, %v749
      %v757 = vcombine.low %v750, %v751
      %v760 = vsel %vm738, %v756, 0.0
      %v761 = vsel %vm738, %v757, 0.0
      %v762 = vadd.f32 %v760, %v761
      %v763 = vrot.slane %v762, 4
      %v764 = vadd.f32 %v762, %v763
      %v765 = vrot.slane %v764, 2
      %v766 = vadd.f32 %v764, %v765
      %v767 = vrot.slane %v766, 1
      %v768 = vadd.f32 %v766, %v767
      %v769 = vmul.f32 %v747, 0.0625
      %v770 = vmul.f32 %v768, 0.0625
      %v771 = vmul.f32 %v769, %v769
      %v772 = vsub.f32 %v770, %v771
      %v773 = vmax.f32 %v772, 0.0
      %v775 = vcombine.high %v769, %v769
      %v777 = vsub.f32 %v726, %v769
      %v778 = vsub.f32 %v727, %v775
      %v779 = vsub.f32 %v728, %v769
      %v780 = vsub.f32 %v729, %v775
      %v781 = vadd.f32 %v773, 1e-05
      %v782 = vrsqrt.pop %v781
      %v784 = vcombine.high %v782, %v782
      %v786 = vmul.f32 %v777, %v782
      %v787 = vmul.f32 %v778, %v784
      %v788 = vmul.f32 %v779, %v782
      %v789 = vmul.f32 %v780, %v784
      %v794 = vcombine.low %v786, %v787
      %v795 = vcombine.low %v788, %v789
      %v798 = vpack.c.bf16 %v795, %v794
      %v799 = vld [vmem:[%s456] sm:$0xff]
      %v800 = vld [vmem:[%s456 + $0x8] sm:$0xff]
      %v801 = vld [vmem:[%s456 + $0x10] sm:$0xff]
      %v802 = vld [vmem:[%s456 + $0x18] sm:$0xff]
      %v803 = vpack.c.bf16 %v800, %v799
      %v804 = vpack.c.bf16 %v802, %v801
      %v805 = vld [vmem:[%s459] sm:$0x1]
      %v807 = vlaneseq
      %v808 = vshrl.u32 %v807, 7
      %v809 = vsub.s32 0, %v808
      %v810 = vrot.slane %v805, %v809
      %v813 = vsel %vm738, %v798, 0
      %815 = vmatprep.subr.bf16.mxu0 0
      %816 = vmatpush1.bf16.msra.mxu0 %v803
      %817 = vmatprep.subr.bf16.mxu0 0
      %818 = vmatpush1.bf16.msra.mxu0 %v804
      %819 = vmatprep.subr.bf16.mxu0 0
      %820 = vmatpush1.bf16.msra.mxu0 0
      %821 = vmatprep.subr.bf16.mxu0 0
      %822 = vmatpush1.bf16.msra.mxu0 0
      %823 = vmatprep.subr.bf16.mxu0 0
      %824 = vmatpush1.bf16.msra.mxu0 0
      %825 = vmatprep.subr.bf16.mxu0 0
      %826 = vmatpush1.bf16.msra.mxu0 0
      %827 = vmatprep.subr.bf16.mxu0 0
      %828 = vmatpush1.bf16.msra.mxu0 0
      %829 = vmatprep.subr.bf16.mxu0 0
      %830 = vmatpush1.bf16.msra.mxu0 0
      %831 = vmatprep.subr.bf16.mxu0 0
      %832 = vmatpush1.bf16.msra.mxu0 0
      %833 = vmatprep.subr.bf16.mxu0 0
      %834 = vmatpush1.bf16.msra.mxu0 0
      %835 = vmatprep.subr.bf16.mxu0 0
      %836 = vmatpush1.bf16.msra.mxu0 0
      %837 = vmatprep.subr.bf16.mxu0 0
      %838 = vmatpush1.bf16.msra.mxu0 0
      %839 = vmatprep.subr.bf16.mxu0 0
      %840 = vmatpush1.bf16.msra.mxu0 0
      %841 = vmatprep.subr.bf16.mxu0 0
      %842 = vmatpush1.bf16.msra.mxu0 0
      %843 = vmatprep.subr.bf16.mxu0 0
      %844 = vmatpush1.bf16.msra.mxu0 0
      %845 = vmatprep.subr.bf16.mxu0 0
      %846 = vmatpush1.bf16.msra.mxu0 0
      %847 = vmatprep.mubr.bf16.mxu0 0
      %848 = vmatmul.mubr.bf16.gmra.mrb[0].mxu0 %v813
      %v849 = vpop.f32.mrb[0].mxu0
      %v850 = vadd.f32 %v810, %v849
      %v851 = vpop.f32.mrb[0].mxu0
      %v852 = vpop.f32.mrb[0].mxu0
      %v853 = vadd.f32 %v810, %v852
      %v854 = vpop.f32.mrb[0].mxu0
      %855 = vdwg.mxu0
      %v856 = vsel %vm738, %v850, 0.0
      %v857 = vsel %vm738, %v853, 0.0
      %v858 = vadd.f32 %v856, %v857
      %v859 = vrot.slane %v858, 4
      %v860 = vadd.f32 %v858, %v859
      %v861 = vrot.slane %v860, 2
      %v862 = vadd.f32 %v860, %v861
      %v863 = vrot.slane %v862, 1
      %v864 = vadd.f32 %v862, %v863
      %v865 = vmul.f32 %v850, %v850
      %v866 = vmul.f32 %v853, %v853
      %v867 = vsel %vm738, %v865, 0.0
      %v868 = vsel %vm738, %v866, 0.0
      %v869 = vadd.f32 %v867, %v868
      %v870 = vrot.slane %v869, 4
      %v871 = vadd.f32 %v869, %v870
      %v872 = vrot.slane %v871, 2
      %v873 = vadd.f32 %v871, %v872
      %v874 = vrot.slane %v873, 1
      %v875 = vadd.f32 %v873, %v874
      %v876 = vmul.f32 %v864, 0.0625
      %v877 = vmul.f32 %v875, 0.0625
      %v878 = vmul.f32 %v876, %v876
      %v879 = vsub.f32 %v877, %v878
      %v880 = vmax.f32 %v879, 0.0
      %v881 = vsub.f32 %v850, %v876
      %v882 = vsub.f32 %v853, %v876
      %v883 = vadd.f32 %v880, 1e-05
      %v884 = vrsqrt.pop %v883
      %v885 = vmul.f32 %v881, %v884
      %v886 = vmul.f32 %v882, %v884
      %v887 = vmax.f32 %v885, 0.0
      %v888 = vmax.f32 %v886, 0.0
      %v891 = vcombine.high %v887, %v887
      %v892 = vcombine.high %v888, %v888
      %s895 = scalar_lea.vmem [#allocation4], 8
      %896 = vst.msk [vmem:[%s895 + $0x1] sm:$0xf] %vm500, %v887
      %897 = vst.msk [vmem:[%s895 + $0x9] sm:$0xf] %vm500, %v891
      %898 = vst.msk [vmem:[%s895 + $0x11] sm:$0xf] %vm500, %v888
      %899 = vst.msk [vmem:[%s895 + $0x19] sm:$0xf] %vm500, %v892
      %900 = vst.msk [vmem:[#allocation4 + $0x1] sm:$0xf] %vm500, %v891
      %s901 = scalar_lea.vmem [#allocation4], 40
      %902 = vst.msk [vmem:[%s901 + $0x1] sm:$0xf] %vm500, %v888
      %v903 = vld [vmem:[#allocation4 + $0x2] sm:$0x1]
      %v904 = vld [vmem:[#allocation4 + $0xa] sm:$0x1]
      %v905 = vld [vmem:[#allocation4 + $0x12] sm:$0x1]
      %v906 = vld [vmem:[#allocation4 + $0x1a] sm:$0x1]
      %v907 = vld [vmem:[#allocation4 + $0x22] sm:$0x1]
      %v908 = vld [vmem:[#allocation4 + $0x2a] sm:$0x1]
      %909 = vst.msk [vmem:[#allocation4] sm:$0x1] %vm514, %v903
      %910 = vst.msk [vmem:[#allocation4 + $0x8] sm:$0x1] %vm514, %v904
      %911 = vst.msk [vmem:[#allocation4 + $0x10] sm:$0x1] %vm514, %v905
      %912 = vst.msk [vmem:[#allocation4 + $0x18] sm:$0x1] %vm514, %v906
      %913 = vst.msk [vmem:[#allocation4 + $0x20] sm:$0x1] %vm514, %v907
      %914 = vst.msk [vmem:[#allocation4 + $0x28] sm:$0x1] %vm514, %v908
      %v915 = vld [vmem:[#allocation4 + $0x3] sm:$0x1]
      %v916 = vld [vmem:[#allocation4 + $0xb] sm:$0x1]
      %v917 = vld [vmem:[#allocation4 + $0x13] sm:$0x1]
      %v918 = vld [vmem:[#allocation4 + $0x1b] sm:$0x1]
      %v919 = vld [vmem:[#allocation4 + $0x23] sm:$0x1]
      %v920 = vld [vmem:[#allocation4 + $0x2b] sm:$0x1]
      %921 = vst.msk [vmem:[#allocation4 + $0x5] sm:$0x1] %vm514, %v915
      %922 = vst.msk [vmem:[#allocation4 + $0xd] sm:$0x1] %vm514, %v916
      %923 = vst.msk [vmem:[#allocation4 + $0x15] sm:$0x1] %vm514, %v917
      %924 = vst.msk [vmem:[#allocation4 + $0x1d] sm:$0x1] %vm514, %v918
      %925 = vst.msk [vmem:[#allocation4 + $0x25] sm:$0x1] %vm514, %v919
      %926 = vst.msk [vmem:[#allocation4 + $0x2d] sm:$0x1] %vm514, %v920
      %v927 = vld [vmem:[%s464] sm:$0xff]
      %v928 = vld [vmem:[%s464 + $0x8] sm:$0x1]
      %v929 = vld [vmem:[#allocation4] sm:$0x3f]
      %v930 = vld [vmem:[#allocation4 + $0x8] sm:$0x3f]
      %v931 = vld [vmem:[#allocation4 + $0x10] sm:$0x3f]
      %v932 = vld [vmem:[#allocation4 + $0x18] sm:$0x3f]
      %v933 = vld [vmem:[#allocation4 + $0x20] sm:$0x3f]
      %v934 = vld [vmem:[#allocation4 + $0x28] sm:$0x3f]
      %v935 = vlaneseq
      %v936 = vshrl.u32 %v935, 7
      %v937 = vsub.s32 0, %v936
      %v938 = vrot.slane %v927, %v937
      %v939 = vmul.f32 %v929, %v938
      %v940 = vmul.f32 %v930, %v938
      %v941 = vmul.f32 %v931, %v938
      %v942 = vmul.f32 %v932, %v938
      %v943 = vlaneseq
      %v944 = vshrl.u32 %v943, 7
      %v945 = vsub.s32 1, %v944
      %v946 = vrot.slane %v927, %v945
      %v947 = vmul.f32 %v929, %v946
      %v948 = vmul.f32 %v930, %v946
      %v949 = vmul.f32 %v931, %v946
      %v950 = vmul.f32 %v932, %v946
      %v955 = vrot.slane %v947, 1
      %v956 = vrot.slane %v948, 1
      %v957 = vrot.slane %v949, 1
      %v958 = vrot.slane %v950, 1
      %v963 = vadd.f32 %v939, %v955
      %v964 = vadd.f32 %v940, %v956
      %v965 = vadd.f32 %v941, %v957
      %v966 = vadd.f32 %v942, %v958
      %v967 = vlaneseq
      %v968 = vshrl.u32 %v967, 7
      %v969 = vsub.s32 2, %v968
      %v970 = vrot.slane %v927, %v969
      %v971 = vmul.f32 %v929, %v970
      %v972 = vmul.f32 %v930, %v970
      %v973 = vmul.f32 %v931, %v970
      %v974 = vmul.f32 %v932, %v970
      %v979 = vrot.slane %v971, 2
      %v980 = vrot.slane %v972, 2
      %v981 = vrot.slane %v973, 2
      %v982 = vrot.slane %v974, 2
      %v987 = vadd.f32 %v963, %v979
      %v988 = vadd.f32 %v964, %v980
      %v989 = vadd.f32 %v965, %v981
      %v990 = vadd.f32 %v966, %v982
      %v991 = vlaneseq
      %v992 = vshrl.u32 %v991, 7
      %v993 = vsub.s32 3, %v992
      %v994 = vrot.slane %v927, %v993
      %v995 = vmul.f32 %v930, %v994
      %v996 = vmul.f32 %v931, %v994
      %v997 = vmul.f32 %v932, %v994
      %v998 = vmul.f32 %v933, %v994
      %v999 = vadd.f32 %v987, %v995
      %v1000 = vadd.f32 %v988, %v996
      %v1001 = vadd.f32 %v989, %v997
      %v1002 = vadd.f32 %v990, %v998
      %v1003 = vlaneseq
      %v1004 = vshrl.u32 %v1003, 7
      %v1005 = vsub.s32 4, %v1004
      %v1006 = vrot.slane %v927, %v1005
      %v1007 = vmul.f32 %v930, %v1006
      %v1008 = vmul.f32 %v931, %v1006
      %v1009 = vmul.f32 %v932, %v1006
      %v1010 = vmul.f32 %v933, %v1006
      %v1015 = vrot.slane %v1007, 1
      %v1016 = vrot.slane %v1008, 1
      %v1017 = vrot.slane %v1009, 1
      %v1018 = vrot.slane %v1010, 1
      %v1023 = vadd.f32 %v999, %v1015
      %v1024 = vadd.f32 %v1000, %v1016
      %v1025 = vadd.f32 %v1001, %v1017
      %v1026 = vadd.f32 %v1002, %v1018
      %v1027 = vlaneseq
      %v1028 = vshrl.u32 %v1027, 7
      %v1029 = vsub.s32 5, %v1028
      %v1030 = vrot.slane %v927, %v1029
      %v1031 = vmul.f32 %v930, %v1030
      %v1032 = vmul.f32 %v931, %v1030
      %v1033 = vmul.f32 %v932, %v1030
      %v1034 = vmul.f32 %v933, %v1030
      %v1039 = vrot.slane %v1031, 2
      %v1040 = vrot.slane %v1032, 2
      %v1041 = vrot.slane %v1033, 2
      %v1042 = vrot.slane %v1034, 2
      %v1047 = vadd.f32 %v1023, %v1039
      %v1048 = vadd.f32 %v1024, %v1040
      %v1049 = vadd.f32 %v1025, %v1041
      %v1050 = vadd.f32 %v1026, %v1042
      %v1051 = vlaneseq
      %v1052 = vshrl.u32 %v1051, 7
      %v1053 = vsub.s32 6, %v1052
      %v1054 = vrot.slane %v927, %v1053
      %v1055 = vmul.f32 %v931, %v1054
      %v1056 = vmul.f32 %v932, %v1054
      %v1057 = vmul.f32 %v933, %v1054
      %v1058 = vmul.f32 %v934, %v1054
      %v1059 = vadd.f32 %v1047, %v1055
      %v1060 = vadd.f32 %v1048, %v1056
      %v1061 = vadd.f32 %v1049, %v1057
      %v1062 = vadd.f32 %v1050, %v1058
      %v1063 = vlaneseq
      %v1064 = vshrl.u32 %v1063, 7
      %v1065 = vsub.s32 7, %v1064
      %v1066 = vrot.slane %v927, %v1065
      %v1067 = vmul.f32 %v931, %v1066
      %v1068 = vmul.f32 %v932, %v1066
      %v1069 = vmul.f32 %v933, %v1066
      %v1070 = vmul.f32 %v934, %v1066
      %v1075 = vrot.slane %v1067, 1
      %v1076 = vrot.slane %v1068, 1
      %v1077 = vrot.slane %v1069, 1
      %v1078 = vrot.slane %v1070, 1
      %v1083 = vadd.f32 %v1059, %v1075
      %v1084 = vadd.f32 %v1060, %v1076
      %v1085 = vadd.f32 %v1061, %v1077
      %v1086 = vadd.f32 %v1062, %v1078
      %v1087 = vlaneseq
      %v1088 = vshrl.u32 %v1087, 7
      %v1089 = vsub.s32 0, %v1088
      %v1090 = vrot.slane %v928, %v1089
      %v1091 = vmul.f32 %v931, %v1090
      %v1092 = vmul.f32 %v932, %v1090
      %v1093 = vmul.f32 %v933, %v1090
      %v1094 = vmul.f32 %v934, %v1090
      %v1099 = vrot.slane %v1091, 2
      %v1100 = vrot.slane %v1092, 2
      %v1101 = vrot.slane %v1093, 2
      %v1102 = vrot.slane %v1094, 2
      %v1107 = vadd.f32 %v1083, %v1099
      %v1108 = vadd.f32 %v1084, %v1100
      %v1109 = vadd.f32 %v1085, %v1101
      %v1110 = vadd.f32 %v1086, %v1102
      %v1111 = vld [vmem:[%s467] sm:$0x1]
      %v1113 = vlaneseq
      %v1114 = vshrl.u32 %v1113, 7
      %v1115 = vsub.s32 0, %v1114
      %v1116 = vrot.slane %v1111, %v1115
      %v1118 = vcombine.high %v1116, %v1116
      %v1120 = vadd.f32 %v1107, %v1116
      %v1121 = vadd.f32 %v1108, %v1118
      %v1122 = vadd.f32 %v1109, %v1116
      %v1123 = vadd.f32 %v1110, %v1118
      %v1128 = vcombine.low %v1120, %v1121
      %v1129 = vcombine.low %v1122, %v1123
      %v1132 = vsel %vm738, %v1128, 0.0
      %v1133 = vsel %vm738, %v1129, 0.0
      %v1134 = vadd.f32 %v1132, %v1133
      %v1135 = vrot.slane %v1134, 4
      %v1136 = vadd.f32 %v1134, %v1135
      %v1137 = vrot.slane %v1136, 2
      %v1138 = vadd.f32 %v1136, %v1137
      %v1139 = vrot.slane %v1138, 1
      %v1140 = vadd.f32 %v1138, %v1139
      %v1141 = vmul.f32 %v1120, %v1120
      %v1142 = vmul.f32 %v1121, %v1121
      %v1143 = vmul.f32 %v1122, %v1122
      %v1144 = vmul.f32 %v1123, %v1123
      %v1149 = vcombine.low %v1141, %v1142
      %v1150 = vcombine.low %v1143, %v1144
      %v1153 = vsel %vm738, %v1149, 0.0
      %v1154 = vsel %vm738, %v1150, 0.0
      %v1155 = vadd.f32 %v1153, %v1154
      %v1156 = vrot.slane %v1155, 4
      %v1157 = vadd.f32 %v1155, %v1156
      %v1158 = vrot.slane %v1157, 2
      %v1159 = vadd.f32 %v1157, %v1158
      %v1160 = vrot.slane %v1159, 1
      %v1161 = vadd.f32 %v1159, %v1160
      %v1162 = vmul.f32 %v1140, 0.0625
      %v1163 = vmul.f32 %v1161, 0.0625
      %v1164 = vmul.f32 %v1162, %v1162
      %v1165 = vsub.f32 %v1163, %v1164
      %v1166 = vmax.f32 %v1165, 0.0
      %v1168 = vcombine.high %v1162, %v1162
      %v1170 = vsub.f32 %v1120, %v1162
      %v1171 = vsub.f32 %v1121, %v1168
      %v1172 = vsub.f32 %v1122, %v1162
      %v1173 = vsub.f32 %v1123, %v1168
      %v1174 = vadd.f32 %v1166, 1e-05
      %v1175 = vrsqrt.pop %v1174
      %v1177 = vcombine.high %v1175, %v1175
      %v1179 = vmul.f32 %v1170, %v1175
      %v1180 = vmul.f32 %v1171, %v1177
      %v1181 = vmul.f32 %v1172, %v1175
      %v1182 = vmul.f32 %v1173, %v1177
      %v1187 = vcombine.low %v1179, %v1180
      %v1188 = vcombine.low %v1181, %v1182
      %v1191 = vpack.c.bf16 %v1188, %v1187
      %v1192 = vld [vmem:[%s472] sm:$0xff]
      %v1193 = vld [vmem:[%s472 + $0x8] sm:$0xff]
      %v1194 = vld [vmem:[%s472 + $0x10] sm:$0xff]
      %v1195 = vld [vmem:[%s472 + $0x18] sm:$0xff]
      %v1196 = vpack.c.bf16 %v1193, %v1192
      %v1197 = vpack.c.bf16 %v1195, %v1194
      %v1198 = vld [vmem:[%s475] sm:$0x1]
      %v1200 = vlaneseq
      %v1201 = vshrl.u32 %v1200, 7
      %v1202 = vsub.s32 0, %v1201
      %v1203 = vrot.slane %v1198, %v1202
      %v1206 = vsel %vm738, %v1191, 0
      %1208 = vmatprep.subr.bf16.mxu0 0
      %1209 = vmatpush1.bf16.msra.mxu0 %v1196
      %1210 = vmatprep.subr.bf16.mxu0 0
      %1211 = vmatpush1.bf16.msra.mxu0 %v1197
      %1212 = vmatprep.subr.bf16.mxu0 0
      %1213 = vmatpush1.bf16.msra.mxu0 0
      %1214 = vmatprep.subr.bf16.mxu0 0
      %1215 = vmatpush1.bf16.msra.mxu0 0
      %1216 = vmatprep.subr.bf16.mxu0 0
      %1217 = vmatpush1.bf16.msra.mxu0 0
      %1218 = vmatprep.subr.bf16.mxu0 0
      %1219 = vmatpush1.bf16.msra.mxu0 0
      %1220 = vmatprep.subr.bf16.mxu0 0
      %1221 = vmatpush1.bf16.msra.mxu0 0
      %1222 = vmatprep.subr.bf16.mxu0 0
      %1223 = vmatpush1.bf16.msra.mxu0 0
      %1224 = vmatprep.subr.bf16.mxu0 0
      %1225 = vmatpush1.bf16.msra.mxu0 0
      %1226 = vmatprep.subr.bf16.mxu0 0
      %1227 = vmatpush1.bf16.msra.mxu0 0
      %1228 = vmatprep.subr.bf16.mxu0 0
      %1229 = vmatpush1.bf16.msra.mxu0 0
      %1230 = vmatprep.subr.bf16.mxu0 0
      %1231 = vmatpush1.bf16.msra.mxu0 0
      %1232 = vmatprep.subr.bf16.mxu0 0
      %1233 = vmatpush1.bf16.msra.mxu0 0
      %1234 = vmatprep.subr.bf16.mxu0 0
      %1235 = vmatpush1.bf16.msra.mxu0 0
      %1236 = vmatprep.subr.bf16.mxu0 0
      %1237 = vmatpush1.bf16.msra.mxu0 0
      %1238 = vmatprep.subr.bf16.mxu0 0
      %1239 = vmatpush1.bf16.msra.mxu0 0
      %1240 = vmatprep.mubr.bf16.mxu0 0
      %1241 = vmatmul.mubr.bf16.gmra.mrb[0].mxu0 %v1206
      %v1242 = vpop.f32.mrb[0].mxu0
      %v1243 = vadd.f32 %v1203, %v1242
      %v1244 = vpop.f32.mrb[0].mxu0
      %v1245 = vpop.f32.mrb[0].mxu0
      %v1246 = vadd.f32 %v1203, %v1245
      %v1247 = vpop.f32.mrb[0].mxu0
      %1248 = vdwg.mxu0
      %v1249 = vsel %vm738, %v1243, 0.0
      %v1250 = vsel %vm738, %v1246, 0.0
      %v1251 = vadd.f32 %v1249, %v1250
      %v1252 = vrot.slane %v1251, 4
      %v1253 = vadd.f32 %v1251, %v1252
      %v1254 = vrot.slane %v1253, 2
      %v1255 = vadd.f32 %v1253, %v1254
      %v1256 = vrot.slane %v1255, 1
      %v1257 = vadd.f32 %v1255, %v1256
      %v1258 = vmul.f32 %v1243, %v1243
      %v1259 = vmul.f32 %v1246, %v1246
      %v1260 = vsel %vm738, %v1258, 0.0
      %v1261 = vsel %vm738, %v1259, 0.0
      %v1262 = vadd.f32 %v1260, %v1261
      %v1263 = vrot.slane %v1262, 4
      %v1264 = vadd.f32 %v1262, %v1263
      %v1265 = vrot.slane %v1264, 2
      %v1266 = vadd.f32 %v1264, %v1265
      %v1267 = vrot.slane %v1266, 1
      %v1268 = vadd.f32 %v1266, %v1267
      %v1269 = vmul.f32 %v1257, 0.0625
      %v1270 = vmul.f32 %v1268, 0.0625
      %v1271 = vmul.f32 %v1269, %v1269
      %v1272 = vsub.f32 %v1270, %v1271
      %v1273 = vmax.f32 %v1272, 0.0
      %v1274 = vsub.f32 %v1243, %v1269
      %v1275 = vsub.f32 %v1246, %v1269
      %v1276 = vadd.f32 %v1273, 1e-05
      %v1277 = vrsqrt.pop %v1276
      %v1278 = vmul.f32 %v1274, %v1277
      %v1279 = vmul.f32 %v1275, %v1277
      %v1280 = vadd.f32 %v491, %v1278
      %v1281 = vadd.f32 %v492, %v1279
      %1282 = vst.msk [vmem:[#allocation2] sm:$0xff] %vm738, %v1280
      %1283 = vst.msk [vmem:[#allocation2 + $0x8] sm:$0xff] %vm738, %v1281
      %p1284 = scmp.eq.s32.totalorder %s25, 8
      // Predicated region
      $region61: #{generator_forward.10} parent=55 // pred_check
        %p1285 = pneg %p1284
      $region62: #{generator_forward.10} parent=55 // pred_check_branch
        %1287 = sbr.rel (%p1285) target = $region64
      $region63: #{generator_forward.10} parent=55 // pred_region
        %1288 = vst.msk [vmem:[%s480] sm:$0xff] %vm738, %v1280
        %1289 = vst.msk [vmem:[%s480 + $0x8] sm:$0xff] %vm738, %v1281
      $region64: #{generator_forward.10} parent=55 // pred_fallthru
        _
      %p1290 = scmp.lt.s32.totalorder %s24, 1
      %s1291 = scalar_select %p1290, %s24, 1
      %s1292 = smul.addr %s1291, 2
      %s1293 = smul.addr %s1292, 8
      %s1294 = scalar_lea.vmem %s9, %s1293
      // Predicated region
      $region65: #{generator_forward.10} parent=55 // pred_check
        %p1295 = pneg %p284
      $region66: #{generator_forward.10} parent=55 // pred_check_branch
        %1297 = sbr.rel (%p1295) target = $region68
      $region67: #{generator_forward.10} parent=55 // pred_region
        _
      $region68: #{generator_forward.10} parent=55 // pred_fallthru
        _
    $region56: #{generator_forward.10} parent=5 // pred_fallthru
      _
    %p1298 = scmp.le.s32.totalorder 2, %s15
    // Predicated region
    $region69: #{generator_forward.10} parent=5 // pred_check
      %p1299 = pneg %p1298
    $region70: #{generator_forward.10} parent=5 // pred_check_branch
      %1301 = sbr.rel (%p1299) target = $region72
    $region71: #{generator_forward.10} parent=5 // pred_region
      %s1302 = ssub.s32 %s15, 2
      // Predicated region
      $region73: #{generator_forward.10} parent=71 // pred_check
        %p1303 = pneg %p290
      $region74: #{generator_forward.10} parent=71 // pred_check_branch
        %1305 = sbr.rel (%p1303) target = $region76
      $region75: #{generator_forward.10} parent=71 // pred_region
        %p1306 = scmp.lt.s32.totalorder %s26, 1
        %s1307 = scalar_select %p1306, %s26, 1
        %s1308 = smul.addr %s1307, 2
        %s1309 = smul.addr %s1308, 8
        %s1310 = scalar_lea.vmem %s9, %s1309
      $region76: #{generator_forward.10} parent=71 // pred_fallthru
        _
    $region72: #{generator_forward.10} parent=5 // pred_fallthru
      _
  $region6: #{generator_forward.10} parent=0 // loop_footer
    %s19 = sadd.s32 1, %s15
  $region7: #{generator_forward.10} parent=0 // loop_footer_branch
    %14 = sbr.rel target = $region3
  $region8: #{generator_forward.10} parent=0 // loop_exit
    _

// kernel: generator_forward.11
$region0: #{generator_forward.11}
  #allocation0 [shape = 'u32[]', space=smem, size = 0x4, offset = 0x4, fixed_abs, tag = 'smem constant byte address 0x4 - core index']
  #allocation1 [shape = 'u32[144,128]{1,0:T(1,128)}', space=vmem, size = 0x12000, scoped, tag = 'internal scratch']
  %s0 = inlined_call_operand.vmem [shape: f32[2,1,10,320], index: 0, kind: input, shape index: {}]
  %s1 = inlined_call_operand.vmem [shape: bf16[3,320,128], index: 1, kind: input, shape index: {}]
  %s2 = inlined_call_operand.vmem [shape: f32[1,128], index: 2, kind: input, shape index: {}]
  %s3 = inlined_call_operand.vmem [shape: f32[128,128], index: 3, kind: input, shape index: {}]
  %s4 = inlined_call_operand.vmem [shape: f32[2,8,128], index: 4, kind: output, shape index: {}]
  %s5 = sld [smem:[#allocation0]]
  $region49: #{generator_forward.11} parent=0
    _
  %s7 = ssub.s32 1, %s5
  %s8 = scalar_select 0, %s7, %s5
  loop: start=0, step=1, limit=4
  $region2: #{generator_forward.11} parent=0 // loop_pre_header
    _
  $region3: #{generator_forward.11} parent=0 // loop_header
    %s10 = sphi 0, %s14
    %p11 = scmp.ge.s32.totalorder %s10, 4
    %s20 = sphi 0, %s22
    %s23 = sphi 0, %s20
    %s24 = sphi 0, %s23
    %s40 = sphi 0, %s24
    %s44 = sphi 0, %s44
    %s46 = sphi 0, %s44
    %s47 = sphi 0, %s46
    %s61 = sphi 0, %s47
    %s65 = sphi 0, %s65
    %s67 = sphi 0, %s65
    %s68 = sphi 0, %s67
    %s82 = sphi 0, %s68
    %s86 = sphi 0, %s86
    %s88 = sphi 0, %s86
    %s89 = sphi 0, %s88
    %s103 = sphi 0, %s89
    %s109 = sphi 0, %s111
    %s112 = sphi 0, %s109
    %s113 = sphi 0, %s112
    %s129 = sphi 0, %s113
  $region4: #{generator_forward.11} parent=0 // loop_header_branch
    %13 = sbr.rel (%p11) target = $region8
  $region5: #{generator_forward.11} parent=0 // loop_body
    %s15 = ssub.s32 %s10, 1
    %s16 = ssub.s32 %s10, 2
    %s17 = sadd.s32 %s10, 1
    %s18 = ssub.s32 %s10, %s17
    %p19 = scmp.eq.s32.totalorder %s18, 0
    %s21 = sadd.s32 %s20, 1
    %s22 = scalar_select %p19, %s20, %s21
    %p25 = pneg %p19
    %p26 = scmp.eq.s32.totalorder %s10, 1
    %p27 = por %p25, %p26
    %p28 = scmp.ne.s32.totalorder %s20, %s23
    %p29 = scmp.eq.s32.totalorder %s10, 0
    %p30 = por %p28, %p29
    %p31 = scmp.ne.s32.totalorder %s20, %s23
    %p32 = scmp.eq.s32.totalorder %s15, 1
    %p33 = por %p31, %p32
    %p34 = scmp.ne.s32.totalorder %s23, %s24
    %p35 = scmp.eq.s32.totalorder %s15, 0
    %p36 = por %p34, %p35
    %p37 = scmp.ne.s32.totalorder %s23, %s24
    %p38 = scmp.eq.s32.totalorder %s16, 1
    %p39 = por %p37, %p38
    %p41 = scmp.ne.s32.totalorder %s24, %s40
    %p42 = scmp.eq.s32.totalorder %s16, 0
    %p43 = por %p41, %p42
    %s45 = sadd.s32 %s44, 1
    %p48 = scmp.eq.s32.totalorder %s10, 1
    %p49 = scmp.ne.s32.totalorder %s44, %s46
    %p50 = scmp.eq.s32.totalorder %s10, 0
    %p51 = por %p49, %p50
    %p52 = scmp.ne.s32.totalorder %s44, %s46
    %p53 = scmp.eq.s32.totalorder %s15, 1
    %p54 = por %p52, %p53
    %p55 = scmp.ne.s32.totalorder %s46, %s47
    %p56 = scmp.eq.s32.totalorder %s15, 0
    %p57 = por %p55, %p56
    %p58 = scmp.ne.s32.totalorder %s46, %s47
    %p59 = scmp.eq.s32.totalorder %s16, 1
    %p60 = por %p58, %p59
    %p62 = scmp.ne.s32.totalorder %s47, %s61
    %p63 = scmp.eq.s32.totalorder %s16, 0
    %p64 = por %p62, %p63
    %s66 = sadd.s32 %s65, 1
    %p69 = scmp.eq.s32.totalorder %s10, 1
    %p70 = scmp.ne.s32.totalorder %s65, %s67
    %p71 = scmp.eq.s32.totalorder %s10, 0
    %p72 = por %p70, %p71
    %p73 = scmp.ne.s32.totalorder %s65, %s67
    %p74 = scmp.eq.s32.totalorder %s15, 1
    %p75 = por %p73, %p74
    %p76 = scmp.ne.s32.totalorder %s67, %s68
    %p77 = scmp.eq.s32.totalorder %s15, 0
    %p78 = por %p76, %p77
    %p79 = scmp.ne.s32.totalorder %s67, %s68
    %p80 = scmp.eq.s32.totalorder %s16, 1
    %p81 = por %p79, %p80
    %p83 = scmp.ne.s32.totalorder %s68, %s82
    %p84 = scmp.eq.s32.totalorder %s16, 0
    %p85 = por %p83, %p84
    %s87 = sadd.s32 %s86, 1
    %p90 = scmp.eq.s32.totalorder %s10, 1
    %p91 = scmp.ne.s32.totalorder %s86, %s88
    %p92 = scmp.eq.s32.totalorder %s10, 0
    %p93 = por %p91, %p92
    %p94 = scmp.ne.s32.totalorder %s86, %s88
    %p95 = scmp.eq.s32.totalorder %s15, 1
    %p96 = por %p94, %p95
    %p97 = scmp.ne.s32.totalorder %s88, %s89
    %p98 = scmp.eq.s32.totalorder %s15, 0
    %p99 = por %p97, %p98
    %p100 = scmp.ne.s32.totalorder %s88, %s89
    %p101 = scmp.eq.s32.totalorder %s16, 1
    %p102 = por %p100, %p101
    %p104 = scmp.ne.s32.totalorder %s89, %s103
    %p105 = scmp.eq.s32.totalorder %s16, 0
    %p106 = por %p104, %p105
    %s107 = ssub.s32 %s10, %s17
    %p108 = scmp.eq.s32.totalorder %s107, 0
    %s110 = sadd.s32 %s109, 1
    %s111 = scalar_select %p108, %s109, %s110
    %p114 = pneg %p108
    %p115 = scmp.eq.s32.totalorder %s10, 1
    %p116 = por %p114, %p115
    %p117 = scmp.ne.s32.totalorder %s109, %s112
    %p118 = scmp.eq.s32.totalorder %s10, 0
    %p119 = por %p117, %p118
    %p120 = scmp.ne.s32.totalorder %s109, %s112
    %p121 = scmp.eq.s32.totalorder %s15, 1
    %p122 = por %p120, %p121
    %p123 = scmp.ne.s32.totalorder %s112, %s113
    %p124 = scmp.eq.s32.totalorder %s15, 0
    %p125 = por %p123, %p124
    %p126 = scmp.ne.s32.totalorder %s112, %s113
    %p127 = scmp.eq.s32.totalorder %s16, 1
    %p128 = por %p126, %p127
    %p130 = scmp.ne.s32.totalorder %s113, %s129
    %p131 = scmp.eq.s32.totalorder %s16, 0
    %p132 = por %p130, %p131
    %p133 = scmp.le.s32.totalorder 1, %s10
    %p134 = scmp.lt.s32.totalorder %s10, 3
    %p135 = pnand %p133, %p134
    %p136 = pneg %p135
    // Predicated region
    $region9: #{generator_forward.11} parent=5 // pred_check
      _
    $region10: #{generator_forward.11} parent=5 // pred_check_branch
      %138 = sbr.rel (%p135) target = $region12
    $region11: #{generator_forward.11} parent=5 // pred_region
      %s139 = ssub.s32 %s10, 1
      // Predicated region
      $region13: #{generator_forward.11} parent=11 // pred_check
        %p140 = pneg %p57
      $region14: #{generator_forward.11} parent=11 // pred_check_branch
        %142 = sbr.rel (%p140) target = $region16
      $region15: #{generator_forward.11} parent=11 // pred_region
        _
      $region16: #{generator_forward.11} parent=11 // pred_fallthru
        _
      // Predicated region
      $region17: #{generator_forward.11} parent=11 // pred_check
        %p143 = pneg %p78
      $region18: #{generator_forward.11} parent=11 // pred_check_branch
        %145 = sbr.rel (%p143) target = $region20
      $region19: #{generator_forward.11} parent=11 // pred_region
        _
      $region20: #{generator_forward.11} parent=11 // pred_fallthru
        _
      // Predicated region
      $region21: #{generator_forward.11} parent=11 // pred_check
        %p146 = pneg %p99
      $region22: #{generator_forward.11} parent=11 // pred_check_branch
        %148 = sbr.rel (%p146) target = $region24
      $region23: #{generator_forward.11} parent=11 // pred_region
        _
      $region24: #{generator_forward.11} parent=11 // pred_fallthru
        _
    $region12: #{generator_forward.11} parent=5 // pred_fallthru
      _
    %p149 = scmp.lt.s32.totalorder %s10, 2
    // Predicated region
    $region25: #{generator_forward.11} parent=5 // pred_check
      %p150 = pneg %p149
    $region26: #{generator_forward.11} parent=5 // pred_check_branch
      %152 = sbr.rel (%p150) target = $region28
    $region27: #{generator_forward.11} parent=5 // pred_region
      // Predicated region
      $region29: #{generator_forward.11} parent=27 // pred_check
        %p153 = pneg %p30
      $region30: #{generator_forward.11} parent=27 // pred_check_branch
        %155 = sbr.rel (%p153) target = $region32
      $region31: #{generator_forward.11} parent=27 // pred_region
        %p156 = scmp.lt.s32.totalorder %s10, 1
        %s157 = scalar_select %p156, %s10, 1
        %s158 = smul.addr %s157, 6
        %s159 = smul.addr %s158, 8
        %s160 = scalar_lea.vmem %s0, %s159
      $region32: #{generator_forward.11} parent=27 // pred_fallthru
        _
    $region28: #{generator_forward.11} parent=5 // pred_fallthru
      _
    %p161 = scmp.le.s32.totalorder 1, %s10
    %p162 = scmp.lt.s32.totalorder %s10, 3
    %p163 = pnand %p161, %p162
    %p164 = pneg %p163
    // Predicated region
    $region33: #{generator_forward.11} parent=5 // pred_check
      _
    $region34: #{generator_forward.11} parent=5 // pred_check_branch
      %166 = sbr.rel (%p163) target = $region36
    $region35: #{generator_forward.11} parent=5 // pred_region
      %s167 = ssub.s32 %s10, 1
      %p168 = scmp.lt.s32.totalorder %s15, 1
      %s169 = scalar_select %p168, %s15, 1
      %s170 = smul.addr %s169, 6
      %s171 = smul.addr %s170, 8
      %s172 = scalar_lea.vmem %s0, %s171
      %p173 = pneg %p36
      %p174 = pneg %p33
      %p175 = pneg %p57
      %p176 = pneg %p54
      %p177 = pneg %p78
      %p178 = pneg %p75
      %p179 = pneg %p99
      %p180 = pneg %p96
      %p181 = pneg %p125
      %p182 = pneg %p122
      %p183 = scmp.lt.s32.totalorder %s15, 1
      %s184 = scalar_select %p183, %s15, 1
      %s185 = smul.addr %s184, 8
      %s186 = scalar_lea.vmem %s4, %s185
      %p187 = scmp.lt.s32.totalorder %s15, 1
      %s188 = scalar_select %p187, %s15, 1
      %s189 = smul.addr %s188, 6
      %s190 = smul.addr %s189, 8
      %s191 = scalar_lea.vmem %s0, %s190
      %p192 = scmp.lt.s32.totalorder %s15, 1
      %s193 = scalar_select %p192, %s15, 1
      %s194 = smul.addr %s193, 8
      %s195 = scalar_lea.vmem %s4, %s194
      %v197 = vld [vmem:[%s191] sm:$0xff]
      %v198 = vld [vmem:[%s191 + $0x8] sm:$0xff]
      %v199 = vld [vmem:[%s191 + $0x10] sm:$0xff]
      %v200 = vpack.c.bf16 %v197, %v197
      %v201 = vpack.c.bf16 %v198, %v198
      %v202 = vpack.c.bf16 %v199, %v199
      %v203 = vld [vmem:[%s1] sm:$0xf]
      %v204 = vld [vmem:[%s1 + $0x4] sm:$0xf]
      %v205 = vld [vmem:[%s1 + $0x8] sm:$0xf]
      %v206 = vld [vmem:[%s1 + $0xc] sm:$0xf]
      %v207 = vld [vmem:[%s1 + $0x10] sm:$0xf]
      %v208 = vld [vmem:[%s1 + $0x14] sm:$0xf]
      %v209 = vld [vmem:[%s1 + $0x18] sm:$0xf]
      %v210 = vld [vmem:[%s1 + $0x1c] sm:$0xf]
      %v211 = vld [vmem:[%s1 + $0x20] sm:$0xf]
      %v212 = vld [vmem:[%s1 + $0x24] sm:$0xf]
      %v213 = vld [vmem:[%s1 + $0x28] sm:$0xf]
      %v214 = vld [vmem:[%s1 + $0x2c] sm:$0xf]
      %v215 = vld [vmem:[%s1 + $0x30] sm:$0xf]
      %v216 = vld [vmem:[%s1 + $0x34] sm:$0xf]
      %v217 = vld [vmem:[%s1 + $0x38] sm:$0xf]
      %v218 = vld [vmem:[%s1 + $0x3c] sm:$0xf]
      %v219 = vld [vmem:[%s1 + $0x40] sm:$0xf]
      %v220 = vld [vmem:[%s1 + $0x44] sm:$0xf]
      %v221 = vld [vmem:[%s1 + $0x48] sm:$0xf]
      %v222 = vld [vmem:[%s1 + $0x4c] sm:$0xf]
      %v223 = vld [vmem:[%s1 + $0x50] sm:$0xf]
      %v224 = vld [vmem:[%s1 + $0x54] sm:$0xf]
      %v225 = vld [vmem:[%s1 + $0x58] sm:$0xf]
      %v226 = vld [vmem:[%s1 + $0x5c] sm:$0xf]
      %v227 = vld [vmem:[%s1 + $0x60] sm:$0xf]
      %v228 = vld [vmem:[%s1 + $0x64] sm:$0xf]
      %v229 = vld [vmem:[%s1 + $0x68] sm:$0xf]
      %v230 = vld [vmem:[%s1 + $0x6c] sm:$0xf]
      %v231 = vld [vmem:[%s1 + $0x70] sm:$0xf]
      %v232 = vld [vmem:[%s1 + $0x74] sm:$0xf]
      %v233 = vld [vmem:[%s1 + $0x78] sm:$0xf]
      %v234 = vld [vmem:[%s1 + $0x7c] sm:$0xf]
      %v235 = vld [vmem:[%s1 + $0x80] sm:$0xf]
      %v236 = vld [vmem:[%s1 + $0x84] sm:$0xf]
      %v237 = vld [vmem:[%s1 + $0x88] sm:$0xf]
      %v238 = vld [vmem:[%s1 + $0x8c] sm:$0xf]
      %v239 = vld [vmem:[%s1 + $0x90] sm:$0xf]
      %v240 = vld [vmem:[%s1 + $0x94] sm:$0xf]
      %v241 = vld [vmem:[%s1 + $0x98] sm:$0xf]
      %v242 = vld [vmem:[%s1 + $0x9c] sm:$0xf]
      %v243 = vld [vmem:[%s191] sm:$0xfe]
      %v244 = vld [vmem:[%s191 + $0x8] sm:$0xfe]
      %v245 = vld [vmem:[%s191 + $0x10] sm:$0xfe]
      %v246 = vld [vmem:[%s191 + $0x18] sm:$0x1]
      %v247 = vld [vmem:[%s191 + $0x20] sm:$0x1]
      %v248 = vld [vmem:[%s191 + $0x28] sm:$0x1]
      %v249 = vpack.c.bf16 %v246, %v243
      %v250 = vpack.c.bf16 %v247, %v244
      %v251 = vpack.c.bf16 %v248, %v245
      %s252 = scalar_lea.vmem %s1, 160
      %v253 = vld [vmem:[%s252] sm:$0xf]
      %v254 = vld [vmem:[%s252 + $0x4] sm:$0xf]
      %v255 = vld [vmem:[%s252 + $0x8] sm:$0xf]
      %v256 = vld [vmem:[%s252 + $0xc] sm:$0xf]
      %v257 = vld [vmem:[%s252 + $0x10] sm:$0xf]
      %v258 = vld [vmem:[%s252 + $0x14] sm:$0xf]
      %v259 = vld [vmem:[%s252 + $0x18] sm:$0xf]
      %v260 = vld [vmem:[%s252 + $0x1c] sm:$0xf]
      %v261 = vld [vmem:[%s252 + $0x20] sm:$0xf]
      %v262 = vld [vmem:[%s252 + $0x24] sm:$0xf]
      %v263 = vld [vmem:[%s252 + $0x28] sm:$0xf]
      %v264 = vld [vmem:[%s252 + $0x2c] sm:$0xf]
      %v265 = vld [vmem:[%s252 + $0x30] sm:$0xf]
      %v266 = vld [vmem:[%s252 + $0x34] sm:$0xf]
      %v267 = vld [vmem:[%s252 + $0x38] sm:$0xf]
      %v268 = vld [vmem:[%s252 + $0x3c] sm:$0xf]
      %v269 = vld [vmem:[%s252 + $0x40] sm:$0xf]
      %v270 = vld [vmem:[%s252 + $0x44] sm:$0xf]
      %v271 = vld [vmem:[%s252 + $0x48] sm:$0xf]
      %v272 = vld [vmem:[%s252 + $0x4c] sm:$0xf]
      %v273 = vld [vmem:[%s252 + $0x50] sm:$0xf]
      %v274 = vld [vmem:[%s252 + $0x54] sm:$0xf]
      %v275 = vld [vmem:[%s252 + $0x58] sm:$0xf]
      %v276 = vld [vmem:[%s252 + $0x5c] sm:$0xf]
      %v277 = vld [vmem:[%s252 + $0x60] sm:$0xf]
      %v278 = vld [vmem:[%s252 + $0x64] sm:$0xf]
      %v279 = vld [vmem:[%s252 + $0x68] sm:$0xf]
      %v280 = vld [vmem:[%s252 + $0x6c] sm:$0xf]
      %v281 = vld [vmem:[%s252 + $0x70] sm:$0xf]
      %v282 = vld [vmem:[%s252 + $0x74] sm:$0xf]
      %v283 = vld [vmem:[%s252 + $0x78] sm:$0xf]
      %v284 = vld [vmem:[%s252 + $0x7c] sm:$0xf]
      %v285 = vld [vmem:[%s252 + $0x80] sm:$0xf]
      %v286 = vld [vmem:[%s252 + $0x84] sm:$0xf]
      %v287 = vld [vmem:[%s252 + $0x88] sm:$0xf]
      %v288 = vld [vmem:[%s252 + $0x8c] sm:$0xf]
      %v289 = vld [vmem:[%s252 + $0x90] sm:$0xf]
      %v290 = vld [vmem:[%s252 + $0x94] sm:$0xf]
      %v291 = vld [vmem:[%s252 + $0x98] sm:$0xf]
      %v292 = vld [vmem:[%s252 + $0x9c] sm:$0xf]
      %v294 = vshrl.u32 %v249, 16
      %v296 = vshll.u32 %v249, 16
      %v298 = vrot.slane %v296, 1
      %v299 = vor.u32 %v294, %v298
      %v301 = vshrl.u32 %v250, 16
      %v303 = vshll.u32 %v250, 16
      %v305 = vrot.slane %v303, 1
      %v306 = vor.u32 %v301, %v305
      %v308 = vshrl.u32 %v251, 16
      %v310 = vshll.u32 %v251, 16
      %v312 = vrot.slane %v310, 1
      %v313 = vor.u32 %v308, %v312
      %v356 = vunpack.c.l.b16 %v253
      %v357 = vunpack.c.l.b16 %v254
      %v358 = vunpack.c.l.b16 %v255
      %v359 = vunpack.c.l.b16 %v256
      %v360 = vunpack.c.l.b16 %v257
      %v361 = vunpack.c.l.b16 %v258
      %v362 = vunpack.c.l.b16 %v259
      %v363 = vunpack.c.l.b16 %v260
      %v364 = vunpack.c.l.b16 %v261
      %v365 = vunpack.c.l.b16 %v262
      %v366 = vunpack.c.l.b16 %v263
      %v367 = vunpack.c.l.b16 %v264
      %v368 = vunpack.c.l.b16 %v265
      %v369 = vunpack.c.l.b16 %v266
      %v370 = vunpack.c.l.b16 %v267
      %v371 = vunpack.c.l.b16 %v268
      %v372 = vunpack.c.l.b16 %v269
      %v373 = vunpack.c.l.b16 %v270
      %v374 = vunpack.c.l.b16 %v271
      %v375 = vunpack.c.l.b16 %v272
      %v376 = vunpack.c.l.b16 %v273
      %v377 = vunpack.c.l.b16 %v274
      %v378 = vunpack.c.l.b16 %v275
      %v379 = vunpack.c.l.b16 %v276
      %v380 = vunpack.c.l.b16 %v277
      %v381 = vunpack.c.l.b16 %v278
      %v382 = vunpack.c.l.b16 %v279
      %v383 = vunpack.c.l.b16 %v280
      %v384 = vunpack.c.l.b16 %v281
      %v385 = vunpack.c.l.b16 %v282
      %v386 = vunpack.c.l.b16 %v283
      %v387 = vunpack.c.l.b16 %v284
      %v388 = vunpack.c.l.b16 %v285
      %v389 = vunpack.c.l.b16 %v286
      %v390 = vunpack.c.l.b16 %v287
      %v391 = vunpack.c.l.b16 %v288
      %v392 = vunpack.c.l.b16 %v289
      %v393 = vunpack.c.l.b16 %v290
      %v394 = vunpack.c.l.b16 %v291
      %v395 = vunpack.c.l.b16 %v292
      %v396 = vpack.c.b16 %v357, %v356
      %v397 = vpack.c.b16 %v359, %v358
      %v398 = vpack.c.b16 %v361, %v360
      %v399 = vpack.c.b16 %v363, %v362
      %v400 = vpack.c.b16 %v365, %v364
      %v401 = vpack.c.b16 %v367, %v366
      %v402 = vpack.c.b16 %v369, %v368
      %v403 = vpack.c.b16 %v371, %v370
      %v404 = vpack.c.b16 %v373, %v372
      %v405 = vpack.c.b16 %v375, %v374
      %v406 = vpack.c.b16 %v377, %v376
      %v407 = vpack.c.b16 %v379, %v378
      %v408 = vpack.c.b16 %v381, %v380
      %v409 = vpack.c.b16 %v383, %v382
      %v410 = vpack.c.b16 %v385, %v384
      %v411 = vpack.c.b16 %v387, %v386
      %v412 = vpack.c.b16 %v389, %v388
      %v413 = vpack.c.b16 %v391, %v390
      %v414 = vpack.c.b16 %v393, %v392
      %v415 = vpack.c.b16 %v395, %v394
      %vm436 = vcmask 523264
      %v438 = vsel %vm436, %v313, 0
      %440 = vmatprep.subr.bf16.mxu0 0
      %441 = vmatpush1.bf16.msra.mxu0 %v396
      %442 = vmatprep.subr.bf16.mxu0 0
      %443 = vmatpush1.bf16.msra.mxu0 %v397
      %444 = vmatprep.subr.bf16.mxu0 0
      %445 = vmatpush1.bf16.msra.mxu0 %v398
      %446 = vmatprep.subr.bf16.mxu0 0
      %447 = vmatpush1.bf16.msra.mxu0 %v399
      %448 = vmatprep.subr.bf16.mxu0 0
      %449 = vmatpush1.bf16.msra.mxu0 %v400
      %450 = vmatprep.subr.bf16.mxu0 0
      %451 = vmatpush1.bf16.msra.mxu0 %v401
      %452 = vmatprep.subr.bf16.mxu0 0
      %453 = vmatpush1.bf16.msra.mxu0 %v402
      %454 = vmatprep.subr.bf16.mxu0 0
      %455 = vmatpush1.bf16.msra.mxu0 %v403
      %456 = vmatprep.subr.bf16.mxu0 0
      %457 = vmatpush1.bf16.msra.mxu0 %v404
      %458 = vmatprep.subr.bf16.mxu0 0
      %459 = vmatpush1.bf16.msra.mxu0 %v405
      %460 = vmatprep.subr.bf16.mxu0 0
      %461 = vmatpush1.bf16.msra.mxu0 %v406
      %462 = vmatprep.subr.bf16.mxu0 0
      %463 = vmatpush1.bf16.msra.mxu0 %v407
      %464 = vmatprep.subr.bf16.mxu0 0
      %465 = vmatpush1.bf16.msra.mxu0 %v408
      %466 = vmatprep.subr.bf16.mxu0 0
      %467 = vmatpush1.bf16.msra.mxu0 %v409
      %468 = vmatprep.subr.bf16.mxu0 0
      %469 = vmatpush1.bf16.msra.mxu0 %v410
      %470 = vmatprep.subr.bf16.mxu0 0
      %471 = vmatpush1.bf16.msra.mxu0 %v411
      %472 = vmatprep.mubr.bf16.mxu0 %v306
      %473 = vmatmul.mubr.bf16.gmra.mrb[0].mxu0 %v299
      %v474 = vpop.f32.mrb[0].mxu0
      %v475 = vadd.f32 0.0, %v474
      %v476 = vpop.f32.mrb[0].mxu0
      %v477 = vpop.f32.mrb[0].mxu0
      %v478 = vpop.f32.mrb[0].mxu0
      %479 = vdwg.mxu0
      %480 = vmatprep.subr.bf16.mxu0 0
      %481 = vmatpush1.bf16.msra.mxu0 %v412
      %482 = vmatprep.subr.bf16.mxu0 0
      %483 = vmatpush1.bf16.msra.mxu0 %v413
      %484 = vmatprep.subr.bf16.mxu0 0
      %485 = vmatpush1.bf16.msra.mxu0 %v414
      %486 = vmatprep.subr.bf16.mxu0 0
      %487 = vmatpush1.bf16.msra.mxu0 %v415
      %488 = vmatprep.subr.bf16.mxu0 0
      %489 = vmatpush1.bf16.msra.mxu0 0
      %490 = vmatprep.subr.bf16.mxu0 0
      %491 = vmatpush1.bf16.msra.mxu0 0
      %492 = vmatprep.subr.bf16.mxu0 0
      %493 = vmatpush1.bf16.msra.mxu0 0
      %494 = vmatprep.subr.bf16.mxu0 0
      %495 = vmatpush1.bf16.msra.mxu0 0
      %496 = vmatprep.subr.bf16.mxu0 0
      %497 = vmatpush1.bf16.msra.mxu0 0
      %498 = vmatprep.subr.bf16.mxu0 0
      %499 = vmatpush1.bf16.msra.mxu0 0
      %500 = vmatprep.subr.bf16.mxu0 0
      %501 = vmatpush1.bf16.msra.mxu0 0
      %502 = vmatprep.subr.bf16.mxu0 0
      %503 = vmatpush1.bf16.msra.mxu0 0
      %504 = vmatprep.subr.bf16.mxu0 0
      %505 = vmatpush1.bf16.msra.mxu0 0
      %506 = vmatprep.subr.bf16.mxu0 0
      %507 = vmatpush1.bf16.msra.mxu0 0
      %508 = vmatprep.subr.bf16.mxu0 0
      %509 = vmatpush1.bf16.msra.mxu0 0
      %510 = vmatprep.subr.bf16.mxu0 0
      %511 = vmatpush1.bf16.msra.mxu0 0
      %512 = vmatprep.mubr.bf16.mxu0 0
      %513 = vmatmul.mubr.bf16.gmra.mrb[0].mxu0 %v438
      %v514 = vpop.f32.mrb[0].mxu0
      %v515 = vadd.f32 %v475, %v514
      %v516 = vpop.f32.mrb[0].mxu0
      %v517 = vpop.f32.mrb[0].mxu0
      %v518 = vpop.f32.mrb[0].mxu0
      %519 = vdwg.mxu0
      %v560 = vunpack.c.l.b16 %v203
      %v561 = vunpack.c.l.b16 %v204
      %v562 = vunpack.c.l.b16 %v205
      %v563 = vunpack.c.l.b16 %v206
      %v564 = vunpack.c.l.b16 %v207
      %v565 = vunpack.c.l.b16 %v208
      %v566 = vunpack.c.l.b16 %v209
      %v567 = vunpack.c.l.b16 %v210
      %v568 = vunpack.c.l.b16 %v211
      %v569 = vunpack.c.l.b16 %v212
      %v570 = vunpack.c.l.b16 %v213
      %v571 = vunpack.c.l.b16 %v214
      %v572 = vunpack.c.l.b16 %v215
      %v573 = vunpack.c.l.b16 %v216
      %v574 = vunpack.c.l.b16 %v217
      %v575 = vunpack.c.l.b16 %v218
      %v576 = vunpack.c.l.b16 %v219
      %v577 = vunpack.c.l.b16 %v220
      %v578 = vunpack.c.l.b16 %v221
      %v579 = vunpack.c.l.b16 %v222
      %v580 = vunpack.c.l.b16 %v223
      %v581 = vunpack.c.l.b16 %v224
      %v582 = vunpack.c.l.b16 %v225
      %v583 = vunpack.c.l.b16 %v226
      %v584 = vunpack.c.l.b16 %v227
      %v585 = vunpack.c.l.b16 %v228
      %v586 = vunpack.c.l.b16 %v229
      %v587 = vunpack.c.l.b16 %v230
      %v588 = vunpack.c.l.b16 %v231
      %v589 = vunpack.c.l.b16 %v232
      %v590 = vunpack.c.l.b16 %v233
      %v591 = vunpack.c.l.b16 %v234
      %v592 = vunpack.c.l.b16 %v235
      %v593 = vunpack.c.l.b16 %v236
      %v594 = vunpack.c.l.b16 %v237
      %v595 = vunpack.c.l.b16 %v238
      %v596 = vunpack.c.l.b16 %v239
      %v597 = vunpack.c.l.b16 %v240
      %v598 = vunpack.c.l.b16 %v241
      %v599 = vunpack.c.l.b16 %v242
      %v600 = vpack.c.b16 %v561, %v560
      %v601 = vpack.c.b16 %v563, %v562
      %v602 = vpack.c.b16 %v565, %v564
      %v603 = vpack.c.b16 %v567, %v566
      %v604 = vpack.c.b16 %v569, %v568
      %v605 = vpack.c.b16 %v571, %v570
      %v606 = vpack.c.b16 %v573, %v572
      %v607 = vpack.c.b16 %v575, %v574
      %v608 = vpack.c.b16 %v577, %v576
      %v609 = vpack.c.b16 %v579, %v578
      %v610 = vpack.c.b16 %v581, %v580
      %v611 = vpack.c.b16 %v583, %v582
      %v612 = vpack.c.b16 %v585, %v584
      %v613 = vpack.c.b16 %v587, %v586
      %v614 = vpack.c.b16 %v589, %v588
      %v615 = vpack.c.b16 %v591, %v590
      %v616 = vpack.c.b16 %v593, %v592
      %v617 = vpack.c.b16 %v595, %v594
      %v618 = vpack.c.b16 %v597, %v596
      %v619 = vpack.c.b16 %v599, %v598
      %v641 = vsel %vm436, %v202, 0
      %643 = vmatprep.subr.bf16.mxu0 0
      %644 = vmatpush1.bf16.msra.mxu0 %v600
      %645 = vmatprep.subr.bf16.mxu0 0
      %646 = vmatpush1.bf16.msra.mxu0 %v601
      %647 = vmatprep.subr.bf16.mxu0 0
      %648 = vmatpush1.bf16.msra.mxu0 %v602
      %649 = vmatprep.subr.bf16.mxu0 0
      %650 = vmatpush1.bf16.msra.mxu0 %v603
      %651 = vmatprep.subr.bf16.mxu0 0
      %652 = vmatpush1.bf16.msra.mxu0 %v604
      %653 = vmatprep.subr.bf16.mxu0 0
      %654 = vmatpush1.bf16.msra.mxu0 %v605
      %655 = vmatprep.subr.bf16.mxu0 0
      %656 = vmatpush1.bf16.msra.mxu0 %v606
      %657 = vmatprep.subr.bf16.mxu0 0
      %658 = vmatpush1.bf16.msra.mxu0 %v607
      %659 = vmatprep.subr.bf16.mxu0 0
      %660 = vmatpush1.bf16.msra.mxu0 %v608
      %661 = vmatprep.subr.bf16.mxu0 0
      %662 = vmatpush1.bf16.msra.mxu0 %v609
      %663 = vmatprep.subr.bf16.mxu0 0
      %664 = vmatpush1.bf16.msra.mxu0 %v610
      %665 = vmatprep.subr.bf16.mxu0 0
      %666 = vmatpush1.bf16.msra.mxu0 %v611
      %667 = vmatprep.subr.bf16.mxu0 0
      %668 = vmatpush1.bf16.msra.mxu0 %v612
      %669 = vmatprep.subr.bf16.mxu0 0
      %670 = vmatpush1.bf16.msra.mxu0 %v613
      %671 = vmatprep.subr.bf16.mxu0 0
      %672 = vmatpush1.bf16.msra.mxu0 %v614
      %673 = vmatprep.subr.bf16.mxu0 0
      %674 = vmatpush1.bf16.msra.mxu0 %v615
      %675 = vmatprep.mubr.bf16.mxu0 %v201
      %676 = vmatmul.mubr.bf16.gmra.mrb[0].mxu0 %v200
      %v677 = vpop.f32.mrb[0].mxu0
      %v678 = vadd.f32 %v515, %v677
      %v679 = vpop.f32.mrb[0].mxu0
      %v680 = vpop.f32.mrb[0].mxu0
      %v681 = vpop.f32.mrb[0].mxu0
      %682 = vdwg.mxu0
      %683 = vmatprep.subr.bf16.mxu0 0
      %684 = vmatpush1.bf16.msra.mxu0 %v616
      %685 = vmatprep.subr.bf16.mxu0 0
      %686 = vmatpush1.bf16.msra.mxu0 %v617
      %687 = vmatprep.subr.bf16.mxu0 0
      %688 = vmatpush1.bf16.msra.mxu0 %v618
      %689 = vmatprep.subr.bf16.mxu0 0
      %690 = vmatpush1.bf16.msra.mxu0 %v619
      %691 = vmatprep.subr.bf16.mxu0 0
      %692 = vmatpush1.bf16.msra.mxu0 0
      %693 = vmatprep.subr.bf16.mxu0 0
      %694 = vmatpush1.bf16.msra.mxu0 0
      %695 = vmatprep.subr.bf16.mxu0 0
      %696 = vmatpush1.bf16.msra.mxu0 0
      %697 = vmatprep.subr.bf16.mxu0 0
      %698 = vmatpush1.bf16.msra.mxu0 0
      %699 = vmatprep.subr.bf16.mxu0 0
      %700 = vmatpush1.bf16.msra.mxu0 0
      %701 = vmatprep.subr.bf16.mxu0 0
      %702 = vmatpush1.bf16.msra.mxu0 0
      %703 = vmatprep.subr.bf16.mxu0 0
      %704 = vmatpush1.bf16.msra.mxu0 0
      %705 = vmatprep.subr.bf16.mxu0 0
      %706 = vmatpush1.bf16.msra.mxu0 0
      %707 = vmatprep.subr.bf16.mxu0 0
      %708 = vmatpush1.bf16.msra.mxu0 0
      %709 = vmatprep.subr.bf16.mxu0 0
      %710 = vmatpush1.bf16.msra.mxu0 0
      %711 = vmatprep.subr.bf16.mxu0 0
      %712 = vmatpush1.bf16.msra.mxu0 0
      %713 = vmatprep.subr.bf16.mxu0 0
      %714 = vmatpush1.bf16.msra.mxu0 0
      %715 = vmatprep.mubr.bf16.mxu0 0
      %716 = vmatmul.mubr.bf16.gmra.mrb[0].mxu0 %v641
      %v717 = vpop.f32.mrb[0].mxu0
      %v718 = vadd.f32 %v678, %v717
      %v719 = vpop.f32.mrb[0].mxu0
      %v720 = vpop.f32.mrb[0].mxu0
      %v721 = vpop.f32.mrb[0].mxu0
      %722 = vdwg.mxu0
      %v723 = vld [vmem:[%s191] sm:$0xfc]
      %v724 = vld [vmem:[%s191 + $0x8] sm:$0xfc]
      %v725 = vld [vmem:[%s191 + $0x10] sm:$0xfc]
      %v726 = vld [vmem:[%s191 + $0x18] sm:$0x3]
      %v727 = vld [vmem:[%s191 + $0x20] sm:$0x3]
      %v728 = vld [vmem:[%s191 + $0x28] sm:$0x3]
      %v729 = vpack.c.bf16 %v726, %v723
      %v730 = vpack.c.bf16 %v727, %v724
      %v731 = vpack.c.bf16 %v728, %v725
      %s732 = scalar_lea.vmem %s1, 320
      %v733 = vld [vmem:[%s732] sm:$0xf]
      %v734 = vld [vmem:[%s732 + $0x4] sm:$0xf]
      %v735 = vld [vmem:[%s732 + $0x8] sm:$0xf]
      %v736 = vld [vmem:[%s732 + $0xc] sm:$0xf]
      %v737 = vld [vmem:[%s732 + $0x10] sm:$0xf]
      %v738 = vld [vmem:[%s732 + $0x14] sm:$0xf]
      %v739 = vld [vmem:[%s732 + $0x18] sm:$0xf]
      %v740 = vld [vmem:[%s732 + $0x1c] sm:$0xf]
      %v741 = vld [vmem:[%s732 + $0x20] sm:$0xf]
      %v742 = vld [vmem:[%s732 + $0x24] sm:$0xf]
      %v743 = vld [vmem:[%s732 + $0x28] sm:$0xf]
      %v744 = vld [vmem:[%s732 + $0x2c] sm:$0xf]
      %v745 = vld [vmem:[%s732 + $0x30] sm:$0xf]
      %v746 = vld [vmem:[%s732 + $0x34] sm:$0xf]
      %v747 = vld [vmem:[%s732 + $0x38] sm:$0xf]
      %v748 = vld [vmem:[%s732 + $0x3c] sm:$0xf]
      %v749 = vld [vmem:[%s732 + $0x40] sm:$0xf]
      %v750 = vld [vmem:[%s732 + $0x44] sm:$0xf]
      %v751 = vld [vmem:[%s732 + $0x48] sm:$0xf]
      %v752 = vld [vmem:[%s732 + $0x4c] sm:$0xf]
      %v753 = vld [vmem:[%s732 + $0x50] sm:$0xf]
      %v754 = vld [vmem:[%s732 + $0x54] sm:$0xf]
      %v755 = vld [vmem:[%s732 + $0x58] sm:$0xf]
      %v756 = vld [vmem:[%s732 + $0x5c] sm:$0xf]
      %v757 = vld [vmem:[%s732 + $0x60] sm:$0xf]
      %v758 = vld [vmem:[%s732 + $0x64] sm:$0xf]
      %v759 = vld [vmem:[%s732 + $0x68] sm:$0xf]
      %v760 = vld [vmem:[%s732 + $0x6c] sm:$0xf]
      %v761 = vld [vmem:[%s732 + $0x70] sm:$0xf]
      %v762 = vld [vmem:[%s732 + $0x74] sm:$0xf]
      %v763 = vld [vmem:[%s732 + $0x78] sm:$0xf]
      %v764 = vld [vmem:[%s732 + $0x7c] sm:$0xf]
      %v765 = vld [vmem:[%s732 + $0x80] sm:$0xf]
      %v766 = vld [vmem:[%s732 + $0x84] sm:$0xf]
      %v767 = vld [vmem:[%s732 + $0x88] sm:$0xf]
      %v768 = vld [vmem:[%s732 + $0x8c] sm:$0xf]
      %v769 = vld [vmem:[%s732 + $0x90] sm:$0xf]
      %v770 = vld [vmem:[%s732 + $0x94] sm:$0xf]
      %v771 = vld [vmem:[%s732 + $0x98] sm:$0xf]
      %v772 = vld [vmem:[%s732 + $0x9c] sm:$0xf]
      %v776 = vrot.slane %v729, 1
      %v777 = vrot.slane %v730, 1
      %v778 = vrot.slane %v731, 1
      %v821 = vunpack.c.l.b16 %v733
      %v822 = vunpack.c.l.b16 %v734
      %v823 = vunpack.c.l.b16 %v735
      %v824 = vunpack.c.l.b16 %v736
      %v825 = vunpack.c.l.b16 %v737
      %v826 = vunpack.c.l.b16 %v738
      %v827 = vunpack.c.l.b16 %v739
      %v828 = vunpack.c.l.b16 %v740
      %v829 = vunpack.c.l.b16 %v741
      %v830 = vunpack.c.l.b16 %v742
      %v831 = vunpack.c.l.b16 %v743
      %v832 = vunpack.c.l.b16 %v744
      %v833 = vunpack.c.l.b16 %v745
      %v834 = vunpack.c.l.b16 %v746
      %v835 = vunpack.c.l.b16 %v747
      %v836 = vunpack.c.l.b16 %v748
      %v837 = vunpack.c.l.b16 %v749
      %v838 = vunpack.c.l.b16 %v750
      %v839 = vunpack.c.l.b16 %v751
      %v840 = vunpack.c.l.b16 %v752
      %v841 = vunpack.c.l.b16 %v753
      %v842 = vunpack.c.l.b16 %v754
      %v843 = vunpack.c.l.b16 %v755
      %v844 = vunpack.c.l.b16 %v756
      %v845 = vunpack.c.l.b16 %v757
      %v846 = vunpack.c.l.b16 %v758
      %v847 = vunpack.c.l.b16 %v759
      %v848 = vunpack.c.l.b16 %v760
      %v849 = vunpack.c.l.b16 %v761
      %v850 = vunpack.c.l.b16 %v762
      %v851 = vunpack.c.l.b16 %v763
      %v852 = vunpack.c.l.b16 %v764
      %v853 = vunpack.c.l.b16 %v765
      %v854 = vunpack.c.l.b16 %v766
      %v855 = vunpack.c.l.b16 %v767
      %v856 = vunpack.c.l.b16 %v768
      %v857 = vunpack.c.l.b16 %v769
      %v858 = vunpack.c.l.b16 %v770
      %v859 = vunpack.c.l.b16 %v771
      %v860 = vunpack.c.l.b16 %v772
      %v861 = vpack.c.b16 %v822, %v821
      %v862 = vpack.c.b16 %v824, %v823
      %v863 = vpack.c.b16 %v826, %v825
      %v864 = vpack.c.b16 %v828, %v827
      %v865 = vpack.c.b16 %v830, %v829
      %v866 = vpack.c.b16 %v832, %v831
      %v867 = vpack.c.b16 %v834, %v833
      %v868 = vpack.c.b16 %v836, %v835
      %v869 = vpack.c.b16 %v838, %v837
      %v870 = vpack.c.b16 %v840, %v839
      %v871 = vpack.c.b16 %v842, %v841
      %v872 = vpack.c.b16 %v844, %v843
      %v873 = vpack.c.b16 %v846, %v845
      %v874 = vpack.c.b16 %v848, %v847
      %v875 = vpack.c.b16 %v850, %v849
      %v876 = vpack.c.b16 %v852, %v851
      %v877 = vpack.c.b16 %v854, %v853
      %v878 = vpack.c.b16 %v856, %v855
      %v879 = vpack.c.b16 %v858, %v857
      %v880 = vpack.c.b16 %v860, %v859
      %v902 = vsel %vm436, %v778, 0
      %904 = vmatprep.subr.bf16.mxu0 0
      %905 = vmatpush1.bf16.msra.mxu0 %v861
      %906 = vmatprep.subr.bf16.mxu0 0
      %907 = vmatpush1.bf16.msra.mxu0 %v862
      %908 = vmatprep.subr.bf16.mxu0 0
      %909 = vmatpush1.bf16.msra.mxu0 %v863
      %910 = vmatprep.subr.bf16.mxu0 0
      %911 = vmatpush1.bf16.msra.mxu0 %v864
      %912 = vmatprep.subr.bf16.mxu0 0
      %913 = vmatpush1.bf16.msra.mxu0 %v865
      %914 = vmatprep.subr.bf16.mxu0 0
      %915 = vmatpush1.bf16.msra.mxu0 %v866
      %916 = vmatprep.subr.bf16.mxu0 0
      %917 = vmatpush1.bf16.msra.mxu0 %v867
      %918 = vmatprep.subr.bf16.mxu0 0
      %919 = vmatpush1.bf16.msra.mxu0 %v868
      %920 = vmatprep.subr.bf16.mxu0 0
      %921 = vmatpush1.bf16.msra.mxu0 %v869
      %922 = vmatprep.subr.bf16.mxu0 0
      %923 = vmatpush1.bf16.msra.mxu0 %v870
      %924 = vmatprep.subr.bf16.mxu0 0
      %925 = vmatpush1.bf16.msra.mxu0 %v871
      %926 = vmatprep.subr.bf16.mxu0 0
      %927 = vmatpush1.bf16.msra.mxu0 %v872
      %928 = vmatprep.subr.bf16.mxu0 0
      %929 = vmatpush1.bf16.msra.mxu0 %v873
      %930 = vmatprep.subr.bf16.mxu0 0
      %931 = vmatpush1.bf16.msra.mxu0 %v874
      %932 = vmatprep.subr.bf16.mxu0 0
      %933 = vmatpush1.bf16.msra.mxu0 %v875
      %934 = vmatprep.subr.bf16.mxu0 0
      %935 = vmatpush1.bf16.msra.mxu0 %v876
      %936 = vmatprep.mubr.bf16.mxu0 %v777
      %937 = vmatmul.mubr.bf16.gmra.mrb[0].mxu0 %v776
      %v938 = vpop.f32.mrb[0].mxu0
      %v939 = vadd.f32 0.0, %v938
      %v940 = vpop.f32.mrb[0].mxu0
      %v941 = vpop.f32.mrb[0].mxu0
      %v942 = vpop.f32.mrb[0].mxu0
      %943 = vdwg.mxu0
      %944 = vmatprep.subr.bf16.mxu0 0
      %945 = vmatpush1.bf16.msra.mxu0 %v877
      %946 = vmatprep.subr.bf16.mxu0 0
      %947 = vmatpush1.bf16.msra.mxu0 %v878
      %948 = vmatprep.subr.bf16.mxu0 0
      %949 = vmatpush1.bf16.msra.mxu0 %v879
      %950 = vmatprep.subr.bf16.mxu0 0
      %951 = vmatpush1.bf16.msra.mxu0 %v880
      %952 = vmatprep.subr.bf16.mxu0 0
      %953 = vmatpush1.bf16.msra.mxu0 0
      %954 = vmatprep.subr.bf16.mxu0 0
      %955 = vmatpush1.bf16.msra.mxu0 0
      %956 = vmatprep.subr.bf16.mxu0 0
      %957 = vmatpush1.bf16.msra.mxu0 0
      %958 = vmatprep.subr.bf16.mxu0 0
      %959 = vmatpush1.bf16.msra.mxu0 0
      %960 = vmatprep.subr.bf16.mxu0 0
      %961 = vmatpush1.bf16.msra.mxu0 0
      %962 = vmatprep.subr.bf16.mxu0 0
      %963 = vmatpush1.bf16.msra.mxu0 0
      %964 = vmatprep.subr.bf16.mxu0 0
      %965 = vmatpush1.bf16.msra.mxu0 0
      %966 = vmatprep.subr.bf16.mxu0 0
      %967 = vmatpush1.bf16.msra.mxu0 0
      %968 = vmatprep.subr.bf16.mxu0 0
      %969 = vmatpush1.bf16.msra.mxu0 0
      %970 = vmatprep.subr.bf16.mxu0 0
      %971 = vmatpush1.bf16.msra.mxu0 0
      %972 = vmatprep.subr.bf16.mxu0 0
      %973 = vmatpush1.bf16.msra.mxu0 0
      %974 = vmatprep.subr.bf16.mxu0 0
      %975 = vmatpush1.bf16.msra.mxu0 0
      %976 = vmatprep.mubr.bf16.mxu0 0
      %977 = vmatmul.mubr.bf16.gmra.mrb[0].mxu0 %v902
      %v978 = vpop.f32.mrb[0].mxu0
      %v979 = vadd.f32 %v939, %v978
      %v980 = vpop.f32.mrb[0].mxu0
      %v981 = vpop.f32.mrb[0].mxu0
      %v982 = vpop.f32.mrb[0].mxu0
      %983 = vdwg.mxu0
      %v984 = vadd.f32 %v718, %v979
      %v985 = vld [vmem:[%s2] sm:$0x1]
      %v987 = vlaneseq
      %v988 = vshrl.u32 %v987, 7
      %v989 = vsub.s32 0, %v988
      %v990 = vrot.slane %v985, %v989
      %v992 = vadd.f32 %v984, %v990
      %v993 = vld [vmem:[%s3] sm:$0xff]
      %v994 = vld [vmem:[%s3 + $0x8] sm:$0xff]
      %v995 = vld [vmem:[%s3 + $0x10] sm:$0xff]
      %v996 = vld [vmem:[%s3 + $0x18] sm:$0xff]
      %v997 = vld [vmem:[%s3 + $0x20] sm:$0xff]
      %v998 = vld [vmem:[%s3 + $0x28] sm:$0xff]
      %v999 = vld [vmem:[%s3 + $0x30] sm:$0xff]
      %v1000 = vld [vmem:[%s3 + $0x38] sm:$0xff]
      %v1001 = vld [vmem:[%s3 + $0x40] sm:$0xff]
      %v1002 = vld [vmem:[%s3 + $0x48] sm:$0xff]
      %v1003 = vld [vmem:[%s3 + $0x50] sm:$0xff]
      %v1004 = vld [vmem:[%s3 + $0x58] sm:$0xff]
      %v1005 = vld [vmem:[%s3 + $0x60] sm:$0xff]
      %v1006 = vld [vmem:[%s3 + $0x68] sm:$0xff]
      %v1007 = vld [vmem:[%s3 + $0x70] sm:$0xff]
      %v1008 = vld [vmem:[%s3 + $0x78] sm:$0xff]
      %1009 = vmatprep.subr.mxu0 0.0
      %1010 = vmatpush1.msra.mxu0 %v993
      %1011 = vmatprep.subr.mxu0 0.0
      %1012 = vmatpush1.msra.mxu0 %v994
      %1013 = vmatprep.subr.mxu0 0.0
      %1014 = vmatpush1.msra.mxu0 %v995
      %1015 = vmatprep.subr.mxu0 0.0
      %1016 = vmatpush1.msra.mxu0 %v996
      %1017 = vmatprep.subr.mxu0 0.0
      %1018 = vmatpush1.msra.mxu0 %v997
      %1019 = vmatprep.subr.mxu0 0.0
      %1020 = vmatpush1.msra.mxu0 %v998
      %1021 = vmatprep.subr.mxu0 0.0
      %1022 = vmatpush1.msra.mxu0 %v999
      %1023 = vmatprep.subr.mxu0 0.0
      %1024 = vmatpush1.msra.mxu0 %v1000
      %1025 = vmatprep.subr.mxu0 0.0
      %1026 = vmatpush1.msra.mxu0 %v1001
      %1027 = vmatprep.subr.mxu0 0.0
      %1028 = vmatpush1.msra.mxu0 %v1002
      %1029 = vmatprep.subr.mxu0 0.0
      %1030 = vmatpush1.msra.mxu0 %v1003
      %1031 = vmatprep.subr.mxu0 0.0
      %1032 = vmatpush1.msra.mxu0 %v1004
      %1033 = vmatprep.subr.mxu0 0.0
      %1034 = vmatpush1.msra.mxu0 %v1005
      %1035 = vmatprep.subr.mxu0 0.0
      %1036 = vmatpush1.msra.mxu0 %v1006
      %1037 = vmatprep.subr.mxu0 0.0
      %1038 = vmatpush1.msra.mxu0 %v1007
      %1039 = vmatprep.subr.mxu0 0.0
      %1040 = vmatpush1.msra.mxu0 %v1008
      %1041 = vmatprep.subr.mxu0 0.0
      %1042 = vmatpush1.msra.mxu0 0.0
      %1043 = vmatprep.subr.mxu0 0.0
      %1044 = vmatpush1.msra.mxu0 0.0
      %1045 = vmatprep.subr.mxu0 0.0
      %1046 = vmatpush1.msra.mxu0 0.0
      %1047 = vmatprep.subr.mxu0 0.0
      %1048 = vmatpush1.msra.mxu0 0.0
      %1049 = vmatprep.subr.mxu0 0.0
      %1050 = vmatpush1.msra.mxu0 0.0
      %1051 = vmatprep.subr.mxu0 0.0
      %1052 = vmatpush1.msra.mxu0 0.0
      %1053 = vmatprep.subr.mxu0 0.0
      %1054 = vmatpush1.msra.mxu0 0.0
      %1055 = vmatprep.subr.mxu0 0.0
      %1056 = vmatpush1.msra.mxu0 0.0
      %1057 = vmatprep.subr.mxu0 0.0
      %1058 = vmatpush1.msra.mxu0 0.0
      %1059 = vmatprep.subr.mxu0 0.0
      %1060 = vmatpush1.msra.mxu0 0.0
      %1061 = vmatprep.subr.mxu0 0.0
      %1062 = vmatpush1.msra.mxu0 0.0
      %1063 = vmatprep.subr.mxu0 0.0
      %1064 = vmatpush1.msra.mxu0 0.0
      %1065 = vmatprep.subr.mxu0 0.0
      %1066 = vmatpush1.msra.mxu0 0.0
      %1067 = vmatprep.subr.mxu0 0.0
      %1068 = vmatpush1.msra.mxu0 0.0
      %1069 = vmatprep.subr.mxu0 0.0
      %1070 = vmatpush1.msra.mxu0 0.0
      %1071 = vmatprep.subr.mxu0 0.0
      %1072 = vmatpush1.msra.mxu0 0.0
      %1073 = vmatprep.mubr.f32.mxu0 0.0
      %1074 = vmatmul.mubr.f32.gmra.mrb[0].mxu0 %v992
      %v1075 = vpop.f32.mrb[0].mxu0
      %v1076 = vadd.f32 0.0, %v1075
      %v1077 = vpop.f32.mrb[0].mxu0
      %1078 = vdwg.mxu0
      %v1079 = vrot.slane %v1076, 4
      %v1080 = vadd.f32 %v1076, %v1079
      %v1081 = vrot.slane %v1080, 2
      %v1082 = vadd.f32 %v1080, %v1081
      %v1083 = vrot.slane %v1082, 1
      %v1084 = vadd.f32 %v1082, %v1083
      %v1085 = vmul.f32 %v992, %v992
      %1086 = vmatprep.subr.mxu0 0.0
      %1087 = vmatpush1.msra.mxu0 %v993
      %1088 = vmatprep.subr.mxu0 0.0
      %1089 = vmatpush1.msra.mxu0 %v994
      %1090 = vmatprep.subr.mxu0 0.0
      %1091 = vmatpush1.msra.mxu0 %v995
      %1092 = vmatprep.subr.mxu0 0.0
      %1093 = vmatpush1.msra.mxu0 %v996
      %1094 = vmatprep.subr.mxu0 0.0
      %1095 = vmatpush1.msra.mxu0 %v997
      %1096 = vmatprep.subr.mxu0 0.0
      %1097 = vmatpush1.msra.mxu0 %v998
      %1098 = vmatprep.subr.mxu0 0.0
      %1099 = vmatpush1.msra.mxu0 %v999
      %1100 = vmatprep.subr.mxu0 0.0
      %1101 = vmatpush1.msra.mxu0 %v1000
      %1102 = vmatprep.subr.mxu0 0.0
      %1103 = vmatpush1.msra.mxu0 %v1001
      %1104 = vmatprep.subr.mxu0 0.0
      %1105 = vmatpush1.msra.mxu0 %v1002
      %1106 = vmatprep.subr.mxu0 0.0
      %1107 = vmatpush1.msra.mxu0 %v1003
      %1108 = vmatprep.subr.mxu0 0.0
      %1109 = vmatpush1.msra.mxu0 %v1004
      %1110 = vmatprep.subr.mxu0 0.0
      %1111 = vmatpush1.msra.mxu0 %v1005
      %1112 = vmatprep.subr.mxu0 0.0
      %1113 = vmatpush1.msra.mxu0 %v1006
      %1114 = vmatprep.subr.mxu0 0.0
      %1115 = vmatpush1.msra.mxu0 %v1007
      %1116 = vmatprep.subr.mxu0 0.0
      %1117 = vmatpush1.msra.mxu0 %v1008
      %1118 = vmatprep.subr.mxu0 0.0
      %1119 = vmatpush1.msra.mxu0 0.0
      %1120 = vmatprep.subr.mxu0 0.0
      %1121 = vmatpush1.msra.mxu0 0.0
      %1122 = vmatprep.subr.mxu0 0.0
      %1123 = vmatpush1.msra.mxu0 0.0
      %1124 = vmatprep.subr.mxu0 0.0
      %1125 = vmatpush1.msra.mxu0 0.0
      %1126 = vmatprep.subr.mxu0 0.0
      %1127 = vmatpush1.msra.mxu0 0.0
      %1128 = vmatprep.subr.mxu0 0.0
      %1129 = vmatpush1.msra.mxu0 0.0
      %1130 = vmatprep.subr.mxu0 0.0
      %1131 = vmatpush1.msra.mxu0 0.0
      %1132 = vmatprep.subr.mxu0 0.0
      %1133 = vmatpush1.msra.mxu0 0.0
      %1134 = vmatprep.subr.mxu0 0.0
      %1135 = vmatpush1.msra.mxu0 0.0
      %1136 = vmatprep.subr.mxu0 0.0
      %1137 = vmatpush1.msra.mxu0 0.0
      %1138 = vmatprep.subr.mxu0 0.0
      %1139 = vmatpush1.msra.mxu0 0.0
      %1140 = vmatprep.subr.mxu0 0.0
      %1141 = vmatpush1.msra.mxu0 0.0
      %1142 = vmatprep.subr.mxu0 0.0
      %1143 = vmatpush1.msra.mxu0 0.0
      %1144 = vmatprep.subr.mxu0 0.0
      %1145 = vmatpush1.msra.mxu0 0.0
      %1146 = vmatprep.subr.mxu0 0.0
      %1147 = vmatpush1.msra.mxu0 0.0
      %1148 = vmatprep.subr.mxu0 0.0
      %1149 = vmatpush1.msra.mxu0 0.0
      %1150 = vmatprep.mubr.f32.mxu0 0.0
      %1151 = vmatmul.mubr.f32.gmra.mrb[0].mxu0 %v1085
      %v1152 = vpop.f32.mrb[0].mxu0
      %v1153 = vadd.f32 0.0, %v1152
      %v1154 = vpop.f32.mrb[0].mxu0
      %1155 = vdwg.mxu0
      %v1156 = vrot.slane %v1153, 4
      %v1157 = vadd.f32 %v1153, %v1156
      %v1158 = vrot.slane %v1157, 2
      %v1159 = vadd.f32 %v1157, %v1158
      %v1160 = vrot.slane %v1159, 1
      %v1161 = vadd.f32 %v1159, %v1160
      %v1162 = vmul.f32 %v1084, %v1084
      %v1163 = vsub.f32 %v1161, %v1162
      %v1164 = vmax.f32 %v1163, 0.0
      %v1165 = vsub.f32 %v992, %v1084
      %v1166 = vadd.f32 %v1164, 1e-05
      %v1167 = vrsqrt.pop %v1166
      %v1168 = vmul.f32 %v1165, %v1167
      %v1169 = vmax.f32 %v1168, 0.0
      %1170 = vst [vmem:[%s195] sm:$0xff] %v1169
      %p1171 = scmp.lt.s32.totalorder %s15, 1
      %s1172 = scalar_select %p1171, %s15, 1
      %s1173 = smul.addr %s1172, 8
      %s1174 = scalar_lea.vmem %s4, %s1173
      // Predicated region
      $region37: #{generator_forward.11} parent=35 // pred_check
        %p1175 = pneg %p122
      $region38: #{generator_forward.11} parent=35 // pred_check_branch
        %1177 = sbr.rel (%p1175) target = $region40
      $region39: #{generator_forward.11} parent=35 // pred_region
        _
      $region40: #{generator_forward.11} parent=35 // pred_fallthru
        _
    $region36: #{generator_forward.11} parent=5 // pred_fallthru
      _
    %p1178 = scmp.le.s32.totalorder 2, %s10
    // Predicated region
    $region41: #{generator_forward.11} parent=5 // pred_check
      %p1179 = pneg %p1178
    $region42: #{generator_forward.11} parent=5 // pred_check_branch
      %1181 = sbr.rel (%p1179) target = $region44
    $region43: #{generator_forward.11} parent=5 // pred_region
      %s1182 = ssub.s32 %s10, 2
      // Predicated region
      $region45: #{generator_forward.11} parent=43 // pred_check
        %p1183 = pneg %p128
      $region46: #{generator_forward.11} parent=43 // pred_check_branch
        %1185 = sbr.rel (%p1183) target = $region48
      $region47: #{generator_forward.11} parent=43 // pred_region
        %p1186 = scmp.lt.s32.totalorder %s16, 1
        %s1187 = scalar_select %p1186, %s16, 1
        %s1188 = smul.addr %s1187, 8
        %s1189 = scalar_lea.vmem %s4, %s1188
      $region48: #{generator_forward.11} parent=43 // pred_fallthru
        _
    $region44: #{generator_forward.11} parent=5 // pred_fallthru
      _
  $region6: #{generator_forward.11} parent=0 // loop_footer
    %s14 = sadd.s32 1, %s10
  $region7: #{generator_forward.11} parent=0 // loop_footer_branch
    %9 = sbr.rel target = $region3
  $region8: #{generator_forward.11} parent=0 // loop_exit
    _

// kernel: generator_forward.12
$region0: #{generator_forward.12}
  #allocation0 [shape = 'u32[]', space=smem, size = 0x4, offset = 0x4, fixed_abs, tag = 'smem constant byte address 0x4 - core index']
  #allocation1 [shape = 'u32[144,128]{1,0:T(1,128)}', space=vmem, size = 0x12000, scoped, tag = 'internal scratch']
  %s0 = inlined_call_operand.vmem [shape: f32[2,1,18,288], index: 0, kind: input, shape index: {}]
  %s1 = inlined_call_operand.vmem [shape: bf16[3,288,128], index: 1, kind: input, shape index: {}]
  %s2 = inlined_call_operand.vmem [shape: f32[1,128], index: 2, kind: input, shape index: {}]
  %s3 = inlined_call_operand.vmem [shape: f32[128,128], index: 3, kind: input, shape index: {}]
  %s4 = inlined_call_operand.vmem [shape: f32[2,16,128], index: 4, kind: output, shape index: {}]
  %s5 = sld [smem:[#allocation0]]
  $region49: #{generator_forward.12} parent=0
    _
  %s7 = ssub.s32 1, %s5
  %s8 = scalar_select 0, %s7, %s5
  loop: start=0, step=1, limit=4
  $region2: #{generator_forward.12} parent=0 // loop_pre_header
    _
  $region3: #{generator_forward.12} parent=0 // loop_header
    %s10 = sphi 0, %s14
    %p11 = scmp.ge.s32.totalorder %s10, 4
    %s20 = sphi 0, %s22
    %s23 = sphi 0, %s20
    %s24 = sphi 0, %s23
    %s40 = sphi 0, %s24
    %s44 = sphi 0, %s44
    %s46 = sphi 0, %s44
    %s47 = sphi 0, %s46
    %s61 = sphi 0, %s47
    %s65 = sphi 0, %s65
    %s67 = sphi 0, %s65
    %s68 = sphi 0, %s67
    %s82 = sphi 0, %s68
    %s86 = sphi 0, %s86
    %s88 = sphi 0, %s86
    %s89 = sphi 0, %s88
    %s103 = sphi 0, %s89
    %s109 = sphi 0, %s111
    %s112 = sphi 0, %s109
    %s113 = sphi 0, %s112
    %s129 = sphi 0, %s113
  $region4: #{generator_forward.12} parent=0 // loop_header_branch
    %13 = sbr.rel (%p11) target = $region8
  $region5: #{generator_forward.12} parent=0 // loop_body
    %s15 = ssub.s32 %s10, 1
    %s16 = ssub.s32 %s10, 2
    %s17 = sadd.s32 %s10, 1
    %s18 = ssub.s32 %s10, %s17
    %p19 = scmp.eq.s32.totalorder %s18, 0
    %s21 = sadd.s32 %s20, 1
    %s22 = scalar_select %p19, %s20, %s21
    %p25 = pneg %p19
    %p26 = scmp.eq.s32.totalorder %s10, 1
    %p27 = por %p25, %p26
    %p28 = scmp.ne.s32.totalorder %s20, %s23
    %p29 = scmp.eq.s32.totalorder %s10, 0
    %p30 = por %p28, %p29
    %p31 = scmp.ne.s32.totalorder %s20, %s23
    %p32 = scmp.eq.s32.totalorder %s15, 1
    %p33 = por %p31, %p32
    %p34 = scmp.ne.s32.totalorder %s23, %s24
    %p35 = scmp.eq.s32.totalorder %s15, 0
    %p36 = por %p34, %p35
    %p37 = scmp.ne.s32.totalorder %s23, %s24
    %p38 = scmp.eq.s32.totalorder %s16, 1
    %p39 = por %p37, %p38
    %p41 = scmp.ne.s32.totalorder %s24, %s40
    %p42 = scmp.eq.s32.totalorder %s16, 0
    %p43 = por %p41, %p42
    %s45 = sadd.s32 %s44, 1
    %p48 = scmp.eq.s32.totalorder %s10, 1
    %p49 = scmp.ne.s32.totalorder %s44, %s46
    %p50 = scmp.eq.s32.totalorder %s10, 0
    %p51 = por %p49, %p50
    %p52 = scmp.ne.s32.totalorder %s44, %s46
    %p53 = scmp.eq.s32.totalorder %s15, 1
    %p54 = por %p52, %p53
    %p55 = scmp.ne.s32.totalorder %s46, %s47
    %p56 = scmp.eq.s32.totalorder %s15, 0
    %p57 = por %p55, %p56
    %p58 = scmp.ne.s32.totalorder %s46, %s47
    %p59 = scmp.eq.s32.totalorder %s16, 1
    %p60 = por %p58, %p59
    %p62 = scmp.ne.s32.totalorder %s47, %s61
    %p63 = scmp.eq.s32.totalorder %s16, 0
    %p64 = por %p62, %p63
    %s66 = sadd.s32 %s65, 1
    %p69 = scmp.eq.s32.totalorder %s10, 1
    %p70 = scmp.ne.s32.totalorder %s65, %s67
    %p71 = scmp.eq.s32.totalorder %s10, 0
    %p72 = por %p70, %p71
    %p73 = scmp.ne.s32.totalorder %s65, %s67
    %p74 = scmp.eq.s32.totalorder %s15, 1
    %p75 = por %p73, %p74
    %p76 = scmp.ne.s32.totalorder %s67, %s68
    %p77 = scmp.eq.s32.totalorder %s15, 0
    %p78 = por %p76, %p77
    %p79 = scmp.ne.s32.totalorder %s67, %s68
    %p80 = scmp.eq.s32.totalorder %s16, 1
    %p81 = por %p79, %p80
    %p83 = scmp.ne.s32.totalorder %s68, %s82
    %p84 = scmp.eq.s32.totalorder %s16, 0
    %p85 = por %p83, %p84
    %s87 = sadd.s32 %s86, 1
    %p90 = scmp.eq.s32.totalorder %s10, 1
    %p91 = scmp.ne.s32.totalorder %s86, %s88
    %p92 = scmp.eq.s32.totalorder %s10, 0
    %p93 = por %p91, %p92
    %p94 = scmp.ne.s32.totalorder %s86, %s88
    %p95 = scmp.eq.s32.totalorder %s15, 1
    %p96 = por %p94, %p95
    %p97 = scmp.ne.s32.totalorder %s88, %s89
    %p98 = scmp.eq.s32.totalorder %s15, 0
    %p99 = por %p97, %p98
    %p100 = scmp.ne.s32.totalorder %s88, %s89
    %p101 = scmp.eq.s32.totalorder %s16, 1
    %p102 = por %p100, %p101
    %p104 = scmp.ne.s32.totalorder %s89, %s103
    %p105 = scmp.eq.s32.totalorder %s16, 0
    %p106 = por %p104, %p105
    %s107 = ssub.s32 %s10, %s17
    %p108 = scmp.eq.s32.totalorder %s107, 0
    %s110 = sadd.s32 %s109, 1
    %s111 = scalar_select %p108, %s109, %s110
    %p114 = pneg %p108
    %p115 = scmp.eq.s32.totalorder %s10, 1
    %p116 = por %p114, %p115
    %p117 = scmp.ne.s32.totalorder %s109, %s112
    %p118 = scmp.eq.s32.totalorder %s10, 0
    %p119 = por %p117, %p118
    %p120 = scmp.ne.s32.totalorder %s109, %s112
    %p121 = scmp.eq.s32.totalorder %s15, 1
    %p122 = por %p120, %p121
    %p123 = scmp.ne.s32.totalorder %s112, %s113
    %p124 = scmp.eq.s32.totalorder %s15, 0
    %p125 = por %p123, %p124
    %p126 = scmp.ne.s32.totalorder %s112, %s113
    %p127 = scmp.eq.s32.totalorder %s16, 1
    %p128 = por %p126, %p127
    %p130 = scmp.ne.s32.totalorder %s113, %s129
    %p131 = scmp.eq.s32.totalorder %s16, 0
    %p132 = por %p130, %p131
    %p133 = scmp.le.s32.totalorder 1, %s10
    %p134 = scmp.lt.s32.totalorder %s10, 3
    %p135 = pnand %p133, %p134
    %p136 = pneg %p135
    // Predicated region
    $region9: #{generator_forward.12} parent=5 // pred_check
      _
    $region10: #{generator_forward.12} parent=5 // pred_check_branch
      %138 = sbr.rel (%p135) target = $region12
    $region11: #{generator_forward.12} parent=5 // pred_region
      %s139 = ssub.s32 %s10, 1
      // Predicated region
      $region13: #{generator_forward.12} parent=11 // pred_check
        %p140 = pneg %p57
      $region14: #{generator_forward.12} parent=11 // pred_check_branch
        %142 = sbr.rel (%p140) target = $region16
      $region15: #{generator_forward.12} parent=11 // pred_region
        _
      $region16: #{generator_forward.12} parent=11 // pred_fallthru
        _
      // Predicated region
      $region17: #{generator_forward.12} parent=11 // pred_check
        %p143 = pneg %p78
      $region18: #{generator_forward.12} parent=11 // pred_check_branch
        %145 = sbr.rel (%p143) target = $region20
      $region19: #{generator_forward.12} parent=11 // pred_region
        _
      $region20: #{generator_forward.12} parent=11 // pred_fallthru
        _
      // Predicated region
      $region21: #{generator_forward.12} parent=11 // pred_check
        %p146 = pneg %p99
      $region22: #{generator_forward.12} parent=11 // pred_check_branch
        %148 = sbr.rel (%p146) target = $region24
      $region23: #{generator_forward.12} parent=11 // pred_region
        _
      $region24: #{generator_forward.12} parent=11 // pred_fallthru
        _
    $region12: #{generator_forward.12} parent=5 // pred_fallthru
      _
    %p149 = scmp.lt.s32.totalorder %s10, 2
    // Predicated region
    $region25: #{generator_forward.12} parent=5 // pred_check
      %p150 = pneg %p149
    $region26: #{generator_forward.12} parent=5 // pred_check_branch
      %152 = sbr.rel (%p150) target = $region28
    $region27: #{generator_forward.12} parent=5 // pred_region
      // Predicated region
      $region29: #{generator_forward.12} parent=27 // pred_check
        %p153 = pneg %p30
      $region30: #{generator_forward.12} parent=27 // pred_check_branch
        %155 = sbr.rel (%p153) target = $region32
      $region31: #{generator_forward.12} parent=27 // pred_region
        %p156 = scmp.lt.s32.totalorder %s10, 1
        %s157 = scalar_select %p156, %s10, 1
        %s158 = smul.addr %s157, 9
        %s159 = smul.addr %s158, 8
        %s160 = scalar_lea.vmem %s0, %s159
      $region32: #{generator_forward.12} parent=27 // pred_fallthru
        _
    $region28: #{generator_forward.12} parent=5 // pred_fallthru
      _
    %p161 = scmp.le.s32.totalorder 1, %s10
    %p162 = scmp.lt.s32.totalorder %s10, 3
    %p163 = pnand %p161, %p162
    %p164 = pneg %p163
    // Predicated region
    $region33: #{generator_forward.12} parent=5 // pred_check
      _
    $region34: #{generator_forward.12} parent=5 // pred_check_branch
      %166 = sbr.rel (%p163) target = $region36
    $region35: #{generator_forward.12} parent=5 // pred_region
      %s167 = ssub.s32 %s10, 1
      %p168 = scmp.lt.s32.totalorder %s15, 1
      %s169 = scalar_select %p168, %s15, 1
      %s170 = smul.addr %s169, 9
      %s171 = smul.addr %s170, 8
      %s172 = scalar_lea.vmem %s0, %s171
      %p173 = pneg %p36
      %p174 = pneg %p33
      %p175 = pneg %p57
      %p176 = pneg %p54
      %p177 = pneg %p78
      %p178 = pneg %p75
      %p179 = pneg %p99
      %p180 = pneg %p96
      %p181 = pneg %p125
      %p182 = pneg %p122
      %p183 = scmp.lt.s32.totalorder %s15, 1
      %s184 = scalar_select %p183, %s15, 1
      %s185 = smul.addr %s184, 2
      %s186 = smul.addr %s185, 8
      %s187 = scalar_lea.vmem %s4, %s186
      %p188 = scmp.lt.s32.totalorder %s15, 1
      %s189 = scalar_select %p188, %s15, 1
      %s190 = smul.addr %s189, 9
      %s191 = smul.addr %s190, 8
      %s192 = scalar_lea.vmem %s0, %s191
      %p193 = scmp.lt.s32.totalorder %s15, 1
      %s194 = scalar_select %p193, %s15, 1
      %s195 = smul.addr %s194, 2
      %s196 = smul.addr %s195, 8
      %s197 = scalar_lea.vmem %s4, %s196
      %v199 = vld [vmem:[%s192] sm:$0xff]
      %v200 = vld [vmem:[%s192 + $0x8] sm:$0xff]
      %v201 = vld [vmem:[%s192 + $0x10] sm:$0xff]
      %v202 = vld [vmem:[%s192 + $0x18] sm:$0xff]
      %v203 = vld [vmem:[%s192 + $0x20] sm:$0xff]
      %v204 = vld [vmem:[%s192 + $0x28] sm:$0xff]
      %v205 = vpack.c.bf16 %v202, %v199
      %v206 = vpack.c.bf16 %v203, %v200
      %v207 = vpack.c.bf16 %v204, %v201
      %v208 = vld [vmem:[%s1] sm:$0xf]
      %v209 = vld [vmem:[%s1 + $0x4] sm:$0xf]
      %v210 = vld [vmem:[%s1 + $0x8] sm:$0xf]
      %v211 = vld [vmem:[%s1 + $0xc] sm:$0xf]
      %v212 = vld [vmem:[%s1 + $0x10] sm:$0xf]
      %v213 = vld [vmem:[%s1 + $0x14] sm:$0xf]
      %v214 = vld [vmem:[%s1 + $0x18] sm:$0xf]
      %v215 = vld [vmem:[%s1 + $0x1c] sm:$0xf]
      %v216 = vld [vmem:[%s1 + $0x20] sm:$0xf]
      %v217 = vld [vmem:[%s1 + $0x24] sm:$0xf]
      %v218 = vld [vmem:[%s1 + $0x28] sm:$0xf]
      %v219 = vld [vmem:[%s1 + $0x2c] sm:$0xf]
      %v220 = vld [vmem:[%s1 + $0x30] sm:$0xf]
      %v221 = vld [vmem:[%s1 + $0x34] sm:$0xf]
      %v222 = vld [vmem:[%s1 + $0x38] sm:$0xf]
      %v223 = vld [vmem:[%s1 + $0x3c] sm:$0xf]
      %v224 = vld [vmem:[%s1 + $0x40] sm:$0xf]
      %v225 = vld [vmem:[%s1 + $0x44] sm:$0xf]
      %v226 = vld [vmem:[%s1 + $0x48] sm:$0xf]
      %v227 = vld [vmem:[%s1 + $0x4c] sm:$0xf]
      %v228 = vld [vmem:[%s1 + $0x50] sm:$0xf]
      %v229 = vld [vmem:[%s1 + $0x54] sm:$0xf]
      %v230 = vld [vmem:[%s1 + $0x58] sm:$0xf]
      %v231 = vld [vmem:[%s1 + $0x5c] sm:$0xf]
      %v232 = vld [vmem:[%s1 + $0x60] sm:$0xf]
      %v233 = vld [vmem:[%s1 + $0x64] sm:$0xf]
      %v234 = vld [vmem:[%s1 + $0x68] sm:$0xf]
      %v235 = vld [vmem:[%s1 + $0x6c] sm:$0xf]
      %v236 = vld [vmem:[%s1 + $0x70] sm:$0xf]
      %v237 = vld [vmem:[%s1 + $0x74] sm:$0xf]
      %v238 = vld [vmem:[%s1 + $0x78] sm:$0xf]
      %v239 = vld [vmem:[%s1 + $0x7c] sm:$0xf]
      %v240 = vld [vmem:[%s1 + $0x80] sm:$0xf]
      %v241 = vld [vmem:[%s1 + $0x84] sm:$0xf]
      %v242 = vld [vmem:[%s1 + $0x88] sm:$0xf]
      %v243 = vld [vmem:[%s1 + $0x8c] sm:$0xf]
      %v244 = vld [vmem:[%s192] sm:$0xfe]
      %v245 = vld [vmem:[%s192 + $0x8] sm:$0xfe]
      %v246 = vld [vmem:[%s192 + $0x10] sm:$0xfe]
      %v247 = vld [vmem:[%s192 + $0x30] sm:$0x1]
      %v248 = vld [vmem:[%s192 + $0x38] sm:$0x1]
      %v249 = vld [vmem:[%s192 + $0x40] sm:$0x1]
      %v250 = vpack.c.bf16 %v202, %v244
      %v251 = vpack.c.bf16 %v203, %v245
      %v252 = vpack.c.bf16 %v204, %v246
      %v253 = vpack.c.bf16 %v247, %v247
      %v254 = vpack.c.bf16 %v248, %v248
      %v255 = vpack.c.bf16 %v249, %v249
      %s256 = scalar_lea.vmem %s1, 144
      %v257 = vld [vmem:[%s256] sm:$0xf]
      %v258 = vld [vmem:[%s256 + $0x4] sm:$0xf]
      %v259 = vld [vmem:[%s256 + $0x8] sm:$0xf]
      %v260 = vld [vmem:[%s256 + $0xc] sm:$0xf]
      %v261 = vld [vmem:[%s256 + $0x10] sm:$0xf]
      %v262 = vld [vmem:[%s256 + $0x14] sm:$0xf]
      %v263 = vld [vmem:[%s256 + $0x18] sm:$0xf]
      %v264 = vld [vmem:[%s256 + $0x1c] sm:$0xf]
      %v265 = vld [vmem:[%s256 + $0x20] sm:$0xf]
      %v266 = vld [vmem:[%s256 + $0x24] sm:$0xf]
      %v267 = vld [vmem:[%s256 + $0x28] sm:$0xf]
      %v268 = vld [vmem:[%s256 + $0x2c] sm:$0xf]
      %v269 = vld [vmem:[%s256 + $0x30] sm:$0xf]
      %v270 = vld [vmem:[%s256 + $0x34] sm:$0xf]
      %v271 = vld [vmem:[%s256 + $0x38] sm:$0xf]
      %v272 = vld [vmem:[%s256 + $0x3c] sm:$0xf]
      %v273 = vld [vmem:[%s256 + $0x40] sm:$0xf]
      %v274 = vld [vmem:[%s256 + $0x44] sm:$0xf]
      %v275 = vld [vmem:[%s256 + $0x48] sm:$0xf]
      %v276 = vld [vmem:[%s256 + $0x4c] sm:$0xf]
      %v277 = vld [vmem:[%s256 + $0x50] sm:$0xf]
      %v278 = vld [vmem:[%s256 + $0x54] sm:$0xf]
      %v279 = vld [vmem:[%s256 + $0x58] sm:$0xf]
      %v280 = vld [vmem:[%s256 + $0x5c] sm:$0xf]
      %v281 = vld [vmem:[%s256 + $0x60] sm:$0xf]
      %v282 = vld [vmem:[%s256 + $0x64] sm:$0xf]
      %v283 = vld [vmem:[%s256 + $0x68] sm:$0xf]
      %v284 = vld [vmem:[%s256 + $0x6c] sm:$0xf]
      %v285 = vld [vmem:[%s256 + $0x70] sm:$0xf]
      %v286 = vld [vmem:[%s256 + $0x74] sm:$0xf]
      %v287 = vld [vmem:[%s256 + $0x78] sm:$0xf]
      %v288 = vld [vmem:[%s256 + $0x7c] sm:$0xf]
      %v289 = vld [vmem:[%s256 + $0x80] sm:$0xf]
      %v290 = vld [vmem:[%s256 + $0x84] sm:$0xf]
      %v291 = vld [vmem:[%s256 + $0x88] sm:$0xf]
      %v292 = vld [vmem:[%s256 + $0x8c] sm:$0xf]
      %vm293 = vsmask.f32 7424
      %v295 = vshrl.u32 %v250, 16
      %v297 = vshll.u32 %v250, 16
      %v299 = vrot.slane %v297, 1
      %v300 = vor.u32 %v295, %v299
      %v302 = vshll.u32 %v253, 16
      %v304 = vrot.slane %v302, 1
      %v305 = vsel %vm293, %v300, %v304
      %v307 = vshrl.u32 %v251, 16
      %v309 = vshll.u32 %v251, 16
      %v311 = vrot.slane %v309, 1
      %v312 = vor.u32 %v307, %v311
      %v314 = vshll.u32 %v254, 16
      %v316 = vrot.slane %v314, 1
      %v317 = vsel %vm293, %v312, %v316
      %v319 = vshrl.u32 %v252, 16
      %v321 = vshll.u32 %v252, 16
      %v323 = vrot.slane %v321, 1
      %v324 = vor.u32 %v319, %v323
      %v326 = vshll.u32 %v255, 16
      %v328 = vrot.slane %v326, 1
      %v329 = vsel %vm293, %v324, %v328
      %v368 = vunpack.c.l.b16 %v257
      %v369 = vunpack.c.l.b16 %v258
      %v370 = vunpack.c.l.b16 %v259
      %v371 = vunpack.c.l.b16 %v260
      %v372 = vunpack.c.l.b16 %v261
      %v373 = vunpack.c.l.b16 %v262
      %v374 = vunpack.c.l.b16 %v263
      %v375 = vunpack.c.l.b16 %v264
      %v376 = vunpack.c.l.b16 %v265
      %v377 = vunpack.c.l.b16 %v266
      %v378 = vunpack.c.l.b16 %v267
      %v379 = vunpack.c.l.b16 %v268
      %v380 = vunpack.c.l.b16 %v269
      %v381 = vunpack.c.l.b16 %v270
      %v382 = vunpack.c.l.b16 %v271
      %v383 = vunpack.c.l.b16 %v272
      %v384 = vunpack.c.l.b16 %v273
      %v385 = vunpack.c.l.b16 %v274
      %v386 = vunpack.c.l.b16 %v275
      %v387 = vunpack.c.l.b16 %v276
      %v388 = vunpack.c.l.b16 %v277
      %v389 = vunpack.c.l.b16 %v278
      %v390 = vunpack.c.l.b16 %v279
      %v391 = vunpack.c.l.b16 %v280
      %v392 = vunpack.c.l.b16 %v281
      %v393 = vunpack.c.l.b16 %v282
      %v394 = vunpack.c.l.b16 %v283
      %v395 = vunpack.c.l.b16 %v284
      %v396 = vunpack.c.l.b16 %v285
      %v397 = vunpack.c.l.b16 %v286
      %v398 = vunpack.c.l.b16 %v287
      %v399 = vunpack.c.l.b16 %v288
      %v400 = vunpack.c.l.b16 %v289
      %v401 = vunpack.c.l.b16 %v290
      %v402 = vunpack.c.l.b16 %v291
      %v403 = vunpack.c.l.b16 %v292
      %v404 = vpack.c.b16 %v369, %v368
      %v405 = vpack.c.b16 %v371, %v370
      %v406 = vpack.c.b16 %v373, %v372
      %v407 = vpack.c.b16 %v375, %v374
      %v408 = vpack.c.b16 %v377, %v376
      %v409 = vpack.c.b16 %v379, %v378
      %v410 = vpack.c.b16 %v381, %v380
      %v411 = vpack.c.b16 %v383, %v382
      %v412 = vpack.c.b16 %v385, %v384
      %v413 = vpack.c.b16 %v387, %v386
      %v414 = vpack.c.b16 %v389, %v388
      %v415 = vpack.c.b16 %v391, %v390
      %v416 = vpack.c.b16 %v393, %v392
      %v417 = vpack.c.b16 %v395, %v394
      %v418 = vpack.c.b16 %v397, %v396
      %v419 = vpack.c.b16 %v399, %v398
      %v420 = vpack.c.b16 %v401, %v400
      %v421 = vpack.c.b16 %v403, %v402
      %vm440 = vcmask 261120
      %v442 = vsel %vm440, %v329, 0
      %444 = vmatprep.subr.bf16.mxu0 0
      %445 = vmatpush1.bf16.msra.mxu0 %v404
      %446 = vmatprep.subr.bf16.mxu0 0
      %447 = vmatpush1.bf16.msra.mxu0 %v405
      %448 = vmatprep.subr.bf16.mxu0 0
      %449 = vmatpush1.bf16.msra.mxu0 %v406
      %450 = vmatprep.subr.bf16.mxu0 0
      %451 = vmatpush1.bf16.msra.mxu0 %v407
      %452 = vmatprep.subr.bf16.mxu0 0
      %453 = vmatpush1.bf16.msra.mxu0 %v408
      %454 = vmatprep.subr.bf16.mxu0 0
      %455 = vmatpush1.bf16.msra.mxu0 %v409
      %456 = vmatprep.subr.bf16.mxu0 0
      %457 = vmatpush1.bf16.msra.mxu0 %v410
      %458 = vmatprep.subr.bf16.mxu0 0
      %459 = vmatpush1.bf16.msra.mxu0 %v411
      %460 = vmatprep.subr.bf16.mxu0 0
      %461 = vmatpush1.bf16.msra.mxu0 %v412
      %462 = vmatprep.subr.bf16.mxu0 0
      %463 = vmatpush1.bf16.msra.mxu0 %v413
      %464 = vmatprep.subr.bf16.mxu0 0
      %465 = vmatpush1.bf16.msra.mxu0 %v414
      %466 = vmatprep.subr.bf16.mxu0 0
      %467 = vmatpush1.bf16.msra.mxu0 %v415
      %468 = vmatprep.subr.bf16.mxu0 0
      %469 = vmatpush1.bf16.msra.mxu0 %v416
      %470 = vmatprep.subr.bf16.mxu0 0
      %471 = vmatpush1.bf16.msra.mxu0 %v417
      %472 = vmatprep.subr.bf16.mxu0 0
      %473 = vmatpush1.bf16.msra.mxu0 %v418
      %474 = vmatprep.subr.bf16.mxu0 0
      %475 = vmatpush1.bf16.msra.mxu0 %v419
      %476 = vmatprep.mubr.bf16.mxu0 %v317
      %477 = vmatmul.mubr.bf16.gmra.mrb[0].mxu0 %v305
      %v478 = vpop.f32.mrb[0].mxu0
      %v479 = vadd.f32 0.0, %v478
      %v480 = vpop.f32.mrb[0].mxu0
      %v481 = vpop.f32.mrb[0].mxu0
      %v482 = vadd.f32 0.0, %v481
      %v483 = vpop.f32.mrb[0].mxu0
      %484 = vdwg.mxu0
      %485 = vmatprep.subr.bf16.mxu0 0
      %486 = vmatpush1.bf16.msra.mxu0 %v420
      %487 = vmatprep.subr.bf16.mxu0 0
      %488 = vmatpush1.bf16.msra.mxu0 %v421
      %489 = vmatprep.subr.bf16.mxu0 0
      %490 = vmatpush1.bf16.msra.mxu0 0
      %491 = vmatprep.subr.bf16.mxu0 0
      %492 = vmatpush1.bf16.msra.mxu0 0
      %493 = vmatprep.subr.bf16.mxu0 0
      %494 = vmatpush1.bf16.msra.mxu0 0
      %495 = vmatprep.subr.bf16.mxu0 0
      %496 = vmatpush1.bf16.msra.mxu0 0
      %497 = vmatprep.subr.bf16.mxu0 0
      %498 = vmatpush1.bf16.msra.mxu0 0
      %499 = vmatprep.subr.bf16.mxu0 0
      %500 = vmatpush1.bf16.msra.mxu0 0
      %501 = vmatprep.subr.bf16.mxu0 0
      %502 = vmatpush1.bf16.msra.mxu0 0
      %503 = vmatprep.subr.bf16.mxu0 0
      %504 = vmatpush1.bf16.msra.mxu0 0
      %505 = vmatprep.subr.bf16.mxu0 0
      %506 = vmatpush1.bf16.msra.mxu0 0
      %507 = vmatprep.subr.bf16.mxu0 0
      %508 = vmatpush1.bf16.msra.mxu0 0
      %509 = vmatprep.subr.bf16.mxu0 0
      %510 = vmatpush1.bf16.msra.mxu0 0
      %511 = vmatprep.subr.bf16.mxu0 0
      %512 = vmatpush1.bf16.msra.mxu0 0
      %513 = vmatprep.subr.bf16.mxu0 0
      %514 = vmatpush1.bf16.msra.mxu0 0
      %515 = vmatprep.subr.bf16.mxu0 0
      %516 = vmatpush1.bf16.msra.mxu0 0
      %517 = vmatprep.mubr.bf16.mxu0 0
      %518 = vmatmul.mubr.bf16.gmra.mrb[0].mxu0 %v442
      %v519 = vpop.f32.mrb[0].mxu0
      %v520 = vadd.f32 %v479, %v519
      %v521 = vpop.f32.mrb[0].mxu0
      %v522 = vpop.f32.mrb[0].mxu0
      %v523 = vadd.f32 %v482, %v522
      %v524 = vpop.f32.mrb[0].mxu0
      %525 = vdwg.mxu0
      %v562 = vunpack.c.l.b16 %v208
      %v563 = vunpack.c.l.b16 %v209
      %v564 = vunpack.c.l.b16 %v210
      %v565 = vunpack.c.l.b16 %v211
      %v566 = vunpack.c.l.b16 %v212
      %v567 = vunpack.c.l.b16 %v213
      %v568 = vunpack.c.l.b16 %v214
      %v569 = vunpack.c.l.b16 %v215
      %v570 = vunpack.c.l.b16 %v216
      %v571 = vunpack.c.l.b16 %v217
      %v572 = vunpack.c.l.b16 %v218
      %v573 = vunpack.c.l.b16 %v219
      %v574 = vunpack.c.l.b16 %v220
      %v575 = vunpack.c.l.b16 %v221
      %v576 = vunpack.c.l.b16 %v222
      %v577 = vunpack.c.l.b16 %v223
      %v578 = vunpack.c.l.b16 %v224
      %v579 = vunpack.c.l.b16 %v225
      %v580 = vunpack.c.l.b16 %v226
      %v581 = vunpack.c.l.b16 %v227
      %v582 = vunpack.c.l.b16 %v228
      %v583 = vunpack.c.l.b16 %v229
      %v584 = vunpack.c.l.b16 %v230
      %v585 = vunpack.c.l.b16 %v231
      %v586 = vunpack.c.l.b16 %v232
      %v587 = vunpack.c.l.b16 %v233
      %v588 = vunpack.c.l.b16 %v234
      %v589 = vunpack.c.l.b16 %v235
      %v590 = vunpack.c.l.b16 %v236
      %v591 = vunpack.c.l.b16 %v237
      %v592 = vunpack.c.l.b16 %v238
      %v593 = vunpack.c.l.b16 %v239
      %v594 = vunpack.c.l.b16 %v240
      %v595 = vunpack.c.l.b16 %v241
      %v596 = vunpack.c.l.b16 %v242
      %v597 = vunpack.c.l.b16 %v243
      %v598 = vpack.c.b16 %v563, %v562
      %v599 = vpack.c.b16 %v565, %v564
      %v600 = vpack.c.b16 %v567, %v566
      %v601 = vpack.c.b16 %v569, %v568
      %v602 = vpack.c.b16 %v571, %v570
      %v603 = vpack.c.b16 %v573, %v572
      %v604 = vpack.c.b16 %v575, %v574
      %v605 = vpack.c.b16 %v577, %v576
      %v606 = vpack.c.b16 %v579, %v578
      %v607 = vpack.c.b16 %v581, %v580
      %v608 = vpack.c.b16 %v583, %v582
      %v609 = vpack.c.b16 %v585, %v584
      %v610 = vpack.c.b16 %v587, %v586
      %v611 = vpack.c.b16 %v589, %v588
      %v612 = vpack.c.b16 %v591, %v590
      %v613 = vpack.c.b16 %v593, %v592
      %v614 = vpack.c.b16 %v595, %v594
      %v615 = vpack.c.b16 %v597, %v596
      %v635 = vsel %vm440, %v207, 0
      %637 = vmatprep.subr.bf16.mxu0 0
      %638 = vmatpush1.bf16.msra.mxu0 %v598
      %639 = vmatprep.subr.bf16.mxu0 0
      %640 = vmatpush1.bf16.msra.mxu0 %v599
      %641 = vmatprep.subr.bf16.mxu0 0
      %642 = vmatpush1.bf16.msra.mxu0 %v600
      %643 = vmatprep.subr.bf16.mxu0 0
      %644 = vmatpush1.bf16.msra.mxu0 %v601
      %645 = vmatprep.subr.bf16.mxu0 0
      %646 = vmatpush1.bf16.msra.mxu0 %v602
      %647 = vmatprep.subr.bf16.mxu0 0
      %648 = vmatpush1.bf16.msra.mxu0 %v603
      %649 = vmatprep.subr.bf16.mxu0 0
      %650 = vmatpush1.bf16.msra.mxu0 %v604
      %651 = vmatprep.subr.bf16.mxu0 0
      %652 = vmatpush1.bf16.msra.mxu0 %v605
      %653 = vmatprep.subr.bf16.mxu0 0
      %654 = vmatpush1.bf16.msra.mxu0 %v606
      %655 = vmatprep.subr.bf16.mxu0 0
      %656 = vmatpush1.bf16.msra.mxu0 %v607
      %657 = vmatprep.subr.bf16.mxu0 0
      %658 = vmatpush1.bf16.msra.mxu0 %v608
      %659 = vmatprep.subr.bf16.mxu0 0
      %660 = vmatpush1.bf16.msra.mxu0 %v609
      %661 = vmatprep.subr.bf16.mxu0 0
      %662 = vmatpush1.bf16.msra.mxu0 %v610
      %663 = vmatprep.subr.bf16.mxu0 0
      %664 = vmatpush1.bf16.msra.mxu0 %v611
      %665 = vmatprep.subr.bf16.mxu0 0
      %666 = vmatpush1.bf16.msra.mxu0 %v612
      %667 = vmatprep.subr.bf16.mxu0 0
      %668 = vmatpush1.bf16.msra.mxu0 %v613
      %669 = vmatprep.mubr.bf16.mxu0 %v206
      %670 = vmatmul.mubr.bf16.gmra.mrb[0].mxu0 %v205
      %v671 = vpop.f32.mrb[0].mxu0
      %v672 = vadd.f32 %v520, %v671
      %v673 = vpop.f32.mrb[0].mxu0
      %v674 = vpop.f32.mrb[0].mxu0
      %v675 = vadd.f32 %v523, %v674
      %v676 = vpop.f32.mrb[0].mxu0
      %677 = vdwg.mxu0
      %678 = vmatprep.subr.bf16.mxu0 0
      %679 = vmatpush1.bf16.msra.mxu0 %v614
      %680 = vmatprep.subr.bf16.mxu0 0
      %681 = vmatpush1.bf16.msra.mxu0 %v615
      %682 = vmatprep.subr.bf16.mxu0 0
      %683 = vmatpush1.bf16.msra.mxu0 0
      %684 = vmatprep.subr.bf16.mxu0 0
      %685 = vmatpush1.bf16.msra.mxu0 0
      %686 = vmatprep.subr.bf16.mxu0 0
      %687 = vmatpush1.bf16.msra.mxu0 0
      %688 = vmatprep.subr.bf16.mxu0 0
      %689 = vmatpush1.bf16.msra.mxu0 0
      %690 = vmatprep.subr.bf16.mxu0 0
      %691 = vmatpush1.bf16.msra.mxu0 0
      %692 = vmatprep.subr.bf16.mxu0 0
      %693 = vmatpush1.bf16.msra.mxu0 0
      %694 = vmatprep.subr.bf16.mxu0 0
      %695 = vmatpush1.bf16.msra.mxu0 0
      %696 = vmatprep.subr.bf16.mxu0 0
      %697 = vmatpush1.bf16.msra.mxu0 0
      %698 = vmatprep.subr.bf16.mxu0 0
      %699 = vmatpush1.bf16.msra.mxu0 0
      %700 = vmatprep.subr.bf16.mxu0 0
      %701 = vmatpush1.bf16.msra.mxu0 0
      %702 = vmatprep.subr.bf16.mxu0 0
      %703 = vmatpush1.bf16.msra.mxu0 0
      %704 = vmatprep.subr.bf16.mxu0 0
      %705 = vmatpush1.bf16.msra.mxu0 0
      %706 = vmatprep.subr.bf16.mxu0 0
      %707 = vmatpush1.bf16.msra.mxu0 0
      %708 = vmatprep.subr.bf16.mxu0 0
      %709 = vmatpush1.bf16.msra.mxu0 0
      %710 = vmatprep.mubr.bf16.mxu0 0
      %711 = vmatmul.mubr.bf16.gmra.mrb[0].mxu0 %v635
      %v712 = vpop.f32.mrb[0].mxu0
      %v713 = vadd.f32 %v672, %v712
      %v714 = vpop.f32.mrb[0].mxu0
      %v715 = vpop.f32.mrb[0].mxu0
      %v716 = vadd.f32 %v675, %v715
      %v717 = vpop.f32.mrb[0].mxu0
      %718 = vdwg.mxu0
      %v719 = vld [vmem:[%s192] sm:$0xfc]
      %v720 = vld [vmem:[%s192 + $0x8] sm:$0xfc]
      %v721 = vld [vmem:[%s192 + $0x10] sm:$0xfc]
      %v722 = vld [vmem:[%s192 + $0x30] sm:$0x3]
      %v723 = vld [vmem:[%s192 + $0x38] sm:$0x3]
      %v724 = vld [vmem:[%s192 + $0x40] sm:$0x3]
      %v725 = vpack.c.bf16 %v202, %v719
      %v726 = vpack.c.bf16 %v203, %v720
      %v727 = vpack.c.bf16 %v204, %v721
      %v728 = vpack.c.bf16 %v722, %v722
      %v729 = vpack.c.bf16 %v723, %v723
      %v730 = vpack.c.bf16 %v724, %v724
      %s731 = scalar_lea.vmem %s1, 288
      %v732 = vld [vmem:[%s731] sm:$0xf]
      %v733 = vld [vmem:[%s731 + $0x4] sm:$0xf]
      %v734 = vld [vmem:[%s731 + $0x8] sm:$0xf]
      %v735 = vld [vmem:[%s731 + $0xc] sm:$0xf]
      %v736 = vld [vmem:[%s731 + $0x10] sm:$0xf]
      %v737 = vld [vmem:[%s731 + $0x14] sm:$0xf]
      %v738 = vld [vmem:[%s731 + $0x18] sm:$0xf]
      %v739 = vld [vmem:[%s731 + $0x1c] sm:$0xf]
      %v740 = vld [vmem:[%s731 + $0x20] sm:$0xf]
      %v741 = vld [vmem:[%s731 + $0x24] sm:$0xf]
      %v742 = vld [vmem:[%s731 + $0x28] sm:$0xf]
      %v743 = vld [vmem:[%s731 + $0x2c] sm:$0xf]
      %v744 = vld [vmem:[%s731 + $0x30] sm:$0xf]
      %v745 = vld [vmem:[%s731 + $0x34] sm:$0xf]
      %v746 = vld [vmem:[%s731 + $0x38] sm:$0xf]
      %v747 = vld [vmem:[%s731 + $0x3c] sm:$0xf]
      %v748 = vld [vmem:[%s731 + $0x40] sm:$0xf]
      %v749 = vld [vmem:[%s731 + $0x44] sm:$0xf]
      %v750 = vld [vmem:[%s731 + $0x48] sm:$0xf]
      %v751 = vld [vmem:[%s731 + $0x4c] sm:$0xf]
      %v752 = vld [vmem:[%s731 + $0x50] sm:$0xf]
      %v753 = vld [vmem:[%s731 + $0x54] sm:$0xf]
      %v754 = vld [vmem:[%s731 + $0x58] sm:$0xf]
      %v755 = vld [vmem:[%s731 + $0x5c] sm:$0xf]
      %v756 = vld [vmem:[%s731 + $0x60] sm:$0xf]
      %v757 = vld [vmem:[%s731 + $0x64] sm:$0xf]
      %v758 = vld [vmem:[%s731 + $0x68] sm:$0xf]
      %v759 = vld [vmem:[%s731 + $0x6c] sm:$0xf]
      %v760 = vld [vmem:[%s731 + $0x70] sm:$0xf]
      %v761 = vld [vmem:[%s731 + $0x74] sm:$0xf]
      %v762 = vld [vmem:[%s731 + $0x78] sm:$0xf]
      %v763 = vld [vmem:[%s731 + $0x7c] sm:$0xf]
      %v764 = vld [vmem:[%s731 + $0x80] sm:$0xf]
      %v765 = vld [vmem:[%s731 + $0x84] sm:$0xf]
      %v766 = vld [vmem:[%s731 + $0x88] sm:$0xf]
      %v767 = vld [vmem:[%s731 + $0x8c] sm:$0xf]
      %vm774 = vcmask 1046528
      %v775 = vrot.slane %v725, 1
      %v776 = vrot.slane %v728, 1
      %v777 = vsel %vm774, %v775, %v776
      %v778 = vrot.slane %v726, 1
      %v779 = vrot.slane %v729, 1
      %v780 = vsel %vm774, %v778, %v779
      %v781 = vrot.slane %v727, 1
      %v782 = vrot.slane %v730, 1
      %v783 = vsel %vm774, %v781, %v782
      %v822 = vunpack.c.l.b16 %v732
      %v823 = vunpack.c.l.b16 %v733
      %v824 = vunpack.c.l.b16 %v734
      %v825 = vunpack.c.l.b16 %v735
      %v826 = vunpack.c.l.b16 %v736
      %v827 = vunpack.c.l.b16 %v737
      %v828 = vunpack.c.l.b16 %v738
      %v829 = vunpack.c.l.b16 %v739
      %v830 = vunpack.c.l.b16 %v740
      %v831 = vunpack.c.l.b16 %v741
      %v832 = vunpack.c.l.b16 %v742
      %v833 = vunpack.c.l.b16 %v743
      %v834 = vunpack.c.l.b16 %v744
      %v835 = vunpack.c.l.b16 %v745
      %v836 = vunpack.c.l.b16 %v746
      %v837 = vunpack.c.l.b16 %v747
      %v838 = vunpack.c.l.b16 %v748
      %v839 = vunpack.c.l.b16 %v749
      %v840 = vunpack.c.l.b16 %v750
      %v841 = vunpack.c.l.b16 %v751
      %v842 = vunpack.c.l.b16 %v752
      %v843 = vunpack.c.l.b16 %v753
      %v844 = vunpack.c.l.b16 %v754
      %v845 = vunpack.c.l.b16 %v755
      %v846 = vunpack.c.l.b16 %v756
      %v847 = vunpack.c.l.b16 %v757
      %v848 = vunpack.c.l.b16 %v758
      %v849 = vunpack.c.l.b16 %v759
      %v850 = vunpack.c.l.b16 %v760
      %v851 = vunpack.c.l.b16 %v761
      %v852 = vunpack.c.l.b16 %v762
      %v853 = vunpack.c.l.b16 %v763
      %v854 = vunpack.c.l.b16 %v764
      %v855 = vunpack.c.l.b16 %v765
      %v856 = vunpack.c.l.b16 %v766
      %v857 = vunpack.c.l.b16 %v767
      %v858 = vpack.c.b16 %v823, %v822
      %v859 = vpack.c.b16 %v825, %v824
      %v860 = vpack.c.b16 %v827, %v826
      %v861 = vpack.c.b16 %v829, %v828
      %v862 = vpack.c.b16 %v831, %v830
      %v863 = vpack.c.b16 %v833, %v832
      %v864 = vpack.c.b16 %v835, %v834
      %v865 = vpack.c.b16 %v837, %v836
      %v866 = vpack.c.b16 %v839, %v838
      %v867 = vpack.c.b16 %v841, %v840
      %v868 = vpack.c.b16 %v843, %v842
      %v869 = vpack.c.b16 %v845, %v844
      %v870 = vpack.c.b16 %v847, %v846
      %v871 = vpack.c.b16 %v849, %v848
      %v872 = vpack.c.b16 %v851, %v850
      %v873 = vpack.c.b16 %v853, %v852
      %v874 = vpack.c.b16 %v855, %v854
      %v875 = vpack.c.b16 %v857, %v856
      %v895 = vsel %vm440, %v783, 0
      %897 = vmatprep.subr.bf16.mxu0 0
      %898 = vmatpush1.bf16.msra.mxu0 %v858
      %899 = vmatprep.subr.bf16.mxu0 0
      %900 = vmatpush1.bf16.msra.mxu0 %v859
      %901 = vmatprep.subr.bf16.mxu0 0
      %902 = vmatpush1.bf16.msra.mxu0 %v860
      %903 = vmatprep.subr.bf16.mxu0 0
      %904 = vmatpush1.bf16.msra.mxu0 %v861
      %905 = vmatprep.subr.bf16.mxu0 0
      %906 = vmatpush1.bf16.msra.mxu0 %v862
      %907 = vmatprep.subr.bf16.mxu0 0
      %908 = vmatpush1.bf16.msra.mxu0 %v863
      %909 = vmatprep.subr.bf16.mxu0 0
      %910 = vmatpush1.bf16.msra.mxu0 %v864
      %911 = vmatprep.subr.bf16.mxu0 0
      %912 = vmatpush1.bf16.msra.mxu0 %v865
      %913 = vmatprep.subr.bf16.mxu0 0
      %914 = vmatpush1.bf16.msra.mxu0 %v866
      %915 = vmatprep.subr.bf16.mxu0 0
      %916 = vmatpush1.bf16.msra.mxu0 %v867
      %917 = vmatprep.subr.bf16.mxu0 0
      %918 = vmatpush1.bf16.msra.mxu0 %v868
      %919 = vmatprep.subr.bf16.mxu0 0
      %920 = vmatpush1.bf16.msra.mxu0 %v869
      %921 = vmatprep.subr.bf16.mxu0 0
      %922 = vmatpush1.bf16.msra.mxu0 %v870
      %923 = vmatprep.subr.bf16.mxu0 0
      %924 = vmatpush1.bf16.msra.mxu0 %v871
      %925 = vmatprep.subr.bf16.mxu0 0
      %926 = vmatpush1.bf16.msra.mxu0 %v872
      %927 = vmatprep.subr.bf16.mxu0 0
      %928 = vmatpush1.bf16.msra.mxu0 %v873
      %929 = vmatprep.mubr.bf16.mxu0 %v780
      %930 = vmatmul.mubr.bf16.gmra.mrb[0].mxu0 %v777
      %v931 = vpop.f32.mrb[0].mxu0
      %v932 = vadd.f32 0.0, %v931
      %v933 = vpop.f32.mrb[0].mxu0
      %v934 = vpop.f32.mrb[0].mxu0
      %v935 = vadd.f32 0.0, %v934
      %v936 = vpop.f32.mrb[0].mxu0
      %937 = vdwg.mxu0
      %938 = vmatprep.subr.bf16.mxu0 0
      %939 = vmatpush1.bf16.msra.mxu0 %v874
      %940 = vmatprep.subr.bf16.mxu0 0
      %941 = vmatpush1.bf16.msra.mxu0 %v875
      %942 = vmatprep.subr.bf16.mxu0 0
      %943 = vmatpush1.bf16.msra.mxu0 0
      %944 = vmatprep.subr.bf16.mxu0 0
      %945 = vmatpush1.bf16.msra.mxu0 0
      %946 = vmatprep.subr.bf16.mxu0 0
      %947 = vmatpush1.bf16.msra.mxu0 0
      %948 = vmatprep.subr.bf16.mxu0 0
      %949 = vmatpush1.bf16.msra.mxu0 0
      %950 = vmatprep.subr.bf16.mxu0 0
      %951 = vmatpush1.bf16.msra.mxu0 0
      %952 = vmatprep.subr.bf16.mxu0 0
      %953 = vmatpush1.bf16.msra.mxu0 0
      %954 = vmatprep.subr.bf16.mxu0 0
      %955 = vmatpush1.bf16.msra.mxu0 0
      %956 = vmatprep.subr.bf16.mxu0 0
      %957 = vmatpush1.bf16.msra.mxu0 0
      %958 = vmatprep.subr.bf16.mxu0 0
      %959 = vmatpush1.bf16.msra.mxu0 0
      %960 = vmatprep.subr.bf16.mxu0 0
      %961 = vmatpush1.bf16.msra.mxu0 0
      %962 = vmatprep.subr.bf16.mxu0 0
      %963 = vmatpush1.bf16.msra.mxu0 0
      %964 = vmatprep.subr.bf16.mxu0 0
      %965 = vmatpush1.bf16.msra.mxu0 0
      %966 = vmatprep.subr.bf16.mxu0 0
      %967 = vmatpush1.bf16.msra.mxu0 0
      %968 = vmatprep.subr.bf16.mxu0 0
      %969 = vmatpush1.bf16.msra.mxu0 0
      %970 = vmatprep.mubr.bf16.mxu0 0
      %971 = vmatmul.mubr.bf16.gmra.mrb[0].mxu0 %v895
      %v972 = vpop.f32.mrb[0].mxu0
      %v973 = vadd.f32 %v932, %v972
      %v974 = vpop.f32.mrb[0].mxu0
      %v975 = vpop.f32.mrb[0].mxu0
      %v976 = vadd.f32 %v935, %v975
      %v977 = vpop.f32.mrb[0].mxu0
      %978 = vdwg.mxu0
      %v979 = vadd.f32 %v713, %v973
      %v980 = vadd.f32 %v716, %v976
      %v981 = vld [vmem:[%s2] sm:$0x1]
      %v983 = vlaneseq
      %v984 = vshrl.u32 %v983, 7
      %v985 = vsub.s32 0, %v984
      %v986 = vrot.slane %v981, %v985
      %v988 = vadd.f32 %v979, %v986
      %v989 = vadd.f32 %v980, %v986
      %v990 = vld [vmem:[%s3] sm:$0xff]
      %v991 = vld [vmem:[%s3 + $0x8] sm:$0xff]
      %v992 = vld [vmem:[%s3 + $0x10] sm:$0xff]
      %v993 = vld [vmem:[%s3 + $0x18] sm:$0xff]
      %v994 = vld [vmem:[%s3 + $0x20] sm:$0xff]
      %v995 = vld [vmem:[%s3 + $0x28] sm:$0xff]
      %v996 = vld [vmem:[%s3 + $0x30] sm:$0xff]
      %v997 = vld [vmem:[%s3 + $0x38] sm:$0xff]
      %v998 = vld [vmem:[%s3 + $0x40] sm:$0xff]
      %v999 = vld [vmem:[%s3 + $0x48] sm:$0xff]
      %v1000 = vld [vmem:[%s3 + $0x50] sm:$0xff]
      %v1001 = vld [vmem:[%s3 + $0x58] sm:$0xff]
      %v1002 = vld [vmem:[%s3 + $0x60] sm:$0xff]
      %v1003 = vld [vmem:[%s3 + $0x68] sm:$0xff]
      %v1004 = vld [vmem:[%s3 + $0x70] sm:$0xff]
      %v1005 = vld [vmem:[%s3 + $0x78] sm:$0xff]
      %1006 = vmatprep.subr.mxu0 0.0
      %1007 = vmatpush1.msra.mxu0 %v990
      %1008 = vmatprep.subr.mxu0 0.0
      %1009 = vmatpush1.msra.mxu0 %v991
      %1010 = vmatprep.subr.mxu0 0.0
      %1011 = vmatpush1.msra.mxu0 %v992
      %1012 = vmatprep.subr.mxu0 0.0
      %1013 = vmatpush1.msra.mxu0 %v993
      %1014 = vmatprep.subr.mxu0 0.0
      %1015 = vmatpush1.msra.mxu0 %v994
      %1016 = vmatprep.subr.mxu0 0.0
      %1017 = vmatpush1.msra.mxu0 %v995
      %1018 = vmatprep.subr.mxu0 0.0
      %1019 = vmatpush1.msra.mxu0 %v996
      %1020 = vmatprep.subr.mxu0 0.0
      %1021 = vmatpush1.msra.mxu0 %v997
      %1022 = vmatprep.subr.mxu0 0.0
      %1023 = vmatpush1.msra.mxu0 %v998
      %1024 = vmatprep.subr.mxu0 0.0
      %1025 = vmatpush1.msra.mxu0 %v999
      %1026 = vmatprep.subr.mxu0 0.0
      %1027 = vmatpush1.msra.mxu0 %v1000
      %1028 = vmatprep.subr.mxu0 0.0
      %1029 = vmatpush1.msra.mxu0 %v1001
      %1030 = vmatprep.subr.mxu0 0.0
      %1031 = vmatpush1.msra.mxu0 %v1002
      %1032 = vmatprep.subr.mxu0 0.0
      %1033 = vmatpush1.msra.mxu0 %v1003
      %1034 = vmatprep.subr.mxu0 0.0
      %1035 = vmatpush1.msra.mxu0 %v1004
      %1036 = vmatprep.subr.mxu0 0.0
      %1037 = vmatpush1.msra.mxu0 %v1005
      %1038 = vmatprep.subr.mxu0 0.0
      %1039 = vmatpush1.msra.mxu0 0.0
      %1040 = vmatprep.subr.mxu0 0.0
      %1041 = vmatpush1.msra.mxu0 0.0
      %1042 = vmatprep.subr.mxu0 0.0
      %1043 = vmatpush1.msra.mxu0 0.0
      %1044 = vmatprep.subr.mxu0 0.0
      %1045 = vmatpush1.msra.mxu0 0.0
      %1046 = vmatprep.subr.mxu0 0.0
      %1047 = vmatpush1.msra.mxu0 0.0
      %1048 = vmatprep.subr.mxu0 0.0
      %1049 = vmatpush1.msra.mxu0 0.0
      %1050 = vmatprep.subr.mxu0 0.0
      %1051 = vmatpush1.msra.mxu0 0.0
      %1052 = vmatprep.subr.mxu0 0.0
      %1053 = vmatpush1.msra.mxu0 0.0
      %1054 = vmatprep.subr.mxu0 0.0
      %1055 = vmatpush1.msra.mxu0 0.0
      %1056 = vmatprep.subr.mxu0 0.0
      %1057 = vmatpush1.msra.mxu0 0.0
      %1058 = vmatprep.subr.mxu0 0.0
      %1059 = vmatpush1.msra.mxu0 0.0
      %1060 = vmatprep.subr.mxu0 0.0
      %1061 = vmatpush1.msra.mxu0 0.0
      %1062 = vmatprep.subr.mxu0 0.0
      %1063 = vmatpush1.msra.mxu0 0.0
      %1064 = vmatprep.subr.mxu0 0.0
      %1065 = vmatpush1.msra.mxu0 0.0
      %1066 = vmatprep.subr.mxu0 0.0
      %1067 = vmatpush1.msra.mxu0 0.0
      %1068 = vmatprep.subr.mxu0 0.0
      %1069 = vmatpush1.msra.mxu0 0.0
      %1070 = vmatprep.mubr.f32.mxu0 0.0
      %1071 = vmatmul.mubr.f32.gmra.mrb[0].mxu0 %v988
      %v1072 = vpop.f32.mrb[0].mxu0
      %v1073 = vadd.f32 0.0, %v1072
      %v1074 = vpop.f32.mrb[0].mxu0
      %1075 = vmatprep.mubr.f32.mxu0 0.0
      %1076 = vmatmul.mubr.f32.gmra.mrb[0].mxu0 %v989
      %v1077 = vpop.f32.mrb[0].mxu0
      %v1078 = vadd.f32 0.0, %v1077
      %v1079 = vpop.f32.mrb[0].mxu0
      %1080 = vdwg.mxu0
      %v1081 = vadd.f32 %v1073, %v1078
      %v1082 = vrot.slane %v1081, 4
      %v1083 = vadd.f32 %v1081, %v1082
      %v1084 = vrot.slane %v1083, 2
      %v1085 = vadd.f32 %v1083, %v1084
      %v1086 = vrot.slane %v1085, 1
      %v1087 = vadd.f32 %v1085, %v1086
      %v1088 = vmul.f32 %v988, %v988
      %v1089 = vmul.f32 %v989, %v989
      %1090 = vmatprep.subr.mxu0 0.0
      %1091 = vmatpush1.msra.mxu0 %v990
      %1092 = vmatprep.subr.mxu0 0.0
      %1093 = vmatpush1.msra.mxu0 %v991
      %1094 = vmatprep.subr.mxu0 0.0
      %1095 = vmatpush1.msra.mxu0 %v992
      %1096 = vmatprep.subr.mxu0 0.0
      %1097 = vmatpush1.msra.mxu0 %v993
      %1098 = vmatprep.subr.mxu0 0.0
      %1099 = vmatpush1.msra.mxu0 %v994
      %1100 = vmatprep.subr.mxu0 0.0
      %1101 = vmatpush1.msra.mxu0 %v995
      %1102 = vmatprep.subr.mxu0 0.0
      %1103 = vmatpush1.msra.mxu0 %v996
      %1104 = vmatprep.subr.mxu0 0.0
      %1105 = vmatpush1.msra.mxu0 %v997
      %1106 = vmatprep.subr.mxu0 0.0
      %1107 = vmatpush1.msra.mxu0 %v998
      %1108 = vmatprep.subr.mxu0 0.0
      %1109 = vmatpush1.msra.mxu0 %v999
      %1110 = vmatprep.subr.mxu0 0.0
      %1111 = vmatpush1.msra.mxu0 %v1000
      %1112 = vmatprep.subr.mxu0 0.0
      %1113 = vmatpush1.msra.mxu0 %v1001
      %1114 = vmatprep.subr.mxu0 0.0
      %1115 = vmatpush1.msra.mxu0 %v1002
      %1116 = vmatprep.subr.mxu0 0.0
      %1117 = vmatpush1.msra.mxu0 %v1003
      %1118 = vmatprep.subr.mxu0 0.0
      %1119 = vmatpush1.msra.mxu0 %v1004
      %1120 = vmatprep.subr.mxu0 0.0
      %1121 = vmatpush1.msra.mxu0 %v1005
      %1122 = vmatprep.subr.mxu0 0.0
      %1123 = vmatpush1.msra.mxu0 0.0
      %1124 = vmatprep.subr.mxu0 0.0
      %1125 = vmatpush1.msra.mxu0 0.0
      %1126 = vmatprep.subr.mxu0 0.0
      %1127 = vmatpush1.msra.mxu0 0.0
      %1128 = vmatprep.subr.mxu0 0.0
      %1129 = vmatpush1.msra.mxu0 0.0
      %1130 = vmatprep.subr.mxu0 0.0
      %1131 = vmatpush1.msra.mxu0 0.0
      %1132 = vmatprep.subr.mxu0 0.0
      %1133 = vmatpush1.msra.mxu0 0.0
      %1134 = vmatprep.subr.mxu0 0.0
      %1135 = vmatpush1.msra.mxu0 0.0
      %1136 = vmatprep.subr.mxu0 0.0
      %1137 = vmatpush1.msra.mxu0 0.0
      %1138 = vmatprep.subr.mxu0 0.0
      %1139 = vmatpush1.msra.mxu0 0.0
      %1140 = vmatprep.subr.mxu0 0.0
      %1141 = vmatpush1.msra.mxu0 0.0
      %1142 = vmatprep.subr.mxu0 0.0
      %1143 = vmatpush1.msra.mxu0 0.0
      %1144 = vmatprep.subr.mxu0 0.0
      %1145 = vmatpush1.msra.mxu0 0.0
      %1146 = vmatprep.subr.mxu0 0.0
      %1147 = vmatpush1.msra.mxu0 0.0
      %1148 = vmatprep.subr.mxu0 0.0
      %1149 = vmatpush1.msra.mxu0 0.0
      %1150 = vmatprep.subr.mxu0 0.0
      %1151 = vmatpush1.msra.mxu0 0.0
      %1152 = vmatprep.subr.mxu0 0.0
      %1153 = vmatpush1.msra.mxu0 0.0
      %1154 = vmatprep.mubr.f32.mxu0 0.0
      %1155 = vmatmul.mubr.f32.gmra.mrb[0].mxu0 %v1088
      %v1156 = vpop.f32.mrb[0].mxu0
      %v1157 = vadd.f32 0.0, %v1156
      %v1158 = vpop.f32.mrb[0].mxu0
      %1159 = vmatprep.mubr.f32.mxu0 0.0
      %1160 = vmatmul.mubr.f32.gmra.mrb[0].mxu0 %v1089
      %v1161 = vpop.f32.mrb[0].mxu0
      %v1162 = vadd.f32 0.0, %v1161
      %v1163 = vpop.f32.mrb[0].mxu0
      %1164 = vdwg.mxu0
      %v1165 = vadd.f32 %v1157, %v1162
      %v1166 = vrot.slane %v1165, 4
      %v1167 = vadd.f32 %v1165, %v1166
      %v1168 = vrot.slane %v1167, 2
      %v1169 = vadd.f32 %v1167, %v1168
      %v1170 = vrot.slane %v1169, 1
      %v1171 = vadd.f32 %v1169, %v1170
      %v1172 = vmul.f32 %v1087, %v1087
      %v1173 = vsub.f32 %v1171, %v1172
      %v1174 = vmax.f32 %v1173, 0.0
      %v1175 = vsub.f32 %v988, %v1087
      %v1176 = vsub.f32 %v989, %v1087
      %v1177 = vadd.f32 %v1174, 1e-05
      %v1178 = vrsqrt.pop %v1177
      %v1179 = vmul.f32 %v1175, %v1178
      %v1180 = vmul.f32 %v1176, %v1178
      %v1181 = vmax.f32 %v1179, 0.0
      %v1182 = vmax.f32 %v1180, 0.0
      %1183 = vst [vmem:[%s197] sm:$0xff] %v1181
      %1184 = vst [vmem:[%s197 + $0x8] sm:$0xff] %v1182
      %p1185 = scmp.lt.s32.totalorder %s15, 1
      %s1186 = scalar_select %p1185, %s15, 1
      %s1187 = smul.addr %s1186, 2
      %s1188 = smul.addr %s1187, 8
      %s1189 = scalar_lea.vmem %s4, %s1188
      // Predicated region
      $region37: #{generator_forward.12} parent=35 // pred_check
        %p1190 = pneg %p122
      $region38: #{generator_forward.12} parent=35 // pred_check_branch
        %1192 = sbr.rel (%p1190) target = $region40
      $region39: #{generator_forward.12} parent=35 // pred_region
        _
      $region40: #{generator_forward.12} parent=35 // pred_fallthru
        _
    $region36: #{generator_forward.12} parent=5 // pred_fallthru
      _
    %p1193 = scmp.le.s32.totalorder 2, %s10
    // Predicated region
    $region41: #{generator_forward.12} parent=5 // pred_check
      %p1194 = pneg %p1193
    $region42: #{generator_forward.12} parent=5 // pred_check_branch
      %1196 = sbr.rel (%p1194) target = $region44
    $region43: #{generator_forward.12} parent=5 // pred_region
      %s1197 = ssub.s32 %s10, 2
      // Predicated region
      $region45: #{generator_forward.12} parent=43 // pred_check
        %p1198 = pneg %p128
      $region46: #{generator_forward.12} parent=43 // pred_check_branch
        %1200 = sbr.rel (%p1198) target = $region48
      $region47: #{generator_forward.12} parent=43 // pred_region
        %p1201 = scmp.lt.s32.totalorder %s16, 1
        %s1202 = scalar_select %p1201, %s16, 1
        %s1203 = smul.addr %s1202, 2
        %s1204 = smul.addr %s1203, 8
        %s1205 = scalar_lea.vmem %s4, %s1204
      $region48: #{generator_forward.12} parent=43 // pred_fallthru
        _
    $region44: #{generator_forward.12} parent=5 // pred_fallthru
      _
  $region6: #{generator_forward.12} parent=0 // loop_footer
    %s14 = sadd.s32 1, %s10
  $region7: #{generator_forward.12} parent=0 // loop_footer_branch
    %9 = sbr.rel target = $region3
  $region8: #{generator_forward.12} parent=0 // loop_exit
    _

// kernel: generator_forward.13
$region0: #{generator_forward.13}
  #allocation0 [shape = 'u32[]', space=smem, size = 0x4, offset = 0x4, fixed_abs, tag = 'smem constant byte address 0x4 - core index']
  #allocation1 [shape = 'u32[144,128]{1,0:T(1,128)}', space=vmem, size = 0x12000, scoped, tag = 'internal scratch']
  %s0 = inlined_call_operand.vmem [shape: f32[2,1,22,176], index: 0, kind: input, shape index: {}]
  %s1 = inlined_call_operand.vmem [shape: bf16[7,176,128], index: 1, kind: input, shape index: {}]
  %s2 = inlined_call_operand.vmem [shape: f32[1,128], index: 2, kind: input, shape index: {}]
  %s3 = inlined_call_operand.vmem [shape: f32[128,128], index: 3, kind: input, shape index: {}]
  %s4 = inlined_call_operand.vmem [shape: f32[2,16,128], index: 4, kind: output, shape index: {}]
  %s5 = sld [smem:[#allocation0]]
  $region49: #{generator_forward.13} parent=0
    _
  %s7 = ssub.s32 1, %s5
  %s8 = scalar_select 0, %s7, %s5
  loop: start=0, step=1, limit=4
  $region2: #{generator_forward.13} parent=0 // loop_pre_header
    _
  $region3: #{generator_forward.13} parent=0 // loop_header
    %s10 = sphi 0, %s14
    %p11 = scmp.ge.s32.totalorder %s10, 4
    %s20 = sphi 0, %s22
    %s23 = sphi 0, %s20
    %s24 = sphi 0, %s23
    %s40 = sphi 0, %s24
    %s44 = sphi 0, %s44
    %s46 = sphi 0, %s44
    %s47 = sphi 0, %s46
    %s61 = sphi 0, %s47
    %s65 = sphi 0, %s65
    %s67 = sphi 0, %s65
    %s68 = sphi 0, %s67
    %s82 = sphi 0, %s68
    %s86 = sphi 0, %s86
    %s88 = sphi 0, %s86
    %s89 = sphi 0, %s88
    %s103 = sphi 0, %s89
    %s109 = sphi 0, %s111
    %s112 = sphi 0, %s109
    %s113 = sphi 0, %s112
    %s129 = sphi 0, %s113
  $region4: #{generator_forward.13} parent=0 // loop_header_branch
    %13 = sbr.rel (%p11) target = $region8
  $region5: #{generator_forward.13} parent=0 // loop_body
    %s15 = ssub.s32 %s10, 1
    %s16 = ssub.s32 %s10, 2
    %s17 = sadd.s32 %s10, 1
    %s18 = ssub.s32 %s10, %s17
    %p19 = scmp.eq.s32.totalorder %s18, 0
    %s21 = sadd.s32 %s20, 1
    %s22 = scalar_select %p19, %s20, %s21
    %p25 = pneg %p19
    %p26 = scmp.eq.s32.totalorder %s10, 1
    %p27 = por %p25, %p26
    %p28 = scmp.ne.s32.totalorder %s20, %s23
    %p29 = scmp.eq.s32.totalorder %s10, 0
    %p30 = por %p28, %p29
    %p31 = scmp.ne.s32.totalorder %s20, %s23
    %p32 = scmp.eq.s32.totalorder %s15, 1
    %p33 = por %p31, %p32
    %p34 = scmp.ne.s32.totalorder %s23, %s24
    %p35 = scmp.eq.s32.totalorder %s15, 0
    %p36 = por %p34, %p35
    %p37 = scmp.ne.s32.totalorder %s23, %s24
    %p38 = scmp.eq.s32.totalorder %s16, 1
    %p39 = por %p37, %p38
    %p41 = scmp.ne.s32.totalorder %s24, %s40
    %p42 = scmp.eq.s32.totalorder %s16, 0
    %p43 = por %p41, %p42
    %s45 = sadd.s32 %s44, 1
    %p48 = scmp.eq.s32.totalorder %s10, 1
    %p49 = scmp.ne.s32.totalorder %s44, %s46
    %p50 = scmp.eq.s32.totalorder %s10, 0
    %p51 = por %p49, %p50
    %p52 = scmp.ne.s32.totalorder %s44, %s46
    %p53 = scmp.eq.s32.totalorder %s15, 1
    %p54 = por %p52, %p53
    %p55 = scmp.ne.s32.totalorder %s46, %s47
    %p56 = scmp.eq.s32.totalorder %s15, 0
    %p57 = por %p55, %p56
    %p58 = scmp.ne.s32.totalorder %s46, %s47
    %p59 = scmp.eq.s32.totalorder %s16, 1
    %p60 = por %p58, %p59
    %p62 = scmp.ne.s32.totalorder %s47, %s61
    %p63 = scmp.eq.s32.totalorder %s16, 0
    %p64 = por %p62, %p63
    %s66 = sadd.s32 %s65, 1
    %p69 = scmp.eq.s32.totalorder %s10, 1
    %p70 = scmp.ne.s32.totalorder %s65, %s67
    %p71 = scmp.eq.s32.totalorder %s10, 0
    %p72 = por %p70, %p71
    %p73 = scmp.ne.s32.totalorder %s65, %s67
    %p74 = scmp.eq.s32.totalorder %s15, 1
    %p75 = por %p73, %p74
    %p76 = scmp.ne.s32.totalorder %s67, %s68
    %p77 = scmp.eq.s32.totalorder %s15, 0
    %p78 = por %p76, %p77
    %p79 = scmp.ne.s32.totalorder %s67, %s68
    %p80 = scmp.eq.s32.totalorder %s16, 1
    %p81 = por %p79, %p80
    %p83 = scmp.ne.s32.totalorder %s68, %s82
    %p84 = scmp.eq.s32.totalorder %s16, 0
    %p85 = por %p83, %p84
    %s87 = sadd.s32 %s86, 1
    %p90 = scmp.eq.s32.totalorder %s10, 1
    %p91 = scmp.ne.s32.totalorder %s86, %s88
    %p92 = scmp.eq.s32.totalorder %s10, 0
    %p93 = por %p91, %p92
    %p94 = scmp.ne.s32.totalorder %s86, %s88
    %p95 = scmp.eq.s32.totalorder %s15, 1
    %p96 = por %p94, %p95
    %p97 = scmp.ne.s32.totalorder %s88, %s89
    %p98 = scmp.eq.s32.totalorder %s15, 0
    %p99 = por %p97, %p98
    %p100 = scmp.ne.s32.totalorder %s88, %s89
    %p101 = scmp.eq.s32.totalorder %s16, 1
    %p102 = por %p100, %p101
    %p104 = scmp.ne.s32.totalorder %s89, %s103
    %p105 = scmp.eq.s32.totalorder %s16, 0
    %p106 = por %p104, %p105
    %s107 = ssub.s32 %s10, %s17
    %p108 = scmp.eq.s32.totalorder %s107, 0
    %s110 = sadd.s32 %s109, 1
    %s111 = scalar_select %p108, %s109, %s110
    %p114 = pneg %p108
    %p115 = scmp.eq.s32.totalorder %s10, 1
    %p116 = por %p114, %p115
    %p117 = scmp.ne.s32.totalorder %s109, %s112
    %p118 = scmp.eq.s32.totalorder %s10, 0
    %p119 = por %p117, %p118
    %p120 = scmp.ne.s32.totalorder %s109, %s112
    %p121 = scmp.eq.s32.totalorder %s15, 1
    %p122 = por %p120, %p121
    %p123 = scmp.ne.s32.totalorder %s112, %s113
    %p124 = scmp.eq.s32.totalorder %s15, 0
    %p125 = por %p123, %p124
    %p126 = scmp.ne.s32.totalorder %s112, %s113
    %p127 = scmp.eq.s32.totalorder %s16, 1
    %p128 = por %p126, %p127
    %p130 = scmp.ne.s32.totalorder %s113, %s129
    %p131 = scmp.eq.s32.totalorder %s16, 0
    %p132 = por %p130, %p131
    %p133 = scmp.le.s32.totalorder 1, %s10
    %p134 = scmp.lt.s32.totalorder %s10, 3
    %p135 = pnand %p133, %p134
    %p136 = pneg %p135
    // Predicated region
    $region9: #{generator_forward.13} parent=5 // pred_check
      _
    $region10: #{generator_forward.13} parent=5 // pred_check_branch
      %138 = sbr.rel (%p135) target = $region12
    $region11: #{generator_forward.13} parent=5 // pred_region
      %s139 = ssub.s32 %s10, 1
      // Predicated region
      $region13: #{generator_forward.13} parent=11 // pred_check
        %p140 = pneg %p57
      $region14: #{generator_forward.13} parent=11 // pred_check_branch
        %142 = sbr.rel (%p140) target = $region16
      $region15: #{generator_forward.13} parent=11 // pred_region
        _
      $region16: #{generator_forward.13} parent=11 // pred_fallthru
        _
      // Predicated region
      $region17: #{generator_forward.13} parent=11 // pred_check
        %p143 = pneg %p78
      $region18: #{generator_forward.13} parent=11 // pred_check_branch
        %145 = sbr.rel (%p143) target = $region20
      $region19: #{generator_forward.13} parent=11 // pred_region
        _
      $region20: #{generator_forward.13} parent=11 // pred_fallthru
        _
      // Predicated region
      $region21: #{generator_forward.13} parent=11 // pred_check
        %p146 = pneg %p99
      $region22: #{generator_forward.13} parent=11 // pred_check_branch
        %148 = sbr.rel (%p146) target = $region24
      $region23: #{generator_forward.13} parent=11 // pred_region
        _
      $region24: #{generator_forward.13} parent=11 // pred_fallthru
        _
    $region12: #{generator_forward.13} parent=5 // pred_fallthru
      _
    %p149 = scmp.lt.s32.totalorder %s10, 2
    // Predicated region
    $region25: #{generator_forward.13} parent=5 // pred_check
      %p150 = pneg %p149
    $region26: #{generator_forward.13} parent=5 // pred_check_branch
      %152 = sbr.rel (%p150) target = $region28
    $region27: #{generator_forward.13} parent=5 // pred_region
      // Predicated region
      $region29: #{generator_forward.13} parent=27 // pred_check
        %p153 = pneg %p30
      $region30: #{generator_forward.13} parent=27 // pred_check_branch
        %155 = sbr.rel (%p153) target = $region32
      $region31: #{generator_forward.13} parent=27 // pred_region
        %p156 = scmp.lt.s32.totalorder %s10, 1
        %s157 = scalar_select %p156, %s10, 1
        %s158 = smul.addr %s157, 6
        %s159 = smul.addr %s158, 8
        %s160 = scalar_lea.vmem %s0, %s159
      $region32: #{generator_forward.13} parent=27 // pred_fallthru
        _
    $region28: #{generator_forward.13} parent=5 // pred_fallthru
      _
    %p161 = scmp.le.s32.totalorder 1, %s10
    %p162 = scmp.lt.s32.totalorder %s10, 3
    %p163 = pnand %p161, %p162
    %p164 = pneg %p163
    // Predicated region
    $region33: #{generator_forward.13} parent=5 // pred_check
      _
    $region34: #{generator_forward.13} parent=5 // pred_check_branch
      %166 = sbr.rel (%p163) target = $region36
    $region35: #{generator_forward.13} parent=5 // pred_region
      %s167 = ssub.s32 %s10, 1
      %p168 = scmp.lt.s32.totalorder %s15, 1
      %s169 = scalar_select %p168, %s15, 1
      %s170 = smul.addr %s169, 6
      %s171 = smul.addr %s170, 8
      %s172 = scalar_lea.vmem %s0, %s171
      %p173 = pneg %p36
      %p174 = pneg %p33
      %p175 = pneg %p57
      %p176 = pneg %p54
      %p177 = pneg %p78
      %p178 = pneg %p75
      %p179 = pneg %p99
      %p180 = pneg %p96
      %p181 = pneg %p125
      %p182 = pneg %p122
      %p183 = scmp.lt.s32.totalorder %s15, 1
      %s184 = scalar_select %p183, %s15, 1
      %s185 = smul.addr %s184, 2
      %s186 = smul.addr %s185, 8
      %s187 = scalar_lea.vmem %s4, %s186
      %p188 = scmp.lt.s32.totalorder %s15, 1
      %s189 = scalar_select %p188, %s15, 1
      %s190 = smul.addr %s189, 6
      %s191 = smul.addr %s190, 8
      %s192 = scalar_lea.vmem %s0, %s191
      %p193 = scmp.lt.s32.totalorder %s15, 1
      %s194 = scalar_select %p193, %s15, 1
      %s195 = smul.addr %s194, 2
      %s196 = smul.addr %s195, 8
      %s197 = scalar_lea.vmem %s4, %s196
      %v199 = vld [vmem:[%s192] sm:$0xff]
      %v200 = vld [vmem:[%s192 + $0x8] sm:$0xff]
      %v201 = vld [vmem:[%s192 + $0x10] sm:$0xff]
      %v202 = vld [vmem:[%s192 + $0x18] sm:$0xff]
      %v203 = vpack.c.bf16 %v201, %v199
      %v204 = vpack.c.bf16 %v202, %v200
      %v205 = vld [vmem:[%s1] sm:$0xf]
      %v206 = vld [vmem:[%s1 + $0x4] sm:$0xf]
      %v207 = vld [vmem:[%s1 + $0x8] sm:$0xf]
      %v208 = vld [vmem:[%s1 + $0xc] sm:$0xf]
      %v209 = vld [vmem:[%s1 + $0x10] sm:$0xf]
      %v210 = vld [vmem:[%s1 + $0x14] sm:$0xf]
      %v211 = vld [vmem:[%s1 + $0x18] sm:$0xf]
      %v212 = vld [vmem:[%s1 + $0x1c] sm:$0xf]
      %v213 = vld [vmem:[%s1 + $0x20] sm:$0xf]
      %v214 = vld [vmem:[%s1 + $0x24] sm:$0xf]
      %v215 = vld [vmem:[%s1 + $0x28] sm:$0xf]
      %v216 = vld [vmem:[%s1 + $0x2c] sm:$0xf]
      %v217 = vld [vmem:[%s1 + $0x30] sm:$0xf]
      %v218 = vld [vmem:[%s1 + $0x34] sm:$0xf]
      %v219 = vld [vmem:[%s1 + $0x38] sm:$0xf]
      %v220 = vld [vmem:[%s1 + $0x3c] sm:$0xf]
      %v221 = vld [vmem:[%s1 + $0x40] sm:$0xf]
      %v222 = vld [vmem:[%s1 + $0x44] sm:$0xf]
      %v223 = vld [vmem:[%s1 + $0x48] sm:$0xf]
      %v224 = vld [vmem:[%s1 + $0x4c] sm:$0xf]
      %v225 = vld [vmem:[%s1 + $0x50] sm:$0xf]
      %v226 = vld [vmem:[%s1 + $0x54] sm:$0xf]
      %v227 = vld [vmem:[%s192] sm:$0xfe]
      %v228 = vld [vmem:[%s192 + $0x8] sm:$0xfe]
      %v229 = vld [vmem:[%s192 + $0x20] sm:$0x1]
      %v230 = vld [vmem:[%s192 + $0x28] sm:$0x1]
      %v231 = vpack.c.bf16 %v201, %v227
      %v232 = vpack.c.bf16 %v202, %v228
      %v233 = vpack.c.bf16 %v229, %v229
      %v234 = vpack.c.bf16 %v230, %v230
      %s235 = scalar_lea.vmem %s1, 88
      %v236 = vld [vmem:[%s235] sm:$0xf]
      %v237 = vld [vmem:[%s235 + $0x4] sm:$0xf]
      %v238 = vld [vmem:[%s235 + $0x8] sm:$0xf]
      %v239 = vld [vmem:[%s235 + $0xc] sm:$0xf]
      %v240 = vld [vmem:[%s235 + $0x10] sm:$0xf]
      %v241 = vld [vmem:[%s235 + $0x14] sm:$0xf]
      %v242 = vld [vmem:[%s235 + $0x18] sm:$0xf]
      %v243 = vld [vmem:[%s235 + $0x1c] sm:$0xf]
      %v244 = vld [vmem:[%s235 + $0x20] sm:$0xf]
      %v245 = vld [vmem:[%s235 + $0x24] sm:$0xf]
      %v246 = vld [vmem:[%s235 + $0x28] sm:$0xf]
      %v247 = vld [vmem:[%s235 + $0x2c] sm:$0xf]
      %v248 = vld [vmem:[%s235 + $0x30] sm:$0xf]
      %v249 = vld [vmem:[%s235 + $0x34] sm:$0xf]
      %v250 = vld [vmem:[%s235 + $0x38] sm:$0xf]
      %v251 = vld [vmem:[%s235 + $0x3c] sm:$0xf]
      %v252 = vld [vmem:[%s235 + $0x40] sm:$0xf]
      %v253 = vld [vmem:[%s235 + $0x44] sm:$0xf]
      %v254 = vld [vmem:[%s235 + $0x48] sm:$0xf]
      %v255 = vld [vmem:[%s235 + $0x4c] sm:$0xf]
      %v256 = vld [vmem:[%s235 + $0x50] sm:$0xf]
      %v257 = vld [vmem:[%s235 + $0x54] sm:$0xf]
      %vm258 = vsmask.f32 7424
      %v260 = vshrl.u32 %v231, 16
      %v262 = vshll.u32 %v231, 16
      %v264 = vrot.slane %v262, 1
      %v265 = vor.u32 %v260, %v264
      %v267 = vshll.u32 %v233, 16
      %v269 = vrot.slane %v267, 1
      %v270 = vsel %vm258, %v265, %v269
      %v272 = vshrl.u32 %v232, 16
      %v274 = vshll.u32 %v232, 16
      %v276 = vrot.slane %v274, 1
      %v277 = vor.u32 %v272, %v276
      %v279 = vshll.u32 %v234, 16
      %v281 = vrot.slane %v279, 1
      %v282 = vsel %vm258, %v277, %v281
      %v306 = vunpack.c.l.b16 %v236
      %v307 = vunpack.c.l.b16 %v237
      %v308 = vunpack.c.l.b16 %v238
      %v309 = vunpack.c.l.b16 %v239
      %v310 = vunpack.c.l.b16 %v240
      %v311 = vunpack.c.l.b16 %v241
      %v312 = vunpack.c.l.b16 %v242
      %v313 = vunpack.c.l.b16 %v243
      %v314 = vunpack.c.l.b16 %v244
      %v315 = vunpack.c.l.b16 %v245
      %v316 = vunpack.c.l.b16 %v246
      %v317 = vunpack.c.l.b16 %v247
      %v318 = vunpack.c.l.b16 %v248
      %v319 = vunpack.c.l.b16 %v249
      %v320 = vunpack.c.l.b16 %v250
      %v321 = vunpack.c.l.b16 %v251
      %v322 = vunpack.c.l.b16 %v252
      %v323 = vunpack.c.l.b16 %v253
      %v324 = vunpack.c.l.b16 %v254
      %v325 = vunpack.c.l.b16 %v255
      %v326 = vunpack.c.l.b16 %v256
      %v327 = vunpack.c.l.b16 %v257
      %v328 = vpack.c.b16 %v307, %v306
      %v329 = vpack.c.b16 %v309, %v308
      %v330 = vpack.c.b16 %v311, %v310
      %v331 = vpack.c.b16 %v313, %v312
      %v332 = vpack.c.b16 %v315, %v314
      %v333 = vpack.c.b16 %v317, %v316
      %v334 = vpack.c.b16 %v319, %v318
      %v335 = vpack.c.b16 %v321, %v320
      %v336 = vpack.c.b16 %v323, %v322
      %v337 = vpack.c.b16 %v325, %v324
      %v338 = vpack.c.b16 %v327, %v326
      %vm350 = vcmask 392192
      %v352 = vsel %vm350, %v282, 0
      %354 = vmatprep.subr.bf16.mxu0 0
      %355 = vmatpush1.bf16.msra.mxu0 %v328
      %356 = vmatprep.subr.bf16.mxu0 0
      %357 = vmatpush1.bf16.msra.mxu0 %v329
      %358 = vmatprep.subr.bf16.mxu0 0
      %359 = vmatpush1.bf16.msra.mxu0 %v330
      %360 = vmatprep.subr.bf16.mxu0 0
      %361 = vmatpush1.bf16.msra.mxu0 %v331
      %362 = vmatprep.subr.bf16.mxu0 0
      %363 = vmatpush1.bf16.msra.mxu0 %v332
      %364 = vmatprep.subr.bf16.mxu0 0
      %365 = vmatpush1.bf16.msra.mxu0 %v333
      %366 = vmatprep.subr.bf16.mxu0 0
      %367 = vmatpush1.bf16.msra.mxu0 %v334
      %368 = vmatprep.subr.bf16.mxu0 0
      %369 = vmatpush1.bf16.msra.mxu0 %v335
      %370 = vmatprep.subr.bf16.mxu0 0
      %371 = vmatpush1.bf16.msra.mxu0 %v336
      %372 = vmatprep.subr.bf16.mxu0 0
      %373 = vmatpush1.bf16.msra.mxu0 %v337
      %374 = vmatprep.subr.bf16.mxu0 0
      %375 = vmatpush1.bf16.msra.mxu0 %v338
      %376 = vmatprep.subr.bf16.mxu0 0
      %377 = vmatpush1.bf16.msra.mxu0 0
      %378 = vmatprep.subr.bf16.mxu0 0
      %379 = vmatpush1.bf16.msra.mxu0 0
      %380 = vmatprep.subr.bf16.mxu0 0
      %381 = vmatpush1.bf16.msra.mxu0 0
      %382 = vmatprep.subr.bf16.mxu0 0
      %383 = vmatpush1.bf16.msra.mxu0 0
      %384 = vmatprep.subr.bf16.mxu0 0
      %385 = vmatpush1.bf16.msra.mxu0 0
      %386 = vmatprep.mubr.bf16.mxu0 %v352
      %387 = vmatmul.mubr.bf16.gmra.mrb[0].mxu0 %v270
      %v388 = vpop.f32.mrb[0].mxu0
      %v389 = vadd.f32 0.0, %v388
      %v390 = vpop.f32.mrb[0].mxu0
      %v391 = vpop.f32.mrb[0].mxu0
      %v392 = vadd.f32 0.0, %v391
      %v393 = vpop.f32.mrb[0].mxu0
      %394 = vdwg.mxu0
      %v417 = vunpack.c.l.b16 %v205
      %v418 = vunpack.c.l.b16 %v206
      %v419 = vunpack.c.l.b16 %v207
      %v420 = vunpack.c.l.b16 %v208
      %v421 = vunpack.c.l.b16 %v209
      %v422 = vunpack.c.l.b16 %v210
      %v423 = vunpack.c.l.b16 %v211
      %v424 = vunpack.c.l.b16 %v212
      %v425 = vunpack.c.l.b16 %v213
      %v426 = vunpack.c.l.b16 %v214
      %v427 = vunpack.c.l.b16 %v215
      %v428 = vunpack.c.l.b16 %v216
      %v429 = vunpack.c.l.b16 %v217
      %v430 = vunpack.c.l.b16 %v218
      %v431 = vunpack.c.l.b16 %v219
      %v432 = vunpack.c.l.b16 %v220
      %v433 = vunpack.c.l.b16 %v221
      %v434 = vunpack.c.l.b16 %v222
      %v435 = vunpack.c.l.b16 %v223
      %v436 = vunpack.c.l.b16 %v224
      %v437 = vunpack.c.l.b16 %v225
      %v438 = vunpack.c.l.b16 %v226
      %v439 = vpack.c.b16 %v418, %v417
      %v440 = vpack.c.b16 %v420, %v419
      %v441 = vpack.c.b16 %v422, %v421
      %v442 = vpack.c.b16 %v424, %v423
      %v443 = vpack.c.b16 %v426, %v425
      %v444 = vpack.c.b16 %v428, %v427
      %v445 = vpack.c.b16 %v430, %v429
      %v446 = vpack.c.b16 %v432, %v431
      %v447 = vpack.c.b16 %v434, %v433
      %v448 = vpack.c.b16 %v436, %v435
      %v449 = vpack.c.b16 %v438, %v437
      %v462 = vsel %vm350, %v204, 0
      %464 = vmatprep.subr.bf16.mxu0 0
      %465 = vmatpush1.bf16.msra.mxu0 %v439
      %466 = vmatprep.subr.bf16.mxu0 0
      %467 = vmatpush1.bf16.msra.mxu0 %v440
      %468 = vmatprep.subr.bf16.mxu0 0
      %469 = vmatpush1.bf16.msra.mxu0 %v441
      %470 = vmatprep.subr.bf16.mxu0 0
      %471 = vmatpush1.bf16.msra.mxu0 %v442
      %472 = vmatprep.subr.bf16.mxu0 0
      %473 = vmatpush1.bf16.msra.mxu0 %v443
      %474 = vmatprep.subr.bf16.mxu0 0
      %475 = vmatpush1.bf16.msra.mxu0 %v444
      %476 = vmatprep.subr.bf16.mxu0 0
      %477 = vmatpush1.bf16.msra.mxu0 %v445
      %478 = vmatprep.subr.bf16.mxu0 0
      %479 = vmatpush1.bf16.msra.mxu0 %v446
      %480 = vmatprep.subr.bf16.mxu0 0
      %481 = vmatpush1.bf16.msra.mxu0 %v447
      %482 = vmatprep.subr.bf16.mxu0 0
      %483 = vmatpush1.bf16.msra.mxu0 %v448
      %484 = vmatprep.subr.bf16.mxu0 0
      %485 = vmatpush1.bf16.msra.mxu0 %v449
      %486 = vmatprep.subr.bf16.mxu0 0
      %487 = vmatpush1.bf16.msra.mxu0 0
      %488 = vmatprep.subr.bf16.mxu0 0
      %489 = vmatpush1.bf16.msra.mxu0 0
      %490 = vmatprep.subr.bf16.mxu0 0
      %491 = vmatpush1.bf16.msra.mxu0 0
      %492 = vmatprep.subr.bf16.mxu0 0
      %493 = vmatpush1.bf16.msra.mxu0 0
      %494 = vmatprep.subr.bf16.mxu0 0
      %495 = vmatpush1.bf16.msra.mxu0 0
      %496 = vmatprep.mubr.bf16.mxu0 %v462
      %497 = vmatmul.mubr.bf16.gmra.mrb[0].mxu0 %v203
      %v498 = vpop.f32.mrb[0].mxu0
      %v499 = vadd.f32 %v389, %v498
      %v500 = vpop.f32.mrb[0].mxu0
      %v501 = vpop.f32.mrb[0].mxu0
      %v502 = vadd.f32 %v392, %v501
      %v503 = vpop.f32.mrb[0].mxu0
      %504 = vdwg.mxu0
      %v505 = vld [vmem:[%s192] sm:$0xfc]
      %v506 = vld [vmem:[%s192 + $0x8] sm:$0xfc]
      %v507 = vld [vmem:[%s192 + $0x20] sm:$0x3]
      %v508 = vld [vmem:[%s192 + $0x28] sm:$0x3]
      %v509 = vpack.c.bf16 %v201, %v505
      %v510 = vpack.c.bf16 %v202, %v506
      %v511 = vpack.c.bf16 %v507, %v507
      %v512 = vpack.c.bf16 %v508, %v508
      %s513 = scalar_lea.vmem %s1, 176
      %v514 = vld [vmem:[%s513] sm:$0xf]
      %v515 = vld [vmem:[%s513 + $0x4] sm:$0xf]
      %v516 = vld [vmem:[%s513 + $0x8] sm:$0xf]
      %v517 = vld [vmem:[%s513 + $0xc] sm:$0xf]
      %v518 = vld [vmem:[%s513 + $0x10] sm:$0xf]
      %v519 = vld [vmem:[%s513 + $0x14] sm:$0xf]
      %v520 = vld [vmem:[%s513 + $0x18] sm:$0xf]
      %v521 = vld [vmem:[%s513 + $0x1c] sm:$0xf]
      %v522 = vld [vmem:[%s513 + $0x20] sm:$0xf]
      %v523 = vld [vmem:[%s513 + $0x24] sm:$0xf]
      %v524 = vld [vmem:[%s513 + $0x28] sm:$0xf]
      %v525 = vld [vmem:[%s513 + $0x2c] sm:$0xf]
      %v526 = vld [vmem:[%s513 + $0x30] sm:$0xf]
      %v527 = vld [vmem:[%s513 + $0x34] sm:$0xf]
      %v528 = vld [vmem:[%s513 + $0x38] sm:$0xf]
      %v529 = vld [vmem:[%s513 + $0x3c] sm:$0xf]
      %v530 = vld [vmem:[%s513 + $0x40] sm:$0xf]
      %v531 = vld [vmem:[%s513 + $0x44] sm:$0xf]
      %v532 = vld [vmem:[%s513 + $0x48] sm:$0xf]
      %v533 = vld [vmem:[%s513 + $0x4c] sm:$0xf]
      %v534 = vld [vmem:[%s513 + $0x50] sm:$0xf]
      %v535 = vld [vmem:[%s513 + $0x54] sm:$0xf]
      %vm540 = vcmask 1046528
      %v541 = vrot.slane %v509, 1
      %v542 = vrot.slane %v511, 1
      %v543 = vsel %vm540, %v541, %v542
      %v544 = vrot.slane %v510, 1
      %v545 = vrot.slane %v512, 1
      %v546 = vsel %vm540, %v544, %v545
      %v570 = vunpack.c.l.b16 %v514
      %v571 = vunpack.c.l.b16 %v515
      %v572 = vunpack.c.l.b16 %v516
      %v573 = vunpack.c.l.b16 %v517
      %v574 = vunpack.c.l.b16 %v518
      %v575 = vunpack.c.l.b16 %v519
      %v576 = vunpack.c.l.b16 %v520
      %v577 = vunpack.c.l.b16 %v521
      %v578 = vunpack.c.l.b16 %v522
      %v579 = vunpack.c.l.b16 %v523
      %v580 = vunpack.c.l.b16 %v524
      %v581 = vunpack.c.l.b16 %v525
      %v582 = vunpack.c.l.b16 %v526
      %v583 = vunpack.c.l.b16 %v527
      %v584 = vunpack.c.l.b16 %v528
      %v585 = vunpack.c.l.b16 %v529
      %v586 = vunpack.c.l.b16 %v530
      %v587 = vunpack.c.l.b16 %v531
      %v588 = vunpack.c.l.b16 %v532
      %v589 = vunpack.c.l.b16 %v533
      %v590 = vunpack.c.l.b16 %v534
      %v591 = vunpack.c.l.b16 %v535
      %v592 = vpack.c.b16 %v571, %v570
      %v593 = vpack.c.b16 %v573, %v572
      %v594 = vpack.c.b16 %v575, %v574
      %v595 = vpack.c.b16 %v577, %v576
      %v596 = vpack.c.b16 %v579, %v578
      %v597 = vpack.c.b16 %v581, %v580
      %v598 = vpack.c.b16 %v583, %v582
      %v599 = vpack.c.b16 %v585, %v584
      %v600 = vpack.c.b16 %v587, %v586
      %v601 = vpack.c.b16 %v589, %v588
      %v602 = vpack.c.b16 %v591, %v590
      %v615 = vsel %vm350, %v546, 0
      %617 = vmatprep.subr.bf16.mxu0 0
      %618 = vmatpush1.bf16.msra.mxu0 %v592
      %619 = vmatprep.subr.bf16.mxu0 0
      %620 = vmatpush1.bf16.msra.mxu0 %v593
      %621 = vmatprep.subr.bf16.mxu0 0
      %622 = vmatpush1.bf16.msra.mxu0 %v594
      %623 = vmatprep.subr.bf16.mxu0 0
      %624 = vmatpush1.bf16.msra.mxu0 %v595
      %625 = vmatprep.subr.bf16.mxu0 0
      %626 = vmatpush1.bf16.msra.mxu0 %v596
      %627 = vmatprep.subr.bf16.mxu0 0
      %628 = vmatpush1.bf16.msra.mxu0 %v597
      %629 = vmatprep.subr.bf16.mxu0 0
      %630 = vmatpush1.bf16.msra.mxu0 %v598
      %631 = vmatprep.subr.bf16.mxu0 0
      %632 = vmatpush1.bf16.msra.mxu0 %v599
      %633 = vmatprep.subr.bf16.mxu0 0
      %634 = vmatpush1.bf16.msra.mxu0 %v600
      %635 = vmatprep.subr.bf16.mxu0 0
      %636 = vmatpush1.bf16.msra.mxu0 %v601
      %637 = vmatprep.subr.bf16.mxu0 0
      %638 = vmatpush1.bf16.msra.mxu0 %v602
      %639 = vmatprep.subr.bf16.mxu0 0
      %640 = vmatpush1.bf16.msra.mxu0 0
      %641 = vmatprep.subr.bf16.mxu0 0
      %642 = vmatpush1.bf16.msra.mxu0 0
      %643 = vmatprep.subr.bf16.mxu0 0
      %644 = vmatpush1.bf16.msra.mxu0 0
      %645 = vmatprep.subr.bf16.mxu0 0
      %646 = vmatpush1.bf16.msra.mxu0 0
      %647 = vmatprep.subr.bf16.mxu0 0
      %648 = vmatpush1.bf16.msra.mxu0 0
      %649 = vmatprep.mubr.bf16.mxu0 %v615
      %650 = vmatmul.mubr.bf16.gmra.mrb[0].mxu0 %v543
      %v651 = vpop.f32.mrb[0].mxu0
      %v652 = vadd.f32 0.0, %v651
      %v653 = vpop.f32.mrb[0].mxu0
      %v654 = vpop.f32.mrb[0].mxu0
      %v655 = vadd.f32 0.0, %v654
      %v656 = vpop.f32.mrb[0].mxu0
      %657 = vdwg.mxu0
      %v658 = vadd.f32 %v499, %v652
      %v659 = vadd.f32 %v502, %v655
      %v660 = vld [vmem:[%s192] sm:$0xf8]
      %v661 = vld [vmem:[%s192 + $0x8] sm:$0xf8]
      %v662 = vld [vmem:[%s192 + $0x20] sm:$0x7]
      %v663 = vld [vmem:[%s192 + $0x28] sm:$0x7]
      %v664 = vpack.c.bf16 %v201, %v660
      %v665 = vpack.c.bf16 %v202, %v661
      %v666 = vpack.c.bf16 %v662, %v662
      %v667 = vpack.c.bf16 %v663, %v663
      %s668 = scalar_lea.vmem %s1, 264
      %v669 = vld [vmem:[%s668] sm:$0xf]
      %v670 = vld [vmem:[%s668 + $0x4] sm:$0xf]
      %v671 = vld [vmem:[%s668 + $0x8] sm:$0xf]
      %v672 = vld [vmem:[%s668 + $0xc] sm:$0xf]
      %v673 = vld [vmem:[%s668 + $0x10] sm:$0xf]
      %v674 = vld [vmem:[%s668 + $0x14] sm:$0xf]
      %v675 = vld [vmem:[%s668 + $0x18] sm:$0xf]
      %v676 = vld [vmem:[%s668 + $0x1c] sm:$0xf]
      %v677 = vld [vmem:[%s668 + $0x20] sm:$0xf]
      %v678 = vld [vmem:[%s668 + $0x24] sm:$0xf]
      %v679 = vld [vmem:[%s668 + $0x28] sm:$0xf]
      %v680 = vld [vmem:[%s668 + $0x2c] sm:$0xf]
      %v681 = vld [vmem:[%s668 + $0x30] sm:$0xf]
      %v682 = vld [vmem:[%s668 + $0x34] sm:$0xf]
      %v683 = vld [vmem:[%s668 + $0x38] sm:$0xf]
      %v684 = vld [vmem:[%s668 + $0x3c] sm:$0xf]
      %v685 = vld [vmem:[%s668 + $0x40] sm:$0xf]
      %v686 = vld [vmem:[%s668 + $0x44] sm:$0xf]
      %v687 = vld [vmem:[%s668 + $0x48] sm:$0xf]
      %v688 = vld [vmem:[%s668 + $0x4c] sm:$0xf]
      %v689 = vld [vmem:[%s668 + $0x50] sm:$0xf]
      %v690 = vld [vmem:[%s668 + $0x54] sm:$0xf]
      %vm691 = vsmask.f32 6400
      %v693 = vshrl.u32 %v664, 16
      %v695 = vrot.slane %v693, 1
      %v696 = vshll.u32 %v664, 16
      %v698 = vrot.slane %v696, 2
      %v699 = vor.u32 %v695, %v698
      %v701 = vshrl.u32 %v666, 16
      %v703 = vrot.slane %v701, 1
      %v704 = vshll.u32 %v666, 16
      %v706 = vrot.slane %v704, 2
      %v707 = vor.u32 %v703, %v706
      %v708 = vsel %vm691, %v699, %v707
      %v710 = vshrl.u32 %v665, 16
      %v712 = vrot.slane %v710, 1
      %v713 = vshll.u32 %v665, 16
      %v715 = vrot.slane %v713, 2
      %v716 = vor.u32 %v712, %v715
      %v718 = vshrl.u32 %v667, 16
      %v720 = vrot.slane %v718, 1
      %v721 = vshll.u32 %v667, 16
      %v723 = vrot.slane %v721, 2
      %v724 = vor.u32 %v720, %v723
      %v725 = vsel %vm691, %v716, %v724
      %v749 = vunpack.c.l.b16 %v669
      %v750 = vunpack.c.l.b16 %v670
      %v751 = vunpack.c.l.b16 %v671
      %v752 = vunpack.c.l.b16 %v672
      %v753 = vunpack.c.l.b16 %v673
      %v754 = vunpack.c.l.b16 %v674
      %v755 = vunpack.c.l.b16 %v675
      %v756 = vunpack.c.l.b16 %v676
      %v757 = vunpack.c.l.b16 %v677
      %v758 = vunpack.c.l.b16 %v678
      %v759 = vunpack.c.l.b16 %v679
      %v760 = vunpack.c.l.b16 %v680
      %v761 = vunpack.c.l.b16 %v681
      %v762 = vunpack.c.l.b16 %v682
      %v763 = vunpack.c.l.b16 %v683
      %v764 = vunpack.c.l.b16 %v684
      %v765 = vunpack.c.l.b16 %v685
      %v766 = vunpack.c.l.b16 %v686
      %v767 = vunpack.c.l.b16 %v687
      %v768 = vunpack.c.l.b16 %v688
      %v769 = vunpack.c.l.b16 %v689
      %v770 = vunpack.c.l.b16 %v690
      %v771 = vpack.c.b16 %v750, %v749
      %v772 = vpack.c.b16 %v752, %v751
      %v773 = vpack.c.b16 %v754, %v753
      %v774 = vpack.c.b16 %v756, %v755
      %v775 = vpack.c.b16 %v758, %v757
      %v776 = vpack.c.b16 %v760, %v759
      %v777 = vpack.c.b16 %v762, %v761
      %v778 = vpack.c.b16 %v764, %v763
      %v779 = vpack.c.b16 %v766, %v765
      %v780 = vpack.c.b16 %v768, %v767
      %v781 = vpack.c.b16 %v770, %v769
      %v794 = vsel %vm350, %v725, 0
      %796 = vmatprep.subr.bf16.mxu0 0
      %797 = vmatpush1.bf16.msra.mxu0 %v771
      %798 = vmatprep.subr.bf16.mxu0 0
      %799 = vmatpush1.bf16.msra.mxu0 %v772
      %800 = vmatprep.subr.bf16.mxu0 0
      %801 = vmatpush1.bf16.msra.mxu0 %v773
      %802 = vmatprep.subr.bf16.mxu0 0
      %803 = vmatpush1.bf16.msra.mxu0 %v774
      %804 = vmatprep.subr.bf16.mxu0 0
      %805 = vmatpush1.bf16.msra.mxu0 %v775
      %806 = vmatprep.subr.bf16.mxu0 0
      %807 = vmatpush1.bf16.msra.mxu0 %v776
      %808 = vmatprep.subr.bf16.mxu0 0
      %809 = vmatpush1.bf16.msra.mxu0 %v777
      %810 = vmatprep.subr.bf16.mxu0 0
      %811 = vmatpush1.bf16.msra.mxu0 %v778
      %812 = vmatprep.subr.bf16.mxu0 0
      %813 = vmatpush1.bf16.msra.mxu0 %v779
      %814 = vmatprep.subr.bf16.mxu0 0
      %815 = vmatpush1.bf16.msra.mxu0 %v780
      %816 = vmatprep.subr.bf16.mxu0 0
      %817 = vmatpush1.bf16.msra.mxu0 %v781
      %818 = vmatprep.subr.bf16.mxu0 0
      %819 = vmatpush1.bf16.msra.mxu0 0
      %820 = vmatprep.subr.bf16.mxu0 0
      %821 = vmatpush1.bf16.msra.mxu0 0
      %822 = vmatprep.subr.bf16.mxu0 0
      %823 = vmatpush1.bf16.msra.mxu0 0
      %824 = vmatprep.subr.bf16.mxu0 0
      %825 = vmatpush1.bf16.msra.mxu0 0
      %826 = vmatprep.subr.bf16.mxu0 0
      %827 = vmatpush1.bf16.msra.mxu0 0
      %828 = vmatprep.mubr.bf16.mxu0 %v794
      %829 = vmatmul.mubr.bf16.gmra.mrb[0].mxu0 %v708
      %v830 = vpop.f32.mrb[0].mxu0
      %v831 = vadd.f32 0.0, %v830
      %v832 = vpop.f32.mrb[0].mxu0
      %v833 = vpop.f32.mrb[0].mxu0
      %v834 = vadd.f32 0.0, %v833
      %v835 = vpop.f32.mrb[0].mxu0
      %836 = vdwg.mxu0
      %v837 = vadd.f32 %v658, %v831
      %v838 = vadd.f32 %v659, %v834
      %v839 = vld [vmem:[%s192] sm:$0xf0]
      %v840 = vld [vmem:[%s192 + $0x8] sm:$0xf0]
      %v841 = vld [vmem:[%s192 + $0x20] sm:$0xf]
      %v842 = vld [vmem:[%s192 + $0x28] sm:$0xf]
      %v843 = vpack.c.bf16 %v201, %v839
      %v844 = vpack.c.bf16 %v202, %v840
      %v845 = vpack.c.bf16 %v841, %v841
      %v846 = vpack.c.bf16 %v842, %v842
      %s847 = scalar_lea.vmem %s1, 352
      %v848 = vld [vmem:[%s847] sm:$0xf]
      %v849 = vld [vmem:[%s847 + $0x4] sm:$0xf]
      %v850 = vld [vmem:[%s847 + $0x8] sm:$0xf]
      %v851 = vld [vmem:[%s847 + $0xc] sm:$0xf]
      %v852 = vld [vmem:[%s847 + $0x10] sm:$0xf]
      %v853 = vld [vmem:[%s847 + $0x14] sm:$0xf]
      %v854 = vld [vmem:[%s847 + $0x18] sm:$0xf]
      %v855 = vld [vmem:[%s847 + $0x1c] sm:$0xf]
      %v856 = vld [vmem:[%s847 + $0x20] sm:$0xf]
      %v857 = vld [vmem:[%s847 + $0x24] sm:$0xf]
      %v858 = vld [vmem:[%s847 + $0x28] sm:$0xf]
      %v859 = vld [vmem:[%s847 + $0x2c] sm:$0xf]
      %v860 = vld [vmem:[%s847 + $0x30] sm:$0xf]
      %v861 = vld [vmem:[%s847 + $0x34] sm:$0xf]
      %v862 = vld [vmem:[%s847 + $0x38] sm:$0xf]
      %v863 = vld [vmem:[%s847 + $0x3c] sm:$0xf]
      %v864 = vld [vmem:[%s847 + $0x40] sm:$0xf]
      %v865 = vld [vmem:[%s847 + $0x44] sm:$0xf]
      %v866 = vld [vmem:[%s847 + $0x48] sm:$0xf]
      %v867 = vld [vmem:[%s847 + $0x4c] sm:$0xf]
      %v868 = vld [vmem:[%s847 + $0x50] sm:$0xf]
      %v869 = vld [vmem:[%s847 + $0x54] sm:$0xf]
      %vm874 = vcmask 1045504
      %v875 = vrot.slane %v843, 2
      %v876 = vrot.slane %v845, 2
      %v877 = vsel %vm874, %v875, %v876
      %v878 = vrot.slane %v844, 2
      %v879 = vrot.slane %v846, 2
      %v880 = vsel %vm874, %v878, %v879
      %v904 = vunpack.c.l.b16 %v848
      %v905 = vunpack.c.l.b16 %v849
      %v906 = vunpack.c.l.b16 %v850
      %v907 = vunpack.c.l.b16 %v851
      %v908 = vunpack.c.l.b16 %v852
      %v909 = vunpack.c.l.b16 %v853
      %v910 = vunpack.c.l.b16 %v854
      %v911 = vunpack.c.l.b16 %v855
      %v912 = vunpack.c.l.b16 %v856
      %v913 = vunpack.c.l.b16 %v857
      %v914 = vunpack.c.l.b16 %v858
      %v915 = vunpack.c.l.b16 %v859
      %v916 = vunpack.c.l.b16 %v860
      %v917 = vunpack.c.l.b16 %v861
      %v918 = vunpack.c.l.b16 %v862
      %v919 = vunpack.c.l.b16 %v863
      %v920 = vunpack.c.l.b16 %v864
      %v921 = vunpack.c.l.b16 %v865
      %v922 = vunpack.c.l.b16 %v866
      %v923 = vunpack.c.l.b16 %v867
      %v924 = vunpack.c.l.b16 %v868
      %v925 = vunpack.c.l.b16 %v869
      %v926 = vpack.c.b16 %v905, %v904
      %v927 = vpack.c.b16 %v907, %v906
      %v928 = vpack.c.b16 %v909, %v908
      %v929 = vpack.c.b16 %v911, %v910
      %v930 = vpack.c.b16 %v913, %v912
      %v931 = vpack.c.b16 %v915, %v914
      %v932 = vpack.c.b16 %v917, %v916
      %v933 = vpack.c.b16 %v919, %v918
      %v934 = vpack.c.b16 %v921, %v920
      %v935 = vpack.c.b16 %v923, %v922
      %v936 = vpack.c.b16 %v925, %v924
      %v949 = vsel %vm350, %v880, 0
      %951 = vmatprep.subr.bf16.mxu0 0
      %952 = vmatpush1.bf16.msra.mxu0 %v926
      %953 = vmatprep.subr.bf16.mxu0 0
      %954 = vmatpush1.bf16.msra.mxu0 %v927
      %955 = vmatprep.subr.bf16.mxu0 0
      %956 = vmatpush1.bf16.msra.mxu0 %v928
      %957 = vmatprep.subr.bf16.mxu0 0
      %958 = vmatpush1.bf16.msra.mxu0 %v929
      %959 = vmatprep.subr.bf16.mxu0 0
      %960 = vmatpush1.bf16.msra.mxu0 %v930
      %961 = vmatprep.subr.bf16.mxu0 0
      %962 = vmatpush1.bf16.msra.mxu0 %v931
      %963 = vmatprep.subr.bf16.mxu0 0
      %964 = vmatpush1.bf16.msra.mxu0 %v932
      %965 = vmatprep.subr.bf16.mxu0 0
      %966 = vmatpush1.bf16.msra.mxu0 %v933
      %967 = vmatprep.subr.bf16.mxu0 0
      %968 = vmatpush1.bf16.msra.mxu0 %v934
      %969 = vmatprep.subr.bf16.mxu0 0
      %970 = vmatpush1.bf16.msra.mxu0 %v935
      %971 = vmatprep.subr.bf16.mxu0 0
      %972 = vmatpush1.bf16.msra.mxu0 %v936
      %973 = vmatprep.subr.bf16.mxu0 0
      %974 = vmatpush1.bf16.msra.mxu0 0
      %975 = vmatprep.subr.bf16.mxu0 0
      %976 = vmatpush1.bf16.msra.mxu0 0
      %977 = vmatprep.subr.bf16.mxu0 0
      %978 = vmatpush1.bf16.msra.mxu0 0
      %979 = vmatprep.subr.bf16.mxu0 0
      %980 = vmatpush1.bf16.msra.mxu0 0
      %981 = vmatprep.subr.bf16.mxu0 0
      %982 = vmatpush1.bf16.msra.mxu0 0
      %983 = vmatprep.mubr.bf16.mxu0 %v949
      %984 = vmatmul.mubr.bf16.gmra.mrb[0].mxu0 %v877
      %v985 = vpop.f32.mrb[0].mxu0
      %v986 = vadd.f32 0.0, %v985
      %v987 = vpop.f32.mrb[0].mxu0
      %v988 = vpop.f32.mrb[0].mxu0
      %v989 = vadd.f32 0.0, %v988
      %v990 = vpop.f32.mrb[0].mxu0
      %991 = vdwg.mxu0
      %v992 = vadd.f32 %v837, %v986
      %v993 = vadd.f32 %v838, %v989
      %v994 = vld [vmem:[%s192] sm:$0xe0]
      %v995 = vld [vmem:[%s192 + $0x8] sm:$0xe0]
      %v996 = vld [vmem:[%s192 + $0x20] sm:$0x1f]
      %v997 = vld [vmem:[%s192 + $0x28] sm:$0x1f]
      %v998 = vpack.c.bf16 %v201, %v994
      %v999 = vpack.c.bf16 %v202, %v995
      %v1000 = vpack.c.bf16 %v996, %v996
      %v1001 = vpack.c.bf16 %v997, %v997
      %s1002 = scalar_lea.vmem %s1, 440
      %v1003 = vld [vmem:[%s1002] sm:$0xf]
      %v1004 = vld [vmem:[%s1002 + $0x4] sm:$0xf]
      %v1005 = vld [vmem:[%s1002 + $0x8] sm:$0xf]
      %v1006 = vld [vmem:[%s1002 + $0xc] sm:$0xf]
      %v1007 = vld [vmem:[%s1002 + $0x10] sm:$0xf]
      %v1008 = vld [vmem:[%s1002 + $0x14] sm:$0xf]
      %v1009 = vld [vmem:[%s1002 + $0x18] sm:$0xf]
      %v1010 = vld [vmem:[%s1002 + $0x1c] sm:$0xf]
      %v1011 = vld [vmem:[%s1002 + $0x20] sm:$0xf]
      %v1012 = vld [vmem:[%s1002 + $0x24] sm:$0xf]
      %v1013 = vld [vmem:[%s1002 + $0x28] sm:$0xf]
      %v1014 = vld [vmem:[%s1002 + $0x2c] sm:$0xf]
      %v1015 = vld [vmem:[%s1002 + $0x30] sm:$0xf]
      %v1016 = vld [vmem:[%s1002 + $0x34] sm:$0xf]
      %v1017 = vld [vmem:[%s1002 + $0x38] sm:$0xf]
      %v1018 = vld [vmem:[%s1002 + $0x3c] sm:$0xf]
      %v1019 = vld [vmem:[%s1002 + $0x40] sm:$0xf]
      %v1020 = vld [vmem:[%s1002 + $0x44] sm:$0xf]
      %v1021 = vld [vmem:[%s1002 + $0x48] sm:$0xf]
      %v1022 = vld [vmem:[%s1002 + $0x4c] sm:$0xf]
      %v1023 = vld [vmem:[%s1002 + $0x50] sm:$0xf]
      %v1024 = vld [vmem:[%s1002 + $0x54] sm:$0xf]
      %vm1025 = vsmask.f32 5376
      %v1027 = vshrl.u32 %v998, 16
      %v1029 = vrot.slane %v1027, 2
      %v1030 = vshll.u32 %v998, 16
      %v1032 = vrot.slane %v1030, 3
      %v1033 = vor.u32 %v1029, %v1032
      %v1035 = vshrl.u32 %v1000, 16
      %v1037 = vrot.slane %v1035, 2
      %v1038 = vshll.u32 %v1000, 16
      %v1040 = vrot.slane %v1038, 3
      %v1041 = vor.u32 %v1037, %v1040
      %v1042 = vsel %vm1025, %v1033, %v1041
      %v1044 = vshrl.u32 %v999, 16
      %v1046 = vrot.slane %v1044, 2
      %v1047 = vshll.u32 %v999, 16
      %v1049 = vrot.slane %v1047, 3
      %v1050 = vor.u32 %v1046, %v1049
      %v1052 = vshrl.u32 %v1001, 16
      %v1054 = vrot.slane %v1052, 2
      %v1055 = vshll.u32 %v1001, 16
      %v1057 = vrot.slane %v1055, 3
      %v1058 = vor.u32 %v1054, %v1057
      %v1059 = vsel %vm1025, %v1050, %v1058
      %v1083 = vunpack.c.l.b16 %v1003
      %v1084 = vunpack.c.l.b16 %v1004
      %v1085 = vunpack.c.l.b16 %v1005
      %v1086 = vunpack.c.l.b16 %v1006
      %v1087 = vunpack.c.l.b16 %v1007
      %v1088 = vunpack.c.l.b16 %v1008
      %v1089 = vunpack.c.l.b16 %v1009
      %v1090 = vunpack.c.l.b16 %v1010
      %v1091 = vunpack.c.l.b16 %v1011
      %v1092 = vunpack.c.l.b16 %v1012
      %v1093 = vunpack.c.l.b16 %v1013
      %v1094 = vunpack.c.l.b16 %v1014
      %v1095 = vunpack.c.l.b16 %v1015
      %v1096 = vunpack.c.l.b16 %v1016
      %v1097 = vunpack.c.l.b16 %v1017
      %v1098 = vunpack.c.l.b16 %v1018
      %v1099 = vunpack.c.l.b16 %v1019
      %v1100 = vunpack.c.l.b16 %v1020
      %v1101 = vunpack.c.l.b16 %v1021
      %v1102 = vunpack.c.l.b16 %v1022
      %v1103 = vunpack.c.l.b16 %v1023
      %v1104 = vunpack.c.l.b16 %v1024
      %v1105 = vpack.c.b16 %v1084, %v1083
      %v1106 = vpack.c.b16 %v1086, %v1085
      %v1107 = vpack.c.b16 %v1088, %v1087
      %v1108 = vpack.c.b16 %v1090, %v1089
      %v1109 = vpack.c.b16 %v1092, %v1091
      %v1110 = vpack.c.b16 %v1094, %v1093
      %v1111 = vpack.c.b16 %v1096, %v1095
      %v1112 = vpack.c.b16 %v1098, %v1097
      %v1113 = vpack.c.b16 %v1100, %v1099
      %v1114 = vpack.c.b16 %v1102, %v1101
      %v1115 = vpack.c.b16 %v1104, %v1103
      %v1128 = vsel %vm350, %v1059, 0
      %1130 = vmatprep.subr.bf16.mxu0 0
      %1131 = vmatpush1.bf16.msra.mxu0 %v1105
      %1132 = vmatprep.subr.bf16.mxu0 0
      %1133 = vmatpush1.bf16.msra.mxu0 %v1106
      %1134 = vmatprep.subr.bf16.mxu0 0
      %1135 = vmatpush1.bf16.msra.mxu0 %v1107
      %1136 = vmatprep.subr.bf16.mxu0 0
      %1137 = vmatpush1.bf16.msra.mxu0 %v1108
      %1138 = vmatprep.subr.bf16.mxu0 0
      %1139 = vmatpush1.bf16.msra.mxu0 %v1109
      %1140 = vmatprep.subr.bf16.mxu0 0
      %1141 = vmatpush1.bf16.msra.mxu0 %v1110
      %1142 = vmatprep.subr.bf16.mxu0 0
      %1143 = vmatpush1.bf16.msra.mxu0 %v1111
      %1144 = vmatprep.subr.bf16.mxu0 0
      %1145 = vmatpush1.bf16.msra.mxu0 %v1112
      %1146 = vmatprep.subr.bf16.mxu0 0
      %1147 = vmatpush1.bf16.msra.mxu0 %v1113
      %1148 = vmatprep.subr.bf16.mxu0 0
      %1149 = vmatpush1.bf16.msra.mxu0 %v1114
      %1150 = vmatprep.subr.bf16.mxu0 0
      %1151 = vmatpush1.bf16.msra.mxu0 %v1115
      %1152 = vmatprep.subr.bf16.mxu0 0
      %1153 = vmatpush1.bf16.msra.mxu0 0
      %1154 = vmatprep.subr.bf16.mxu0 0
      %1155 = vmatpush1.bf16.msra.mxu0 0
      %1156 = vmatprep.subr.bf16.mxu0 0
      %1157 = vmatpush1.bf16.msra.mxu0 0
      %1158 = vmatprep.subr.bf16.mxu0 0
      %1159 = vmatpush1.bf16.msra.mxu0 0
      %1160 = vmatprep.subr.bf16.mxu0 0
      %1161 = vmatpush1.bf16.msra.mxu0 0
      %1162 = vmatprep.mubr.bf16.mxu0 %v1128
      %1163 = vmatmul.mubr.bf16.gmra.mrb[0].mxu0 %v1042
      %v1164 = vpop.f32.mrb[0].mxu0
      %v1165 = vadd.f32 0.0, %v1164
      %v1166 = vpop.f32.mrb[0].mxu0
      %v1167 = vpop.f32.mrb[0].mxu0
      %v1168 = vadd.f32 0.0, %v1167
      %v1169 = vpop.f32.mrb[0].mxu0
      %1170 = vdwg.mxu0
      %v1171 = vadd.f32 %v992, %v1165
      %v1172 = vadd.f32 %v993, %v1168
      %v1173 = vld [vmem:[%s192] sm:$0xc0]
      %v1174 = vld [vmem:[%s192 + $0x8] sm:$0xc0]
      %v1175 = vld [vmem:[%s192 + $0x20] sm:$0x3f]
      %v1176 = vld [vmem:[%s192 + $0x28] sm:$0x3f]
      %v1177 = vpack.c.bf16 %v201, %v1173
      %v1178 = vpack.c.bf16 %v202, %v1174
      %v1179 = vpack.c.bf16 %v1175, %v1175
      %v1180 = vpack.c.bf16 %v1176, %v1176
      %s1181 = scalar_lea.vmem %s1, 528
      %v1182 = vld [vmem:[%s1181] sm:$0xf]
      %v1183 = vld [vmem:[%s1181 + $0x4] sm:$0xf]
      %v1184 = vld [vmem:[%s1181 + $0x8] sm:$0xf]
      %v1185 = vld [vmem:[%s1181 + $0xc] sm:$0xf]
      %v1186 = vld [vmem:[%s1181 + $0x10] sm:$0xf]
      %v1187 = vld [vmem:[%s1181 + $0x14] sm:$0xf]
      %v1188 = vld [vmem:[%s1181 + $0x18] sm:$0xf]
      %v1189 = vld [vmem:[%s1181 + $0x1c] sm:$0xf]
      %v1190 = vld [vmem:[%s1181 + $0x20] sm:$0xf]
      %v1191 = vld [vmem:[%s1181 + $0x24] sm:$0xf]
      %v1192 = vld [vmem:[%s1181 + $0x28] sm:$0xf]
      %v1193 = vld [vmem:[%s1181 + $0x2c] sm:$0xf]
      %v1194 = vld [vmem:[%s1181 + $0x30] sm:$0xf]
      %v1195 = vld [vmem:[%s1181 + $0x34] sm:$0xf]
      %v1196 = vld [vmem:[%s1181 + $0x38] sm:$0xf]
      %v1197 = vld [vmem:[%s1181 + $0x3c] sm:$0xf]
      %v1198 = vld [vmem:[%s1181 + $0x40] sm:$0xf]
      %v1199 = vld [vmem:[%s1181 + $0x44] sm:$0xf]
      %v1200 = vld [vmem:[%s1181 + $0x48] sm:$0xf]
      %v1201 = vld [vmem:[%s1181 + $0x4c] sm:$0xf]
      %v1202 = vld [vmem:[%s1181 + $0x50] sm:$0xf]
      %v1203 = vld [vmem:[%s1181 + $0x54] sm:$0xf]
      %vm1208 = vcmask 1044480
      %v1209 = vrot.slane %v1177, 3
      %v1210 = vrot.slane %v1179, 3
      %v1211 = vsel %vm1208, %v1209, %v1210
      %v1212 = vrot.slane %v1178, 3
      %v1213 = vrot.slane %v1180, 3
      %v1214 = vsel %vm1208, %v1212, %v1213
      %v1238 = vunpack.c.l.b16 %v1182
      %v1239 = vunpack.c.l.b16 %v1183
      %v1240 = vunpack.c.l.b16 %v1184
      %v1241 = vunpack.c.l.b16 %v1185
      %v1242 = vunpack.c.l.b16 %v1186
      %v1243 = vunpack.c.l.b16 %v1187
      %v1244 = vunpack.c.l.b16 %v1188
      %v1245 = vunpack.c.l.b16 %v1189
      %v1246 = vunpack.c.l.b16 %v1190
      %v1247 = vunpack.c.l.b16 %v1191
      %v1248 = vunpack.c.l.b16 %v1192
      %v1249 = vunpack.c.l.b16 %v1193
      %v1250 = vunpack.c.l.b16 %v1194
      %v1251 = vunpack.c.l.b16 %v1195
      %v1252 = vunpack.c.l.b16 %v1196
      %v1253 = vunpack.c.l.b16 %v1197
      %v1254 = vunpack.c.l.b16 %v1198
      %v1255 = vunpack.c.l.b16 %v1199
      %v1256 = vunpack.c.l.b16 %v1200
      %v1257 = vunpack.c.l.b16 %v1201
      %v1258 = vunpack.c.l.b16 %v1202
      %v1259 = vunpack.c.l.b16 %v1203
      %v1260 = vpack.c.b16 %v1239, %v1238
      %v1261 = vpack.c.b16 %v1241, %v1240
      %v1262 = vpack.c.b16 %v1243, %v1242
      %v1263 = vpack.c.b16 %v1245, %v1244
      %v1264 = vpack.c.b16 %v1247, %v1246
      %v1265 = vpack.c.b16 %v1249, %v1248
      %v1266 = vpack.c.b16 %v1251, %v1250
      %v1267 = vpack.c.b16 %v1253, %v1252
      %v1268 = vpack.c.b16 %v1255, %v1254
      %v1269 = vpack.c.b16 %v1257, %v1256
      %v1270 = vpack.c.b16 %v1259, %v1258
      %v1283 = vsel %vm350, %v1214, 0
      %1285 = vmatprep.subr.bf16.mxu0 0
      %1286 = vmatpush1.bf16.msra.mxu0 %v1260
      %1287 = vmatprep.subr.bf16.mxu0 0
      %1288 = vmatpush1.bf16.msra.mxu0 %v1261
      %1289 = vmatprep.subr.bf16.mxu0 0
      %1290 = vmatpush1.bf16.msra.mxu0 %v1262
      %1291 = vmatprep.subr.bf16.mxu0 0
      %1292 = vmatpush1.bf16.msra.mxu0 %v1263
      %1293 = vmatprep.subr.bf16.mxu0 0
      %1294 = vmatpush1.bf16.msra.mxu0 %v1264
      %1295 = vmatprep.subr.bf16.mxu0 0
      %1296 = vmatpush1.bf16.msra.mxu0 %v1265
      %1297 = vmatprep.subr.bf16.mxu0 0
      %1298 = vmatpush1.bf16.msra.mxu0 %v1266
      %1299 = vmatprep.subr.bf16.mxu0 0
      %1300 = vmatpush1.bf16.msra.mxu0 %v1267
      %1301 = vmatprep.subr.bf16.mxu0 0
      %1302 = vmatpush1.bf16.msra.mxu0 %v1268
      %1303 = vmatprep.subr.bf16.mxu0 0
      %1304 = vmatpush1.bf16.msra.mxu0 %v1269
      %1305 = vmatprep.subr.bf16.mxu0 0
      %1306 = vmatpush1.bf16.msra.mxu0 %v1270
      %1307 = vmatprep.subr.bf16.mxu0 0
      %1308 = vmatpush1.bf16.msra.mxu0 0
      %1309 = vmatprep.subr.bf16.mxu0 0
      %1310 = vmatpush1.bf16.msra.mxu0 0
      %1311 = vmatprep.subr.bf16.mxu0 0
      %1312 = vmatpush1.bf16.msra.mxu0 0
      %1313 = vmatprep.subr.bf16.mxu0 0
      %1314 = vmatpush1.bf16.msra.mxu0 0
      %1315 = vmatprep.subr.bf16.mxu0 0
      %1316 = vmatpush1.bf16.msra.mxu0 0
      %1317 = vmatprep.mubr.bf16.mxu0 %v1283
      %1318 = vmatmul.mubr.bf16.gmra.mrb[0].mxu0 %v1211
      %v1319 = vpop.f32.mrb[0].mxu0
      %v1320 = vadd.f32 0.0, %v1319
      %v1321 = vpop.f32.mrb[0].mxu0
      %v1322 = vpop.f32.mrb[0].mxu0
      %v1323 = vadd.f32 0.0, %v1322
      %v1324 = vpop.f32.mrb[0].mxu0
      %1325 = vdwg.mxu0
      %v1326 = vadd.f32 %v1171, %v1320
      %v1327 = vadd.f32 %v1172, %v1323
      %v1328 = vld [vmem:[%s2] sm:$0x1]
      %v1330 = vlaneseq
      %v1331 = vshrl.u32 %v1330, 7
      %v1332 = vsub.s32 0, %v1331
      %v1333 = vrot.slane %v1328, %v1332
      %v1335 = vadd.f32 %v1326, %v1333
      %v1336 = vadd.f32 %v1327, %v1333
      %v1337 = vtanh.pop %v1335
      %v1338 = vtanh.pop %v1336
      %1339 = vst [vmem:[%s197] sm:$0xff] %v1337
      %1340 = vst [vmem:[%s197 + $0x8] sm:$0xff] %v1338
      %p1341 = scmp.lt.s32.totalorder %s15, 1
      %s1342 = scalar_select %p1341, %s15, 1
      %s1343 = smul.addr %s1342, 2
      %s1344 = smul.addr %s1343, 8
      %s1345 = scalar_lea.vmem %s4, %s1344
      // Predicated region
      $region37: #{generator_forward.13} parent=35 // pred_check
        %p1346 = pneg %p122
      $region38: #{generator_forward.13} parent=35 // pred_check_branch
        %1348 = sbr.rel (%p1346) target = $region40
      $region39: #{generator_forward.13} parent=35 // pred_region
        _
      $region40: #{generator_forward.13} parent=35 // pred_fallthru
        _
    $region36: #{generator_forward.13} parent=5 // pred_fallthru
      _
    %p1349 = scmp.le.s32.totalorder 2, %s10
    // Predicated region
    $region41: #{generator_forward.13} parent=5 // pred_check
      %p1350 = pneg %p1349
    $region42: #{generator_forward.13} parent=5 // pred_check_branch
      %1352 = sbr.rel (%p1350) target = $region44
    $region43: #{generator_forward.13} parent=5 // pred_region
      %s1353 = ssub.s32 %s10, 2
      // Predicated region
      $region45: #{generator_forward.13} parent=43 // pred_check
        %p1354 = pneg %p128
      $region46: #{generator_forward.13} parent=43 // pred_check_branch
        %1356 = sbr.rel (%p1354) target = $region48
      $region47: #{generator_forward.13} parent=43 // pred_region
        %p1357 = scmp.lt.s32.totalorder %s16, 1
        %s1358 = scalar_select %p1357, %s16, 1
        %s1359 = smul.addr %s1358, 2
        %s1360 = smul.addr %s1359, 8
        %s1361 = scalar_lea.vmem %s4, %s1360
      $region48: #{generator_forward.13} parent=43 // pred_fallthru
        _
    $region44: #{generator_forward.13} parent=5 // pred_fallthru
      _
  $region6: #{generator_forward.13} parent=0 // loop_footer
    %s14 = sadd.s32 1, %s10
  $region7: #{generator_forward.13} parent=0 // loop_footer_branch
    %9 = sbr.rel target = $region3
  $region8: #{generator_forward.13} parent=0 // loop_exit
    _

</llo_original>
